<compile_context>
chip_gen: v5e
topology: v5e:2x2
jax: 0.10.0
libtpu: 0.0.40
codegen_flags: <defaults>
</compile_context>

<pallas_src>
import functools

import jax
import jax.numpy as jnp
from jax.experimental import pallas as pl
from jax.experimental.pallas import tpu as pltpu

EPS = 1e-5
LEAKY_SLOPE = 0.05            # matches F.leaky_relu(x, 0.05) in the reference model
VMEM_LIMIT_BYTES = 48 * 1024 * 1024
MAX_TILE_K = 2048             # K larger than this gets split into 1024-wide tiles
MAX_TILE_N = 512


def _round_up(n, m):
    return -(-n // m) * m


def _choose_m_tiling(m):
    """Pick an M tile.  Pads M by at most one tile (vs. the old full-array
    padding) and tries to produce >=2 M blocks so the "parallel" M axis can
    shard across both v7x TensorCores."""
    mp = _round_up(m, 8)
    if mp >= 1024:
        tm = 512
    elif mp >= 256:
        tm = 128
    elif mp >= 16:
        tm = _round_up(mp // 2, 8)
    else:
        tm = mp
    return _round_up(mp, tm), tm


# ---------------------------------------------------------------------------
# Pallas kernels
# ---------------------------------------------------------------------------
def _gemm_bias_stats_kernel(a_ref, b_ref, bias_ref, y_ref, sum_ref, sumsq_ref,
                            acc_ref, *, act):
    """One (TM, TN) tile of act(A @ B + bias) with a fused BN-stats epilogue.

    K is the innermost ("arbitrary") reduction grid axis: the f32 accumulator
    is zeroed at k == 0; bias, optional activation and the per-channel
    sum / sum-of-squares (for BatchNorm) run at k == last.
    """
    k = pl.program_id(2)

    @pl.when(k == 0)
    def _init():
        acc_ref[...] = jnp.zeros_like(acc_ref)

    acc_ref[...] += jnp.dot(a_ref[...], b_ref[...],
                            preferred_element_type=jnp.float32)

    @pl.when(k == pl.num_programs(2) - 1)
    def _epilogue():
        acc = acc_ref[...]
        # Stats of the *pre-bias* accumulator (padded rows are exactly zero so
        # they contribute nothing); bias is folded in analytically by the tiny
        # host-side BN finalisation.
        s = jnp.sum(acc, axis=0, keepdims=True)             # (1, TN)
        sq = jnp.sum(acc * acc, axis=0, keepdims=True)      # (1, TN)
        sum_ref[...] = s[None]
        sumsq_ref[...] = sq[None]

        y = acc + bias_ref[...]
        if act == "leaky_relu":
            y = jnp.where(y >= 0, y, LEAKY_SLOPE * y)
        elif act == "tanh":
            y = jnp.tanh(y)
        y_ref[...] = y.astype(y_ref.dtype)


def _scale_shift_act_kernel(x_ref, scale_ref, shift_ref, o_ref, *, act):
    """Elementwise y = act(x * scale + shift); math in f32, store in o.dtype."""
    v = x_ref[...] * scale_ref[...] + shift_ref[...]
    if act == "leaky_relu":
        v = jnp.where(v >= 0, v, LEAKY_SLOPE * v)
    elif act == "tanh":
        v = jnp.tanh(v)
    o_ref[...] = v.astype(o_ref.dtype)


# ---------------------------------------------------------------------------
# Pallas wrappers
# ---------------------------------------------------------------------------
def fused_gemm(a, b, bias, *, act="none", out_dtype=jnp.float32):
    """act(a @ b + bias) plus per-M-tile channel sums / sums-of-squares of a@b.

    a: (M, K), b: (K, N) (cast to bf16 for the MXU); bias: (N,) f32.
    Returns (y[M, N] out_dtype, sums[grid_m, 1, N] f32, sumsq[grid_m, 1, N] f32).
    """
    m, k = a.shape
    k2, n = b.shape
    assert k == k2 and bias.shape == (n,)

    a = a.astype(jnp.bfloat16)
    b = b.astype(jnp.bfloat16)
    bias2 = bias.reshape(1, n).astype(jnp.float32)

    mp, tm = _choose_m_tiling(m)
    if mp != m:
        a = jnp.pad(a, ((0, mp - m), (0, 0)))

    if k <= MAX_TILE_K:
        tk, kp = k, k
    else:
        tk = 1024
        kp = _round_up(k, tk)
        a = jnp.pad(a, ((0, 0), (0, kp - k)))
        b = jnp.pad(b, ((0, kp - k), (0, 0)))

    if n <= MAX_TILE_N:
        tn, np_ = n, n
    else:
        tn = MAX_TILE_N
        np_ = _round_up(n, tn)
        b = jnp.pad(b, ((0, 0), (0, np_ - n)))
        bias2 = jnp.pad(bias2, ((0, 0), (0, np_ - n)))

    grid = (mp // tm, np_ // tn, kp // tk)

    flops = 2 * mp * np_ * kp
    transcendentals = mp * np_ if act == "tanh" else 0
    bytes_accessed = (mp * kp * 2 + kp * np_ * 2 + np_ * 4
                      + mp * np_ * jnp.dtype(out_dtype).itemsize
                      + 2 * grid[0] * np_ * 4)

    y, sums, sumsq = pl.pallas_call(
        functools.partial(_gemm_bias_stats_kernel, act=act),
        out_shape=(
            jax.ShapeDtypeStruct((mp, np_), out_dtype),
            jax.ShapeDtypeStruct((grid[0], 1, np_), jnp.float32),
            jax.ShapeDtypeStruct((grid[0], 1, np_), jnp.float32),
        ),
        grid=grid,
        in_specs=[
            pl.BlockSpec((tm, tk), lambda i, j, kk: (i, kk)),
            pl.BlockSpec((tk, tn), lambda i, j, kk: (kk, j)),
            pl.BlockSpec((1, tn), lambda i, j, kk: (0, j)),
        ],
        out_specs=(
            pl.BlockSpec((tm, tn), lambda i, j, kk: (i, j)),
            pl.BlockSpec((1, 1, tn), lambda i, j, kk: (i, 0, j)),
            pl.BlockSpec((1, 1, tn), lambda i, j, kk: (i, 0, j)),
        ),
        scratch_shapes=[pltpu.VMEM((tm, tn), jnp.float32)],
        compiler_params=pltpu.CompilerParams(
            dimension_semantics=("parallel", "parallel", "arbitrary"),
            vmem_limit_bytes=VMEM_LIMIT_BYTES),
        cost_estimate=pl.CostEstimate(flops=flops,
                                      transcendentals=transcendentals,
                                      bytes_accessed=bytes_accessed),
    )(a, b, bias2)

    if mp != m or np_ != n:
        y = y[:m, :n]
        sums = sums[:, :, :n]
        sumsq = sumsq[:, :, :n]
    return y, sums, sumsq


def scale_shift_act(x, scale, shift, *, act, out_dtype):
    """Tiled elementwise y = act(x * scale + shift) over the M axis."""
    m, n = x.shape
    mp, tm = _choose_m_tiling(m)
    if mp != m:
        x = jnp.pad(x, ((0, mp - m), (0, 0)))
    scale2 = scale.reshape(1, n).astype(jnp.float32)
    shift2 = shift.reshape(1, n).astype(jnp.float32)

    bytes_accessed = (mp * n * x.dtype.itemsize
                      + mp * n * jnp.dtype(out_dtype).itemsize + 2 * n * 4)
    y = pl.pallas_call(
        functools.partial(_scale_shift_act_kernel, act=act),
        out_shape=jax.ShapeDtypeStruct((mp, n), out_dtype),
        grid=(mp // tm,),
        in_specs=[
            pl.BlockSpec((tm, n), lambda i: (i, 0)),
            pl.BlockSpec((1, n), lambda i: (0, 0)),
            pl.BlockSpec((1, n), lambda i: (0, 0)),
        ],
        out_specs=pl.BlockSpec((tm, n), lambda i: (i, 0)),
        compiler_params=pltpu.CompilerParams(
            dimension_semantics=("parallel",),
            vmem_limit_bytes=VMEM_LIMIT_BYTES),
        cost_estimate=pl.CostEstimate(
            flops=2 * mp * n,
            transcendentals=mp * n if act == "tanh" else 0,
            bytes_accessed=bytes_accessed),
    )(x, scale2, shift2)
    return y[:m] if mp != m else y


# ---------------------------------------------------------------------------
# Layer glue (im2col, conv-transpose -> conv + pixel-shuffle, BN finalisation)
# ---------------------------------------------------------------------------
def im2col(x_nhwc, kh, kw, stride, padding):
    """Gather conv patches.  Returns (N*OH*OW, kh*kw*C), OH, OW."""
    # TODO(synk): the patches matrix is still materialized in HBM; fusing the
    # (ki, kj) gather into the GEMM grid requires manual strided DMA
    # (memory_space=pl.ANY + make_async_copy) and is not done here.
    n, h, w, c = x_nhwc.shape
    xp = jnp.pad(x_nhwc, ((0, 0), (padding, padding), (padding, padding), (0, 0)))
    oh = (h + 2 * padding - kh) // stride + 1
    ow = (w + 2 * padding - kw) // stride + 1
    cols = []
    for i in range(kh):
        for j in range(kw):
            cols.append(xp[:, i:i + stride * oh:stride, j:j + stride * ow:stride, :])
    patches = jnp.concatenate(cols, axis=-1)          # (N, OH, OW, kh*kw*C)
    return patches.reshape(n * oh * ow, kh * kw * c), oh, ow


def conv_block(x_nhwc, wmat, bias, gamma, beta, *, kh, kw, stride, padding,
               bn, act, phases=1):
    """conv (im2col GEMM) -> [BatchNorm, training-mode stats] -> activation.

    wmat: (kh*kw*Cin, N) with N = phases * C; bias: (N,), identical across
    phases.  With bn=True, BN stats for channel c are pooled over all `phases`
    column groups (used by the deconv lowering)."""
    nb = x_nhwc.shape[0]
    patches, oh, ow = im2col(x_nhwc, kh, kw, stride, padding)
    m = patches.shape[0]
    n = wmat.shape[1]
    c = n // phases

    if bn:
        y_pre, sums, sumsq = fused_gemm(patches, wmat, bias, act="none",
                                        out_dtype=jnp.float32)
        bias_c = bias[:c].astype(jnp.float32)
        s = jnp.sum(sums, axis=(0, 1)).reshape(phases, c).sum(axis=0)
        ss = jnp.sum(sumsq, axis=(0, 1)).reshape(phases, c).sum(axis=0)
        cnt = jnp.float32(m * phases)
        mean = s / cnt + bias_c
        ex2 = (ss + 2.0 * bias_c * s) / cnt + bias_c * bias_c
        var = jnp.maximum(ex2 - mean * mean, 0.0)      # biased batch variance
        scale = gamma / jnp.sqrt(var + EPS)
        shift = beta - mean * scale
        y = scale_shift_act(y_pre, jnp.tile(scale, phases), jnp.tile(shift, phases),
                            act=act, out_dtype=jnp.bfloat16)
    else:
        # No BN: bias + activation are fully fused into the GEMM epilogue.
        y, _, _ = fused_gemm(patches, wmat, bias, act=act, out_dtype=jnp.float32)
    return y.reshape(nb, oh, ow, n)


def _conv_wmat(w):
    """PyTorch Conv2d weight (Cout, Cin, kh, kw) -> (kh*kw*Cin, Cout) bf16."""
    cout, cin, kh, kw = w.shape
    return (jnp.transpose(w, (2, 3, 1, 0))
            .reshape(kh * kw * cin, cout).astype(jnp.bfloat16))


# For ConvTranspose2d(k=4, s=2, p=1): 3x3-conv tap position -> transposed-kernel
# index, per output-pixel phase (0 = even, 1 = odd).
_PHASE_TAPS = {0: ((0, 3), (1, 1)), 1: ((1, 2), (2, 0))}


def _deconv_to_conv_wmat(w_t):
    """Exact rewrite of ConvTranspose2d(k=4, s=2, p=1) as a 3x3 / stride-1 /
    pad-1 conv with 4x output channels (one group per phase), to be followed by
    a pixel shuffle.  w_t: (Cin, Cout, 4, 4) PyTorch layout."""
    cin, cout = w_t.shape[0], w_t.shape[1]
    w3 = jnp.zeros((3, 3, cin, 4 * cout), w_t.dtype)
    for a in (0, 1):
        for b in (0, 1):
            p = 2 * a + b
            for u, kh in _PHASE_TAPS[a]:
                for v, kw in _PHASE_TAPS[b]:
                    w3 = w3.at[u, v, :, p * cout:(p + 1) * cout].set(w_t[:, :, kh, kw])
    return w3.reshape(9 * cin, 4 * cout).astype(jnp.bfloat16)


def deconv_block(x_nhwc, w_t, bias, gamma, beta, *, bn, act):
    """ConvTranspose2d(k=4, s=2, p=1) + [BN] + act, via 3x3 conv + pixel shuffle."""
    cout = w_t.shape[1]
    wmat = _deconv_to_conv_wmat(w_t)
    bias4 = jnp.tile(bias, 4)
    y4 = conv_block(x_nhwc, wmat, bias4, gamma, beta, kh=3, kw=3, stride=1,
                    padding=1, bn=bn, act=act, phases=4)
    nb, h, w, _ = y4.shape
    y4 = y4.reshape(nb, h, w, 2, 2, cout)
    return jnp.transpose(y4, (0, 1, 3, 2, 4, 5)).reshape(nb, 2 * h, 2 * w, cout)


# ---------------------------------------------------------------------------
# Gyx parameters + forward
# ---------------------------------------------------------------------------
def init_gyx_params(key, conv_dim=64):
    ks = jax.random.split(key, 6)

    def conv_p(k, cout, cin, ksz):
        kw_, kb_ = jax.random.split(k)
        return {
            "w": 0.05 * jax.random.normal(kw_, (cout, cin, ksz, ksz), jnp.float32),
            "b": 0.05 * jax.random.normal(kb_, (cout,), jnp.float32),
            "gamma": jnp.ones((cout,), jnp.float32),
            "beta": jnp.zeros((cout,), jnp.float32),
        }

    def deconv_p(k, cin, cout, ksz):
        kw_, kb_ = jax.random.split(k)
        return {
            "w": 0.05 * jax.random.normal(kw_, (cin, cout, ksz, ksz), jnp.float32),
            "b": 0.05 * jax.random.normal(kb_, (cout,), jnp.float32),
            "gamma": jnp.ones((cout,), jnp.float32),
            "beta": jnp.zeros((cout,), jnp.float32),
        }

    d = conv_dim
    return {
        "cnn1": conv_p(ks[0], d, 3, 4),
        "cnn2": conv_p(ks[1], 2 * d, d, 3),
        "cnn3": conv_p(ks[2], 2 * d, 2 * d, 3),
        "cnn4": conv_p(ks[3], 2 * d, 2 * d, 3),
        "cnn5": deconv_p(ks[4], 2 * d, d, 4),
        "cnn6": deconv_p(ks[5], d, 1, 4),
    }


def gyx_forward(params, x_nchw):
    x = jnp.transpose(x_nchw, (0, 2, 3, 1)).astype(jnp.bfloat16)   # NCHW -> NHWC

    p = params["cnn1"]
    x = conv_block(x, _conv_wmat(p["w"]), p["b"], p["gamma"], p["beta"],
                   kh=4, kw=4, stride=2, padding=1, bn=True, act="leaky_relu")
    p = params["cnn2"]
    x = conv_block(x, _conv_wmat(p["w"]), p["b"], p["gamma"], p["beta"],
                   kh=3, kw=3, stride=2, padding=1, bn=True, act="leaky_relu")
    p = params["cnn3"]
    x = conv_block(x, _conv_wmat(p["w"]), p["b"], p["gamma"], p["beta"],
                   kh=3, kw=3, stride=1, padding=1, bn=True, act="leaky_relu")
    p = params["cnn4"]
    x = conv_block(x, _conv_wmat(p["w"]), p["b"], p["gamma"], p["beta"],
                   kh=3, kw=3, stride=1, padding=1, bn=True, act="leaky_relu")
    p = params["cnn5"]
    x = deconv_block(x, p["w"], p["b"], p["gamma"], p["beta"],
                     bn=True, act="leaky_relu")
    p = params["cnn6"]
    x = deconv_block(x, p["w"], p["b"], p["gamma"], p["beta"],
                     bn=False, act="tanh")
    return jnp.transpose(x, (0, 3, 1, 2)).astype(jnp.float32)      # NHWC -> NCHW


if __name__ == "__main__":
    key = jax.random.PRNGKey(0)
    k_param, k_x = jax.random.split(key)
    params = init_gyx_params(k_param, conv_dim=64)

    # batch=2, 3 input channels, 16x16 spatial (consistent with the module).
    x = jax.random.normal(k_x, (2, 3, 16, 16), jnp.float32)

    fwd = jax.jit(gyx_forward)
    out = jax.block_until_ready(fwd(params, x))

    assert out.shape == (2, 1, 16, 16), out.shape
    assert bool(jnp.all(jnp.isfinite(out)))
    print("KERNEL_OK")
</pallas_src>

<mosaic_0001>
module attributes {stable_mosaic.version = 11 : i64} {
  func.func @_gemm_bias_stats_kernel(%arg0: i32, %arg1: i32, %arg2: i32, %arg3: memref<64x48xbf16, #tpu.memory_space<vmem>>, %arg4: memref<48x64xbf16, #tpu.memory_space<vmem>>, %arg5: memref<1x64xf32, #tpu.memory_space<vmem>>, %arg6: memref<64x64xf32, #tpu.memory_space<vmem>>, %arg7: memref<1x1x64xf32, #tpu.memory_space<vmem>>, %arg8: memref<1x1x64xf32, #tpu.memory_space<vmem>>, %arg9: memref<64x64xf32, #tpu.memory_space<vmem>>) attributes {dimension_semantics = [#tpu.dimension_semantics<parallel>, #tpu.dimension_semantics<parallel>, #tpu.dimension_semantics<arbitrary>], iteration_bounds = array<i64: 2, 1, 1>, scalar_prefetch = 0 : i64, scratch_operands = 1 : i64, tpu.core_type = #tpu.core_type<tc>, window_params = [{transform_indices = @transform_0, window_bounds = array<i64: 64, 48>}, {transform_indices = @transform_1, window_bounds = array<i64: 48, 64>}, {transform_indices = @transform_2, window_bounds = array<i64: 1, 64>}, {transform_indices = @transform_3, window_bounds = array<i64: 64, 64>}, {transform_indices = @transform_4, window_bounds = array<i64: 1, 1, 64>}, {transform_indices = @transform_5, window_bounds = array<i64: 1, 1, 64>}]} {
    %c0_i32 = arith.constant 0 : i32
    %0 = arith.cmpi eq, %arg2, %c0_i32 : i32
    %1 = arith.extui %0 : i1 to i32
    %c0_i32_0 = arith.constant 0 : i32
    %2 = arith.cmpi ne, %1, %c0_i32_0 : i32
    scf.if %2 {
      %cst_10 = arith.constant 0.000000e+00 : f32
      %12 = vector.broadcast %cst_10 : f32 to vector<64x64xf32>
      %c0_11 = arith.constant 0 : index
      %c0_12 = arith.constant 0 : index
      %13 = vector.load %arg9[%c0_11, %c0_12] : memref<64x64xf32, #tpu.memory_space<vmem>>, vector<64x64xf32>
      tpu.vector_store %arg9[%c0_11, %c0_12], %12 {strides = array<i32>} : memref<64x64xf32, #tpu.memory_space<vmem>>, vector<64x64xf32>,
    } else {
    }
    %c0 = arith.constant 0 : index
    %c0_1 = arith.constant 0 : index
    %3 = vector.load %arg9[%c0, %c0_1] : memref<64x64xf32, #tpu.memory_space<vmem>>, vector<64x64xf32>
    %c0_2 = arith.constant 0 : index
    %c0_3 = arith.constant 0 : index
    %4 = vector.load %arg3[%c0_2, %c0_3] : memref<64x48xbf16, #tpu.memory_space<vmem>>, vector<64x48xbf16>
    %c0_4 = arith.constant 0 : index
    %c0_5 = arith.constant 0 : index
    %5 = vector.load %arg4[%c0_4, %c0_5] : memref<48x64xbf16, #tpu.memory_space<vmem>>, vector<48x64xbf16>
    %cst = arith.constant dense<0.000000e+00> : vector<64x64xf32>
    %6 = tpu.matmul %4, %5, %cst {dimension_numbers = #tpu.dot_dimension_numbers<[1], [0], [0], [1], [0, 0, 1, 1], [], []>} : vector<64x48xbf16>, vector<48x64xbf16>, vector<64x64xf32> -> vector<64x64xf32>
    %7 = arith.addf %3, %6 : vector<64x64xf32>
    %c0_6 = arith.constant 0 : index
    %c0_7 = arith.constant 0 : index
    %8 = vector.load %arg9[%c0_6, %c0_7] : memref<64x64xf32, #tpu.memory_space<vmem>>, vector<64x64xf32>
    tpu.vector_store %arg9[%c0_6, %c0_7], %7 {strides = array<i32>} : memref<64x64xf32, #tpu.memory_space<vmem>>, vector<64x64xf32>,
    %c0_i32_8 = arith.constant 0 : i32
    %9 = arith.cmpi eq, %arg2, %c0_i32_8 : i32
    %10 = arith.extui %9 : i1 to i32
    %c0_i32_9 = arith.constant 0 : i32
    %11 = arith.cmpi ne, %10, %c0_i32_9 : i32
    scf.if %11 {
      %c0_10 = arith.constant 0 : index
      %c0_11 = arith.constant 0 : index
      %12 = vector.load %arg9[%c0_10, %c0_11] : memref<64x64xf32, #tpu.memory_space<vmem>>, vector<64x64xf32>
      %cst_12 = arith.constant dense<0.000000e+00> : vector<64xf32>
      %13 = vector.multi_reduction <add>, %12, %cst_12 [0] : vector<64x64xf32> to vector<64xf32>
      %14 = vector.shape_cast %13 : vector<64xf32> to vector<1x64xf32>
      %15 = arith.mulf %12, %12 : vector<64x64xf32>
      %cst_13 = arith.constant dense<0.000000e+00> : vector<64xf32>
      %16 = vector.multi_reduction <add>, %15, %cst_13 [0] : vector<64x64xf32> to vector<64xf32>
      %17 = vector.shape_cast %16 : vector<64xf32> to vector<1x64xf32>
      %18 = vector.shape_cast %14 : vector<1x64xf32> to vector<1x1x64xf32>
      %c0_14 = arith.constant 0 : index
      %c0_15 = arith.constant 0 : index
      %c0_16 = arith.constant 0 : index
      %19 = vector.load %arg7[%c0_14, %c0_15, %c0_16] : memref<1x1x64xf32, #tpu.memory_space<vmem>>, vector<1x1x64xf32>
      tpu.vector_store %arg7[%c0_14, %c0_15, %c0_16], %18 {strides = array<i32>} : memref<1x1x64xf32, #tpu.memory_space<vmem>>, vector<1x1x64xf32>,
      %20 = vector.shape_cast %17 : vector<1x64xf32> to vector<1x1x64xf32>
      %c0_17 = arith.constant 0 : index
      %c0_18 = arith.constant 0 : index
      %c0_19 = arith.constant 0 : index
      %21 = vector.load %arg8[%c0_17, %c0_18, %c0_19] : memref<1x1x64xf32, #tpu.memory_space<vmem>>, vector<1x1x64xf32>
      tpu.vector_store %arg8[%c0_17, %c0_18, %c0_19], %20 {strides = array<i32>} : memref<1x1x64xf32, #tpu.memory_space<vmem>>, vector<1x1x64xf32>,
      %c0_20 = arith.constant 0 : index
      %c0_21 = arith.constant 0 : index
      %22 = vector.load %arg5[%c0_20, %c0_21] : memref<1x64xf32, #tpu.memory_space<vmem>>, vector<1x64xf32>
      %23 = vector.broadcast %22 : vector<1x64xf32> to vector<64x64xf32>
      %24 = arith.addf %12, %23 : vector<64x64xf32>
      %c0_22 = arith.constant 0 : index
      %c0_23 = arith.constant 0 : index
      %25 = vector.load %arg6[%c0_22, %c0_23] : memref<64x64xf32, #tpu.memory_space<vmem>>, vector<64x64xf32>
      tpu.vector_store %arg6[%c0_22, %c0_23], %24 {strides = array<i32>} : memref<64x64xf32, #tpu.memory_space<vmem>>, vector<64x64xf32>,
    } else {
    }
    return
  }
  func.func @transform_0(%arg0: i32, %arg1: i32, %arg2: i32) -> (i32, i32) {
    %c0_i32 = arith.constant 0 : i32
    return %arg0, %arg2 : i32, i32
  }
  func.func @transform_1(%arg0: i32, %arg1: i32, %arg2: i32) -> (i32, i32) {
    %c0_i32 = arith.constant 0 : i32
    return %arg2, %arg1 : i32, i32
  }
  func.func @transform_2(%arg0: i32, %arg1: i32, %arg2: i32) -> (i32, i32) {
    %c0_i32 = arith.constant 0 : i32
    %c0_i32_0 = arith.constant 0 : i32
    return %c0_i32, %arg1 : i32, i32
  }
  func.func @transform_3(%arg0: i32, %arg1: i32, %arg2: i32) -> (i32, i32) {
    %c0_i32 = arith.constant 0 : i32
    return %arg0, %arg1 : i32, i32
  }
  func.func @transform_4(%arg0: i32, %arg1: i32, %arg2: i32) -> (i32, i32, i32) {
    %c0_i32 = arith.constant 0 : i32
    %c0_i32_0 = arith.constant 0 : i32
    return %arg0, %c0_i32, %arg1 : i32, i32, i32
  }
  func.func @transform_5(%arg0: i32, %arg1: i32, %arg2: i32) -> (i32, i32, i32) {
    %c0_i32 = arith.constant 0 : i32
    %c0_i32_0 = arith.constant 0 : i32
    return %arg0, %c0_i32, %arg1 : i32, i32, i32
  }
}

module attributes {stable_mosaic.version = 11 : i64} {
  func.func @_scale_shift_act_kernel(%arg0: i32, %arg1: memref<64x64xf32, #tpu.memory_space<vmem>>, %arg2: memref<1x64xf32, #tpu.memory_space<vmem>>, %arg3: memref<1x64xf32, #tpu.memory_space<vmem>>, %arg4: memref<64x64xbf16, #tpu.memory_space<vmem>>) attributes {dimension_semantics = [#tpu.dimension_semantics<parallel>], iteration_bounds = array<i64: 2>, scalar_prefetch = 0 : i64, scratch_operands = 0 : i64, tpu.core_type = #tpu.core_type<tc>, window_params = [{transform_indices = @transform_0, window_bounds = array<i64: 64, 64>}, {pipeline_mode = #tpu.pipeline_mode<synchronous>, transform_indices = @transform_1, window_bounds = array<i64: 1, 64>}, {pipeline_mode = #tpu.pipeline_mode<synchronous>, transform_indices = @transform_2, window_bounds = array<i64: 1, 64>}, {transform_indices = @transform_3, window_bounds = array<i64: 64, 64>}]} {
    %c0 = arith.constant 0 : index
    %c0_0 = arith.constant 0 : index
    %0 = vector.load %arg1[%c0, %c0_0] : memref<64x64xf32, #tpu.memory_space<vmem>>, vector<64x64xf32>
    %c0_1 = arith.constant 0 : index
    %c0_2 = arith.constant 0 : index
    %1 = vector.load %arg2[%c0_1, %c0_2] : memref<1x64xf32, #tpu.memory_space<vmem>>, vector<1x64xf32>
    %2 = vector.broadcast %1 : vector<1x64xf32> to vector<64x64xf32>
    %3 = arith.mulf %0, %2 : vector<64x64xf32>
    %c0_3 = arith.constant 0 : index
    %c0_4 = arith.constant 0 : index
    %4 = vector.load %arg3[%c0_3, %c0_4] : memref<1x64xf32, #tpu.memory_space<vmem>>, vector<1x64xf32>
    %5 = vector.broadcast %4 : vector<1x64xf32> to vector<64x64xf32>
    %6 = arith.addf %3, %5 : vector<64x64xf32>
    %cst = arith.constant 0.000000e+00 : f32
    %7 = vector.broadcast %cst : f32 to vector<64x64xf32>
    %8 = arith.cmpf oge, %6, %7 : vector<64x64xf32>
    %cst_5 = arith.constant 5.000000e-02 : f32
    %9 = vector.broadcast %cst_5 : f32 to vector<64x64xf32>
    %10 = arith.mulf %9, %6 : vector<64x64xf32>
    %11 = arith.select %8, %6, %10 : vector<64x64xi1>, vector<64x64xf32>
    %12 = arith.truncf %11 : vector<64x64xf32> to vector<64x64xbf16>
    %c0_6 = arith.constant 0 : index
    %c0_7 = arith.constant 0 : index
    %13 = vector.load %arg4[%c0_6, %c0_7] : memref<64x64xbf16, #tpu.memory_space<vmem>>, vector<64x64xbf16>
    tpu.vector_store %arg4[%c0_6, %c0_7], %12 {strides = array<i32>} : memref<64x64xbf16, #tpu.memory_space<vmem>>, vector<64x64xbf16>,
    return
  }
  func.func @transform_0(%arg0: i32) -> (i32, i32) {
    %c0_i32 = arith.constant 0 : i32
    %c0_i32_0 = arith.constant 0 : i32
    return %arg0, %c0_i32 : i32, i32
  }
  func.func @transform_1(%arg0: i32) -> (i32, i32) {
    %c0_i32 = arith.constant 0 : i32
    %c0_i32_0 = arith.constant 0 : i32
    %c0_i32_1 = arith.constant 0 : i32
    return %c0_i32, %c0_i32_0 : i32, i32
  }
  func.func @transform_2(%arg0: i32) -> (i32, i32) {
    %c0_i32 = arith.constant 0 : i32
    %c0_i32_0 = arith.constant 0 : i32
    %c0_i32_1 = arith.constant 0 : i32
    return %c0_i32, %c0_i32_0 : i32, i32
  }
  func.func @transform_3(%arg0: i32) -> (i32, i32) {
    %c0_i32 = arith.constant 0 : i32
    %c0_i32_0 = arith.constant 0 : i32
    return %arg0, %c0_i32 : i32, i32
  }
}

module attributes {stable_mosaic.version = 11 : i64} {
  func.func @_gemm_bias_stats_kernel(%arg0: i32, %arg1: i32, %arg2: i32, %arg3: memref<16x576xbf16, #tpu.memory_space<vmem>>, %arg4: memref<576x128xbf16, #tpu.memory_space<vmem>>, %arg5: memref<1x128xf32, #tpu.memory_space<vmem>>, %arg6: memref<16x128xf32, #tpu.memory_space<vmem>>, %arg7: memref<1x1x128xf32, #tpu.memory_space<vmem>>, %arg8: memref<1x1x128xf32, #tpu.memory_space<vmem>>, %arg9: memref<16x128xf32, #tpu.memory_space<vmem>>) attributes {dimension_semantics = [#tpu.dimension_semantics<parallel>, #tpu.dimension_semantics<parallel>, #tpu.dimension_semantics<arbitrary>], iteration_bounds = array<i64: 2, 1, 1>, scalar_prefetch = 0 : i64, scratch_operands = 1 : i64, tpu.core_type = #tpu.core_type<tc>, window_params = [{transform_indices = @transform_0, window_bounds = array<i64: 16, 576>}, {transform_indices = @transform_1, window_bounds = array<i64: 576, 128>}, {transform_indices = @transform_2, window_bounds = array<i64: 1, 128>}, {transform_indices = @transform_3, window_bounds = array<i64: 16, 128>}, {transform_indices = @transform_4, window_bounds = array<i64: 1, 1, 128>}, {transform_indices = @transform_5, window_bounds = array<i64: 1, 1, 128>}]} {
    %c0_i32 = arith.constant 0 : i32
    %0 = arith.cmpi eq, %arg2, %c0_i32 : i32
    %1 = arith.extui %0 : i1 to i32
    %c0_i32_0 = arith.constant 0 : i32
    %2 = arith.cmpi ne, %1, %c0_i32_0 : i32
    scf.if %2 {
      %cst_10 = arith.constant 0.000000e+00 : f32
      %12 = vector.broadcast %cst_10 : f32 to vector<16x128xf32>
      %c0_11 = arith.constant 0 : index
      %c0_12 = arith.constant 0 : index
      %13 = vector.load %arg9[%c0_11, %c0_12] : memref<16x128xf32, #tpu.memory_space<vmem>>, vector<16x128xf32>
      tpu.vector_store %arg9[%c0_11, %c0_12], %12 {strides = array<i32>} : memref<16x128xf32, #tpu.memory_space<vmem>>, vector<16x128xf32>,
    } else {
    }
    %c0 = arith.constant 0 : index
    %c0_1 = arith.constant 0 : index
    %3 = vector.load %arg9[%c0, %c0_1] : memref<16x128xf32, #tpu.memory_space<vmem>>, vector<16x128xf32>
    %c0_2 = arith.constant 0 : index
    %c0_3 = arith.constant 0 : index
    %4 = vector.load %arg3[%c0_2, %c0_3] : memref<16x576xbf16, #tpu.memory_space<vmem>>, vector<16x576xbf16>
    %c0_4 = arith.constant 0 : index
    %c0_5 = arith.constant 0 : index
    %5 = vector.load %arg4[%c0_4, %c0_5] : memref<576x128xbf16, #tpu.memory_space<vmem>>, vector<576x128xbf16>
    %cst = arith.constant dense<0.000000e+00> : vector<16x128xf32>
    %6 = tpu.matmul %4, %5, %cst {dimension_numbers = #tpu.dot_dimension_numbers<[1], [0], [0], [1], [0, 0, 1, 1], [], []>} : vector<16x576xbf16>, vector<576x128xbf16>, vector<16x128xf32> -> vector<16x128xf32>
    %7 = arith.addf %3, %6 : vector<16x128xf32>
    %c0_6 = arith.constant 0 : index
    %c0_7 = arith.constant 0 : index
    %8 = vector.load %arg9[%c0_6, %c0_7] : memref<16x128xf32, #tpu.memory_space<vmem>>, vector<16x128xf32>
    tpu.vector_store %arg9[%c0_6, %c0_7], %7 {strides = array<i32>} : memref<16x128xf32, #tpu.memory_space<vmem>>, vector<16x128xf32>,
    %c0_i32_8 = arith.constant 0 : i32
    %9 = arith.cmpi eq, %arg2, %c0_i32_8 : i32
    %10 = arith.extui %9 : i1 to i32
    %c0_i32_9 = arith.constant 0 : i32
    %11 = arith.cmpi ne, %10, %c0_i32_9 : i32
    scf.if %11 {
      %c0_10 = arith.constant 0 : index
      %c0_11 = arith.constant 0 : index
      %12 = vector.load %arg9[%c0_10, %c0_11] : memref<16x128xf32, #tpu.memory_space<vmem>>, vector<16x128xf32>
      %cst_12 = arith.constant dense<0.000000e+00> : vector<128xf32>
      %13 = vector.multi_reduction <add>, %12, %cst_12 [0] : vector<16x128xf32> to vector<128xf32>
      %14 = vector.shape_cast %13 : vector<128xf32> to vector<1x128xf32>
      %15 = arith.mulf %12, %12 : vector<16x128xf32>
      %cst_13 = arith.constant dense<0.000000e+00> : vector<128xf32>
      %16 = vector.multi_reduction <add>, %15, %cst_13 [0] : vector<16x128xf32> to vector<128xf32>
      %17 = vector.shape_cast %16 : vector<128xf32> to vector<1x128xf32>
      %18 = vector.shape_cast %14 : vector<1x128xf32> to vector<1x1x128xf32>
      %c0_14 = arith.constant 0 : index
      %c0_15 = arith.constant 0 : index
      %c0_16 = arith.constant 0 : index
      %19 = vector.load %arg7[%c0_14, %c0_15, %c0_16] : memref<1x1x128xf32, #tpu.memory_space<vmem>>, vector<1x1x128xf32>
      tpu.vector_store %arg7[%c0_14, %c0_15, %c0_16], %18 {strides = array<i32>} : memref<1x1x128xf32, #tpu.memory_space<vmem>>, vector<1x1x128xf32>,
      %20 = vector.shape_cast %17 : vector<1x128xf32> to vector<1x1x128xf32>
      %c0_17 = arith.constant 0 : index
      %c0_18 = arith.constant 0 : index
      %c0_19 = arith.constant 0 : index
      %21 = vector.load %arg8[%c0_17, %c0_18, %c0_19] : memref<1x1x128xf32, #tpu.memory_space<vmem>>, vector<1x1x128xf32>
      tpu.vector_store %arg8[%c0_17, %c0_18, %c0_19], %20 {strides = array<i32>} : memref<1x1x128xf32, #tpu.memory_space<vmem>>, vector<1x1x128xf32>,
      %c0_20 = arith.constant 0 : index
      %c0_21 = arith.constant 0 : index
      %22 = vector.load %arg5[%c0_20, %c0_21] : memref<1x128xf32, #tpu.memory_space<vmem>>, vector<1x128xf32>
      %23 = vector.broadcast %22 : vector<1x128xf32> to vector<16x128xf32>
      %24 = arith.addf %12, %23 : vector<16x128xf32>
      %c0_22 = arith.constant 0 : index
      %c0_23 = arith.constant 0 : index
      %25 = vector.load %arg6[%c0_22, %c0_23] : memref<16x128xf32, #tpu.memory_space<vmem>>, vector<16x128xf32>
      tpu.vector_store %arg6[%c0_22, %c0_23], %24 {strides = array<i32>} : memref<16x128xf32, #tpu.memory_space<vmem>>, vector<16x128xf32>,
    } else {
    }
    return
  }
  func.func @transform_0(%arg0: i32, %arg1: i32, %arg2: i32) -> (i32, i32) {
    %c0_i32 = arith.constant 0 : i32
    return %arg0, %arg2 : i32, i32
  }
  func.func @transform_1(%arg0: i32, %arg1: i32, %arg2: i32) -> (i32, i32) {
    %c0_i32 = arith.constant 0 : i32
    return %arg2, %arg1 : i32, i32
  }
  func.func @transform_2(%arg0: i32, %arg1: i32, %arg2: i32) -> (i32, i32) {
    %c0_i32 = arith.constant 0 : i32
    %c0_i32_0 = arith.constant 0 : i32
    return %c0_i32, %arg1 : i32, i32
  }
  func.func @transform_3(%arg0: i32, %arg1: i32, %arg2: i32) -> (i32, i32) {
    %c0_i32 = arith.constant 0 : i32
    return %arg0, %arg1 : i32, i32
  }
  func.func @transform_4(%arg0: i32, %arg1: i32, %arg2: i32) -> (i32, i32, i32) {
    %c0_i32 = arith.constant 0 : i32
    %c0_i32_0 = arith.constant 0 : i32
    return %arg0, %c0_i32, %arg1 : i32, i32, i32
  }
  func.func @transform_5(%arg0: i32, %arg1: i32, %arg2: i32) -> (i32, i32, i32) {
    %c0_i32 = arith.constant 0 : i32
    %c0_i32_0 = arith.constant 0 : i32
    return %arg0, %c0_i32, %arg1 : i32, i32, i32
  }
}

module attributes {stable_mosaic.version = 11 : i64} {
  func.func @_scale_shift_act_kernel(%arg0: i32, %arg1: memref<16x128xf32, #tpu.memory_space<vmem>>, %arg2: memref<1x128xf32, #tpu.memory_space<vmem>>, %arg3: memref<1x128xf32, #tpu.memory_space<vmem>>, %arg4: memref<16x128xbf16, #tpu.memory_space<vmem>>) attributes {dimension_semantics = [#tpu.dimension_semantics<parallel>], iteration_bounds = array<i64: 2>, scalar_prefetch = 0 : i64, scratch_operands = 0 : i64, tpu.core_type = #tpu.core_type<tc>, window_params = [{transform_indices = @transform_0, window_bounds = array<i64: 16, 128>}, {pipeline_mode = #tpu.pipeline_mode<synchronous>, transform_indices = @transform_1, window_bounds = array<i64: 1, 128>}, {pipeline_mode = #tpu.pipeline_mode<synchronous>, transform_indices = @transform_2, window_bounds = array<i64: 1, 128>}, {transform_indices = @transform_3, window_bounds = array<i64: 16, 128>}]} {
    %c0 = arith.constant 0 : index
    %c0_0 = arith.constant 0 : index
    %0 = vector.load %arg1[%c0, %c0_0] : memref<16x128xf32, #tpu.memory_space<vmem>>, vector<16x128xf32>
    %c0_1 = arith.constant 0 : index
    %c0_2 = arith.constant 0 : index
    %1 = vector.load %arg2[%c0_1, %c0_2] : memref<1x128xf32, #tpu.memory_space<vmem>>, vector<1x128xf32>
    %2 = vector.broadcast %1 : vector<1x128xf32> to vector<16x128xf32>
    %3 = arith.mulf %0, %2 : vector<16x128xf32>
    %c0_3 = arith.constant 0 : index
    %c0_4 = arith.constant 0 : index
    %4 = vector.load %arg3[%c0_3, %c0_4] : memref<1x128xf32, #tpu.memory_space<vmem>>, vector<1x128xf32>
    %5 = vector.broadcast %4 : vector<1x128xf32> to vector<16x128xf32>
    %6 = arith.addf %3, %5 : vector<16x128xf32>
    %cst = arith.constant 0.000000e+00 : f32
    %7 = vector.broadcast %cst : f32 to vector<16x128xf32>
    %8 = arith.cmpf oge, %6, %7 : vector<16x128xf32>
    %cst_5 = arith.constant 5.000000e-02 : f32
    %9 = vector.broadcast %cst_5 : f32 to vector<16x128xf32>
    %10 = arith.mulf %9, %6 : vector<16x128xf32>
    %11 = arith.select %8, %6, %10 : vector<16x128xi1>, vector<16x128xf32>
    %12 = arith.truncf %11 : vector<16x128xf32> to vector<16x128xbf16>
    %c0_6 = arith.constant 0 : index
    %c0_7 = arith.constant 0 : index
    %13 = vector.load %arg4[%c0_6, %c0_7] : memref<16x128xbf16, #tpu.memory_space<vmem>>, vector<16x128xbf16>
    tpu.vector_store %arg4[%c0_6, %c0_7], %12 {strides = array<i32>} : memref<16x128xbf16, #tpu.memory_space<vmem>>, vector<16x128xbf16>,
    return
  }
  func.func @transform_0(%arg0: i32) -> (i32, i32) {
    %c0_i32 = arith.constant 0 : i32
    %c0_i32_0 = arith.constant 0 : i32
    return %arg0, %c0_i32 : i32, i32
  }
  func.func @transform_1(%arg0: i32) -> (i32, i32) {
    %c0_i32 = arith.constant 0 : i32
    %c0_i32_0 = arith.constant 0 : i32
    %c0_i32_1 = arith.constant 0 : i32
    return %c0_i32, %c0_i32_0 : i32, i32
  }
  func.func @transform_2(%arg0: i32) -> (i32, i32) {
    %c0_i32 = arith.constant 0 : i32
    %c0_i32_0 = arith.constant 0 : i32
    %c0_i32_1 = arith.constant 0 : i32
    return %c0_i32, %c0_i32_0 : i32, i32
  }
  func.func @transform_3(%arg0: i32) -> (i32, i32) {
    %c0_i32 = arith.constant 0 : i32
    %c0_i32_0 = arith.constant 0 : i32
    return %arg0, %c0_i32 : i32, i32
  }
}

module attributes {stable_mosaic.version = 11 : i64} {
  func.func @_gemm_bias_stats_kernel(%arg0: i32, %arg1: i32, %arg2: i32, %arg3: memref<16x1152xbf16, #tpu.memory_space<vmem>>, %arg4: memref<1152x128xbf16, #tpu.memory_space<vmem>>, %arg5: memref<1x128xf32, #tpu.memory_space<vmem>>, %arg6: memref<16x128xf32, #tpu.memory_space<vmem>>, %arg7: memref<1x1x128xf32, #tpu.memory_space<vmem>>, %arg8: memref<1x1x128xf32, #tpu.memory_space<vmem>>, %arg9: memref<16x128xf32, #tpu.memory_space<vmem>>) attributes {dimension_semantics = [#tpu.dimension_semantics<parallel>, #tpu.dimension_semantics<parallel>, #tpu.dimension_semantics<arbitrary>], iteration_bounds = array<i64: 2, 1, 1>, scalar_prefetch = 0 : i64, scratch_operands = 1 : i64, tpu.core_type = #tpu.core_type<tc>, window_params = [{transform_indices = @transform_0, window_bounds = array<i64: 16, 1152>}, {transform_indices = @transform_1, window_bounds = array<i64: 1152, 128>}, {transform_indices = @transform_2, window_bounds = array<i64: 1, 128>}, {transform_indices = @transform_3, window_bounds = array<i64: 16, 128>}, {transform_indices = @transform_4, window_bounds = array<i64: 1, 1, 128>}, {transform_indices = @transform_5, window_bounds = array<i64: 1, 1, 128>}]} {
    %c0_i32 = arith.constant 0 : i32
    %0 = arith.cmpi eq, %arg2, %c0_i32 : i32
    %1 = arith.extui %0 : i1 to i32
    %c0_i32_0 = arith.constant 0 : i32
    %2 = arith.cmpi ne, %1, %c0_i32_0 : i32
    scf.if %2 {
      %cst_10 = arith.constant 0.000000e+00 : f32
      %12 = vector.broadcast %cst_10 : f32 to vector<16x128xf32>
      %c0_11 = arith.constant 0 : index
      %c0_12 = arith.constant 0 : index
      %13 = vector.load %arg9[%c0_11, %c0_12] : memref<16x128xf32, #tpu.memory_space<vmem>>, vector<16x128xf32>
      tpu.vector_store %arg9[%c0_11, %c0_12], %12 {strides = array<i32>} : memref<16x128xf32, #tpu.memory_space<vmem>>, vector<16x128xf32>,
    } else {
    }
    %c0 = arith.constant 0 : index
    %c0_1 = arith.constant 0 : index
    %3 = vector.load %arg9[%c0, %c0_1] : memref<16x128xf32, #tpu.memory_space<vmem>>, vector<16x128xf32>
    %c0_2 = arith.constant 0 : index
    %c0_3 = arith.constant 0 : index
    %4 = vector.load %arg3[%c0_2, %c0_3] : memref<16x1152xbf16, #tpu.memory_space<vmem>>, vector<16x1152xbf16>
    %c0_4 = arith.constant 0 : index
    %c0_5 = arith.constant 0 : index
    %5 = vector.load %arg4[%c0_4, %c0_5] : memref<1152x128xbf16, #tpu.memory_space<vmem>>, vector<1152x128xbf16>
    %cst = arith.constant dense<0.000000e+00> : vector<16x128xf32>
    %6 = tpu.matmul %4, %5, %cst {dimension_numbers = #tpu.dot_dimension_numbers<[1], [0], [0], [1], [0, 0, 1, 1], [], []>} : vector<16x1152xbf16>, vector<1152x128xbf16>, vector<16x128xf32> -> vector<16x128xf32>
    %7 = arith.addf %3, %6 : vector<16x128xf32>
    %c0_6 = arith.constant 0 : index
    %c0_7 = arith.constant 0 : index
    %8 = vector.load %arg9[%c0_6, %c0_7] : memref<16x128xf32, #tpu.memory_space<vmem>>, vector<16x128xf32>
    tpu.vector_store %arg9[%c0_6, %c0_7], %7 {strides = array<i32>} : memref<16x128xf32, #tpu.memory_space<vmem>>, vector<16x128xf32>,
    %c0_i32_8 = arith.constant 0 : i32
    %9 = arith.cmpi eq, %arg2, %c0_i32_8 : i32
    %10 = arith.extui %9 : i1 to i32
    %c0_i32_9 = arith.constant 0 : i32
    %11 = arith.cmpi ne, %10, %c0_i32_9 : i32
    scf.if %11 {
      %c0_10 = arith.constant 0 : index
      %c0_11 = arith.constant 0 : index
      %12 = vector.load %arg9[%c0_10, %c0_11] : memref<16x128xf32, #tpu.memory_space<vmem>>, vector<16x128xf32>
      %cst_12 = arith.constant dense<0.000000e+00> : vector<128xf32>
      %13 = vector.multi_reduction <add>, %12, %cst_12 [0] : vector<16x128xf32> to vector<128xf32>
      %14 = vector.shape_cast %13 : vector<128xf32> to vector<1x128xf32>
      %15 = arith.mulf %12, %12 : vector<16x128xf32>
      %cst_13 = arith.constant dense<0.000000e+00> : vector<128xf32>
      %16 = vector.multi_reduction <add>, %15, %cst_13 [0] : vector<16x128xf32> to vector<128xf32>
      %17 = vector.shape_cast %16 : vector<128xf32> to vector<1x128xf32>
      %18 = vector.shape_cast %14 : vector<1x128xf32> to vector<1x1x128xf32>
      %c0_14 = arith.constant 0 : index
      %c0_15 = arith.constant 0 : index
      %c0_16 = arith.constant 0 : index
      %19 = vector.load %arg7[%c0_14, %c0_15, %c0_16] : memref<1x1x128xf32, #tpu.memory_space<vmem>>, vector<1x1x128xf32>
      tpu.vector_store %arg7[%c0_14, %c0_15, %c0_16], %18 {strides = array<i32>} : memref<1x1x128xf32, #tpu.memory_space<vmem>>, vector<1x1x128xf32>,
      %20 = vector.shape_cast %17 : vector<1x128xf32> to vector<1x1x128xf32>
      %c0_17 = arith.constant 0 : index
      %c0_18 = arith.constant 0 : index
      %c0_19 = arith.constant 0 : index
      %21 = vector.load %arg8[%c0_17, %c0_18, %c0_19] : memref<1x1x128xf32, #tpu.memory_space<vmem>>, vector<1x1x128xf32>
      tpu.vector_store %arg8[%c0_17, %c0_18, %c0_19], %20 {strides = array<i32>} : memref<1x1x128xf32, #tpu.memory_space<vmem>>, vector<1x1x128xf32>,
      %c0_20 = arith.constant 0 : index
      %c0_21 = arith.constant 0 : index
      %22 = vector.load %arg5[%c0_20, %c0_21] : memref<1x128xf32, #tpu.memory_space<vmem>>, vector<1x128xf32>
      %23 = vector.broadcast %22 : vector<1x128xf32> to vector<16x128xf32>
      %24 = arith.addf %12, %23 : vector<16x128xf32>
      %c0_22 = arith.constant 0 : index
      %c0_23 = arith.constant 0 : index
      %25 = vector.load %arg6[%c0_22, %c0_23] : memref<16x128xf32, #tpu.memory_space<vmem>>, vector<16x128xf32>
      tpu.vector_store %arg6[%c0_22, %c0_23], %24 {strides = array<i32>} : memref<16x128xf32, #tpu.memory_space<vmem>>, vector<16x128xf32>,
    } else {
    }
    return
  }
  func.func @transform_0(%arg0: i32, %arg1: i32, %arg2: i32) -> (i32, i32) {
    %c0_i32 = arith.constant 0 : i32
    return %arg0, %arg2 : i32, i32
  }
  func.func @transform_1(%arg0: i32, %arg1: i32, %arg2: i32) -> (i32, i32) {
    %c0_i32 = arith.constant 0 : i32
    return %arg2, %arg1 : i32, i32
  }
  func.func @transform_2(%arg0: i32, %arg1: i32, %arg2: i32) -> (i32, i32) {
    %c0_i32 = arith.constant 0 : i32
    %c0_i32_0 = arith.constant 0 : i32
    return %c0_i32, %arg1 : i32, i32
  }
  func.func @transform_3(%arg0: i32, %arg1: i32, %arg2: i32) -> (i32, i32) {
    %c0_i32 = arith.constant 0 : i32
    return %arg0, %arg1 : i32, i32
  }
  func.func @transform_4(%arg0: i32, %arg1: i32, %arg2: i32) -> (i32, i32, i32) {
    %c0_i32 = arith.constant 0 : i32
    %c0_i32_0 = arith.constant 0 : i32
    return %arg0, %c0_i32, %arg1 : i32, i32, i32
  }
  func.func @transform_5(%arg0: i32, %arg1: i32, %arg2: i32) -> (i32, i32, i32) {
    %c0_i32 = arith.constant 0 : i32
    %c0_i32_0 = arith.constant 0 : i32
    return %arg0, %c0_i32, %arg1 : i32, i32, i32
  }
}

module attributes {stable_mosaic.version = 11 : i64} {
  func.func @_scale_shift_act_kernel(%arg0: i32, %arg1: memref<16x256xf32, #tpu.memory_space<vmem>>, %arg2: memref<1x256xf32, #tpu.memory_space<vmem>>, %arg3: memref<1x256xf32, #tpu.memory_space<vmem>>, %arg4: memref<16x256xbf16, #tpu.memory_space<vmem>>) attributes {dimension_semantics = [#tpu.dimension_semantics<parallel>], iteration_bounds = array<i64: 2>, scalar_prefetch = 0 : i64, scratch_operands = 0 : i64, tpu.core_type = #tpu.core_type<tc>, window_params = [{transform_indices = @transform_0, window_bounds = array<i64: 16, 256>}, {pipeline_mode = #tpu.pipeline_mode<synchronous>, transform_indices = @transform_1, window_bounds = array<i64: 1, 256>}, {pipeline_mode = #tpu.pipeline_mode<synchronous>, transform_indices = @transform_2, window_bounds = array<i64: 1, 256>}, {transform_indices = @transform_3, window_bounds = array<i64: 16, 256>}]} {
    %c0 = arith.constant 0 : index
    %c0_0 = arith.constant 0 : index
    %0 = vector.load %arg1[%c0, %c0_0] : memref<16x256xf32, #tpu.memory_space<vmem>>, vector<16x256xf32>
    %c0_1 = arith.constant 0 : index
    %c0_2 = arith.constant 0 : index
    %1 = vector.load %arg2[%c0_1, %c0_2] : memref<1x256xf32, #tpu.memory_space<vmem>>, vector<1x256xf32>
    %2 = vector.broadcast %1 : vector<1x256xf32> to vector<16x256xf32>
    %3 = arith.mulf %0, %2 : vector<16x256xf32>
    %c0_3 = arith.constant 0 : index
    %c0_4 = arith.constant 0 : index
    %4 = vector.load %arg3[%c0_3, %c0_4] : memref<1x256xf32, #tpu.memory_space<vmem>>, vector<1x256xf32>
    %5 = vector.broadcast %4 : vector<1x256xf32> to vector<16x256xf32>
    %6 = arith.addf %3, %5 : vector<16x256xf32>
    %cst = arith.constant 0.000000e+00 : f32
    %7 = vector.broadcast %cst : f32 to vector<16x256xf32>
    %8 = arith.cmpf oge, %6, %7 : vector<16x256xf32>
    %cst_5 = arith.constant 5.000000e-02 : f32
    %9 = vector.broadcast %cst_5 : f32 to vector<16x256xf32>
    %10 = arith.mulf %9, %6 : vector<16x256xf32>
    %11 = arith.select %8, %6, %10 : vector<16x256xi1>, vector<16x256xf32>
    %12 = arith.truncf %11 : vector<16x256xf32> to vector<16x256xbf16>
    %c0_6 = arith.constant 0 : index
    %c0_7 = arith.constant 0 : index
    %13 = vector.load %arg4[%c0_6, %c0_7] : memref<16x256xbf16, #tpu.memory_space<vmem>>, vector<16x256xbf16>
    tpu.vector_store %arg4[%c0_6, %c0_7], %12 {strides = array<i32>} : memref<16x256xbf16, #tpu.memory_space<vmem>>, vector<16x256xbf16>,
    return
  }
  func.func @transform_0(%arg0: i32) -> (i32, i32) {
    %c0_i32 = arith.constant 0 : i32
    %c0_i32_0 = arith.constant 0 : i32
    return %arg0, %c0_i32 : i32, i32
  }
  func.func @transform_1(%arg0: i32) -> (i32, i32) {
    %c0_i32 = arith.constant 0 : i32
    %c0_i32_0 = arith.constant 0 : i32
    %c0_i32_1 = arith.constant 0 : i32
    return %c0_i32, %c0_i32_0 : i32, i32
  }
  func.func @transform_2(%arg0: i32) -> (i32, i32) {
    %c0_i32 = arith.constant 0 : i32
    %c0_i32_0 = arith.constant 0 : i32
    %c0_i32_1 = arith.constant 0 : i32
    return %c0_i32, %c0_i32_0 : i32, i32
  }
  func.func @transform_3(%arg0: i32) -> (i32, i32) {
    %c0_i32 = arith.constant 0 : i32
    %c0_i32_0 = arith.constant 0 : i32
    return %arg0, %c0_i32 : i32, i32
  }
}

module attributes {stable_mosaic.version = 11 : i64} {
  func.func @_gemm_bias_stats_kernel(%arg0: i32, %arg1: i32, %arg2: i32, %arg3: memref<16x1152xbf16, #tpu.memory_space<vmem>>, %arg4: memref<1152x256xbf16, #tpu.memory_space<vmem>>, %arg5: memref<1x256xf32, #tpu.memory_space<vmem>>, %arg6: memref<16x256xf32, #tpu.memory_space<vmem>>, %arg7: memref<1x1x256xf32, #tpu.memory_space<vmem>>, %arg8: memref<1x1x256xf32, #tpu.memory_space<vmem>>, %arg9: memref<16x256xf32, #tpu.memory_space<vmem>>) attributes {dimension_semantics = [#tpu.dimension_semantics<parallel>, #tpu.dimension_semantics<parallel>, #tpu.dimension_semantics<arbitrary>], iteration_bounds = array<i64: 2, 1, 1>, scalar_prefetch = 0 : i64, scratch_operands = 1 : i64, tpu.core_type = #tpu.core_type<tc>, window_params = [{transform_indices = @transform_0, window_bounds = array<i64: 16, 1152>}, {transform_indices = @transform_1, window_bounds = array<i64: 1152, 256>}, {transform_indices = @transform_2, window_bounds = array<i64: 1, 256>}, {transform_indices = @transform_3, window_bounds = array<i64: 16, 256>}, {transform_indices = @transform_4, window_bounds = array<i64: 1, 1, 256>}, {transform_indices = @transform_5, window_bounds = array<i64: 1, 1, 256>}]} {
    %c0_i32 = arith.constant 0 : i32
    %0 = arith.cmpi eq, %arg2, %c0_i32 : i32
    %1 = arith.extui %0 : i1 to i32
    %c0_i32_0 = arith.constant 0 : i32
    %2 = arith.cmpi ne, %1, %c0_i32_0 : i32
    scf.if %2 {
      %cst_10 = arith.constant 0.000000e+00 : f32
      %12 = vector.broadcast %cst_10 : f32 to vector<16x256xf32>
      %c0_11 = arith.constant 0 : index
      %c0_12 = arith.constant 0 : index
      %13 = vector.load %arg9[%c0_11, %c0_12] : memref<16x256xf32, #tpu.memory_space<vmem>>, vector<16x256xf32>
      tpu.vector_store %arg9[%c0_11, %c0_12], %12 {strides = array<i32>} : memref<16x256xf32, #tpu.memory_space<vmem>>, vector<16x256xf32>,
    } else {
    }
    %c0 = arith.constant 0 : index
    %c0_1 = arith.constant 0 : index
    %3 = vector.load %arg9[%c0, %c0_1] : memref<16x256xf32, #tpu.memory_space<vmem>>, vector<16x256xf32>
    %c0_2 = arith.constant 0 : index
    %c0_3 = arith.constant 0 : index
    %4 = vector.load %arg3[%c0_2, %c0_3] : memref<16x1152xbf16, #tpu.memory_space<vmem>>, vector<16x1152xbf16>
    %c0_4 = arith.constant 0 : index
    %c0_5 = arith.constant 0 : index
    %5 = vector.load %arg4[%c0_4, %c0_5] : memref<1152x256xbf16, #tpu.memory_space<vmem>>, vector<1152x256xbf16>
    %cst = arith.constant dense<0.000000e+00> : vector<16x256xf32>
    %6 = tpu.matmul %4, %5, %cst {dimension_numbers = #tpu.dot_dimension_numbers<[1], [0], [0], [1], [0, 0, 1, 1], [], []>} : vector<16x1152xbf16>, vector<1152x256xbf16>, vector<16x256xf32> -> vector<16x256xf32>
    %7 = arith.addf %3, %6 : vector<16x256xf32>
    %c0_6 = arith.constant 0 : index
    %c0_7 = arith.constant 0 : index
    %8 = vector.load %arg9[%c0_6, %c0_7] : memref<16x256xf32, #tpu.memory_space<vmem>>, vector<16x256xf32>
    tpu.vector_store %arg9[%c0_6, %c0_7], %7 {strides = array<i32>} : memref<16x256xf32, #tpu.memory_space<vmem>>, vector<16x256xf32>,
    %c0_i32_8 = arith.constant 0 : i32
    %9 = arith.cmpi eq, %arg2, %c0_i32_8 : i32
    %10 = arith.extui %9 : i1 to i32
    %c0_i32_9 = arith.constant 0 : i32
    %11 = arith.cmpi ne, %10, %c0_i32_9 : i32
    scf.if %11 {
      %c0_10 = arith.constant 0 : index
      %c0_11 = arith.constant 0 : index
      %12 = vector.load %arg9[%c0_10, %c0_11] : memref<16x256xf32, #tpu.memory_space<vmem>>, vector<16x256xf32>
      %cst_12 = arith.constant dense<0.000000e+00> : vector<256xf32>
      %13 = vector.multi_reduction <add>, %12, %cst_12 [0] : vector<16x256xf32> to vector<256xf32>
      %14 = vector.shape_cast %13 : vector<256xf32> to vector<1x256xf32>
      %15 = arith.mulf %12, %12 : vector<16x256xf32>
      %cst_13 = arith.constant dense<0.000000e+00> : vector<256xf32>
      %16 = vector.multi_reduction <add>, %15, %cst_13 [0] : vector<16x256xf32> to vector<256xf32>
      %17 = vector.shape_cast %16 : vector<256xf32> to vector<1x256xf32>
      %18 = vector.shape_cast %14 : vector<1x256xf32> to vector<1x1x256xf32>
      %c0_14 = arith.constant 0 : index
      %c0_15 = arith.constant 0 : index
      %c0_16 = arith.constant 0 : index
      %19 = vector.load %arg7[%c0_14, %c0_15, %c0_16] : memref<1x1x256xf32, #tpu.memory_space<vmem>>, vector<1x1x256xf32>
      tpu.vector_store %arg7[%c0_14, %c0_15, %c0_16], %18 {strides = array<i32>} : memref<1x1x256xf32, #tpu.memory_space<vmem>>, vector<1x1x256xf32>,
      %20 = vector.shape_cast %17 : vector<1x256xf32> to vector<1x1x256xf32>
      %c0_17 = arith.constant 0 : index
      %c0_18 = arith.constant 0 : index
      %c0_19 = arith.constant 0 : index
      %21 = vector.load %arg8[%c0_17, %c0_18, %c0_19] : memref<1x1x256xf32, #tpu.memory_space<vmem>>, vector<1x1x256xf32>
      tpu.vector_store %arg8[%c0_17, %c0_18, %c0_19], %20 {strides = array<i32>} : memref<1x1x256xf32, #tpu.memory_space<vmem>>, vector<1x1x256xf32>,
      %c0_20 = arith.constant 0 : index
      %c0_21 = arith.constant 0 : index
      %22 = vector.load %arg5[%c0_20, %c0_21] : memref<1x256xf32, #tpu.memory_space<vmem>>, vector<1x256xf32>
      %23 = vector.broadcast %22 : vector<1x256xf32> to vector<16x256xf32>
      %24 = arith.addf %12, %23 : vector<16x256xf32>
      %c0_22 = arith.constant 0 : index
      %c0_23 = arith.constant 0 : index
      %25 = vector.load %arg6[%c0_22, %c0_23] : memref<16x256xf32, #tpu.memory_space<vmem>>, vector<16x256xf32>
      tpu.vector_store %arg6[%c0_22, %c0_23], %24 {strides = array<i32>} : memref<16x256xf32, #tpu.memory_space<vmem>>, vector<16x256xf32>,
    } else {
    }
    return
  }
  func.func @transform_0(%arg0: i32, %arg1: i32, %arg2: i32) -> (i32, i32) {
    %c0_i32 = arith.constant 0 : i32
    return %arg0, %arg2 : i32, i32
  }
  func.func @transform_1(%arg0: i32, %arg1: i32, %arg2: i32) -> (i32, i32) {
    %c0_i32 = arith.constant 0 : i32
    return %arg2, %arg1 : i32, i32
  }
  func.func @transform_2(%arg0: i32, %arg1: i32, %arg2: i32) -> (i32, i32) {
    %c0_i32 = arith.constant 0 : i32
    %c0_i32_0 = arith.constant 0 : i32
    return %c0_i32, %arg1 : i32, i32
  }
  func.func @transform_3(%arg0: i32, %arg1: i32, %arg2: i32) -> (i32, i32) {
    %c0_i32 = arith.constant 0 : i32
    return %arg0, %arg1 : i32, i32
  }
  func.func @transform_4(%arg0: i32, %arg1: i32, %arg2: i32) -> (i32, i32, i32) {
    %c0_i32 = arith.constant 0 : i32
    %c0_i32_0 = arith.constant 0 : i32
    return %arg0, %c0_i32, %arg1 : i32, i32, i32
  }
  func.func @transform_5(%arg0: i32, %arg1: i32, %arg2: i32) -> (i32, i32, i32) {
    %c0_i32 = arith.constant 0 : i32
    %c0_i32_0 = arith.constant 0 : i32
    return %arg0, %c0_i32, %arg1 : i32, i32, i32
  }
}

module attributes {stable_mosaic.version = 11 : i64} {
  func.func @_gemm_bias_stats_kernel(%arg0: i32, %arg1: i32, %arg2: i32, %arg3: memref<64x576xbf16, #tpu.memory_space<vmem>>, %arg4: memref<576x4xbf16, #tpu.memory_space<vmem>>, %arg5: memref<1x4xf32, #tpu.memory_space<vmem>>, %arg6: memref<64x4xf32, #tpu.memory_space<vmem>>, %arg7: memref<1x1x4xf32, #tpu.memory_space<vmem>>, %arg8: memref<1x1x4xf32, #tpu.memory_space<vmem>>, %arg9: memref<64x4xf32, #tpu.memory_space<vmem>>) attributes {dimension_semantics = [#tpu.dimension_semantics<parallel>, #tpu.dimension_semantics<parallel>, #tpu.dimension_semantics<arbitrary>], iteration_bounds = array<i64: 2, 1, 1>, scalar_prefetch = 0 : i64, scratch_operands = 1 : i64, tpu.core_type = #tpu.core_type<tc>, window_params = [{transform_indices = @transform_0, window_bounds = array<i64: 64, 576>}, {transform_indices = @transform_1, window_bounds = array<i64: 576, 4>}, {transform_indices = @transform_2, window_bounds = array<i64: 1, 4>}, {transform_indices = @transform_3, window_bounds = array<i64: 64, 4>}, {transform_indices = @transform_4, window_bounds = array<i64: 1, 1, 4>}, {transform_indices = @transform_5, window_bounds = array<i64: 1, 1, 4>}]} {
    %c0_i32 = arith.constant 0 : i32
    %0 = arith.cmpi eq, %arg2, %c0_i32 : i32
    %1 = arith.extui %0 : i1 to i32
    %c0_i32_0 = arith.constant 0 : i32
    %2 = arith.cmpi ne, %1, %c0_i32_0 : i32
    scf.if %2 {
      %cst_10 = arith.constant 0.000000e+00 : f32
      %12 = vector.broadcast %cst_10 : f32 to vector<64x4xf32>
      %c0_11 = arith.constant 0 : index
      %c0_12 = arith.constant 0 : index
      %13 = vector.load %arg9[%c0_11, %c0_12] : memref<64x4xf32, #tpu.memory_space<vmem>>, vector<64x4xf32>
      tpu.vector_store %arg9[%c0_11, %c0_12], %12 {strides = array<i32>} : memref<64x4xf32, #tpu.memory_space<vmem>>, vector<64x4xf32>,
    } else {
    }
    %c0 = arith.constant 0 : index
    %c0_1 = arith.constant 0 : index
    %3 = vector.load %arg9[%c0, %c0_1] : memref<64x4xf32, #tpu.memory_space<vmem>>, vector<64x4xf32>
    %c0_2 = arith.constant 0 : index
    %c0_3 = arith.constant 0 : index
    %4 = vector.load %arg3[%c0_2, %c0_3] : memref<64x576xbf16, #tpu.memory_space<vmem>>, vector<64x576xbf16>
    %c0_4 = arith.constant 0 : index
    %c0_5 = arith.constant 0 : index
    %5 = vector.load %arg4[%c0_4, %c0_5] : memref<576x4xbf16, #tpu.memory_space<vmem>>, vector<576x4xbf16>
    %cst = arith.constant dense<0.000000e+00> : vector<64x4xf32>
    %6 = tpu.matmul %4, %5, %cst {dimension_numbers = #tpu.dot_dimension_numbers<[1], [0], [0], [1], [0, 0, 1, 1], [], []>} : vector<64x576xbf16>, vector<576x4xbf16>, vector<64x4xf32> -> vector<64x4xf32>
    %7 = arith.addf %3, %6 : vector<64x4xf32>
    %c0_6 = arith.constant 0 : index
    %c0_7 = arith.constant 0 : index
    %8 = vector.load %arg9[%c0_6, %c0_7] : memref<64x4xf32, #tpu.memory_space<vmem>>, vector<64x4xf32>
    tpu.vector_store %arg9[%c0_6, %c0_7], %7 {strides = array<i32>} : memref<64x4xf32, #tpu.memory_space<vmem>>, vector<64x4xf32>,
    %c0_i32_8 = arith.constant 0 : i32
    %9 = arith.cmpi eq, %arg2, %c0_i32_8 : i32
    %10 = arith.extui %9 : i1 to i32
    %c0_i32_9 = arith.constant 0 : i32
    %11 = arith.cmpi ne, %10, %c0_i32_9 : i32
    scf.if %11 {
      %c0_10 = arith.constant 0 : index
      %c0_11 = arith.constant 0 : index
      %12 = vector.load %arg9[%c0_10, %c0_11] : memref<64x4xf32, #tpu.memory_space<vmem>>, vector<64x4xf32>
      %cst_12 = arith.constant dense<0.000000e+00> : vector<4xf32>
      %13 = vector.multi_reduction <add>, %12, %cst_12 [0] : vector<64x4xf32> to vector<4xf32>
      %14 = vector.shape_cast %13 : vector<4xf32> to vector<1x4xf32>
      %15 = arith.mulf %12, %12 : vector<64x4xf32>
      %cst_13 = arith.constant dense<0.000000e+00> : vector<4xf32>
      %16 = vector.multi_reduction <add>, %15, %cst_13 [0] : vector<64x4xf32> to vector<4xf32>
      %17 = vector.shape_cast %16 : vector<4xf32> to vector<1x4xf32>
      %18 = vector.shape_cast %14 : vector<1x4xf32> to vector<1x1x4xf32>
      %c0_14 = arith.constant 0 : index
      %c0_15 = arith.constant 0 : index
      %c0_16 = arith.constant 0 : index
      %19 = vector.load %arg7[%c0_14, %c0_15, %c0_16] : memref<1x1x4xf32, #tpu.memory_space<vmem>>, vector<1x1x4xf32>
      tpu.vector_store %arg7[%c0_14, %c0_15, %c0_16], %18 {strides = array<i32>} : memref<1x1x4xf32, #tpu.memory_space<vmem>>, vector<1x1x4xf32>,
      %20 = vector.shape_cast %17 : vector<1x4xf32> to vector<1x1x4xf32>
      %c0_17 = arith.constant 0 : index
      %c0_18 = arith.constant 0 : index
      %c0_19 = arith.constant 0 : index
      %21 = vector.load %arg8[%c0_17, %c0_18, %c0_19] : memref<1x1x4xf32, #tpu.memory_space<vmem>>, vector<1x1x4xf32>
      tpu.vector_store %arg8[%c0_17, %c0_18, %c0_19], %20 {strides = array<i32>} : memref<1x1x4xf32, #tpu.memory_space<vmem>>, vector<1x1x4xf32>,
      %c0_20 = arith.constant 0 : index
      %c0_21 = arith.constant 0 : index
      %22 = vector.load %arg5[%c0_20, %c0_21] : memref<1x4xf32, #tpu.memory_space<vmem>>, vector<1x4xf32>
      %23 = vector.broadcast %22 : vector<1x4xf32> to vector<64x4xf32>
      %24 = arith.addf %12, %23 : vector<64x4xf32>
      %25 = math.tanh %24 : vector<64x4xf32>
      %c0_22 = arith.constant 0 : index
      %c0_23 = arith.constant 0 : index
      %26 = vector.load %arg6[%c0_22, %c0_23] : memref<64x4xf32, #tpu.memory_space<vmem>>, vector<64x4xf32>
      tpu.vector_store %arg6[%c0_22, %c0_23], %25 {strides = array<i32>} : memref<64x4xf32, #tpu.memory_space<vmem>>, vector<64x4xf32>,
    } else {
    }
    return
  }
  func.func @transform_0(%arg0: i32, %arg1: i32, %arg2: i32) -> (i32, i32) {
    %c0_i32 = arith.constant 0 : i32
    return %arg0, %arg2 : i32, i32
  }
  func.func @transform_1(%arg0: i32, %arg1: i32, %arg2: i32) -> (i32, i32) {
    %c0_i32 = arith.constant 0 : i32
    return %arg2, %arg1 : i32, i32
  }
  func.func @transform_2(%arg0: i32, %arg1: i32, %arg2: i32) -> (i32, i32) {
    %c0_i32 = arith.constant 0 : i32
    %c0_i32_0 = arith.constant 0 : i32
    return %c0_i32, %arg1 : i32, i32
  }
  func.func @transform_3(%arg0: i32, %arg1: i32, %arg2: i32) -> (i32, i32) {
    %c0_i32 = arith.constant 0 : i32
    return %arg0, %arg1 : i32, i32
  }
  func.func @transform_4(%arg0: i32, %arg1: i32, %arg2: i32) -> (i32, i32, i32) {
    %c0_i32 = arith.constant 0 : i32
    %c0_i32_0 = arith.constant 0 : i32
    return %arg0, %c0_i32, %arg1 : i32, i32, i32
  }
  func.func @transform_5(%arg0: i32, %arg1: i32, %arg2: i32) -> (i32, i32, i32) {
    %c0_i32 = arith.constant 0 : i32
    %c0_i32_0 = arith.constant 0 : i32
    return %arg0, %c0_i32, %arg1 : i32, i32, i32
  }
}

</mosaic_0001>

<llo_original>
// kernel: gyx_forward.12
$region0: #{gyx_forward.12}
  #allocation0 [shape = 'u32[]', space=smem, size = 0x4, offset = 0x4, fixed_abs, tag = 'smem constant byte address 0x4 - core index']
  #allocation1 [shape = 'u32[72,128]{1,0:T(1,128)}', space=vmem, size = 0x9000, scoped, tag = 'internal scratch']
  %s0 = inlined_call_operand.vmem [shape: f32[128,64], index: 0, kind: input, shape index: {}]
  %s1 = inlined_call_operand.vmem [shape: f32[1,64], index: 1, kind: input, shape index: {}]
  %s2 = inlined_call_operand.vmem [shape: f32[1,64], index: 2, kind: input, shape index: {}]
  %s3 = inlined_call_operand.vmem [shape: bf16[128,64], index: 3, kind: output, shape index: {}]
  %s4 = sld [smem:[#allocation0]]
  $region45: #{gyx_forward.12} parent=0
    _
  %s6 = ssub.s32 1, %s4
  %s7 = scalar_select 0, %s6, %s4
  loop: start=0, step=1, limit=4
  $region2: #{gyx_forward.12} parent=0 // loop_pre_header
    _
  $region3: #{gyx_forward.12} parent=0 // loop_header
    %s9 = sphi 0, %s13
    %p10 = scmp.ge.s32.totalorder %s9, 4
    %s19 = sphi 0, %s21
    %s22 = sphi 0, %s19
    %s23 = sphi 0, %s22
    %s39 = sphi 0, %s23
    %s43 = sphi 0, %s43
    %s45 = sphi 0, %s43
    %s46 = sphi 0, %s45
    %s60 = sphi 0, %s46
    %s64 = sphi 0, %s64
    %s66 = sphi 0, %s64
    %s67 = sphi 0, %s66
    %s81 = sphi 0, %s67
    %s87 = sphi 0, %s89
    %s90 = sphi 0, %s87
    %s91 = sphi 0, %s90
    %s107 = sphi 0, %s91
  $region4: #{gyx_forward.12} parent=0 // loop_header_branch
    %12 = sbr.rel (%p10) target = $region8
  $region5: #{gyx_forward.12} parent=0 // loop_body
    %s14 = ssub.s32 %s9, 1
    %s15 = ssub.s32 %s9, 2
    %s16 = sadd.s32 %s9, 1
    %s17 = ssub.s32 %s9, %s16
    %p18 = scmp.eq.s32.totalorder %s17, 0
    %s20 = sadd.s32 %s19, 1
    %s21 = scalar_select %p18, %s19, %s20
    %p24 = pneg %p18
    %p25 = scmp.eq.s32.totalorder %s9, 1
    %p26 = por %p24, %p25
    %p27 = scmp.ne.s32.totalorder %s19, %s22
    %p28 = scmp.eq.s32.totalorder %s9, 0
    %p29 = por %p27, %p28
    %p30 = scmp.ne.s32.totalorder %s19, %s22
    %p31 = scmp.eq.s32.totalorder %s14, 1
    %p32 = por %p30, %p31
    %p33 = scmp.ne.s32.totalorder %s22, %s23
    %p34 = scmp.eq.s32.totalorder %s14, 0
    %p35 = por %p33, %p34
    %p36 = scmp.ne.s32.totalorder %s22, %s23
    %p37 = scmp.eq.s32.totalorder %s15, 1
    %p38 = por %p36, %p37
    %p40 = scmp.ne.s32.totalorder %s23, %s39
    %p41 = scmp.eq.s32.totalorder %s15, 0
    %p42 = por %p40, %p41
    %s44 = sadd.s32 %s43, 1
    %p47 = scmp.eq.s32.totalorder %s9, 1
    %p48 = scmp.ne.s32.totalorder %s43, %s45
    %p49 = scmp.eq.s32.totalorder %s9, 0
    %p50 = por %p48, %p49
    %p51 = scmp.ne.s32.totalorder %s43, %s45
    %p52 = scmp.eq.s32.totalorder %s14, 1
    %p53 = por %p51, %p52
    %p54 = scmp.ne.s32.totalorder %s45, %s46
    %p55 = scmp.eq.s32.totalorder %s14, 0
    %p56 = por %p54, %p55
    %p57 = scmp.ne.s32.totalorder %s45, %s46
    %p58 = scmp.eq.s32.totalorder %s15, 1
    %p59 = por %p57, %p58
    %p61 = scmp.ne.s32.totalorder %s46, %s60
    %p62 = scmp.eq.s32.totalorder %s15, 0
    %p63 = por %p61, %p62
    %s65 = sadd.s32 %s64, 1
    %p68 = scmp.eq.s32.totalorder %s9, 1
    %p69 = scmp.ne.s32.totalorder %s64, %s66
    %p70 = scmp.eq.s32.totalorder %s9, 0
    %p71 = por %p69, %p70
    %p72 = scmp.ne.s32.totalorder %s64, %s66
    %p73 = scmp.eq.s32.totalorder %s14, 1
    %p74 = por %p72, %p73
    %p75 = scmp.ne.s32.totalorder %s66, %s67
    %p76 = scmp.eq.s32.totalorder %s14, 0
    %p77 = por %p75, %p76
    %p78 = scmp.ne.s32.totalorder %s66, %s67
    %p79 = scmp.eq.s32.totalorder %s15, 1
    %p80 = por %p78, %p79
    %p82 = scmp.ne.s32.totalorder %s67, %s81
    %p83 = scmp.eq.s32.totalorder %s15, 0
    %p84 = por %p82, %p83
    %s85 = ssub.s32 %s9, %s16
    %p86 = scmp.eq.s32.totalorder %s85, 0
    %s88 = sadd.s32 %s87, 1
    %s89 = scalar_select %p86, %s87, %s88
    %p92 = pneg %p86
    %p93 = scmp.eq.s32.totalorder %s9, 1
    %p94 = por %p92, %p93
    %p95 = scmp.ne.s32.totalorder %s87, %s90
    %p96 = scmp.eq.s32.totalorder %s9, 0
    %p97 = por %p95, %p96
    %p98 = scmp.ne.s32.totalorder %s87, %s90
    %p99 = scmp.eq.s32.totalorder %s14, 1
    %p100 = por %p98, %p99
    %p101 = scmp.ne.s32.totalorder %s90, %s91
    %p102 = scmp.eq.s32.totalorder %s14, 0
    %p103 = por %p101, %p102
    %p104 = scmp.ne.s32.totalorder %s90, %s91
    %p105 = scmp.eq.s32.totalorder %s15, 1
    %p106 = por %p104, %p105
    %p108 = scmp.ne.s32.totalorder %s91, %s107
    %p109 = scmp.eq.s32.totalorder %s15, 0
    %p110 = por %p108, %p109
    %p111 = scmp.le.s32.totalorder 1, %s9
    %p112 = scmp.lt.s32.totalorder %s9, 3
    %p113 = pnand %p111, %p112
    %p114 = pneg %p113
    // Predicated region
    $region9: #{gyx_forward.12} parent=5 // pred_check
      _
    $region10: #{gyx_forward.12} parent=5 // pred_check_branch
      %116 = sbr.rel (%p113) target = $region12
    $region11: #{gyx_forward.12} parent=5 // pred_region
      %s117 = ssub.s32 %s9, 1
      // Predicated region
      $region13: #{gyx_forward.12} parent=11 // pred_check
        %p118 = pneg %p56
      $region14: #{gyx_forward.12} parent=11 // pred_check_branch
        %120 = sbr.rel (%p118) target = $region16
      $region15: #{gyx_forward.12} parent=11 // pred_region
        _
      $region16: #{gyx_forward.12} parent=11 // pred_fallthru
        _
      // Predicated region
      $region17: #{gyx_forward.12} parent=11 // pred_check
        %p121 = pneg %p77
      $region18: #{gyx_forward.12} parent=11 // pred_check_branch
        %123 = sbr.rel (%p121) target = $region20
      $region19: #{gyx_forward.12} parent=11 // pred_region
        _
      $region20: #{gyx_forward.12} parent=11 // pred_fallthru
        _
    $region12: #{gyx_forward.12} parent=5 // pred_fallthru
      _
    %p124 = scmp.lt.s32.totalorder %s9, 2
    // Predicated region
    $region21: #{gyx_forward.12} parent=5 // pred_check
      %p125 = pneg %p124
    $region22: #{gyx_forward.12} parent=5 // pred_check_branch
      %127 = sbr.rel (%p125) target = $region24
    $region23: #{gyx_forward.12} parent=5 // pred_region
      // Predicated region
      $region25: #{gyx_forward.12} parent=23 // pred_check
        %p128 = pneg %p29
      $region26: #{gyx_forward.12} parent=23 // pred_check_branch
        %130 = sbr.rel (%p128) target = $region28
      $region27: #{gyx_forward.12} parent=23 // pred_region
        %s131 = smul.u32 8, %s9
        %p132 = scmp.lt.s32.totalorder %s131, 15
        %s133 = scalar_select %p132, %s131, 15
        %s134 = smul.addr %s133, 8
        %s135 = scalar_lea.vmem %s0, %s134
        %s136 = smul.u32 8, %s9
      $region28: #{gyx_forward.12} parent=23 // pred_fallthru
        _
    $region24: #{gyx_forward.12} parent=5 // pred_fallthru
      _
    %p137 = scmp.le.s32.totalorder 1, %s9
    %p138 = scmp.lt.s32.totalorder %s9, 3
    %p139 = pnand %p137, %p138
    %p140 = pneg %p139
    // Predicated region
    $region29: #{gyx_forward.12} parent=5 // pred_check
      _
    $region30: #{gyx_forward.12} parent=5 // pred_check_branch
      %142 = sbr.rel (%p139) target = $region32
    $region31: #{gyx_forward.12} parent=5 // pred_region
      %s143 = ssub.s32 %s9, 1
      %s144 = smul.u32 8, %s14
      %p145 = scmp.lt.s32.totalorder %s144, 15
      %s146 = scalar_select %p145, %s144, 15
      %s147 = smul.addr %s146, 8
      %s148 = scalar_lea.vmem %s0, %s147
      %p149 = pneg %p35
      %p150 = pneg %p32
      %p151 = pneg %p56
      %p152 = pneg %p53
      %p153 = pneg %p77
      %p154 = pneg %p74
      %p155 = pneg %p103
      %p156 = pneg %p100
      %s157 = smul.u32 8, %s14
      %p158 = scmp.lt.s32.totalorder %s157, 15
      %s159 = scalar_select %p158, %s157, 15
      %s160 = smul.addr %s159, 4
      %s161 = scalar_lea.vmem %s3, %s160
      %s162 = smul.u32 8, %s14
      %p163 = scmp.lt.s32.totalorder %s162, 15
      %s164 = scalar_select %p163, %s162, 15
      %s165 = smul.addr %s164, 8
      %s166 = scalar_lea.vmem %s0, %s165
      %s167 = smul.u32 8, %s14
      %s168 = smul.u32 8, %s14
      %p169 = scmp.lt.s32.totalorder %s168, 15
      %s170 = scalar_select %p169, %s168, 15
      %s171 = smul.addr %s170, 4
      %s172 = scalar_lea.vmem %s3, %s171
      %s173 = smul.u32 8, %s14
      %v174 = vld [vmem:[%s166] sm:$0xff]
      %v175 = vld [vmem:[%s166 + $0x8] sm:$0xff]
      %v176 = vld [vmem:[%s166 + $0x10] sm:$0xff]
      %v177 = vld [vmem:[%s166 + $0x18] sm:$0xff]
      %v178 = vld [vmem:[%s166 + $0x20] sm:$0xff]
      %v179 = vld [vmem:[%s166 + $0x28] sm:$0xff]
      %v180 = vld [vmem:[%s166 + $0x30] sm:$0xff]
      %v181 = vld [vmem:[%s166 + $0x38] sm:$0xff]
      %v182 = vld [vmem:[%s1] sm:$0x1]
      %v184 = vperm.slane %v182, 0
      %v186 = vmul.f32 %v174, %v184
      %v187 = vmul.f32 %v175, %v184
      %v188 = vmul.f32 %v176, %v184
      %v189 = vmul.f32 %v177, %v184
      %v190 = vmul.f32 %v178, %v184
      %v191 = vmul.f32 %v179, %v184
      %v192 = vmul.f32 %v180, %v184
      %v193 = vmul.f32 %v181, %v184
      %v194 = vld [vmem:[%s2] sm:$0x1]
      %v196 = vperm.slane %v194, 0
      %v198 = vadd.f32 %v186, %v196
      %v199 = vadd.f32 %v187, %v196
      %v200 = vadd.f32 %v188, %v196
      %v201 = vadd.f32 %v189, %v196
      %v202 = vadd.f32 %v190, %v196
      %v203 = vadd.f32 %v191, %v196
      %v204 = vadd.f32 %v192, %v196
      %v205 = vadd.f32 %v193, %v196
      %vm206 = vcmp.ge.f32.partialorder %v198, 0.0
      %vm207 = vcmp.ge.f32.partialorder %v199, 0.0
      %vm208 = vcmp.ge.f32.partialorder %v200, 0.0
      %vm209 = vcmp.ge.f32.partialorder %v201, 0.0
      %vm210 = vcmp.ge.f32.partialorder %v202, 0.0
      %vm211 = vcmp.ge.f32.partialorder %v203, 0.0
      %vm212 = vcmp.ge.f32.partialorder %v204, 0.0
      %vm213 = vcmp.ge.f32.partialorder %v205, 0.0
      %v214 = vmul.f32 %v198, 0.05
      %v215 = vmul.f32 %v199, 0.05
      %v216 = vmul.f32 %v200, 0.05
      %v217 = vmul.f32 %v201, 0.05
      %v218 = vmul.f32 %v202, 0.05
      %v219 = vmul.f32 %v203, 0.05
      %v220 = vmul.f32 %v204, 0.05
      %v221 = vmul.f32 %v205, 0.05
      %v222 = vsel %vm206, %v198, %v214
      %v223 = vsel %vm207, %v199, %v215
      %v224 = vsel %vm208, %v200, %v216
      %v225 = vsel %vm209, %v201, %v217
      %v226 = vsel %vm210, %v202, %v218
      %v227 = vsel %vm211, %v203, %v219
      %v228 = vsel %vm212, %v204, %v220
      %v229 = vsel %vm213, %v205, %v221
      %v230 = vpack.c.bf16 %v222, %v222
      %v231 = vpack.c.bf16 %v223, %v223
      %v232 = vpack.c.bf16 %v224, %v224
      %v233 = vpack.c.bf16 %v225, %v225
      %v234 = vpack.c.bf16 %v226, %v226
      %v235 = vpack.c.bf16 %v227, %v227
      %v236 = vpack.c.bf16 %v228, %v228
      %v237 = vpack.c.bf16 %v229, %v229
      %vm238 = vcmask 519168
      %239 = vst.msk [vmem:[%s172] sm:$0xf] %vm238, %v230
      %240 = vst.msk [vmem:[%s172 + $0x4] sm:$0xf] %vm238, %v231
      %241 = vst.msk [vmem:[%s172 + $0x8] sm:$0xf] %vm238, %v232
      %242 = vst.msk [vmem:[%s172 + $0xc] sm:$0xf] %vm238, %v233
      %243 = vst.msk [vmem:[%s172 + $0x10] sm:$0xf] %vm238, %v234
      %244 = vst.msk [vmem:[%s172 + $0x14] sm:$0xf] %vm238, %v235
      %245 = vst.msk [vmem:[%s172 + $0x18] sm:$0xf] %vm238, %v236
      %246 = vst.msk [vmem:[%s172 + $0x1c] sm:$0xf] %vm238, %v237
      %s247 = smul.u32 8, %s14
      %p248 = scmp.lt.s32.totalorder %s247, 15
      %s249 = scalar_select %p248, %s247, 15
      %s250 = smul.addr %s249, 4
      %s251 = scalar_lea.vmem %s3, %s250
      // Predicated region
      $region33: #{gyx_forward.12} parent=31 // pred_check
        %p252 = pneg %p100
      $region34: #{gyx_forward.12} parent=31 // pred_check_branch
        %254 = sbr.rel (%p252) target = $region36
      $region35: #{gyx_forward.12} parent=31 // pred_region
        %s255 = smul.u32 8, %s14
      $region36: #{gyx_forward.12} parent=31 // pred_fallthru
        _
    $region32: #{gyx_forward.12} parent=5 // pred_fallthru
      _
    %p256 = scmp.le.s32.totalorder 2, %s9
    // Predicated region
    $region37: #{gyx_forward.12} parent=5 // pred_check
      %p257 = pneg %p256
    $region38: #{gyx_forward.12} parent=5 // pred_check_branch
      %259 = sbr.rel (%p257) target = $region40
    $region39: #{gyx_forward.12} parent=5 // pred_region
      %s260 = ssub.s32 %s9, 2
      // Predicated region
      $region41: #{gyx_forward.12} parent=39 // pred_check
        %p261 = pneg %p106
      $region42: #{gyx_forward.12} parent=39 // pred_check_branch
        %263 = sbr.rel (%p261) target = $region44
      $region43: #{gyx_forward.12} parent=39 // pred_region
        %s264 = smul.u32 8, %s15
        %p265 = scmp.lt.s32.totalorder %s264, 15
        %s266 = scalar_select %p265, %s264, 15
        %s267 = smul.addr %s266, 4
        %s268 = scalar_lea.vmem %s3, %s267
      $region44: #{gyx_forward.12} parent=39 // pred_fallthru
        _
    $region40: #{gyx_forward.12} parent=5 // pred_fallthru
      _
  $region6: #{gyx_forward.12} parent=0 // loop_footer
    %s13 = sadd.s32 1, %s9
  $region7: #{gyx_forward.12} parent=0 // loop_footer_branch
    %8 = sbr.rel target = $region3
  $region8: #{gyx_forward.12} parent=0 // loop_exit
    _

// kernel: gyx_forward.11
$region0: #{gyx_forward.11}
  #allocation0 [shape = 'u32[]', space=smem, size = 0x4, offset = 0x4, fixed_abs, tag = 'smem constant byte address 0x4 - core index']
  #allocation1 [shape = 'u32[72,128]{1,0:T(1,128)}', space=vmem, size = 0x9000, scoped, tag = 'internal scratch']
  #allocation2 [shape = 'f32[64,64]{1,0:T(8,128)}', space=vmem, size = 0x8000, scoped, tag = 'scratch operand']
  %s0 = inlined_call_operand.vmem [shape: bf16[128,48], index: 0, kind: input, shape index: {}]
  %s1 = inlined_call_operand.vmem [shape: bf16[48,64], index: 1, kind: input, shape index: {}]
  %s2 = inlined_call_operand.vmem [shape: f32[1,64], index: 2, kind: input, shape index: {}]
  %s3 = inlined_call_operand.vmem [shape: f32[128,64], index: 3, kind: output, shape index: {0}]
  %s4 = inlined_call_operand.vmem [shape: f32[2,1,64], index: 4, kind: output, shape index: {1}]
  %s5 = inlined_call_operand.vmem [shape: f32[2,1,64], index: 5, kind: output, shape index: {2}]
  %6 = xla_tuple %s3, %s4, %s5
  %s7 = sld [smem:[#allocation0]]
  $region69: #{gyx_forward.11} parent=0
    _
  %s9 = ssub.s32 1, %s7
  %s10 = scalar_select 0, %s9, %s7
  loop: start=0, step=1, limit=4
  $region2: #{gyx_forward.11} parent=0 // loop_pre_header
    _
  $region3: #{gyx_forward.11} parent=0 // loop_header
    %s12 = sphi 0, %s16
    %p13 = scmp.ge.s32.totalorder %s12, 4
    %s19 = sphi 0, %s38
    %s20 = sphi 0, %s34
    %s21 = sphi 0, %s30
    %s22 = sphi 0, %s19
    %s23 = sphi 0, %s20
    %s24 = sphi 0, %s21
    %s25 = sphi 0, %s22
    %s26 = sphi 0, %s23
    %s27 = sphi 0, %s24
    %s43 = sphi 0, %s45
    %s46 = sphi 0, %s43
    %s47 = sphi 0, %s46
    %s63 = sphi 0, %s47
    %s71 = sphi 0, %s73
    %s74 = sphi 0, %s71
    %s75 = sphi 0, %s74
    %s91 = sphi 0, %s75
    %s97 = sphi 0, %s99
    %s100 = sphi 0, %s97
    %s101 = sphi 0, %s100
    %s117 = sphi 0, %s101
    %s125 = sphi 0, %s127
    %s128 = sphi 0, %s125
    %s129 = sphi 0, %s128
    %s145 = sphi 0, %s129
    %s153 = sphi 0, %s155
    %s156 = sphi 0, %s153
    %s157 = sphi 0, %s156
    %s173 = sphi 0, %s157
    %s181 = sphi 0, %s183
    %s184 = sphi 0, %s181
    %s185 = sphi 0, %s184
    %s201 = sphi 0, %s185
  $region4: #{gyx_forward.11} parent=0 // loop_header_branch
    %15 = sbr.rel (%p13) target = $region8
  $region5: #{gyx_forward.11} parent=0 // loop_body
    %s17 = ssub.s32 %s12, 1
    %s18 = ssub.s32 %s12, 2
    %s28 = sadd.s32 1, %s21
    %p29 = scmp.ge.s32.totalorder %s28, 1
    %s30 = scalar_select %p29, 0, %s28
    %s31 = sadd.s32 1, %s20
    %s32 = scalar_select %p29, %s31, %s20
    %p33 = scmp.ge.s32.totalorder %s32, 1
    %s34 = scalar_select %p33, 0, %s32
    %s35 = sadd.s32 1, %s19
    %s36 = scalar_select %p33, %s35, %s19
    %p37 = scmp.ge.s32.totalorder %s36, 2
    %s38 = scalar_select %p37, 0, %s36
    %s39 = ssub.s32 %s19, %s38
    %s40 = ssub.s32 %s21, %s30
    %s41 = sor.u32 %s39, %s40
    %p42 = scmp.eq.s32.totalorder %s41, 0
    %s44 = sadd.s32 %s43, 1
    %s45 = scalar_select %p42, %s43, %s44
    %p48 = pneg %p42
    %p49 = scmp.eq.s32.totalorder %s12, 1
    %p50 = por %p48, %p49
    %p51 = scmp.ne.s32.totalorder %s43, %s46
    %p52 = scmp.eq.s32.totalorder %s12, 0
    %p53 = por %p51, %p52
    %p54 = scmp.ne.s32.totalorder %s43, %s46
    %p55 = scmp.eq.s32.totalorder %s17, 1
    %p56 = por %p54, %p55
    %p57 = scmp.ne.s32.totalorder %s46, %s47
    %p58 = scmp.eq.s32.totalorder %s17, 0
    %p59 = por %p57, %p58
    %p60 = scmp.ne.s32.totalorder %s46, %s47
    %p61 = scmp.eq.s32.totalorder %s18, 1
    %p62 = por %p60, %p61
    %p64 = scmp.ne.s32.totalorder %s47, %s63
    %p65 = scmp.eq.s32.totalorder %s18, 0
    %p66 = por %p64, %p65
    %s67 = ssub.s32 %s21, %s30
    %s68 = ssub.s32 %s20, %s34
    %s69 = sor.u32 %s67, %s68
    %p70 = scmp.eq.s32.totalorder %s69, 0
    %s72 = sadd.s32 %s71, 1
    %s73 = scalar_select %p70, %s71, %s72
    %p76 = pneg %p70
    %p77 = scmp.eq.s32.totalorder %s12, 1
    %p78 = por %p76, %p77
    %p79 = scmp.ne.s32.totalorder %s71, %s74
    %p80 = scmp.eq.s32.totalorder %s12, 0
    %p81 = por %p79, %p80
    %p82 = scmp.ne.s32.totalorder %s71, %s74
    %p83 = scmp.eq.s32.totalorder %s17, 1
    %p84 = por %p82, %p83
    %p85 = scmp.ne.s32.totalorder %s74, %s75
    %p86 = scmp.eq.s32.totalorder %s17, 0
    %p87 = por %p85, %p86
    %p88 = scmp.ne.s32.totalorder %s74, %s75
    %p89 = scmp.eq.s32.totalorder %s18, 1
    %p90 = por %p88, %p89
    %p92 = scmp.ne.s32.totalorder %s75, %s91
    %p93 = scmp.eq.s32.totalorder %s18, 0
    %p94 = por %p92, %p93
    %s95 = ssub.s32 %s20, %s34
    %p96 = scmp.eq.s32.totalorder %s95, 0
    %s98 = sadd.s32 %s97, 1
    %s99 = scalar_select %p96, %s97, %s98
    %p102 = pneg %p96
    %p103 = scmp.eq.s32.totalorder %s12, 1
    %p104 = por %p102, %p103
    %p105 = scmp.ne.s32.totalorder %s97, %s100
    %p106 = scmp.eq.s32.totalorder %s12, 0
    %p107 = por %p105, %p106
    %p108 = scmp.ne.s32.totalorder %s97, %s100
    %p109 = scmp.eq.s32.totalorder %s17, 1
    %p110 = por %p108, %p109
    %p111 = scmp.ne.s32.totalorder %s100, %s101
    %p112 = scmp.eq.s32.totalorder %s17, 0
    %p113 = por %p111, %p112
    %p114 = scmp.ne.s32.totalorder %s100, %s101
    %p115 = scmp.eq.s32.totalorder %s18, 1
    %p116 = por %p114, %p115
    %p118 = scmp.ne.s32.totalorder %s101, %s117
    %p119 = scmp.eq.s32.totalorder %s18, 0
    %p120 = por %p118, %p119
    %s121 = ssub.s32 %s19, %s38
    %s122 = ssub.s32 %s20, %s34
    %s123 = sor.u32 %s121, %s122
    %p124 = scmp.eq.s32.totalorder %s123, 0
    %s126 = sadd.s32 %s125, 1
    %s127 = scalar_select %p124, %s125, %s126
    %p130 = pneg %p124
    %p131 = scmp.eq.s32.totalorder %s12, 1
    %p132 = por %p130, %p131
    %p133 = scmp.ne.s32.totalorder %s125, %s128
    %p134 = scmp.eq.s32.totalorder %s12, 0
    %p135 = por %p133, %p134
    %p136 = scmp.ne.s32.totalorder %s125, %s128
    %p137 = scmp.eq.s32.totalorder %s17, 1
    %p138 = por %p136, %p137
    %p139 = scmp.ne.s32.totalorder %s128, %s129
    %p140 = scmp.eq.s32.totalorder %s17, 0
    %p141 = por %p139, %p140
    %p142 = scmp.ne.s32.totalorder %s128, %s129
    %p143 = scmp.eq.s32.totalorder %s18, 1
    %p144 = por %p142, %p143
    %p146 = scmp.ne.s32.totalorder %s129, %s145
    %p147 = scmp.eq.s32.totalorder %s18, 0
    %p148 = por %p146, %p147
    %s149 = ssub.s32 %s19, %s38
    %s150 = ssub.s32 %s20, %s34
    %s151 = sor.u32 %s149, %s150
    %p152 = scmp.eq.s32.totalorder %s151, 0
    %s154 = sadd.s32 %s153, 1
    %s155 = scalar_select %p152, %s153, %s154
    %p158 = pneg %p152
    %p159 = scmp.eq.s32.totalorder %s12, 1
    %p160 = por %p158, %p159
    %p161 = scmp.ne.s32.totalorder %s153, %s156
    %p162 = scmp.eq.s32.totalorder %s12, 0
    %p163 = por %p161, %p162
    %p164 = scmp.ne.s32.totalorder %s153, %s156
    %p165 = scmp.eq.s32.totalorder %s17, 1
    %p166 = por %p164, %p165
    %p167 = scmp.ne.s32.totalorder %s156, %s157
    %p168 = scmp.eq.s32.totalorder %s17, 0
    %p169 = por %p167, %p168
    %p170 = scmp.ne.s32.totalorder %s156, %s157
    %p171 = scmp.eq.s32.totalorder %s18, 1
    %p172 = por %p170, %p171
    %p174 = scmp.ne.s32.totalorder %s157, %s173
    %p175 = scmp.eq.s32.totalorder %s18, 0
    %p176 = por %p174, %p175
    %s177 = ssub.s32 %s19, %s38
    %s178 = ssub.s32 %s20, %s34
    %s179 = sor.u32 %s177, %s178
    %p180 = scmp.eq.s32.totalorder %s179, 0
    %s182 = sadd.s32 %s181, 1
    %s183 = scalar_select %p180, %s181, %s182
    %p186 = pneg %p180
    %p187 = scmp.eq.s32.totalorder %s12, 1
    %p188 = por %p186, %p187
    %p189 = scmp.ne.s32.totalorder %s181, %s184
    %p190 = scmp.eq.s32.totalorder %s12, 0
    %p191 = por %p189, %p190
    %p192 = scmp.ne.s32.totalorder %s181, %s184
    %p193 = scmp.eq.s32.totalorder %s17, 1
    %p194 = por %p192, %p193
    %p195 = scmp.ne.s32.totalorder %s184, %s185
    %p196 = scmp.eq.s32.totalorder %s17, 0
    %p197 = por %p195, %p196
    %p198 = scmp.ne.s32.totalorder %s184, %s185
    %p199 = scmp.eq.s32.totalorder %s18, 1
    %p200 = por %p198, %p199
    %p202 = scmp.ne.s32.totalorder %s185, %s201
    %p203 = scmp.eq.s32.totalorder %s18, 0
    %p204 = por %p202, %p203
    %p205 = scmp.le.s32.totalorder 1, %s12
    %p206 = scmp.lt.s32.totalorder %s12, 3
    %p207 = pnand %p205, %p206
    %p208 = pneg %p207
    // Predicated region
    $region9: #{gyx_forward.11} parent=5 // pred_check
      _
    $region10: #{gyx_forward.11} parent=5 // pred_check_branch
      %210 = sbr.rel (%p207) target = $region12
    $region11: #{gyx_forward.11} parent=5 // pred_region
      %s211 = ssub.s32 %s12, 1
      // Predicated region
      $region13: #{gyx_forward.11} parent=11 // pred_check
        %p212 = pneg %p87
      $region14: #{gyx_forward.11} parent=11 // pred_check_branch
        %214 = sbr.rel (%p212) target = $region16
      $region15: #{gyx_forward.11} parent=11 // pred_region
        %s215 = smul.u32 6, %s24
        %p216 = scmp.lt.s32.totalorder %s215, 5
        %s217 = scalar_select %p216, %s215, 5
        %p218 = scmp.lt.s32.totalorder %s23, 0
        %s219 = scalar_select %p218, %s23, 0
        %s220 = sadd.s32 %s219, %s217
        %s221 = smul.addr %s220, 4
        %s222 = scalar_lea.vmem %s1, %s221
        %s223 = smul.u32 6, %s24
      $region16: #{gyx_forward.11} parent=11 // pred_fallthru
        _
      // Predicated region
      $region17: #{gyx_forward.11} parent=11 // pred_check
        %p224 = pneg %p113
      $region18: #{gyx_forward.11} parent=11 // pred_check_branch
        %226 = sbr.rel (%p224) target = $region20
      $region19: #{gyx_forward.11} parent=11 // pred_region
        %p227 = scmp.lt.s32.totalorder %s23, 0
        %s228 = scalar_select %p227, %s23, 0
        %s229 = scalar_lea.vmem %s2, %s228
      $region20: #{gyx_forward.11} parent=11 // pred_fallthru
        _
    $region12: #{gyx_forward.11} parent=5 // pred_fallthru
      _
    %p230 = scmp.lt.s32.totalorder %s12, 2
    // Predicated region
    $region21: #{gyx_forward.11} parent=5 // pred_check
      %p231 = pneg %p230
    $region22: #{gyx_forward.11} parent=5 // pred_check_branch
      %233 = sbr.rel (%p231) target = $region24
    $region23: #{gyx_forward.11} parent=5 // pred_region
      // Predicated region
      $region25: #{gyx_forward.11} parent=23 // pred_check
        %p234 = pneg %p53
      $region26: #{gyx_forward.11} parent=23 // pred_check_branch
        %236 = sbr.rel (%p234) target = $region28
      $region27: #{gyx_forward.11} parent=23 // pred_region
        %s237 = smul.u32 8, %s19
        %p238 = scmp.lt.s32.totalorder %s237, 15
        %s239 = scalar_select %p238, %s237, 15
        %p240 = scmp.lt.s32.totalorder %s21, 0
        %s241 = scalar_select %p240, %s21, 0
        %s242 = sadd.s32 %s241, %s239
        %s243 = smul.addr %s242, 4
        %s244 = scalar_lea.vmem %s0, %s243
        %s245 = smul.u32 8, %s19
      $region28: #{gyx_forward.11} parent=23 // pred_fallthru
        _
    $region24: #{gyx_forward.11} parent=5 // pred_fallthru
      _
    %p246 = scmp.le.s32.totalorder 1, %s12
    %p247 = scmp.lt.s32.totalorder %s12, 3
    %p248 = pnand %p246, %p247
    %p249 = pneg %p248
    // Predicated region
    $region29: #{gyx_forward.11} parent=5 // pred_check
      _
    $region30: #{gyx_forward.11} parent=5 // pred_check_branch
      %251 = sbr.rel (%p248) target = $region32
    $region31: #{gyx_forward.11} parent=5 // pred_region
      %s252 = ssub.s32 %s12, 1
      %s253 = smul.u32 8, %s22
      %p254 = scmp.lt.s32.totalorder %s253, 15
      %s255 = scalar_select %p254, %s253, 15
      %p256 = scmp.lt.s32.totalorder %s24, 0
      %s257 = scalar_select %p256, %s24, 0
      %s258 = sadd.s32 %s257, %s255
      %s259 = smul.addr %s258, 4
      %s260 = scalar_lea.vmem %s0, %s259
      %p261 = pneg %p59
      %p262 = pneg %p56
      %s263 = smul.u32 6, %s24
      %p264 = scmp.lt.s32.totalorder %s263, 5
      %s265 = scalar_select %p264, %s263, 5
      %p266 = scmp.lt.s32.totalorder %s23, 0
      %s267 = scalar_select %p266, %s23, 0
      %s268 = sadd.s32 %s267, %s265
      %s269 = smul.addr %s268, 4
      %s270 = scalar_lea.vmem %s1, %s269
      %p271 = pneg %p87
      %p272 = pneg %p84
      %p273 = scmp.lt.s32.totalorder %s23, 0
      %s274 = scalar_select %p273, %s23, 0
      %s275 = scalar_lea.vmem %s2, %s274
      %p276 = pneg %p113
      %p277 = pneg %p110
      %p278 = pneg %p141
      %p279 = pneg %p138
      %s280 = smul.u32 8, %s22
      %p281 = scmp.lt.s32.totalorder %s280, 15
      %s282 = scalar_select %p281, %s280, 15
      %p283 = scmp.lt.s32.totalorder %s23, 0
      %s284 = scalar_select %p283, %s23, 0
      %s285 = sadd.s32 %s284, %s282
      %s286 = smul.addr %s285, 8
      %s287 = scalar_lea.vmem %s3, %s286
      %p288 = pneg %p169
      %p289 = pneg %p166
      %p290 = scmp.lt.s32.totalorder %s22, 1
      %s291 = scalar_select %p290, %s22, 1
      %p292 = scmp.lt.s32.totalorder %s23, 0
      %s293 = scalar_select %p292, %s23, 0
      %s294 = sadd.s32 %s293, %s291
      %s295 = scalar_lea.vmem %s4, %s294
      %p296 = pneg %p197
      %p297 = pneg %p194
      %p298 = scmp.lt.s32.totalorder %s22, 1
      %s299 = scalar_select %p298, %s22, 1
      %p300 = scmp.lt.s32.totalorder %s23, 0
      %s301 = scalar_select %p300, %s23, 0
      %s302 = sadd.s32 %s301, %s299
      %s303 = scalar_lea.vmem %s5, %s302
      %s304 = smul.u32 8, %s22
      %p305 = scmp.lt.s32.totalorder %s304, 15
      %s306 = scalar_select %p305, %s304, 15
      %p307 = scmp.lt.s32.totalorder %s24, 0
      %s308 = scalar_select %p307, %s24, 0
      %s309 = sadd.s32 %s308, %s306
      %s310 = smul.addr %s309, 4
      %s311 = scalar_lea.vmem %s0, %s310
      %s312 = smul.u32 8, %s22
      %s313 = smul.u32 6, %s24
      %p314 = scmp.lt.s32.totalorder %s313, 5
      %s315 = scalar_select %p314, %s313, 5
      %p316 = scmp.lt.s32.totalorder %s23, 0
      %s317 = scalar_select %p316, %s23, 0
      %s318 = sadd.s32 %s317, %s315
      %s319 = smul.addr %s318, 4
      %s320 = scalar_lea.vmem %s1, %s319
      %s321 = smul.u32 6, %s24
      %p322 = scmp.lt.s32.totalorder %s23, 0
      %s323 = scalar_select %p322, %s23, 0
      %s324 = scalar_lea.vmem %s2, %s323
      %s325 = smul.u32 8, %s22
      %p326 = scmp.lt.s32.totalorder %s325, 15
      %s327 = scalar_select %p326, %s325, 15
      %p328 = scmp.lt.s32.totalorder %s23, 0
      %s329 = scalar_select %p328, %s23, 0
      %s330 = sadd.s32 %s329, %s327
      %s331 = smul.addr %s330, 8
      %s332 = scalar_lea.vmem %s3, %s331
      %s333 = smul.u32 8, %s22
      %p334 = scmp.lt.s32.totalorder %s22, 1
      %s335 = scalar_select %p334, %s22, 1
      %p336 = scmp.lt.s32.totalorder %s23, 0
      %s337 = scalar_select %p336, %s23, 0
      %s338 = sadd.s32 %s337, %s335
      %s339 = scalar_lea.vmem %s4, %s338
      %p340 = scmp.lt.s32.totalorder %s22, 1
      %s341 = scalar_select %p340, %s22, 1
      %p342 = scmp.lt.s32.totalorder %s23, 0
      %s343 = scalar_select %p342, %s23, 0
      %s344 = sadd.s32 %s343, %s341
      %s345 = scalar_lea.vmem %s5, %s344
      %p347 = scmp.eq.s32.totalorder %s24, 0
      // Predicated region
      $region33: #{gyx_forward.11} parent=31 // pred_check
        %p348 = pneg %p347
      $region34: #{gyx_forward.11} parent=31 // pred_check_branch
        %350 = sbr.rel (%p348) target = $region36
      $region35: #{gyx_forward.11} parent=31 // pred_region
        %vm351 = vcmask 523264
        %352 = vst.msk [vmem:[#allocation2] sm:$0xff] %vm351, 0.0
        %353 = vst.msk [vmem:[#allocation2 + $0x8] sm:$0xff] %vm351, 0.0
        %354 = vst.msk [vmem:[#allocation2 + $0x10] sm:$0xff] %vm351, 0.0
        %355 = vst.msk [vmem:[#allocation2 + $0x18] sm:$0xff] %vm351, 0.0
        %356 = vst.msk [vmem:[#allocation2 + $0x20] sm:$0xff] %vm351, 0.0
        %357 = vst.msk [vmem:[#allocation2 + $0x28] sm:$0xff] %vm351, 0.0
        %358 = vst.msk [vmem:[#allocation2 + $0x30] sm:$0xff] %vm351, 0.0
        %359 = vst.msk [vmem:[#allocation2 + $0x38] sm:$0xff] %vm351, 0.0
      $region36: #{gyx_forward.11} parent=31 // pred_fallthru
        _
      %v360 = vld [vmem:[#allocation2] sm:$0xff]
      %v361 = vld [vmem:[#allocation2 + $0x8] sm:$0xff]
      %v362 = vld [vmem:[#allocation2 + $0x10] sm:$0xff]
      %v363 = vld [vmem:[#allocation2 + $0x18] sm:$0xff]
      %v364 = vld [vmem:[#allocation2 + $0x20] sm:$0xff]
      %v365 = vld [vmem:[#allocation2 + $0x28] sm:$0xff]
      %v366 = vld [vmem:[#allocation2 + $0x30] sm:$0xff]
      %v367 = vld [vmem:[#allocation2 + $0x38] sm:$0xff]
      %v368 = vld [vmem:[%s311] sm:$0xf]
      %v369 = vld [vmem:[%s311 + $0x4] sm:$0xf]
      %v370 = vld [vmem:[%s311 + $0x8] sm:$0xf]
      %v371 = vld [vmem:[%s311 + $0xc] sm:$0xf]
      %v372 = vld [vmem:[%s311 + $0x10] sm:$0xf]
      %v373 = vld [vmem:[%s311 + $0x14] sm:$0xf]
      %v374 = vld [vmem:[%s311 + $0x18] sm:$0xf]
      %v375 = vld [vmem:[%s311 + $0x1c] sm:$0xf]
      %v376 = vld [vmem:[%s320] sm:$0xf]
      %v377 = vld [vmem:[%s320 + $0x4] sm:$0xf]
      %v378 = vld [vmem:[%s320 + $0x8] sm:$0xf]
      %v379 = vld [vmem:[%s320 + $0xc] sm:$0xf]
      %v380 = vld [vmem:[%s320 + $0x10] sm:$0xf]
      %v381 = vld [vmem:[%s320 + $0x14] sm:$0xf]
      %v390 = vunpack.c.l.b16 %v368
      %v391 = vunpack.c.l.b16 %v369
      %v392 = vunpack.c.l.b16 %v370
      %v393 = vunpack.c.l.b16 %v371
      %v394 = vunpack.c.l.b16 %v372
      %v395 = vunpack.c.l.b16 %v373
      %v396 = vunpack.c.l.b16 %v374
      %v397 = vunpack.c.l.b16 %v375
      %v398 = vpack.c.b16 %v391, %v390
      %v399 = vpack.c.b16 %v393, %v392
      %v400 = vpack.c.b16 %v395, %v394
      %v401 = vpack.c.b16 %v397, %v396
      %v408 = vunpack.c.l.b16 %v376
      %v409 = vunpack.c.l.b16 %v377
      %v410 = vunpack.c.l.b16 %v378
      %v411 = vunpack.c.l.b16 %v379
      %v412 = vunpack.c.l.b16 %v380
      %v413 = vunpack.c.l.b16 %v381
      %v414 = vpack.c.b16 %v409, %v408
      %v415 = vpack.c.b16 %v411, %v410
      %v416 = vpack.c.b16 %v413, %v412
      %vm420 = vcmask 392192
      %v422 = vsel %vm420, %v398, 0
      %v425 = vsel %vm420, %v399, 0
      %v428 = vsel %vm420, %v400, 0
      %v431 = vsel %vm420, %v401, 0
      %433 = vmatpush.bf16.msra.mxu0 0
      %434 = vmatpush.bf16.msra.mxu0 0
      %435 = vmatpush.bf16.msra.mxu0 0
      %436 = vmatpush.bf16.msra.mxu0 0
      %437 = vmatpush.bf16.msra.mxu0 0
      %438 = vmatpush.bf16.msra.mxu0 %v416
      %439 = vmatpush.bf16.msra.mxu0 %v415
      %440 = vmatpush.bf16.msra.mxu0 %v414
      %441 = vmatmul.bf16.gmra.mxu0 %v422
      %v442 = vpop.f32.mrf.mxu0
      %v443 = vadd.f32 0.0, %v442
      %v444 = vpop.f32.mrf.mxu0
      %v445 = vadd.f32 0.0, %v444
      %446 = vmatmul.bf16.gmra.mxu0 %v425
      %v447 = vpop.f32.mrf.mxu0
      %v448 = vadd.f32 0.0, %v447
      %v449 = vpop.f32.mrf.mxu0
      %v450 = vadd.f32 0.0, %v449
      %451 = vmatmul.bf16.gmra.mxu0 %v428
      %v452 = vpop.f32.mrf.mxu0
      %v453 = vadd.f32 0.0, %v452
      %v454 = vpop.f32.mrf.mxu0
      %v455 = vadd.f32 0.0, %v454
      %456 = vmatmul.bf16.gmra.mxu0 %v431
      %v457 = vpop.f32.mrf.mxu0
      %v458 = vadd.f32 0.0, %v457
      %v459 = vpop.f32.mrf.mxu0
      %v460 = vadd.f32 0.0, %v459
      %461 = vdwg.mxu0
      %v462 = vadd.f32 %v360, %v443
      %v463 = vadd.f32 %v361, %v445
      %v464 = vadd.f32 %v362, %v448
      %v465 = vadd.f32 %v363, %v450
      %v466 = vadd.f32 %v364, %v453
      %v467 = vadd.f32 %v365, %v455
      %v468 = vadd.f32 %v366, %v458
      %v469 = vadd.f32 %v367, %v460
      %vm470 = vcmask 523264
      %471 = vst.msk [vmem:[#allocation2] sm:$0xff] %vm470, %v462
      %472 = vst.msk [vmem:[#allocation2 + $0x8] sm:$0xff] %vm470, %v463
      %473 = vst.msk [vmem:[#allocation2 + $0x10] sm:$0xff] %vm470, %v464
      %474 = vst.msk [vmem:[#allocation2 + $0x18] sm:$0xff] %vm470, %v465
      %475 = vst.msk [vmem:[#allocation2 + $0x20] sm:$0xff] %vm470, %v466
      %476 = vst.msk [vmem:[#allocation2 + $0x28] sm:$0xff] %vm470, %v467
      %477 = vst.msk [vmem:[#allocation2 + $0x30] sm:$0xff] %vm470, %v468
      %478 = vst.msk [vmem:[#allocation2 + $0x38] sm:$0xff] %vm470, %v469
      // Predicated region
      $region37: #{gyx_forward.11} parent=31 // pred_check
        %p479 = pneg %p347
      $region38: #{gyx_forward.11} parent=31 // pred_check_branch
        %481 = sbr.rel (%p479) target = $region40
      $region39: #{gyx_forward.11} parent=31 // pred_region
        %v482 = vld [vmem:[#allocation2] sm:$0xff]
        %v483 = vld [vmem:[#allocation2 + $0x8] sm:$0xff]
        %v484 = vld [vmem:[#allocation2 + $0x10] sm:$0xff]
        %v485 = vld [vmem:[#allocation2 + $0x18] sm:$0xff]
        %v486 = vld [vmem:[#allocation2 + $0x20] sm:$0xff]
        %v487 = vld [vmem:[#allocation2 + $0x28] sm:$0xff]
        %v488 = vld [vmem:[#allocation2 + $0x30] sm:$0xff]
        %v489 = vld [vmem:[#allocation2 + $0x38] sm:$0xff]
        %v490 = vsel %vm470, %v482, 0.0
        %v491 = vsel %vm470, %v483, 0.0
        %v492 = vadd.f32 %v490, %v491
        %v493 = vsel %vm470, %v484, 0.0
        %v494 = vadd.f32 %v492, %v493
        %v495 = vsel %vm470, %v485, 0.0
        %v496 = vadd.f32 %v494, %v495
        %v497 = vsel %vm470, %v486, 0.0
        %v498 = vadd.f32 %v496, %v497
        %v499 = vsel %vm470, %v487, 0.0
        %v500 = vadd.f32 %v498, %v499
        %v501 = vsel %vm470, %v488, 0.0
        %v502 = vadd.f32 %v500, %v501
        %v503 = vsel %vm470, %v489, 0.0
        %v504 = vadd.f32 %v502, %v503
        %v505 = vrot.slane %v504, 4
        %v506 = vadd.f32 %v504, %v505
        %v507 = vrot.slane %v506, 2
        %v508 = vadd.f32 %v506, %v507
        %v509 = vrot.slane %v508, 1
        %v510 = vadd.f32 %v508, %v509
        %v511 = vmul.f32 %v482, %v482
        %v512 = vmul.f32 %v483, %v483
        %v513 = vmul.f32 %v484, %v484
        %v514 = vmul.f32 %v485, %v485
        %v515 = vmul.f32 %v486, %v486
        %v516 = vmul.f32 %v487, %v487
        %v517 = vmul.f32 %v488, %v488
        %v518 = vmul.f32 %v489, %v489
        %v519 = vsel %vm470, %v511, 0.0
        %v520 = vsel %vm470, %v512, 0.0
        %v521 = vadd.f32 %v519, %v520
        %v522 = vsel %vm470, %v513, 0.0
        %v523 = vadd.f32 %v521, %v522
        %v524 = vsel %vm470, %v514, 0.0
        %v525 = vadd.f32 %v523, %v524
        %v526 = vsel %vm470, %v515, 0.0
        %v527 = vadd.f32 %v525, %v526
        %v528 = vsel %vm470, %v516, 0.0
        %v529 = vadd.f32 %v527, %v528
        %v530 = vsel %vm470, %v517, 0.0
        %v531 = vadd.f32 %v529, %v530
        %v532 = vsel %vm470, %v518, 0.0
        %v533 = vadd.f32 %v531, %v532
        %v534 = vrot.slane %v533, 4
        %v535 = vadd.f32 %v533, %v534
        %v536 = vrot.slane %v535, 2
        %v537 = vadd.f32 %v535, %v536
        %v538 = vrot.slane %v537, 1
        %v539 = vadd.f32 %v537, %v538
        %vm540 = vcmask 516096
        %541 = vst.msk [vmem:[%s339] sm:$0x1] %vm540, %v510
        %542 = vst.msk [vmem:[%s345] sm:$0x1] %vm540, %v539
        %v543 = vld [vmem:[%s324] sm:$0x1]
        %v545 = vperm.slane %v543, 0
        %v547 = vadd.f32 %v482, %v545
        %v548 = vadd.f32 %v483, %v545
        %v549 = vadd.f32 %v484, %v545
        %v550 = vadd.f32 %v485, %v545
        %v551 = vadd.f32 %v486, %v545
        %v552 = vadd.f32 %v487, %v545
        %v553 = vadd.f32 %v488, %v545
        %v554 = vadd.f32 %v489, %v545
        %555 = vst.msk [vmem:[%s332] sm:$0xff] %vm470, %v547
        %556 = vst.msk [vmem:[%s332 + $0x8] sm:$0xff] %vm470, %v548
        %557 = vst.msk [vmem:[%s332 + $0x10] sm:$0xff] %vm470, %v549
        %558 = vst.msk [vmem:[%s332 + $0x18] sm:$0xff] %vm470, %v550
        %559 = vst.msk [vmem:[%s332 + $0x20] sm:$0xff] %vm470, %v551
        %560 = vst.msk [vmem:[%s332 + $0x28] sm:$0xff] %vm470, %v552
        %561 = vst.msk [vmem:[%s332 + $0x30] sm:$0xff] %vm470, %v553
        %562 = vst.msk [vmem:[%s332 + $0x38] sm:$0xff] %vm470, %v554
      $region40: #{gyx_forward.11} parent=31 // pred_fallthru
        _
      %s563 = smul.u32 8, %s22
      %p564 = scmp.lt.s32.totalorder %s563, 15
      %s565 = scalar_select %p564, %s563, 15
      %p566 = scmp.lt.s32.totalorder %s23, 0
      %s567 = scalar_select %p566, %s23, 0
      %s568 = sadd.s32 %s567, %s565
      %s569 = smul.addr %s568, 8
      %s570 = scalar_lea.vmem %s3, %s569
      %p571 = scmp.lt.s32.totalorder %s22, 1
      %s572 = scalar_select %p571, %s22, 1
      %p573 = scmp.lt.s32.totalorder %s23, 0
      %s574 = scalar_select %p573, %s23, 0
      %s575 = sadd.s32 %s574, %s572
      %s576 = scalar_lea.vmem %s4, %s575
      %p577 = scmp.lt.s32.totalorder %s22, 1
      %s578 = scalar_select %p577, %s22, 1
      %p579 = scmp.lt.s32.totalorder %s23, 0
      %s580 = scalar_select %p579, %s23, 0
      %s581 = sadd.s32 %s580, %s578
      %s582 = scalar_lea.vmem %s5, %s581
      // Predicated region
      $region41: #{gyx_forward.11} parent=31 // pred_check
        %p583 = pneg %p138
      $region42: #{gyx_forward.11} parent=31 // pred_check_branch
        %585 = sbr.rel (%p583) target = $region44
      $region43: #{gyx_forward.11} parent=31 // pred_region
        %s586 = smul.u32 8, %s22
      $region44: #{gyx_forward.11} parent=31 // pred_fallthru
        _
      // Predicated region
      $region45: #{gyx_forward.11} parent=31 // pred_check
        %p587 = pneg %p166
      $region46: #{gyx_forward.11} parent=31 // pred_check_branch
        %589 = sbr.rel (%p587) target = $region48
      $region47: #{gyx_forward.11} parent=31 // pred_region
        _
      $region48: #{gyx_forward.11} parent=31 // pred_fallthru
        _
      // Predicated region
      $region49: #{gyx_forward.11} parent=31 // pred_check
        %p590 = pneg %p194
      $region50: #{gyx_forward.11} parent=31 // pred_check_branch
        %592 = sbr.rel (%p590) target = $region52
      $region51: #{gyx_forward.11} parent=31 // pred_region
        _
      $region52: #{gyx_forward.11} parent=31 // pred_fallthru
        _
    $region32: #{gyx_forward.11} parent=5 // pred_fallthru
      _
    %p593 = scmp.le.s32.totalorder 2, %s12
    // Predicated region
    $region53: #{gyx_forward.11} parent=5 // pred_check
      %p594 = pneg %p593
    $region54: #{gyx_forward.11} parent=5 // pred_check_branch
      %596 = sbr.rel (%p594) target = $region56
    $region55: #{gyx_forward.11} parent=5 // pred_region
      %s597 = ssub.s32 %s12, 2
      // Predicated region
      $region57: #{gyx_forward.11} parent=55 // pred_check
        %p598 = pneg %p144
      $region58: #{gyx_forward.11} parent=55 // pred_check_branch
        %600 = sbr.rel (%p598) target = $region60
      $region59: #{gyx_forward.11} parent=55 // pred_region
        %s601 = smul.u32 8, %s25
        %p602 = scmp.lt.s32.totalorder %s601, 15
        %s603 = scalar_select %p602, %s601, 15
        %p604 = scmp.lt.s32.totalorder %s26, 0
        %s605 = scalar_select %p604, %s26, 0
        %s606 = sadd.s32 %s605, %s603
        %s607 = smul.addr %s606, 8
        %s608 = scalar_lea.vmem %s3, %s607
      $region60: #{gyx_forward.11} parent=55 // pred_fallthru
        _
      // Predicated region
      $region61: #{gyx_forward.11} parent=55 // pred_check
        %p609 = pneg %p172
      $region62: #{gyx_forward.11} parent=55 // pred_check_branch
        %611 = sbr.rel (%p609) target = $region64
      $region63: #{gyx_forward.11} parent=55 // pred_region
        %p612 = scmp.lt.s32.totalorder %s25, 1
        %s613 = scalar_select %p612, %s25, 1
        %p614 = scmp.lt.s32.totalorder %s26, 0
        %s615 = scalar_select %p614, %s26, 0
        %s616 = sadd.s32 %s615, %s613
        %s617 = scalar_lea.vmem %s4, %s616
      $region64: #{gyx_forward.11} parent=55 // pred_fallthru
        _
      // Predicated region
      $region65: #{gyx_forward.11} parent=55 // pred_check
        %p618 = pneg %p200
      $region66: #{gyx_forward.11} parent=55 // pred_check_branch
        %620 = sbr.rel (%p618) target = $region68
      $region67: #{gyx_forward.11} parent=55 // pred_region
        %p621 = scmp.lt.s32.totalorder %s25, 1
        %s622 = scalar_select %p621, %s25, 1
        %p623 = scmp.lt.s32.totalorder %s26, 0
        %s624 = scalar_select %p623, %s26, 0
        %s625 = sadd.s32 %s624, %s622
        %s626 = scalar_lea.vmem %s5, %s625
      $region68: #{gyx_forward.11} parent=55 // pred_fallthru
        _
    $region56: #{gyx_forward.11} parent=5 // pred_fallthru
      _
  $region6: #{gyx_forward.11} parent=0 // loop_footer
    %s16 = sadd.s32 1, %s12
  $region7: #{gyx_forward.11} parent=0 // loop_footer_branch
    %11 = sbr.rel target = $region3
  $region8: #{gyx_forward.11} parent=0 // loop_exit
    _

// kernel: gyx_forward.14
$region0: #{gyx_forward.14}
  #allocation0 [shape = 'u32[]', space=smem, size = 0x4, offset = 0x4, fixed_abs, tag = 'smem constant byte address 0x4 - core index']
  #allocation1 [shape = 'u32[72,128]{1,0:T(1,128)}', space=vmem, size = 0x9000, scoped, tag = 'internal scratch']
  %s0 = inlined_call_operand.vmem [shape: f32[32,128], index: 0, kind: input, shape index: {}]
  %s1 = inlined_call_operand.vmem [shape: f32[1,128], index: 1, kind: input, shape index: {}]
  %s2 = inlined_call_operand.vmem [shape: f32[1,128], index: 2, kind: input, shape index: {}]
  %s3 = inlined_call_operand.vmem [shape: bf16[32,128], index: 3, kind: output, shape index: {}]
  %s4 = sld [smem:[#allocation0]]
  $region45: #{gyx_forward.14} parent=0
    _
  %s6 = ssub.s32 1, %s4
  %s7 = scalar_select 0, %s6, %s4
  loop: start=0, step=1, limit=4
  $region2: #{gyx_forward.14} parent=0 // loop_pre_header
    _
  $region3: #{gyx_forward.14} parent=0 // loop_header
    %s9 = sphi 0, %s13
    %p10 = scmp.ge.s32.totalorder %s9, 4
    %s19 = sphi 0, %s21
    %s22 = sphi 0, %s19
    %s23 = sphi 0, %s22
    %s39 = sphi 0, %s23
    %s43 = sphi 0, %s43
    %s45 = sphi 0, %s43
    %s46 = sphi 0, %s45
    %s60 = sphi 0, %s46
    %s64 = sphi 0, %s64
    %s66 = sphi 0, %s64
    %s67 = sphi 0, %s66
    %s81 = sphi 0, %s67
    %s87 = sphi 0, %s89
    %s90 = sphi 0, %s87
    %s91 = sphi 0, %s90
    %s107 = sphi 0, %s91
  $region4: #{gyx_forward.14} parent=0 // loop_header_branch
    %12 = sbr.rel (%p10) target = $region8
  $region5: #{gyx_forward.14} parent=0 // loop_body
    %s14 = ssub.s32 %s9, 1
    %s15 = ssub.s32 %s9, 2
    %s16 = sadd.s32 %s9, 1
    %s17 = ssub.s32 %s9, %s16
    %p18 = scmp.eq.s32.totalorder %s17, 0
    %s20 = sadd.s32 %s19, 1
    %s21 = scalar_select %p18, %s19, %s20
    %p24 = pneg %p18
    %p25 = scmp.eq.s32.totalorder %s9, 1
    %p26 = por %p24, %p25
    %p27 = scmp.ne.s32.totalorder %s19, %s22
    %p28 = scmp.eq.s32.totalorder %s9, 0
    %p29 = por %p27, %p28
    %p30 = scmp.ne.s32.totalorder %s19, %s22
    %p31 = scmp.eq.s32.totalorder %s14, 1
    %p32 = por %p30, %p31
    %p33 = scmp.ne.s32.totalorder %s22, %s23
    %p34 = scmp.eq.s32.totalorder %s14, 0
    %p35 = por %p33, %p34
    %p36 = scmp.ne.s32.totalorder %s22, %s23
    %p37 = scmp.eq.s32.totalorder %s15, 1
    %p38 = por %p36, %p37
    %p40 = scmp.ne.s32.totalorder %s23, %s39
    %p41 = scmp.eq.s32.totalorder %s15, 0
    %p42 = por %p40, %p41
    %s44 = sadd.s32 %s43, 1
    %p47 = scmp.eq.s32.totalorder %s9, 1
    %p48 = scmp.ne.s32.totalorder %s43, %s45
    %p49 = scmp.eq.s32.totalorder %s9, 0
    %p50 = por %p48, %p49
    %p51 = scmp.ne.s32.totalorder %s43, %s45
    %p52 = scmp.eq.s32.totalorder %s14, 1
    %p53 = por %p51, %p52
    %p54 = scmp.ne.s32.totalorder %s45, %s46
    %p55 = scmp.eq.s32.totalorder %s14, 0
    %p56 = por %p54, %p55
    %p57 = scmp.ne.s32.totalorder %s45, %s46
    %p58 = scmp.eq.s32.totalorder %s15, 1
    %p59 = por %p57, %p58
    %p61 = scmp.ne.s32.totalorder %s46, %s60
    %p62 = scmp.eq.s32.totalorder %s15, 0
    %p63 = por %p61, %p62
    %s65 = sadd.s32 %s64, 1
    %p68 = scmp.eq.s32.totalorder %s9, 1
    %p69 = scmp.ne.s32.totalorder %s64, %s66
    %p70 = scmp.eq.s32.totalorder %s9, 0
    %p71 = por %p69, %p70
    %p72 = scmp.ne.s32.totalorder %s64, %s66
    %p73 = scmp.eq.s32.totalorder %s14, 1
    %p74 = por %p72, %p73
    %p75 = scmp.ne.s32.totalorder %s66, %s67
    %p76 = scmp.eq.s32.totalorder %s14, 0
    %p77 = por %p75, %p76
    %p78 = scmp.ne.s32.totalorder %s66, %s67
    %p79 = scmp.eq.s32.totalorder %s15, 1
    %p80 = por %p78, %p79
    %p82 = scmp.ne.s32.totalorder %s67, %s81
    %p83 = scmp.eq.s32.totalorder %s15, 0
    %p84 = por %p82, %p83
    %s85 = ssub.s32 %s9, %s16
    %p86 = scmp.eq.s32.totalorder %s85, 0
    %s88 = sadd.s32 %s87, 1
    %s89 = scalar_select %p86, %s87, %s88
    %p92 = pneg %p86
    %p93 = scmp.eq.s32.totalorder %s9, 1
    %p94 = por %p92, %p93
    %p95 = scmp.ne.s32.totalorder %s87, %s90
    %p96 = scmp.eq.s32.totalorder %s9, 0
    %p97 = por %p95, %p96
    %p98 = scmp.ne.s32.totalorder %s87, %s90
    %p99 = scmp.eq.s32.totalorder %s14, 1
    %p100 = por %p98, %p99
    %p101 = scmp.ne.s32.totalorder %s90, %s91
    %p102 = scmp.eq.s32.totalorder %s14, 0
    %p103 = por %p101, %p102
    %p104 = scmp.ne.s32.totalorder %s90, %s91
    %p105 = scmp.eq.s32.totalorder %s15, 1
    %p106 = por %p104, %p105
    %p108 = scmp.ne.s32.totalorder %s91, %s107
    %p109 = scmp.eq.s32.totalorder %s15, 0
    %p110 = por %p108, %p109
    %p111 = scmp.le.s32.totalorder 1, %s9
    %p112 = scmp.lt.s32.totalorder %s9, 3
    %p113 = pnand %p111, %p112
    %p114 = pneg %p113
    // Predicated region
    $region9: #{gyx_forward.14} parent=5 // pred_check
      _
    $region10: #{gyx_forward.14} parent=5 // pred_check_branch
      %116 = sbr.rel (%p113) target = $region12
    $region11: #{gyx_forward.14} parent=5 // pred_region
      %s117 = ssub.s32 %s9, 1
      // Predicated region
      $region13: #{gyx_forward.14} parent=11 // pred_check
        %p118 = pneg %p56
      $region14: #{gyx_forward.14} parent=11 // pred_check_branch
        %120 = sbr.rel (%p118) target = $region16
      $region15: #{gyx_forward.14} parent=11 // pred_region
        _
      $region16: #{gyx_forward.14} parent=11 // pred_fallthru
        _
      // Predicated region
      $region17: #{gyx_forward.14} parent=11 // pred_check
        %p121 = pneg %p77
      $region18: #{gyx_forward.14} parent=11 // pred_check_branch
        %123 = sbr.rel (%p121) target = $region20
      $region19: #{gyx_forward.14} parent=11 // pred_region
        _
      $region20: #{gyx_forward.14} parent=11 // pred_fallthru
        _
    $region12: #{gyx_forward.14} parent=5 // pred_fallthru
      _
    %p124 = scmp.lt.s32.totalorder %s9, 2
    // Predicated region
    $region21: #{gyx_forward.14} parent=5 // pred_check
      %p125 = pneg %p124
    $region22: #{gyx_forward.14} parent=5 // pred_check_branch
      %127 = sbr.rel (%p125) target = $region24
    $region23: #{gyx_forward.14} parent=5 // pred_region
      // Predicated region
      $region25: #{gyx_forward.14} parent=23 // pred_check
        %p128 = pneg %p29
      $region26: #{gyx_forward.14} parent=23 // pred_check_branch
        %130 = sbr.rel (%p128) target = $region28
      $region27: #{gyx_forward.14} parent=23 // pred_region
        %s131 = smul.u32 2, %s9
        %p132 = scmp.lt.s32.totalorder %s131, 3
        %s133 = scalar_select %p132, %s131, 3
        %s134 = smul.addr %s133, 8
        %s135 = scalar_lea.vmem %s0, %s134
        %s136 = smul.u32 2, %s9
      $region28: #{gyx_forward.14} parent=23 // pred_fallthru
        _
    $region24: #{gyx_forward.14} parent=5 // pred_fallthru
      _
    %p137 = scmp.le.s32.totalorder 1, %s9
    %p138 = scmp.lt.s32.totalorder %s9, 3
    %p139 = pnand %p137, %p138
    %p140 = pneg %p139
    // Predicated region
    $region29: #{gyx_forward.14} parent=5 // pred_check
      _
    $region30: #{gyx_forward.14} parent=5 // pred_check_branch
      %142 = sbr.rel (%p139) target = $region32
    $region31: #{gyx_forward.14} parent=5 // pred_region
      %s143 = ssub.s32 %s9, 1
      %s144 = smul.u32 2, %s14
      %p145 = scmp.lt.s32.totalorder %s144, 3
      %s146 = scalar_select %p145, %s144, 3
      %s147 = smul.addr %s146, 8
      %s148 = scalar_lea.vmem %s0, %s147
      %p149 = pneg %p35
      %p150 = pneg %p32
      %p151 = pneg %p56
      %p152 = pneg %p53
      %p153 = pneg %p77
      %p154 = pneg %p74
      %p155 = pneg %p103
      %p156 = pneg %p100
      %s157 = smul.u32 2, %s14
      %p158 = scmp.lt.s32.totalorder %s157, 3
      %s159 = scalar_select %p158, %s157, 3
      %s160 = smul.addr %s159, 4
      %s161 = scalar_lea.vmem %s3, %s160
      %s162 = smul.u32 2, %s14
      %p163 = scmp.lt.s32.totalorder %s162, 3
      %s164 = scalar_select %p163, %s162, 3
      %s165 = smul.addr %s164, 8
      %s166 = scalar_lea.vmem %s0, %s165
      %s167 = smul.u32 2, %s14
      %s168 = smul.u32 2, %s14
      %p169 = scmp.lt.s32.totalorder %s168, 3
      %s170 = scalar_select %p169, %s168, 3
      %s171 = smul.addr %s170, 4
      %s172 = scalar_lea.vmem %s3, %s171
      %s173 = smul.u32 2, %s14
      %v174 = vld [vmem:[%s166] sm:$0xff]
      %v175 = vld [vmem:[%s166 + $0x8] sm:$0xff]
      %v176 = vld [vmem:[%s1] sm:$0x1]
      %v178 = vperm.slane %v176, 0
      %v180 = vmul.f32 %v174, %v178
      %v181 = vmul.f32 %v175, %v178
      %v182 = vld [vmem:[%s2] sm:$0x1]
      %v184 = vperm.slane %v182, 0
      %v186 = vadd.f32 %v180, %v184
      %v187 = vadd.f32 %v181, %v184
      %vm188 = vcmp.ge.f32.partialorder %v186, 0.0
      %vm189 = vcmp.ge.f32.partialorder %v187, 0.0
      %v190 = vmul.f32 %v186, 0.05
      %v191 = vmul.f32 %v187, 0.05
      %v192 = vsel %vm188, %v186, %v190
      %v193 = vsel %vm189, %v187, %v191
      %v194 = vpack.c.bf16 %v192, %v192
      %v195 = vpack.c.bf16 %v193, %v193
      %196 = vst [vmem:[%s172] sm:$0xf] %v194
      %197 = vst [vmem:[%s172 + $0x4] sm:$0xf] %v195
      %s198 = smul.u32 2, %s14
      %p199 = scmp.lt.s32.totalorder %s198, 3
      %s200 = scalar_select %p199, %s198, 3
      %s201 = smul.addr %s200, 4
      %s202 = scalar_lea.vmem %s3, %s201
      // Predicated region
      $region33: #{gyx_forward.14} parent=31 // pred_check
        %p203 = pneg %p100
      $region34: #{gyx_forward.14} parent=31 // pred_check_branch
        %205 = sbr.rel (%p203) target = $region36
      $region35: #{gyx_forward.14} parent=31 // pred_region
        %s206 = smul.u32 2, %s14
      $region36: #{gyx_forward.14} parent=31 // pred_fallthru
        _
    $region32: #{gyx_forward.14} parent=5 // pred_fallthru
      _
    %p207 = scmp.le.s32.totalorder 2, %s9
    // Predicated region
    $region37: #{gyx_forward.14} parent=5 // pred_check
      %p208 = pneg %p207
    $region38: #{gyx_forward.14} parent=5 // pred_check_branch
      %210 = sbr.rel (%p208) target = $region40
    $region39: #{gyx_forward.14} parent=5 // pred_region
      %s211 = ssub.s32 %s9, 2
      // Predicated region
      $region41: #{gyx_forward.14} parent=39 // pred_check
        %p212 = pneg %p106
      $region42: #{gyx_forward.14} parent=39 // pred_check_branch
        %214 = sbr.rel (%p212) target = $region44
      $region43: #{gyx_forward.14} parent=39 // pred_region
        %s215 = smul.u32 2, %s15
        %p216 = scmp.lt.s32.totalorder %s215, 3
        %s217 = scalar_select %p216, %s215, 3
        %s218 = smul.addr %s217, 4
        %s219 = scalar_lea.vmem %s3, %s218
      $region44: #{gyx_forward.14} parent=39 // pred_fallthru
        _
    $region40: #{gyx_forward.14} parent=5 // pred_fallthru
      _
  $region6: #{gyx_forward.14} parent=0 // loop_footer
    %s13 = sadd.s32 1, %s9
  $region7: #{gyx_forward.14} parent=0 // loop_footer_branch
    %8 = sbr.rel target = $region3
  $region8: #{gyx_forward.14} parent=0 // loop_exit
    _

// kernel: gyx_forward.13
$region0: #{gyx_forward.13}
  #allocation0 [shape = 'u32[]', space=smem, size = 0x4, offset = 0x4, fixed_abs, tag = 'smem constant byte address 0x4 - core index']
  #allocation1 [shape = 'u32[72,128]{1,0:T(1,128)}', space=vmem, size = 0x9000, scoped, tag = 'internal scratch']
  #allocation2 [shape = 'f32[16,128]{1,0:T(8,128)}', space=vmem, size = 0x2000, scoped, tag = 'scratch operand']
  %s0 = inlined_call_operand.vmem [shape: bf16[32,576], index: 0, kind: input, shape index: {}]
  %s1 = inlined_call_operand.vmem [shape: bf16[576,128], index: 1, kind: input, shape index: {}]
  %s2 = inlined_call_operand.vmem [shape: f32[1,128], index: 2, kind: input, shape index: {}]
  %s3 = inlined_call_operand.vmem [shape: f32[32,128], index: 3, kind: output, shape index: {0}]
  %s4 = inlined_call_operand.vmem [shape: f32[2,1,128], index: 4, kind: output, shape index: {1}]
  %s5 = inlined_call_operand.vmem [shape: f32[2,1,128], index: 5, kind: output, shape index: {2}]
  %6 = xla_tuple %s3, %s4, %s5
  %s7 = sld [smem:[#allocation0]]
  $region69: #{gyx_forward.13} parent=0
    _
  %s9 = ssub.s32 1, %s7
  %s10 = scalar_select 0, %s9, %s7
  loop: start=0, step=1, limit=4
  $region2: #{gyx_forward.13} parent=0 // loop_pre_header
    _
  $region3: #{gyx_forward.13} parent=0 // loop_header
    %s12 = sphi 0, %s16
    %p13 = scmp.ge.s32.totalorder %s12, 4
    %s19 = sphi 0, %s38
    %s20 = sphi 0, %s34
    %s21 = sphi 0, %s30
    %s22 = sphi 0, %s19
    %s23 = sphi 0, %s20
    %s24 = sphi 0, %s21
    %s25 = sphi 0, %s22
    %s26 = sphi 0, %s23
    %s27 = sphi 0, %s24
    %s43 = sphi 0, %s45
    %s46 = sphi 0, %s43
    %s47 = sphi 0, %s46
    %s63 = sphi 0, %s47
    %s71 = sphi 0, %s73
    %s74 = sphi 0, %s71
    %s75 = sphi 0, %s74
    %s91 = sphi 0, %s75
    %s97 = sphi 0, %s99
    %s100 = sphi 0, %s97
    %s101 = sphi 0, %s100
    %s117 = sphi 0, %s101
    %s125 = sphi 0, %s127
    %s128 = sphi 0, %s125
    %s129 = sphi 0, %s128
    %s145 = sphi 0, %s129
    %s153 = sphi 0, %s155
    %s156 = sphi 0, %s153
    %s157 = sphi 0, %s156
    %s173 = sphi 0, %s157
    %s181 = sphi 0, %s183
    %s184 = sphi 0, %s181
    %s185 = sphi 0, %s184
    %s201 = sphi 0, %s185
  $region4: #{gyx_forward.13} parent=0 // loop_header_branch
    %15 = sbr.rel (%p13) target = $region8
  $region5: #{gyx_forward.13} parent=0 // loop_body
    %s17 = ssub.s32 %s12, 1
    %s18 = ssub.s32 %s12, 2
    %s28 = sadd.s32 1, %s21
    %p29 = scmp.ge.s32.totalorder %s28, 1
    %s30 = scalar_select %p29, 0, %s28
    %s31 = sadd.s32 1, %s20
    %s32 = scalar_select %p29, %s31, %s20
    %p33 = scmp.ge.s32.totalorder %s32, 1
    %s34 = scalar_select %p33, 0, %s32
    %s35 = sadd.s32 1, %s19
    %s36 = scalar_select %p33, %s35, %s19
    %p37 = scmp.ge.s32.totalorder %s36, 2
    %s38 = scalar_select %p37, 0, %s36
    %s39 = ssub.s32 %s19, %s38
    %s40 = ssub.s32 %s21, %s30
    %s41 = sor.u32 %s39, %s40
    %p42 = scmp.eq.s32.totalorder %s41, 0
    %s44 = sadd.s32 %s43, 1
    %s45 = scalar_select %p42, %s43, %s44
    %p48 = pneg %p42
    %p49 = scmp.eq.s32.totalorder %s12, 1
    %p50 = por %p48, %p49
    %p51 = scmp.ne.s32.totalorder %s43, %s46
    %p52 = scmp.eq.s32.totalorder %s12, 0
    %p53 = por %p51, %p52
    %p54 = scmp.ne.s32.totalorder %s43, %s46
    %p55 = scmp.eq.s32.totalorder %s17, 1
    %p56 = por %p54, %p55
    %p57 = scmp.ne.s32.totalorder %s46, %s47
    %p58 = scmp.eq.s32.totalorder %s17, 0
    %p59 = por %p57, %p58
    %p60 = scmp.ne.s32.totalorder %s46, %s47
    %p61 = scmp.eq.s32.totalorder %s18, 1
    %p62 = por %p60, %p61
    %p64 = scmp.ne.s32.totalorder %s47, %s63
    %p65 = scmp.eq.s32.totalorder %s18, 0
    %p66 = por %p64, %p65
    %s67 = ssub.s32 %s21, %s30
    %s68 = ssub.s32 %s20, %s34
    %s69 = sor.u32 %s67, %s68
    %p70 = scmp.eq.s32.totalorder %s69, 0
    %s72 = sadd.s32 %s71, 1
    %s73 = scalar_select %p70, %s71, %s72
    %p76 = pneg %p70
    %p77 = scmp.eq.s32.totalorder %s12, 1
    %p78 = por %p76, %p77
    %p79 = scmp.ne.s32.totalorder %s71, %s74
    %p80 = scmp.eq.s32.totalorder %s12, 0
    %p81 = por %p79, %p80
    %p82 = scmp.ne.s32.totalorder %s71, %s74
    %p83 = scmp.eq.s32.totalorder %s17, 1
    %p84 = por %p82, %p83
    %p85 = scmp.ne.s32.totalorder %s74, %s75
    %p86 = scmp.eq.s32.totalorder %s17, 0
    %p87 = por %p85, %p86
    %p88 = scmp.ne.s32.totalorder %s74, %s75
    %p89 = scmp.eq.s32.totalorder %s18, 1
    %p90 = por %p88, %p89
    %p92 = scmp.ne.s32.totalorder %s75, %s91
    %p93 = scmp.eq.s32.totalorder %s18, 0
    %p94 = por %p92, %p93
    %s95 = ssub.s32 %s20, %s34
    %p96 = scmp.eq.s32.totalorder %s95, 0
    %s98 = sadd.s32 %s97, 1
    %s99 = scalar_select %p96, %s97, %s98
    %p102 = pneg %p96
    %p103 = scmp.eq.s32.totalorder %s12, 1
    %p104 = por %p102, %p103
    %p105 = scmp.ne.s32.totalorder %s97, %s100
    %p106 = scmp.eq.s32.totalorder %s12, 0
    %p107 = por %p105, %p106
    %p108 = scmp.ne.s32.totalorder %s97, %s100
    %p109 = scmp.eq.s32.totalorder %s17, 1
    %p110 = por %p108, %p109
    %p111 = scmp.ne.s32.totalorder %s100, %s101
    %p112 = scmp.eq.s32.totalorder %s17, 0
    %p113 = por %p111, %p112
    %p114 = scmp.ne.s32.totalorder %s100, %s101
    %p115 = scmp.eq.s32.totalorder %s18, 1
    %p116 = por %p114, %p115
    %p118 = scmp.ne.s32.totalorder %s101, %s117
    %p119 = scmp.eq.s32.totalorder %s18, 0
    %p120 = por %p118, %p119
    %s121 = ssub.s32 %s19, %s38
    %s122 = ssub.s32 %s20, %s34
    %s123 = sor.u32 %s121, %s122
    %p124 = scmp.eq.s32.totalorder %s123, 0
    %s126 = sadd.s32 %s125, 1
    %s127 = scalar_select %p124, %s125, %s126
    %p130 = pneg %p124
    %p131 = scmp.eq.s32.totalorder %s12, 1
    %p132 = por %p130, %p131
    %p133 = scmp.ne.s32.totalorder %s125, %s128
    %p134 = scmp.eq.s32.totalorder %s12, 0
    %p135 = por %p133, %p134
    %p136 = scmp.ne.s32.totalorder %s125, %s128
    %p137 = scmp.eq.s32.totalorder %s17, 1
    %p138 = por %p136, %p137
    %p139 = scmp.ne.s32.totalorder %s128, %s129
    %p140 = scmp.eq.s32.totalorder %s17, 0
    %p141 = por %p139, %p140
    %p142 = scmp.ne.s32.totalorder %s128, %s129
    %p143 = scmp.eq.s32.totalorder %s18, 1
    %p144 = por %p142, %p143
    %p146 = scmp.ne.s32.totalorder %s129, %s145
    %p147 = scmp.eq.s32.totalorder %s18, 0
    %p148 = por %p146, %p147
    %s149 = ssub.s32 %s19, %s38
    %s150 = ssub.s32 %s20, %s34
    %s151 = sor.u32 %s149, %s150
    %p152 = scmp.eq.s32.totalorder %s151, 0
    %s154 = sadd.s32 %s153, 1
    %s155 = scalar_select %p152, %s153, %s154
    %p158 = pneg %p152
    %p159 = scmp.eq.s32.totalorder %s12, 1
    %p160 = por %p158, %p159
    %p161 = scmp.ne.s32.totalorder %s153, %s156
    %p162 = scmp.eq.s32.totalorder %s12, 0
    %p163 = por %p161, %p162
    %p164 = scmp.ne.s32.totalorder %s153, %s156
    %p165 = scmp.eq.s32.totalorder %s17, 1
    %p166 = por %p164, %p165
    %p167 = scmp.ne.s32.totalorder %s156, %s157
    %p168 = scmp.eq.s32.totalorder %s17, 0
    %p169 = por %p167, %p168
    %p170 = scmp.ne.s32.totalorder %s156, %s157
    %p171 = scmp.eq.s32.totalorder %s18, 1
    %p172 = por %p170, %p171
    %p174 = scmp.ne.s32.totalorder %s157, %s173
    %p175 = scmp.eq.s32.totalorder %s18, 0
    %p176 = por %p174, %p175
    %s177 = ssub.s32 %s19, %s38
    %s178 = ssub.s32 %s20, %s34
    %s179 = sor.u32 %s177, %s178
    %p180 = scmp.eq.s32.totalorder %s179, 0
    %s182 = sadd.s32 %s181, 1
    %s183 = scalar_select %p180, %s181, %s182
    %p186 = pneg %p180
    %p187 = scmp.eq.s32.totalorder %s12, 1
    %p188 = por %p186, %p187
    %p189 = scmp.ne.s32.totalorder %s181, %s184
    %p190 = scmp.eq.s32.totalorder %s12, 0
    %p191 = por %p189, %p190
    %p192 = scmp.ne.s32.totalorder %s181, %s184
    %p193 = scmp.eq.s32.totalorder %s17, 1
    %p194 = por %p192, %p193
    %p195 = scmp.ne.s32.totalorder %s184, %s185
    %p196 = scmp.eq.s32.totalorder %s17, 0
    %p197 = por %p195, %p196
    %p198 = scmp.ne.s32.totalorder %s184, %s185
    %p199 = scmp.eq.s32.totalorder %s18, 1
    %p200 = por %p198, %p199
    %p202 = scmp.ne.s32.totalorder %s185, %s201
    %p203 = scmp.eq.s32.totalorder %s18, 0
    %p204 = por %p202, %p203
    %p205 = scmp.le.s32.totalorder 1, %s12
    %p206 = scmp.lt.s32.totalorder %s12, 3
    %p207 = pnand %p205, %p206
    %p208 = pneg %p207
    // Predicated region
    $region9: #{gyx_forward.13} parent=5 // pred_check
      _
    $region10: #{gyx_forward.13} parent=5 // pred_check_branch
      %210 = sbr.rel (%p207) target = $region12
    $region11: #{gyx_forward.13} parent=5 // pred_region
      %s211 = ssub.s32 %s12, 1
      // Predicated region
      $region13: #{gyx_forward.13} parent=11 // pred_check
        %p212 = pneg %p87
      $region14: #{gyx_forward.13} parent=11 // pred_check_branch
        %214 = sbr.rel (%p212) target = $region16
      $region15: #{gyx_forward.13} parent=11 // pred_region
        %s215 = smul.u32 72, %s24
        %p216 = scmp.lt.s32.totalorder %s215, 71
        %s217 = scalar_select %p216, %s215, 71
        %p218 = scmp.lt.s32.totalorder %s23, 0
        %s219 = scalar_select %p218, %s23, 0
        %s220 = sadd.s32 %s219, %s217
        %s221 = smul.addr %s220, 4
        %s222 = scalar_lea.vmem %s1, %s221
        %s223 = smul.u32 72, %s24
      $region16: #{gyx_forward.13} parent=11 // pred_fallthru
        _
      // Predicated region
      $region17: #{gyx_forward.13} parent=11 // pred_check
        %p224 = pneg %p113
      $region18: #{gyx_forward.13} parent=11 // pred_check_branch
        %226 = sbr.rel (%p224) target = $region20
      $region19: #{gyx_forward.13} parent=11 // pred_region
        %p227 = scmp.lt.s32.totalorder %s23, 0
        %s228 = scalar_select %p227, %s23, 0
        %s229 = scalar_lea.vmem %s2, %s228
      $region20: #{gyx_forward.13} parent=11 // pred_fallthru
        _
    $region12: #{gyx_forward.13} parent=5 // pred_fallthru
      _
    %p230 = scmp.lt.s32.totalorder %s12, 2
    // Predicated region
    $region21: #{gyx_forward.13} parent=5 // pred_check
      %p231 = pneg %p230
    $region22: #{gyx_forward.13} parent=5 // pred_check_branch
      %233 = sbr.rel (%p231) target = $region24
    $region23: #{gyx_forward.13} parent=5 // pred_region
      // Predicated region
      $region25: #{gyx_forward.13} parent=23 // pred_check
        %p234 = pneg %p53
      $region26: #{gyx_forward.13} parent=23 // pred_check_branch
        %236 = sbr.rel (%p234) target = $region28
      $region27: #{gyx_forward.13} parent=23 // pred_region
        %s237 = smul.u32 2, %s19
        %s238 = smul.u32 5, %s21
        %p239 = scmp.lt.s32.totalorder %s237, 3
        %s240 = scalar_select %p239, %s237, 3
        %p241 = scmp.lt.s32.totalorder %s238, 4
        %s242 = scalar_select %p241, %s238, 4
        %s243 = smul.addr %s240, 5
        %s244 = sadd.s32 %s242, %s243
        %s245 = smul.addr %s244, 4
        %s246 = scalar_lea.vmem %s0, %s245
        %s247 = smul.u32 2, %s19
        %s248 = smul.u32 5, %s21
      $region28: #{gyx_forward.13} parent=23 // pred_fallthru
        _
    $region24: #{gyx_forward.13} parent=5 // pred_fallthru
      _
    %p249 = scmp.le.s32.totalorder 1, %s12
    %p250 = scmp.lt.s32.totalorder %s12, 3
    %p251 = pnand %p249, %p250
    %p252 = pneg %p251
    // Predicated region
    $region29: #{gyx_forward.13} parent=5 // pred_check
      _
    $region30: #{gyx_forward.13} parent=5 // pred_check_branch
      %254 = sbr.rel (%p251) target = $region32
    $region31: #{gyx_forward.13} parent=5 // pred_region
      %s255 = ssub.s32 %s12, 1
      %s256 = smul.u32 2, %s22
      %s257 = smul.u32 5, %s24
      %p258 = scmp.lt.s32.totalorder %s256, 3
      %s259 = scalar_select %p258, %s256, 3
      %p260 = scmp.lt.s32.totalorder %s257, 4
      %s261 = scalar_select %p260, %s257, 4
      %s262 = smul.addr %s259, 5
      %s263 = sadd.s32 %s261, %s262
      %s264 = smul.addr %s263, 4
      %s265 = scalar_lea.vmem %s0, %s264
      %p266 = pneg %p59
      %p267 = pneg %p56
      %s268 = smul.u32 72, %s24
      %p269 = scmp.lt.s32.totalorder %s268, 71
      %s270 = scalar_select %p269, %s268, 71
      %p271 = scmp.lt.s32.totalorder %s23, 0
      %s272 = scalar_select %p271, %s23, 0
      %s273 = sadd.s32 %s272, %s270
      %s274 = smul.addr %s273, 4
      %s275 = scalar_lea.vmem %s1, %s274
      %p276 = pneg %p87
      %p277 = pneg %p84
      %p278 = scmp.lt.s32.totalorder %s23, 0
      %s279 = scalar_select %p278, %s23, 0
      %s280 = scalar_lea.vmem %s2, %s279
      %p281 = pneg %p113
      %p282 = pneg %p110
      %p283 = pneg %p141
      %p284 = pneg %p138
      %s285 = smul.u32 2, %s22
      %p286 = scmp.lt.s32.totalorder %s285, 3
      %s287 = scalar_select %p286, %s285, 3
      %p288 = scmp.lt.s32.totalorder %s23, 0
      %s289 = scalar_select %p288, %s23, 0
      %s290 = sadd.s32 %s289, %s287
      %s291 = smul.addr %s290, 8
      %s292 = scalar_lea.vmem %s3, %s291
      %p293 = pneg %p169
      %p294 = pneg %p166
      %p295 = scmp.lt.s32.totalorder %s22, 1
      %s296 = scalar_select %p295, %s22, 1
      %p297 = scmp.lt.s32.totalorder %s23, 0
      %s298 = scalar_select %p297, %s23, 0
      %s299 = sadd.s32 %s298, %s296
      %s300 = scalar_lea.vmem %s4, %s299
      %p301 = pneg %p197
      %p302 = pneg %p194
      %p303 = scmp.lt.s32.totalorder %s22, 1
      %s304 = scalar_select %p303, %s22, 1
      %p305 = scmp.lt.s32.totalorder %s23, 0
      %s306 = scalar_select %p305, %s23, 0
      %s307 = sadd.s32 %s306, %s304
      %s308 = scalar_lea.vmem %s5, %s307
      %s309 = smul.u32 2, %s22
      %s310 = smul.u32 5, %s24
      %p311 = scmp.lt.s32.totalorder %s309, 3
      %s312 = scalar_select %p311, %s309, 3
      %p313 = scmp.lt.s32.totalorder %s310, 4
      %s314 = scalar_select %p313, %s310, 4
      %s315 = smul.addr %s312, 5
      %s316 = sadd.s32 %s314, %s315
      %s317 = smul.addr %s316, 4
      %s318 = scalar_lea.vmem %s0, %s317
      %s319 = smul.u32 2, %s22
      %s320 = smul.u32 5, %s24
      %s321 = smul.u32 72, %s24
      %p322 = scmp.lt.s32.totalorder %s321, 71
      %s323 = scalar_select %p322, %s321, 71
      %p324 = scmp.lt.s32.totalorder %s23, 0
      %s325 = scalar_select %p324, %s23, 0
      %s326 = sadd.s32 %s325, %s323
      %s327 = smul.addr %s326, 4
      %s328 = scalar_lea.vmem %s1, %s327
      %s329 = smul.u32 72, %s24
      %p330 = scmp.lt.s32.totalorder %s23, 0
      %s331 = scalar_select %p330, %s23, 0
      %s332 = scalar_lea.vmem %s2, %s331
      %s333 = smul.u32 2, %s22
      %p334 = scmp.lt.s32.totalorder %s333, 3
      %s335 = scalar_select %p334, %s333, 3
      %p336 = scmp.lt.s32.totalorder %s23, 0
      %s337 = scalar_select %p336, %s23, 0
      %s338 = sadd.s32 %s337, %s335
      %s339 = smul.addr %s338, 8
      %s340 = scalar_lea.vmem %s3, %s339
      %s341 = smul.u32 2, %s22
      %p342 = scmp.lt.s32.totalorder %s22, 1
      %s343 = scalar_select %p342, %s22, 1
      %p344 = scmp.lt.s32.totalorder %s23, 0
      %s345 = scalar_select %p344, %s23, 0
      %s346 = sadd.s32 %s345, %s343
      %s347 = scalar_lea.vmem %s4, %s346
      %p348 = scmp.lt.s32.totalorder %s22, 1
      %s349 = scalar_select %p348, %s22, 1
      %p350 = scmp.lt.s32.totalorder %s23, 0
      %s351 = scalar_select %p350, %s23, 0
      %s352 = sadd.s32 %s351, %s349
      %s353 = scalar_lea.vmem %s5, %s352
      %p355 = scmp.eq.s32.totalorder %s24, 0
      // Predicated region
      $region33: #{gyx_forward.13} parent=31 // pred_check
        %p356 = pneg %p355
      $region34: #{gyx_forward.13} parent=31 // pred_check_branch
        %358 = sbr.rel (%p356) target = $region36
      $region35: #{gyx_forward.13} parent=31 // pred_region
        %359 = vst [vmem:[#allocation2] sm:$0xff] 0.0
        %360 = vst [vmem:[#allocation2 + $0x8] sm:$0xff] 0.0
      $region36: #{gyx_forward.13} parent=31 // pred_fallthru
        _
      %v361 = vld [vmem:[#allocation2] sm:$0xff]
      %v362 = vld [vmem:[#allocation2 + $0x8] sm:$0xff]
      %v363 = vld [vmem:[%s318] sm:$0xff]
      %v364 = vld [vmem:[%s318 + $0x8] sm:$0xff]
      %v365 = vld [vmem:[%s318 + $0x10] sm:$0xf]
      %v366 = vld [vmem:[%s318 + $0x14] sm:$0xff]
      %v367 = vld [vmem:[%s318 + $0x1c] sm:$0xff]
      %v368 = vld [vmem:[%s318 + $0x24] sm:$0xf]
      %v369 = vld [vmem:[%s328] sm:$0xf]
      %v370 = vld [vmem:[%s328 + $0x4] sm:$0xf]
      %v371 = vld [vmem:[%s328 + $0x8] sm:$0xf]
      %v372 = vld [vmem:[%s328 + $0xc] sm:$0xf]
      %v373 = vld [vmem:[%s328 + $0x10] sm:$0xf]
      %v374 = vld [vmem:[%s328 + $0x14] sm:$0xf]
      %v375 = vld [vmem:[%s328 + $0x18] sm:$0xf]
      %v376 = vld [vmem:[%s328 + $0x1c] sm:$0xf]
      %v377 = vld [vmem:[%s328 + $0x20] sm:$0xf]
      %v378 = vld [vmem:[%s328 + $0x24] sm:$0xf]
      %v379 = vld [vmem:[%s328 + $0x28] sm:$0xf]
      %v380 = vld [vmem:[%s328 + $0x2c] sm:$0xf]
      %v381 = vld [vmem:[%s328 + $0x30] sm:$0xf]
      %v382 = vld [vmem:[%s328 + $0x34] sm:$0xf]
      %v383 = vld [vmem:[%s328 + $0x38] sm:$0xf]
      %v384 = vld [vmem:[%s328 + $0x3c] sm:$0xf]
      %v385 = vld [vmem:[%s328 + $0x40] sm:$0xf]
      %v386 = vld [vmem:[%s328 + $0x44] sm:$0xf]
      %v387 = vld [vmem:[%s328 + $0x48] sm:$0xf]
      %v388 = vld [vmem:[%s328 + $0x4c] sm:$0xf]
      %v389 = vld [vmem:[%s328 + $0x50] sm:$0xf]
      %v390 = vld [vmem:[%s328 + $0x54] sm:$0xf]
      %v391 = vld [vmem:[%s328 + $0x58] sm:$0xf]
      %v392 = vld [vmem:[%s328 + $0x5c] sm:$0xf]
      %v393 = vld [vmem:[%s328 + $0x60] sm:$0xf]
      %v394 = vld [vmem:[%s328 + $0x64] sm:$0xf]
      %v395 = vld [vmem:[%s328 + $0x68] sm:$0xf]
      %v396 = vld [vmem:[%s328 + $0x6c] sm:$0xf]
      %v397 = vld [vmem:[%s328 + $0x70] sm:$0xf]
      %v398 = vld [vmem:[%s328 + $0x74] sm:$0xf]
      %v399 = vld [vmem:[%s328 + $0x78] sm:$0xf]
      %v400 = vld [vmem:[%s328 + $0x7c] sm:$0xf]
      %v401 = vld [vmem:[%s328 + $0x80] sm:$0xf]
      %v402 = vld [vmem:[%s328 + $0x84] sm:$0xf]
      %v403 = vld [vmem:[%s328 + $0x88] sm:$0xf]
      %v404 = vld [vmem:[%s328 + $0x8c] sm:$0xf]
      %v405 = vld [vmem:[%s328 + $0x90] sm:$0xf]
      %v406 = vld [vmem:[%s328 + $0x94] sm:$0xf]
      %v407 = vld [vmem:[%s328 + $0x98] sm:$0xf]
      %v408 = vld [vmem:[%s328 + $0x9c] sm:$0xf]
      %v409 = vld [vmem:[%s328 + $0xa0] sm:$0xf]
      %v410 = vld [vmem:[%s328 + $0xa4] sm:$0xf]
      %v411 = vld [vmem:[%s328 + $0xa8] sm:$0xf]
      %v412 = vld [vmem:[%s328 + $0xac] sm:$0xf]
      %v413 = vld [vmem:[%s328 + $0xb0] sm:$0xf]
      %v414 = vld [vmem:[%s328 + $0xb4] sm:$0xf]
      %v415 = vld [vmem:[%s328 + $0xb8] sm:$0xf]
      %v416 = vld [vmem:[%s328 + $0xbc] sm:$0xf]
      %v417 = vld [vmem:[%s328 + $0xc0] sm:$0xf]
      %v418 = vld [vmem:[%s328 + $0xc4] sm:$0xf]
      %v419 = vld [vmem:[%s328 + $0xc8] sm:$0xf]
      %v420 = vld [vmem:[%s328 + $0xcc] sm:$0xf]
      %v421 = vld [vmem:[%s328 + $0xd0] sm:$0xf]
      %v422 = vld [vmem:[%s328 + $0xd4] sm:$0xf]
      %v423 = vld [vmem:[%s328 + $0xd8] sm:$0xf]
      %v424 = vld [vmem:[%s328 + $0xdc] sm:$0xf]
      %v425 = vld [vmem:[%s328 + $0xe0] sm:$0xf]
      %v426 = vld [vmem:[%s328 + $0xe4] sm:$0xf]
      %v427 = vld [vmem:[%s328 + $0xe8] sm:$0xf]
      %v428 = vld [vmem:[%s328 + $0xec] sm:$0xf]
      %v429 = vld [vmem:[%s328 + $0xf0] sm:$0xf]
      %v430 = vld [vmem:[%s328 + $0xf4] sm:$0xf]
      %v431 = vld [vmem:[%s328 + $0xf8] sm:$0xf]
      %v432 = vld [vmem:[%s328 + $0xfc] sm:$0xf]
      %v433 = vld [vmem:[%s328 + $0x100] sm:$0xf]
      %v434 = vld [vmem:[%s328 + $0x104] sm:$0xf]
      %v435 = vld [vmem:[%s328 + $0x108] sm:$0xf]
      %v436 = vld [vmem:[%s328 + $0x10c] sm:$0xf]
      %v437 = vld [vmem:[%s328 + $0x110] sm:$0xf]
      %v438 = vld [vmem:[%s328 + $0x114] sm:$0xf]
      %v439 = vld [vmem:[%s328 + $0x118] sm:$0xf]
      %v440 = vld [vmem:[%s328 + $0x11c] sm:$0xf]
      %v447 = vunpack.c.l.b16 %v363
      %v448 = vunpack.c.h.b16 %v363
      %v449 = vunpack.c.l.b16 %v364
      %v450 = vunpack.c.h.b16 %v364
      %v451 = vunpack.c.l.b16 %v365
      %v452 = vunpack.c.l.b16 %v366
      %v453 = vunpack.c.h.b16 %v366
      %v454 = vunpack.c.l.b16 %v367
      %v455 = vunpack.c.h.b16 %v367
      %v456 = vunpack.c.l.b16 %v368
      %v457 = vpack.c.b16 %v452, %v447
      %v458 = vpack.c.b16 %v453, %v448
      %v459 = vpack.c.b16 %v454, %v449
      %v460 = vpack.c.b16 %v455, %v450
      %v461 = vpack.c.b16 %v456, %v451
      %v538 = vunpack.c.l.b16 %v369
      %v539 = vunpack.c.l.b16 %v370
      %v540 = vunpack.c.l.b16 %v371
      %v541 = vunpack.c.l.b16 %v372
      %v542 = vunpack.c.l.b16 %v373
      %v543 = vunpack.c.l.b16 %v374
      %v544 = vunpack.c.l.b16 %v375
      %v545 = vunpack.c.l.b16 %v376
      %v546 = vunpack.c.l.b16 %v377
      %v547 = vunpack.c.l.b16 %v378
      %v548 = vunpack.c.l.b16 %v379
      %v549 = vunpack.c.l.b16 %v380
      %v550 = vunpack.c.l.b16 %v381
      %v551 = vunpack.c.l.b16 %v382
      %v552 = vunpack.c.l.b16 %v383
      %v553 = vunpack.c.l.b16 %v384
      %v554 = vunpack.c.l.b16 %v385
      %v555 = vunpack.c.l.b16 %v386
      %v556 = vunpack.c.l.b16 %v387
      %v557 = vunpack.c.l.b16 %v388
      %v558 = vunpack.c.l.b16 %v389
      %v559 = vunpack.c.l.b16 %v390
      %v560 = vunpack.c.l.b16 %v391
      %v561 = vunpack.c.l.b16 %v392
      %v562 = vunpack.c.l.b16 %v393
      %v563 = vunpack.c.l.b16 %v394
      %v564 = vunpack.c.l.b16 %v395
      %v565 = vunpack.c.l.b16 %v396
      %v566 = vunpack.c.l.b16 %v397
      %v567 = vunpack.c.l.b16 %v398
      %v568 = vunpack.c.l.b16 %v399
      %v569 = vunpack.c.l.b16 %v400
      %v570 = vunpack.c.l.b16 %v401
      %v571 = vunpack.c.l.b16 %v402
      %v572 = vunpack.c.l.b16 %v403
      %v573 = vunpack.c.l.b16 %v404
      %v574 = vunpack.c.l.b16 %v405
      %v575 = vunpack.c.l.b16 %v406
      %v576 = vunpack.c.l.b16 %v407
      %v577 = vunpack.c.l.b16 %v408
      %v578 = vunpack.c.l.b16 %v409
      %v579 = vunpack.c.l.b16 %v410
      %v580 = vunpack.c.l.b16 %v411
      %v581 = vunpack.c.l.b16 %v412
      %v582 = vunpack.c.l.b16 %v413
      %v583 = vunpack.c.l.b16 %v414
      %v584 = vunpack.c.l.b16 %v415
      %v585 = vunpack.c.l.b16 %v416
      %v586 = vunpack.c.l.b16 %v417
      %v587 = vunpack.c.l.b16 %v418
      %v588 = vunpack.c.l.b16 %v419
      %v589 = vunpack.c.l.b16 %v420
      %v590 = vunpack.c.l.b16 %v421
      %v591 = vunpack.c.l.b16 %v422
      %v592 = vunpack.c.l.b16 %v423
      %v593 = vunpack.c.l.b16 %v424
      %v594 = vunpack.c.l.b16 %v425
      %v595 = vunpack.c.l.b16 %v426
      %v596 = vunpack.c.l.b16 %v427
      %v597 = vunpack.c.l.b16 %v428
      %v598 = vunpack.c.l.b16 %v429
      %v599 = vunpack.c.l.b16 %v430
      %v600 = vunpack.c.l.b16 %v431
      %v601 = vunpack.c.l.b16 %v432
      %v602 = vunpack.c.l.b16 %v433
      %v603 = vunpack.c.l.b16 %v434
      %v604 = vunpack.c.l.b16 %v435
      %v605 = vunpack.c.l.b16 %v436
      %v606 = vunpack.c.l.b16 %v437
      %v607 = vunpack.c.l.b16 %v438
      %v608 = vunpack.c.l.b16 %v439
      %v609 = vunpack.c.l.b16 %v440
      %v610 = vpack.c.b16 %v539, %v538
      %v611 = vpack.c.b16 %v541, %v540
      %v612 = vpack.c.b16 %v543, %v542
      %v613 = vpack.c.b16 %v545, %v544
      %v614 = vpack.c.b16 %v547, %v546
      %v615 = vpack.c.b16 %v549, %v548
      %v616 = vpack.c.b16 %v551, %v550
      %v617 = vpack.c.b16 %v553, %v552
      %v618 = vpack.c.b16 %v555, %v554
      %v619 = vpack.c.b16 %v557, %v556
      %v620 = vpack.c.b16 %v559, %v558
      %v621 = vpack.c.b16 %v561, %v560
      %v622 = vpack.c.b16 %v563, %v562
      %v623 = vpack.c.b16 %v565, %v564
      %v624 = vpack.c.b16 %v567, %v566
      %v625 = vpack.c.b16 %v569, %v568
      %v626 = vpack.c.b16 %v571, %v570
      %v627 = vpack.c.b16 %v573, %v572
      %v628 = vpack.c.b16 %v575, %v574
      %v629 = vpack.c.b16 %v577, %v576
      %v630 = vpack.c.b16 %v579, %v578
      %v631 = vpack.c.b16 %v581, %v580
      %v632 = vpack.c.b16 %v583, %v582
      %v633 = vpack.c.b16 %v585, %v584
      %v634 = vpack.c.b16 %v587, %v586
      %v635 = vpack.c.b16 %v589, %v588
      %v636 = vpack.c.b16 %v591, %v590
      %v637 = vpack.c.b16 %v593, %v592
      %v638 = vpack.c.b16 %v595, %v594
      %v639 = vpack.c.b16 %v597, %v596
      %v640 = vpack.c.b16 %v599, %v598
      %v641 = vpack.c.b16 %v601, %v600
      %v642 = vpack.c.b16 %v603, %v602
      %v643 = vpack.c.b16 %v605, %v604
      %v644 = vpack.c.b16 %v607, %v606
      %v645 = vpack.c.b16 %v609, %v608
      %vm682 = vcmask 523264
      %v684 = vsel %vm682, %v461, 0
      %686 = vmatpush.bf16.msra.mxu0 %v617
      %687 = vmatpush.bf16.msra.mxu0 %v616
      %688 = vmatpush.bf16.msra.mxu0 %v615
      %689 = vmatpush.bf16.msra.mxu0 %v614
      %690 = vmatpush.bf16.msra.mxu0 %v613
      %691 = vmatpush.bf16.msra.mxu0 %v612
      %692 = vmatpush.bf16.msra.mxu0 %v611
      %693 = vmatpush.bf16.msra.mxu0 %v610
      %694 = vmatmul.bf16.gmra.mxu0 %v457
      %v695 = vpop.f32.mrf.mxu0
      %v696 = vadd.f32 0.0, %v695
      %v697 = vpop.f32.mrf.mxu0
      %v698 = vadd.f32 0.0, %v697
      %699 = vdwg.mxu0
      %700 = vmatpush.bf16.msra.mxu0 %v625
      %701 = vmatpush.bf16.msra.mxu0 %v624
      %702 = vmatpush.bf16.msra.mxu0 %v623
      %703 = vmatpush.bf16.msra.mxu0 %v622
      %704 = vmatpush.bf16.msra.mxu0 %v621
      %705 = vmatpush.bf16.msra.mxu0 %v620
      %706 = vmatpush.bf16.msra.mxu0 %v619
      %707 = vmatpush.bf16.msra.mxu0 %v618
      %708 = vmatmul.bf16.gmra.mxu0 %v458
      %v709 = vpop.f32.mrf.mxu0
      %v710 = vadd.f32 %v696, %v709
      %v711 = vpop.f32.mrf.mxu0
      %v712 = vadd.f32 %v698, %v711
      %713 = vdwg.mxu0
      %714 = vmatpush.bf16.msra.mxu0 %v633
      %715 = vmatpush.bf16.msra.mxu0 %v632
      %716 = vmatpush.bf16.msra.mxu0 %v631
      %717 = vmatpush.bf16.msra.mxu0 %v630
      %718 = vmatpush.bf16.msra.mxu0 %v629
      %719 = vmatpush.bf16.msra.mxu0 %v628
      %720 = vmatpush.bf16.msra.mxu0 %v627
      %721 = vmatpush.bf16.msra.mxu0 %v626
      %722 = vmatmul.bf16.gmra.mxu0 %v459
      %v723 = vpop.f32.mrf.mxu0
      %v724 = vadd.f32 %v710, %v723
      %v725 = vpop.f32.mrf.mxu0
      %v726 = vadd.f32 %v712, %v725
      %727 = vdwg.mxu0
      %728 = vmatpush.bf16.msra.mxu0 %v641
      %729 = vmatpush.bf16.msra.mxu0 %v640
      %730 = vmatpush.bf16.msra.mxu0 %v639
      %731 = vmatpush.bf16.msra.mxu0 %v638
      %732 = vmatpush.bf16.msra.mxu0 %v637
      %733 = vmatpush.bf16.msra.mxu0 %v636
      %734 = vmatpush.bf16.msra.mxu0 %v635
      %735 = vmatpush.bf16.msra.mxu0 %v634
      %736 = vmatmul.bf16.gmra.mxu0 %v460
      %v737 = vpop.f32.mrf.mxu0
      %v738 = vadd.f32 %v724, %v737
      %v739 = vpop.f32.mrf.mxu0
      %v740 = vadd.f32 %v726, %v739
      %741 = vdwg.mxu0
      %742 = vmatpush.bf16.msra.mxu0 0
      %743 = vmatpush.bf16.msra.mxu0 0
      %744 = vmatpush.bf16.msra.mxu0 0
      %745 = vmatpush.bf16.msra.mxu0 0
      %746 = vmatpush.bf16.msra.mxu0 %v645
      %747 = vmatpush.bf16.msra.mxu0 %v644
      %748 = vmatpush.bf16.msra.mxu0 %v643
      %749 = vmatpush.bf16.msra.mxu0 %v642
      %750 = vmatmul.bf16.gmra.mxu0 %v684
      %v751 = vpop.f32.mrf.mxu0
      %v752 = vadd.f32 %v738, %v751
      %v753 = vpop.f32.mrf.mxu0
      %v754 = vadd.f32 %v740, %v753
      %755 = vdwg.mxu0
      %v756 = vadd.f32 %v361, %v752
      %v757 = vadd.f32 %v362, %v754
      %758 = vst [vmem:[#allocation2] sm:$0xff] %v756
      %759 = vst [vmem:[#allocation2 + $0x8] sm:$0xff] %v757
      // Predicated region
      $region37: #{gyx_forward.13} parent=31 // pred_check
        %p760 = pneg %p355
      $region38: #{gyx_forward.13} parent=31 // pred_check_branch
        %762 = sbr.rel (%p760) target = $region40
      $region39: #{gyx_forward.13} parent=31 // pred_region
        %v763 = vld [vmem:[#allocation2] sm:$0xff]
        %v764 = vld [vmem:[#allocation2 + $0x8] sm:$0xff]
        %v765 = vadd.f32 %v763, %v764
        %v766 = vrot.slane %v765, 4
        %v767 = vadd.f32 %v765, %v766
        %v768 = vrot.slane %v767, 2
        %v769 = vadd.f32 %v767, %v768
        %v770 = vrot.slane %v769, 1
        %v771 = vadd.f32 %v769, %v770
        %v772 = vmul.f32 %v763, %v763
        %v773 = vmul.f32 %v764, %v764
        %v774 = vadd.f32 %v772, %v773
        %v775 = vrot.slane %v774, 4
        %v776 = vadd.f32 %v774, %v775
        %v777 = vrot.slane %v776, 2
        %v778 = vadd.f32 %v776, %v777
        %v779 = vrot.slane %v778, 1
        %v780 = vadd.f32 %v778, %v779
        %781 = vst [vmem:[%s347] sm:$0x1] %v771
        %782 = vst [vmem:[%s353] sm:$0x1] %v780
        %v783 = vld [vmem:[%s332] sm:$0x1]
        %v785 = vperm.slane %v783, 0
        %v787 = vadd.f32 %v763, %v785
        %v788 = vadd.f32 %v764, %v785
        %789 = vst [vmem:[%s340] sm:$0xff] %v787
        %790 = vst [vmem:[%s340 + $0x8] sm:$0xff] %v788
      $region40: #{gyx_forward.13} parent=31 // pred_fallthru
        _
      %s791 = smul.u32 2, %s22
      %p792 = scmp.lt.s32.totalorder %s791, 3
      %s793 = scalar_select %p792, %s791, 3
      %p794 = scmp.lt.s32.totalorder %s23, 0
      %s795 = scalar_select %p794, %s23, 0
      %s796 = sadd.s32 %s795, %s793
      %s797 = smul.addr %s796, 8
      %s798 = scalar_lea.vmem %s3, %s797
      %p799 = scmp.lt.s32.totalorder %s22, 1
      %s800 = scalar_select %p799, %s22, 1
      %p801 = scmp.lt.s32.totalorder %s23, 0
      %s802 = scalar_select %p801, %s23, 0
      %s803 = sadd.s32 %s802, %s800
      %s804 = scalar_lea.vmem %s4, %s803
      %p805 = scmp.lt.s32.totalorder %s22, 1
      %s806 = scalar_select %p805, %s22, 1
      %p807 = scmp.lt.s32.totalorder %s23, 0
      %s808 = scalar_select %p807, %s23, 0
      %s809 = sadd.s32 %s808, %s806
      %s810 = scalar_lea.vmem %s5, %s809
      // Predicated region
      $region41: #{gyx_forward.13} parent=31 // pred_check
        %p811 = pneg %p138
      $region42: #{gyx_forward.13} parent=31 // pred_check_branch
        %813 = sbr.rel (%p811) target = $region44
      $region43: #{gyx_forward.13} parent=31 // pred_region
        %s814 = smul.u32 2, %s22
      $region44: #{gyx_forward.13} parent=31 // pred_fallthru
        _
      // Predicated region
      $region45: #{gyx_forward.13} parent=31 // pred_check
        %p815 = pneg %p166
      $region46: #{gyx_forward.13} parent=31 // pred_check_branch
        %817 = sbr.rel (%p815) target = $region48
      $region47: #{gyx_forward.13} parent=31 // pred_region
        _
      $region48: #{gyx_forward.13} parent=31 // pred_fallthru
        _
      // Predicated region
      $region49: #{gyx_forward.13} parent=31 // pred_check
        %p818 = pneg %p194
      $region50: #{gyx_forward.13} parent=31 // pred_check_branch
        %820 = sbr.rel (%p818) target = $region52
      $region51: #{gyx_forward.13} parent=31 // pred_region
        _
      $region52: #{gyx_forward.13} parent=31 // pred_fallthru
        _
    $region32: #{gyx_forward.13} parent=5 // pred_fallthru
      _
    %p821 = scmp.le.s32.totalorder 2, %s12
    // Predicated region
    $region53: #{gyx_forward.13} parent=5 // pred_check
      %p822 = pneg %p821
    $region54: #{gyx_forward.13} parent=5 // pred_check_branch
      %824 = sbr.rel (%p822) target = $region56
    $region55: #{gyx_forward.13} parent=5 // pred_region
      %s825 = ssub.s32 %s12, 2
      // Predicated region
      $region57: #{gyx_forward.13} parent=55 // pred_check
        %p826 = pneg %p144
      $region58: #{gyx_forward.13} parent=55 // pred_check_branch
        %828 = sbr.rel (%p826) target = $region60
      $region59: #{gyx_forward.13} parent=55 // pred_region
        %s829 = smul.u32 2, %s25
        %p830 = scmp.lt.s32.totalorder %s829, 3
        %s831 = scalar_select %p830, %s829, 3
        %p832 = scmp.lt.s32.totalorder %s26, 0
        %s833 = scalar_select %p832, %s26, 0
        %s834 = sadd.s32 %s833, %s831
        %s835 = smul.addr %s834, 8
        %s836 = scalar_lea.vmem %s3, %s835
      $region60: #{gyx_forward.13} parent=55 // pred_fallthru
        _
      // Predicated region
      $region61: #{gyx_forward.13} parent=55 // pred_check
        %p837 = pneg %p172
      $region62: #{gyx_forward.13} parent=55 // pred_check_branch
        %839 = sbr.rel (%p837) target = $region64
      $region63: #{gyx_forward.13} parent=55 // pred_region
        %p840 = scmp.lt.s32.totalorder %s25, 1
        %s841 = scalar_select %p840, %s25, 1
        %p842 = scmp.lt.s32.totalorder %s26, 0
        %s843 = scalar_select %p842, %s26, 0
        %s844 = sadd.s32 %s843, %s841
        %s845 = scalar_lea.vmem %s4, %s844
      $region64: #{gyx_forward.13} parent=55 // pred_fallthru
        _
      // Predicated region
      $region65: #{gyx_forward.13} parent=55 // pred_check
        %p846 = pneg %p200
      $region66: #{gyx_forward.13} parent=55 // pred_check_branch
        %848 = sbr.rel (%p846) target = $region68
      $region67: #{gyx_forward.13} parent=55 // pred_region
        %p849 = scmp.lt.s32.totalorder %s25, 1
        %s850 = scalar_select %p849, %s25, 1
        %p851 = scmp.lt.s32.totalorder %s26, 0
        %s852 = scalar_select %p851, %s26, 0
        %s853 = sadd.s32 %s852, %s850
        %s854 = scalar_lea.vmem %s5, %s853
      $region68: #{gyx_forward.13} parent=55 // pred_fallthru
        _
    $region56: #{gyx_forward.13} parent=5 // pred_fallthru
      _
  $region6: #{gyx_forward.13} parent=0 // loop_footer
    %s16 = sadd.s32 1, %s12
  $region7: #{gyx_forward.13} parent=0 // loop_footer_branch
    %11 = sbr.rel target = $region3
  $region8: #{gyx_forward.13} parent=0 // loop_exit
    _

// kernel: gyx_forward.15
$region0: #{gyx_forward.15}
  #allocation0 [shape = 'u32[]', space=smem, size = 0x4, offset = 0x4, fixed_abs, tag = 'smem constant byte address 0x4 - core index']
  #allocation1 [shape = 'u32[72,128]{1,0:T(1,128)}', space=vmem, size = 0x9000, scoped, tag = 'internal scratch']
  #allocation2 [shape = 'f32[16,128]{1,0:T(8,128)}', space=vmem, size = 0x2000, scoped, tag = 'scratch operand']
  %s0 = inlined_call_operand.vmem [shape: bf16[32,1152], index: 0, kind: input, shape index: {}]
  %s1 = inlined_call_operand.vmem [shape: bf16[1152,128], index: 1, kind: input, shape index: {}]
  %s2 = inlined_call_operand.vmem [shape: f32[1,128], index: 2, kind: input, shape index: {}]
  %s3 = inlined_call_operand.vmem [shape: f32[32,128], index: 3, kind: output, shape index: {0}]
  %s4 = inlined_call_operand.vmem [shape: f32[2,1,128], index: 4, kind: output, shape index: {1}]
  %s5 = inlined_call_operand.vmem [shape: f32[2,1,128], index: 5, kind: output, shape index: {2}]
  %6 = xla_tuple %s3, %s4, %s5
  %s7 = sld [smem:[#allocation0]]
  $region69: #{gyx_forward.15} parent=0
    _
  %s9 = ssub.s32 1, %s7
  %s10 = scalar_select 0, %s9, %s7
  loop: start=0, step=1, limit=4
  $region2: #{gyx_forward.15} parent=0 // loop_pre_header
    _
  $region3: #{gyx_forward.15} parent=0 // loop_header
    %s12 = sphi 0, %s16
    %p13 = scmp.ge.s32.totalorder %s12, 4
    %s19 = sphi 0, %s38
    %s20 = sphi 0, %s34
    %s21 = sphi 0, %s30
    %s22 = sphi 0, %s19
    %s23 = sphi 0, %s20
    %s24 = sphi 0, %s21
    %s25 = sphi 0, %s22
    %s26 = sphi 0, %s23
    %s27 = sphi 0, %s24
    %s43 = sphi 0, %s45
    %s46 = sphi 0, %s43
    %s47 = sphi 0, %s46
    %s63 = sphi 0, %s47
    %s71 = sphi 0, %s73
    %s74 = sphi 0, %s71
    %s75 = sphi 0, %s74
    %s91 = sphi 0, %s75
    %s97 = sphi 0, %s99
    %s100 = sphi 0, %s97
    %s101 = sphi 0, %s100
    %s117 = sphi 0, %s101
    %s125 = sphi 0, %s127
    %s128 = sphi 0, %s125
    %s129 = sphi 0, %s128
    %s145 = sphi 0, %s129
    %s153 = sphi 0, %s155
    %s156 = sphi 0, %s153
    %s157 = sphi 0, %s156
    %s173 = sphi 0, %s157
    %s181 = sphi 0, %s183
    %s184 = sphi 0, %s181
    %s185 = sphi 0, %s184
    %s201 = sphi 0, %s185
  $region4: #{gyx_forward.15} parent=0 // loop_header_branch
    %15 = sbr.rel (%p13) target = $region8
  $region5: #{gyx_forward.15} parent=0 // loop_body
    %s17 = ssub.s32 %s12, 1
    %s18 = ssub.s32 %s12, 2
    %s28 = sadd.s32 1, %s21
    %p29 = scmp.ge.s32.totalorder %s28, 1
    %s30 = scalar_select %p29, 0, %s28
    %s31 = sadd.s32 1, %s20
    %s32 = scalar_select %p29, %s31, %s20
    %p33 = scmp.ge.s32.totalorder %s32, 1
    %s34 = scalar_select %p33, 0, %s32
    %s35 = sadd.s32 1, %s19
    %s36 = scalar_select %p33, %s35, %s19
    %p37 = scmp.ge.s32.totalorder %s36, 2
    %s38 = scalar_select %p37, 0, %s36
    %s39 = ssub.s32 %s19, %s38
    %s40 = ssub.s32 %s21, %s30
    %s41 = sor.u32 %s39, %s40
    %p42 = scmp.eq.s32.totalorder %s41, 0
    %s44 = sadd.s32 %s43, 1
    %s45 = scalar_select %p42, %s43, %s44
    %p48 = pneg %p42
    %p49 = scmp.eq.s32.totalorder %s12, 1
    %p50 = por %p48, %p49
    %p51 = scmp.ne.s32.totalorder %s43, %s46
    %p52 = scmp.eq.s32.totalorder %s12, 0
    %p53 = por %p51, %p52
    %p54 = scmp.ne.s32.totalorder %s43, %s46
    %p55 = scmp.eq.s32.totalorder %s17, 1
    %p56 = por %p54, %p55
    %p57 = scmp.ne.s32.totalorder %s46, %s47
    %p58 = scmp.eq.s32.totalorder %s17, 0
    %p59 = por %p57, %p58
    %p60 = scmp.ne.s32.totalorder %s46, %s47
    %p61 = scmp.eq.s32.totalorder %s18, 1
    %p62 = por %p60, %p61
    %p64 = scmp.ne.s32.totalorder %s47, %s63
    %p65 = scmp.eq.s32.totalorder %s18, 0
    %p66 = por %p64, %p65
    %s67 = ssub.s32 %s21, %s30
    %s68 = ssub.s32 %s20, %s34
    %s69 = sor.u32 %s67, %s68
    %p70 = scmp.eq.s32.totalorder %s69, 0
    %s72 = sadd.s32 %s71, 1
    %s73 = scalar_select %p70, %s71, %s72
    %p76 = pneg %p70
    %p77 = scmp.eq.s32.totalorder %s12, 1
    %p78 = por %p76, %p77
    %p79 = scmp.ne.s32.totalorder %s71, %s74
    %p80 = scmp.eq.s32.totalorder %s12, 0
    %p81 = por %p79, %p80
    %p82 = scmp.ne.s32.totalorder %s71, %s74
    %p83 = scmp.eq.s32.totalorder %s17, 1
    %p84 = por %p82, %p83
    %p85 = scmp.ne.s32.totalorder %s74, %s75
    %p86 = scmp.eq.s32.totalorder %s17, 0
    %p87 = por %p85, %p86
    %p88 = scmp.ne.s32.totalorder %s74, %s75
    %p89 = scmp.eq.s32.totalorder %s18, 1
    %p90 = por %p88, %p89
    %p92 = scmp.ne.s32.totalorder %s75, %s91
    %p93 = scmp.eq.s32.totalorder %s18, 0
    %p94 = por %p92, %p93
    %s95 = ssub.s32 %s20, %s34
    %p96 = scmp.eq.s32.totalorder %s95, 0
    %s98 = sadd.s32 %s97, 1
    %s99 = scalar_select %p96, %s97, %s98
    %p102 = pneg %p96
    %p103 = scmp.eq.s32.totalorder %s12, 1
    %p104 = por %p102, %p103
    %p105 = scmp.ne.s32.totalorder %s97, %s100
    %p106 = scmp.eq.s32.totalorder %s12, 0
    %p107 = por %p105, %p106
    %p108 = scmp.ne.s32.totalorder %s97, %s100
    %p109 = scmp.eq.s32.totalorder %s17, 1
    %p110 = por %p108, %p109
    %p111 = scmp.ne.s32.totalorder %s100, %s101
    %p112 = scmp.eq.s32.totalorder %s17, 0
    %p113 = por %p111, %p112
    %p114 = scmp.ne.s32.totalorder %s100, %s101
    %p115 = scmp.eq.s32.totalorder %s18, 1
    %p116 = por %p114, %p115
    %p118 = scmp.ne.s32.totalorder %s101, %s117
    %p119 = scmp.eq.s32.totalorder %s18, 0
    %p120 = por %p118, %p119
    %s121 = ssub.s32 %s19, %s38
    %s122 = ssub.s32 %s20, %s34
    %s123 = sor.u32 %s121, %s122
    %p124 = scmp.eq.s32.totalorder %s123, 0
    %s126 = sadd.s32 %s125, 1
    %s127 = scalar_select %p124, %s125, %s126
    %p130 = pneg %p124
    %p131 = scmp.eq.s32.totalorder %s12, 1
    %p132 = por %p130, %p131
    %p133 = scmp.ne.s32.totalorder %s125, %s128
    %p134 = scmp.eq.s32.totalorder %s12, 0
    %p135 = por %p133, %p134
    %p136 = scmp.ne.s32.totalorder %s125, %s128
    %p137 = scmp.eq.s32.totalorder %s17, 1
    %p138 = por %p136, %p137
    %p139 = scmp.ne.s32.totalorder %s128, %s129
    %p140 = scmp.eq.s32.totalorder %s17, 0
    %p141 = por %p139, %p140
    %p142 = scmp.ne.s32.totalorder %s128, %s129
    %p143 = scmp.eq.s32.totalorder %s18, 1
    %p144 = por %p142, %p143
    %p146 = scmp.ne.s32.totalorder %s129, %s145
    %p147 = scmp.eq.s32.totalorder %s18, 0
    %p148 = por %p146, %p147
    %s149 = ssub.s32 %s19, %s38
    %s150 = ssub.s32 %s20, %s34
    %s151 = sor.u32 %s149, %s150
    %p152 = scmp.eq.s32.totalorder %s151, 0
    %s154 = sadd.s32 %s153, 1
    %s155 = scalar_select %p152, %s153, %s154
    %p158 = pneg %p152
    %p159 = scmp.eq.s32.totalorder %s12, 1
    %p160 = por %p158, %p159
    %p161 = scmp.ne.s32.totalorder %s153, %s156
    %p162 = scmp.eq.s32.totalorder %s12, 0
    %p163 = por %p161, %p162
    %p164 = scmp.ne.s32.totalorder %s153, %s156
    %p165 = scmp.eq.s32.totalorder %s17, 1
    %p166 = por %p164, %p165
    %p167 = scmp.ne.s32.totalorder %s156, %s157
    %p168 = scmp.eq.s32.totalorder %s17, 0
    %p169 = por %p167, %p168
    %p170 = scmp.ne.s32.totalorder %s156, %s157
    %p171 = scmp.eq.s32.totalorder %s18, 1
    %p172 = por %p170, %p171
    %p174 = scmp.ne.s32.totalorder %s157, %s173
    %p175 = scmp.eq.s32.totalorder %s18, 0
    %p176 = por %p174, %p175
    %s177 = ssub.s32 %s19, %s38
    %s178 = ssub.s32 %s20, %s34
    %s179 = sor.u32 %s177, %s178
    %p180 = scmp.eq.s32.totalorder %s179, 0
    %s182 = sadd.s32 %s181, 1
    %s183 = scalar_select %p180, %s181, %s182
    %p186 = pneg %p180
    %p187 = scmp.eq.s32.totalorder %s12, 1
    %p188 = por %p186, %p187
    %p189 = scmp.ne.s32.totalorder %s181, %s184
    %p190 = scmp.eq.s32.totalorder %s12, 0
    %p191 = por %p189, %p190
    %p192 = scmp.ne.s32.totalorder %s181, %s184
    %p193 = scmp.eq.s32.totalorder %s17, 1
    %p194 = por %p192, %p193
    %p195 = scmp.ne.s32.totalorder %s184, %s185
    %p196 = scmp.eq.s32.totalorder %s17, 0
    %p197 = por %p195, %p196
    %p198 = scmp.ne.s32.totalorder %s184, %s185
    %p199 = scmp.eq.s32.totalorder %s18, 1
    %p200 = por %p198, %p199
    %p202 = scmp.ne.s32.totalorder %s185, %s201
    %p203 = scmp.eq.s32.totalorder %s18, 0
    %p204 = por %p202, %p203
    %p205 = scmp.le.s32.totalorder 1, %s12
    %p206 = scmp.lt.s32.totalorder %s12, 3
    %p207 = pnand %p205, %p206
    %p208 = pneg %p207
    // Predicated region
    $region9: #{gyx_forward.15} parent=5 // pred_check
      _
    $region10: #{gyx_forward.15} parent=5 // pred_check_branch
      %210 = sbr.rel (%p207) target = $region12
    $region11: #{gyx_forward.15} parent=5 // pred_region
      %s211 = ssub.s32 %s12, 1
      // Predicated region
      $region13: #{gyx_forward.15} parent=11 // pred_check
        %p212 = pneg %p87
      $region14: #{gyx_forward.15} parent=11 // pred_check_branch
        %214 = sbr.rel (%p212) target = $region16
      $region15: #{gyx_forward.15} parent=11 // pred_region
        %s215 = smul.u32 144, %s24
        %p216 = scmp.lt.s32.totalorder %s215, 143
        %s217 = scalar_select %p216, %s215, 143
        %p218 = scmp.lt.s32.totalorder %s23, 0
        %s219 = scalar_select %p218, %s23, 0
        %s220 = sadd.s32 %s219, %s217
        %s221 = smul.addr %s220, 4
        %s222 = scalar_lea.vmem %s1, %s221
        %s223 = smul.u32 144, %s24
      $region16: #{gyx_forward.15} parent=11 // pred_fallthru
        _
      // Predicated region
      $region17: #{gyx_forward.15} parent=11 // pred_check
        %p224 = pneg %p113
      $region18: #{gyx_forward.15} parent=11 // pred_check_branch
        %226 = sbr.rel (%p224) target = $region20
      $region19: #{gyx_forward.15} parent=11 // pred_region
        %p227 = scmp.lt.s32.totalorder %s23, 0
        %s228 = scalar_select %p227, %s23, 0
        %s229 = scalar_lea.vmem %s2, %s228
      $region20: #{gyx_forward.15} parent=11 // pred_fallthru
        _
    $region12: #{gyx_forward.15} parent=5 // pred_fallthru
      _
    %p230 = scmp.lt.s32.totalorder %s12, 2
    // Predicated region
    $region21: #{gyx_forward.15} parent=5 // pred_check
      %p231 = pneg %p230
    $region22: #{gyx_forward.15} parent=5 // pred_check_branch
      %233 = sbr.rel (%p231) target = $region24
    $region23: #{gyx_forward.15} parent=5 // pred_region
      // Predicated region
      $region25: #{gyx_forward.15} parent=23 // pred_check
        %p234 = pneg %p53
      $region26: #{gyx_forward.15} parent=23 // pred_check_branch
        %236 = sbr.rel (%p234) target = $region28
      $region27: #{gyx_forward.15} parent=23 // pred_region
        %s237 = smul.u32 2, %s19
        %s238 = smul.u32 9, %s21
        %p239 = scmp.lt.s32.totalorder %s237, 3
        %s240 = scalar_select %p239, %s237, 3
        %p241 = scmp.lt.s32.totalorder %s238, 8
        %s242 = scalar_select %p241, %s238, 8
        %s243 = smul.addr %s240, 9
        %s244 = sadd.s32 %s242, %s243
        %s245 = smul.addr %s244, 4
        %s246 = scalar_lea.vmem %s0, %s245
        %s247 = smul.u32 2, %s19
        %s248 = smul.u32 9, %s21
      $region28: #{gyx_forward.15} parent=23 // pred_fallthru
        _
    $region24: #{gyx_forward.15} parent=5 // pred_fallthru
      _
    %p249 = scmp.le.s32.totalorder 1, %s12
    %p250 = scmp.lt.s32.totalorder %s12, 3
    %p251 = pnand %p249, %p250
    %p252 = pneg %p251
    // Predicated region
    $region29: #{gyx_forward.15} parent=5 // pred_check
      _
    $region30: #{gyx_forward.15} parent=5 // pred_check_branch
      %254 = sbr.rel (%p251) target = $region32
    $region31: #{gyx_forward.15} parent=5 // pred_region
      %s255 = ssub.s32 %s12, 1
      %s256 = smul.u32 2, %s22
      %s257 = smul.u32 9, %s24
      %p258 = scmp.lt.s32.totalorder %s256, 3
      %s259 = scalar_select %p258, %s256, 3
      %p260 = scmp.lt.s32.totalorder %s257, 8
      %s261 = scalar_select %p260, %s257, 8
      %s262 = smul.addr %s259, 9
      %s263 = sadd.s32 %s261, %s262
      %s264 = smul.addr %s263, 4
      %s265 = scalar_lea.vmem %s0, %s264
      %p266 = pneg %p59
      %p267 = pneg %p56
      %s268 = smul.u32 144, %s24
      %p269 = scmp.lt.s32.totalorder %s268, 143
      %s270 = scalar_select %p269, %s268, 143
      %p271 = scmp.lt.s32.totalorder %s23, 0
      %s272 = scalar_select %p271, %s23, 0
      %s273 = sadd.s32 %s272, %s270
      %s274 = smul.addr %s273, 4
      %s275 = scalar_lea.vmem %s1, %s274
      %p276 = pneg %p87
      %p277 = pneg %p84
      %p278 = scmp.lt.s32.totalorder %s23, 0
      %s279 = scalar_select %p278, %s23, 0
      %s280 = scalar_lea.vmem %s2, %s279
      %p281 = pneg %p113
      %p282 = pneg %p110
      %p283 = pneg %p141
      %p284 = pneg %p138
      %s285 = smul.u32 2, %s22
      %p286 = scmp.lt.s32.totalorder %s285, 3
      %s287 = scalar_select %p286, %s285, 3
      %p288 = scmp.lt.s32.totalorder %s23, 0
      %s289 = scalar_select %p288, %s23, 0
      %s290 = sadd.s32 %s289, %s287
      %s291 = smul.addr %s290, 8
      %s292 = scalar_lea.vmem %s3, %s291
      %p293 = pneg %p169
      %p294 = pneg %p166
      %p295 = scmp.lt.s32.totalorder %s22, 1
      %s296 = scalar_select %p295, %s22, 1
      %p297 = scmp.lt.s32.totalorder %s23, 0
      %s298 = scalar_select %p297, %s23, 0
      %s299 = sadd.s32 %s298, %s296
      %s300 = scalar_lea.vmem %s4, %s299
      %p301 = pneg %p197
      %p302 = pneg %p194
      %p303 = scmp.lt.s32.totalorder %s22, 1
      %s304 = scalar_select %p303, %s22, 1
      %p305 = scmp.lt.s32.totalorder %s23, 0
      %s306 = scalar_select %p305, %s23, 0
      %s307 = sadd.s32 %s306, %s304
      %s308 = scalar_lea.vmem %s5, %s307
      %s309 = smul.u32 2, %s22
      %s310 = smul.u32 9, %s24
      %p311 = scmp.lt.s32.totalorder %s309, 3
      %s312 = scalar_select %p311, %s309, 3
      %p313 = scmp.lt.s32.totalorder %s310, 8
      %s314 = scalar_select %p313, %s310, 8
      %s315 = smul.addr %s312, 9
      %s316 = sadd.s32 %s314, %s315
      %s317 = smul.addr %s316, 4
      %s318 = scalar_lea.vmem %s0, %s317
      %s319 = smul.u32 2, %s22
      %s320 = smul.u32 9, %s24
      %s321 = smul.u32 144, %s24
      %p322 = scmp.lt.s32.totalorder %s321, 143
      %s323 = scalar_select %p322, %s321, 143
      %p324 = scmp.lt.s32.totalorder %s23, 0
      %s325 = scalar_select %p324, %s23, 0
      %s326 = sadd.s32 %s325, %s323
      %s327 = smul.addr %s326, 4
      %s328 = scalar_lea.vmem %s1, %s327
      %s329 = smul.u32 144, %s24
      %p330 = scmp.lt.s32.totalorder %s23, 0
      %s331 = scalar_select %p330, %s23, 0
      %s332 = scalar_lea.vmem %s2, %s331
      %s333 = smul.u32 2, %s22
      %p334 = scmp.lt.s32.totalorder %s333, 3
      %s335 = scalar_select %p334, %s333, 3
      %p336 = scmp.lt.s32.totalorder %s23, 0
      %s337 = scalar_select %p336, %s23, 0
      %s338 = sadd.s32 %s337, %s335
      %s339 = smul.addr %s338, 8
      %s340 = scalar_lea.vmem %s3, %s339
      %s341 = smul.u32 2, %s22
      %p342 = scmp.lt.s32.totalorder %s22, 1
      %s343 = scalar_select %p342, %s22, 1
      %p344 = scmp.lt.s32.totalorder %s23, 0
      %s345 = scalar_select %p344, %s23, 0
      %s346 = sadd.s32 %s345, %s343
      %s347 = scalar_lea.vmem %s4, %s346
      %p348 = scmp.lt.s32.totalorder %s22, 1
      %s349 = scalar_select %p348, %s22, 1
      %p350 = scmp.lt.s32.totalorder %s23, 0
      %s351 = scalar_select %p350, %s23, 0
      %s352 = sadd.s32 %s351, %s349
      %s353 = scalar_lea.vmem %s5, %s352
      %p354 = scmp.eq.s32.totalorder %s24, 0
      // Predicated region
      $region33: #{gyx_forward.15} parent=31 // pred_check
        %p355 = pneg %p354
      $region34: #{gyx_forward.15} parent=31 // pred_check_branch
        %357 = sbr.rel (%p355) target = $region36
      $region35: #{gyx_forward.15} parent=31 // pred_region
        %358 = vst [vmem:[#allocation2] sm:$0xff] 0.0
        %359 = vst [vmem:[#allocation2 + $0x8] sm:$0xff] 0.0
      $region36: #{gyx_forward.15} parent=31 // pred_fallthru
        _
      %v360 = vld [vmem:[#allocation2] sm:$0xff]
      %v361 = vld [vmem:[#allocation2 + $0x8] sm:$0xff]
      %v362 = vld [vmem:[%s318] sm:$0xff]
      %v363 = vld [vmem:[%s318 + $0x8] sm:$0xff]
      %v364 = vld [vmem:[%s318 + $0x10] sm:$0xff]
      %v365 = vld [vmem:[%s318 + $0x18] sm:$0xff]
      %v366 = vld [vmem:[%s318 + $0x20] sm:$0xf]
      %v367 = vld [vmem:[%s318 + $0x24] sm:$0xff]
      %v368 = vld [vmem:[%s318 + $0x2c] sm:$0xff]
      %v369 = vld [vmem:[%s318 + $0x34] sm:$0xff]
      %v370 = vld [vmem:[%s318 + $0x3c] sm:$0xff]
      %v371 = vld [vmem:[%s318 + $0x44] sm:$0xf]
      %v372 = vld [vmem:[%s328] sm:$0xf]
      %v373 = vld [vmem:[%s328 + $0x4] sm:$0xf]
      %v374 = vld [vmem:[%s328 + $0x8] sm:$0xf]
      %v375 = vld [vmem:[%s328 + $0xc] sm:$0xf]
      %v376 = vld [vmem:[%s328 + $0x10] sm:$0xf]
      %v377 = vld [vmem:[%s328 + $0x14] sm:$0xf]
      %v378 = vld [vmem:[%s328 + $0x18] sm:$0xf]
      %v379 = vld [vmem:[%s328 + $0x1c] sm:$0xf]
      %v380 = vld [vmem:[%s328 + $0x20] sm:$0xf]
      %v381 = vld [vmem:[%s328 + $0x24] sm:$0xf]
      %v382 = vld [vmem:[%s328 + $0x28] sm:$0xf]
      %v383 = vld [vmem:[%s328 + $0x2c] sm:$0xf]
      %v384 = vld [vmem:[%s328 + $0x30] sm:$0xf]
      %v385 = vld [vmem:[%s328 + $0x34] sm:$0xf]
      %v386 = vld [vmem:[%s328 + $0x38] sm:$0xf]
      %v387 = vld [vmem:[%s328 + $0x3c] sm:$0xf]
      %v388 = vld [vmem:[%s328 + $0x40] sm:$0xf]
      %v389 = vld [vmem:[%s328 + $0x44] sm:$0xf]
      %v390 = vld [vmem:[%s328 + $0x48] sm:$0xf]
      %v391 = vld [vmem:[%s328 + $0x4c] sm:$0xf]
      %v392 = vld [vmem:[%s328 + $0x50] sm:$0xf]
      %v393 = vld [vmem:[%s328 + $0x54] sm:$0xf]
      %v394 = vld [vmem:[%s328 + $0x58] sm:$0xf]
      %v395 = vld [vmem:[%s328 + $0x5c] sm:$0xf]
      %v396 = vld [vmem:[%s328 + $0x60] sm:$0xf]
      %v397 = vld [vmem:[%s328 + $0x64] sm:$0xf]
      %v398 = vld [vmem:[%s328 + $0x68] sm:$0xf]
      %v399 = vld [vmem:[%s328 + $0x6c] sm:$0xf]
      %v400 = vld [vmem:[%s328 + $0x70] sm:$0xf]
      %v401 = vld [vmem:[%s328 + $0x74] sm:$0xf]
      %v402 = vld [vmem:[%s328 + $0x78] sm:$0xf]
      %v403 = vld [vmem:[%s328 + $0x7c] sm:$0xf]
      %v404 = vld [vmem:[%s328 + $0x80] sm:$0xf]
      %v405 = vld [vmem:[%s328 + $0x84] sm:$0xf]
      %v406 = vld [vmem:[%s328 + $0x88] sm:$0xf]
      %v407 = vld [vmem:[%s328 + $0x8c] sm:$0xf]
      %v408 = vld [vmem:[%s328 + $0x90] sm:$0xf]
      %v409 = vld [vmem:[%s328 + $0x94] sm:$0xf]
      %v410 = vld [vmem:[%s328 + $0x98] sm:$0xf]
      %v411 = vld [vmem:[%s328 + $0x9c] sm:$0xf]
      %v412 = vld [vmem:[%s328 + $0xa0] sm:$0xf]
      %v413 = vld [vmem:[%s328 + $0xa4] sm:$0xf]
      %v414 = vld [vmem:[%s328 + $0xa8] sm:$0xf]
      %v415 = vld [vmem:[%s328 + $0xac] sm:$0xf]
      %v416 = vld [vmem:[%s328 + $0xb0] sm:$0xf]
      %v417 = vld [vmem:[%s328 + $0xb4] sm:$0xf]
      %v418 = vld [vmem:[%s328 + $0xb8] sm:$0xf]
      %v419 = vld [vmem:[%s328 + $0xbc] sm:$0xf]
      %v420 = vld [vmem:[%s328 + $0xc0] sm:$0xf]
      %v421 = vld [vmem:[%s328 + $0xc4] sm:$0xf]
      %v422 = vld [vmem:[%s328 + $0xc8] sm:$0xf]
      %v423 = vld [vmem:[%s328 + $0xcc] sm:$0xf]
      %v424 = vld [vmem:[%s328 + $0xd0] sm:$0xf]
      %v425 = vld [vmem:[%s328 + $0xd4] sm:$0xf]
      %v426 = vld [vmem:[%s328 + $0xd8] sm:$0xf]
      %v427 = vld [vmem:[%s328 + $0xdc] sm:$0xf]
      %v428 = vld [vmem:[%s328 + $0xe0] sm:$0xf]
      %v429 = vld [vmem:[%s328 + $0xe4] sm:$0xf]
      %v430 = vld [vmem:[%s328 + $0xe8] sm:$0xf]
      %v431 = vld [vmem:[%s328 + $0xec] sm:$0xf]
      %v432 = vld [vmem:[%s328 + $0xf0] sm:$0xf]
      %v433 = vld [vmem:[%s328 + $0xf4] sm:$0xf]
      %v434 = vld [vmem:[%s328 + $0xf8] sm:$0xf]
      %v435 = vld [vmem:[%s328 + $0xfc] sm:$0xf]
      %v436 = vld [vmem:[%s328 + $0x100] sm:$0xf]
      %v437 = vld [vmem:[%s328 + $0x104] sm:$0xf]
      %v438 = vld [vmem:[%s328 + $0x108] sm:$0xf]
      %v439 = vld [vmem:[%s328 + $0x10c] sm:$0xf]
      %v440 = vld [vmem:[%s328 + $0x110] sm:$0xf]
      %v441 = vld [vmem:[%s328 + $0x114] sm:$0xf]
      %v442 = vld [vmem:[%s328 + $0x118] sm:$0xf]
      %v443 = vld [vmem:[%s328 + $0x11c] sm:$0xf]
      %v444 = vld [vmem:[%s328 + $0x120] sm:$0xf]
      %v445 = vld [vmem:[%s328 + $0x124] sm:$0xf]
      %v446 = vld [vmem:[%s328 + $0x128] sm:$0xf]
      %v447 = vld [vmem:[%s328 + $0x12c] sm:$0xf]
      %v448 = vld [vmem:[%s328 + $0x130] sm:$0xf]
      %v449 = vld [vmem:[%s328 + $0x134] sm:$0xf]
      %v450 = vld [vmem:[%s328 + $0x138] sm:$0xf]
      %v451 = vld [vmem:[%s328 + $0x13c] sm:$0xf]
      %v452 = vld [vmem:[%s328 + $0x140] sm:$0xf]
      %v453 = vld [vmem:[%s328 + $0x144] sm:$0xf]
      %v454 = vld [vmem:[%s328 + $0x148] sm:$0xf]
      %v455 = vld [vmem:[%s328 + $0x14c] sm:$0xf]
      %v456 = vld [vmem:[%s328 + $0x150] sm:$0xf]
      %v457 = vld [vmem:[%s328 + $0x154] sm:$0xf]
      %v458 = vld [vmem:[%s328 + $0x158] sm:$0xf]
      %v459 = vld [vmem:[%s328 + $0x15c] sm:$0xf]
      %v460 = vld [vmem:[%s328 + $0x160] sm:$0xf]
      %v461 = vld [vmem:[%s328 + $0x164] sm:$0xf]
      %v462 = vld [vmem:[%s328 + $0x168] sm:$0xf]
      %v463 = vld [vmem:[%s328 + $0x16c] sm:$0xf]
      %v464 = vld [vmem:[%s328 + $0x170] sm:$0xf]
      %v465 = vld [vmem:[%s328 + $0x174] sm:$0xf]
      %v466 = vld [vmem:[%s328 + $0x178] sm:$0xf]
      %v467 = vld [vmem:[%s328 + $0x17c] sm:$0xf]
      %v468 = vld [vmem:[%s328 + $0x180] sm:$0xf]
      %v469 = vld [vmem:[%s328 + $0x184] sm:$0xf]
      %v470 = vld [vmem:[%s328 + $0x188] sm:$0xf]
      %v471 = vld [vmem:[%s328 + $0x18c] sm:$0xf]
      %v472 = vld [vmem:[%s328 + $0x190] sm:$0xf]
      %v473 = vld [vmem:[%s328 + $0x194] sm:$0xf]
      %v474 = vld [vmem:[%s328 + $0x198] sm:$0xf]
      %v475 = vld [vmem:[%s328 + $0x19c] sm:$0xf]
      %v476 = vld [vmem:[%s328 + $0x1a0] sm:$0xf]
      %v477 = vld [vmem:[%s328 + $0x1a4] sm:$0xf]
      %v478 = vld [vmem:[%s328 + $0x1a8] sm:$0xf]
      %v479 = vld [vmem:[%s328 + $0x1ac] sm:$0xf]
      %v480 = vld [vmem:[%s328 + $0x1b0] sm:$0xf]
      %v481 = vld [vmem:[%s328 + $0x1b4] sm:$0xf]
      %v482 = vld [vmem:[%s328 + $0x1b8] sm:$0xf]
      %v483 = vld [vmem:[%s328 + $0x1bc] sm:$0xf]
      %v484 = vld [vmem:[%s328 + $0x1c0] sm:$0xf]
      %v485 = vld [vmem:[%s328 + $0x1c4] sm:$0xf]
      %v486 = vld [vmem:[%s328 + $0x1c8] sm:$0xf]
      %v487 = vld [vmem:[%s328 + $0x1cc] sm:$0xf]
      %v488 = vld [vmem:[%s328 + $0x1d0] sm:$0xf]
      %v489 = vld [vmem:[%s328 + $0x1d4] sm:$0xf]
      %v490 = vld [vmem:[%s328 + $0x1d8] sm:$0xf]
      %v491 = vld [vmem:[%s328 + $0x1dc] sm:$0xf]
      %v492 = vld [vmem:[%s328 + $0x1e0] sm:$0xf]
      %v493 = vld [vmem:[%s328 + $0x1e4] sm:$0xf]
      %v494 = vld [vmem:[%s328 + $0x1e8] sm:$0xf]
      %v495 = vld [vmem:[%s328 + $0x1ec] sm:$0xf]
      %v496 = vld [vmem:[%s328 + $0x1f0] sm:$0xf]
      %v497 = vld [vmem:[%s328 + $0x1f4] sm:$0xf]
      %v498 = vld [vmem:[%s328 + $0x1f8] sm:$0xf]
      %v499 = vld [vmem:[%s328 + $0x1fc] sm:$0xf]
      %v500 = vld [vmem:[%s328 + $0x200] sm:$0xf]
      %v501 = vld [vmem:[%s328 + $0x204] sm:$0xf]
      %v502 = vld [vmem:[%s328 + $0x208] sm:$0xf]
      %v503 = vld [vmem:[%s328 + $0x20c] sm:$0xf]
      %v504 = vld [vmem:[%s328 + $0x210] sm:$0xf]
      %v505 = vld [vmem:[%s328 + $0x214] sm:$0xf]
      %v506 = vld [vmem:[%s328 + $0x218] sm:$0xf]
      %v507 = vld [vmem:[%s328 + $0x21c] sm:$0xf]
      %v508 = vld [vmem:[%s328 + $0x220] sm:$0xf]
      %v509 = vld [vmem:[%s328 + $0x224] sm:$0xf]
      %v510 = vld [vmem:[%s328 + $0x228] sm:$0xf]
      %v511 = vld [vmem:[%s328 + $0x22c] sm:$0xf]
      %v512 = vld [vmem:[%s328 + $0x230] sm:$0xf]
      %v513 = vld [vmem:[%s328 + $0x234] sm:$0xf]
      %v514 = vld [vmem:[%s328 + $0x238] sm:$0xf]
      %v515 = vld [vmem:[%s328 + $0x23c] sm:$0xf]
      %v526 = vunpack.c.l.b16 %v362
      %v527 = vunpack.c.h.b16 %v362
      %v528 = vunpack.c.l.b16 %v363
      %v529 = vunpack.c.h.b16 %v363
      %v530 = vunpack.c.l.b16 %v364
      %v531 = vunpack.c.h.b16 %v364
      %v532 = vunpack.c.l.b16 %v365
      %v533 = vunpack.c.h.b16 %v365
      %v534 = vunpack.c.l.b16 %v366
      %v535 = vunpack.c.l.b16 %v367
      %v536 = vunpack.c.h.b16 %v367
      %v537 = vunpack.c.l.b16 %v368
      %v538 = vunpack.c.h.b16 %v368
      %v539 = vunpack.c.l.b16 %v369
      %v540 = vunpack.c.h.b16 %v369
      %v541 = vunpack.c.l.b16 %v370
      %v542 = vunpack.c.h.b16 %v370
      %v543 = vunpack.c.l.b16 %v371
      %v544 = vpack.c.b16 %v535, %v526
      %v545 = vpack.c.b16 %v536, %v527
      %v546 = vpack.c.b16 %v537, %v528
      %v547 = vpack.c.b16 %v538, %v529
      %v548 = vpack.c.b16 %v539, %v530
      %v549 = vpack.c.b16 %v540, %v531
      %v550 = vpack.c.b16 %v541, %v532
      %v551 = vpack.c.b16 %v542, %v533
      %v552 = vpack.c.b16 %v543, %v534
      %v706 = vunpack.c.l.b16 %v372
      %v707 = vunpack.c.l.b16 %v373
      %v708 = vunpack.c.l.b16 %v374
      %v709 = vunpack.c.l.b16 %v375
      %v710 = vunpack.c.l.b16 %v376
      %v711 = vunpack.c.l.b16 %v377
      %v712 = vunpack.c.l.b16 %v378
      %v713 = vunpack.c.l.b16 %v379
      %v714 = vunpack.c.l.b16 %v380
      %v715 = vunpack.c.l.b16 %v381
      %v716 = vunpack.c.l.b16 %v382
      %v717 = vunpack.c.l.b16 %v383
      %v718 = vunpack.c.l.b16 %v384
      %v719 = vunpack.c.l.b16 %v385
      %v720 = vunpack.c.l.b16 %v386
      %v721 = vunpack.c.l.b16 %v387
      %v722 = vunpack.c.l.b16 %v388
      %v723 = vunpack.c.l.b16 %v389
      %v724 = vunpack.c.l.b16 %v390
      %v725 = vunpack.c.l.b16 %v391
      %v726 = vunpack.c.l.b16 %v392
      %v727 = vunpack.c.l.b16 %v393
      %v728 = vunpack.c.l.b16 %v394
      %v729 = vunpack.c.l.b16 %v395
      %v730 = vunpack.c.l.b16 %v396
      %v731 = vunpack.c.l.b16 %v397
      %v732 = vunpack.c.l.b16 %v398
      %v733 = vunpack.c.l.b16 %v399
      %v734 = vunpack.c.l.b16 %v400
      %v735 = vunpack.c.l.b16 %v401
      %v736 = vunpack.c.l.b16 %v402
      %v737 = vunpack.c.l.b16 %v403
      %v738 = vunpack.c.l.b16 %v404
      %v739 = vunpack.c.l.b16 %v405
      %v740 = vunpack.c.l.b16 %v406
      %v741 = vunpack.c.l.b16 %v407
      %v742 = vunpack.c.l.b16 %v408
      %v743 = vunpack.c.l.b16 %v409
      %v744 = vunpack.c.l.b16 %v410
      %v745 = vunpack.c.l.b16 %v411
      %v746 = vunpack.c.l.b16 %v412
      %v747 = vunpack.c.l.b16 %v413
      %v748 = vunpack.c.l.b16 %v414
      %v749 = vunpack.c.l.b16 %v415
      %v750 = vunpack.c.l.b16 %v416
      %v751 = vunpack.c.l.b16 %v417
      %v752 = vunpack.c.l.b16 %v418
      %v753 = vunpack.c.l.b16 %v419
      %v754 = vunpack.c.l.b16 %v420
      %v755 = vunpack.c.l.b16 %v421
      %v756 = vunpack.c.l.b16 %v422
      %v757 = vunpack.c.l.b16 %v423
      %v758 = vunpack.c.l.b16 %v424
      %v759 = vunpack.c.l.b16 %v425
      %v760 = vunpack.c.l.b16 %v426
      %v761 = vunpack.c.l.b16 %v427
      %v762 = vunpack.c.l.b16 %v428
      %v763 = vunpack.c.l.b16 %v429
      %v764 = vunpack.c.l.b16 %v430
      %v765 = vunpack.c.l.b16 %v431
      %v766 = vunpack.c.l.b16 %v432
      %v767 = vunpack.c.l.b16 %v433
      %v768 = vunpack.c.l.b16 %v434
      %v769 = vunpack.c.l.b16 %v435
      %v770 = vunpack.c.l.b16 %v436
      %v771 = vunpack.c.l.b16 %v437
      %v772 = vunpack.c.l.b16 %v438
      %v773 = vunpack.c.l.b16 %v439
      %v774 = vunpack.c.l.b16 %v440
      %v775 = vunpack.c.l.b16 %v441
      %v776 = vunpack.c.l.b16 %v442
      %v777 = vunpack.c.l.b16 %v443
      %v778 = vunpack.c.l.b16 %v444
      %v779 = vunpack.c.l.b16 %v445
      %v780 = vunpack.c.l.b16 %v446
      %v781 = vunpack.c.l.b16 %v447
      %v782 = vunpack.c.l.b16 %v448
      %v783 = vunpack.c.l.b16 %v449
      %v784 = vunpack.c.l.b16 %v450
      %v785 = vunpack.c.l.b16 %v451
      %v786 = vunpack.c.l.b16 %v452
      %v787 = vunpack.c.l.b16 %v453
      %v788 = vunpack.c.l.b16 %v454
      %v789 = vunpack.c.l.b16 %v455
      %v790 = vunpack.c.l.b16 %v456
      %v791 = vunpack.c.l.b16 %v457
      %v792 = vunpack.c.l.b16 %v458
      %v793 = vunpack.c.l.b16 %v459
      %v794 = vunpack.c.l.b16 %v460
      %v795 = vunpack.c.l.b16 %v461
      %v796 = vunpack.c.l.b16 %v462
      %v797 = vunpack.c.l.b16 %v463
      %v798 = vunpack.c.l.b16 %v464
      %v799 = vunpack.c.l.b16 %v465
      %v800 = vunpack.c.l.b16 %v466
      %v801 = vunpack.c.l.b16 %v467
      %v802 = vunpack.c.l.b16 %v468
      %v803 = vunpack.c.l.b16 %v469
      %v804 = vunpack.c.l.b16 %v470
      %v805 = vunpack.c.l.b16 %v471
      %v806 = vunpack.c.l.b16 %v472
      %v807 = vunpack.c.l.b16 %v473
      %v808 = vunpack.c.l.b16 %v474
      %v809 = vunpack.c.l.b16 %v475
      %v810 = vunpack.c.l.b16 %v476
      %v811 = vunpack.c.l.b16 %v477
      %v812 = vunpack.c.l.b16 %v478
      %v813 = vunpack.c.l.b16 %v479
      %v814 = vunpack.c.l.b16 %v480
      %v815 = vunpack.c.l.b16 %v481
      %v816 = vunpack.c.l.b16 %v482
      %v817 = vunpack.c.l.b16 %v483
      %v818 = vunpack.c.l.b16 %v484
      %v819 = vunpack.c.l.b16 %v485
      %v820 = vunpack.c.l.b16 %v486
      %v821 = vunpack.c.l.b16 %v487
      %v822 = vunpack.c.l.b16 %v488
      %v823 = vunpack.c.l.b16 %v489
      %v824 = vunpack.c.l.b16 %v490
      %v825 = vunpack.c.l.b16 %v491
      %v826 = vunpack.c.l.b16 %v492
      %v827 = vunpack.c.l.b16 %v493
      %v828 = vunpack.c.l.b16 %v494
      %v829 = vunpack.c.l.b16 %v495
      %v830 = vunpack.c.l.b16 %v496
      %v831 = vunpack.c.l.b16 %v497
      %v832 = vunpack.c.l.b16 %v498
      %v833 = vunpack.c.l.b16 %v499
      %v834 = vunpack.c.l.b16 %v500
      %v835 = vunpack.c.l.b16 %v501
      %v836 = vunpack.c.l.b16 %v502
      %v837 = vunpack.c.l.b16 %v503
      %v838 = vunpack.c.l.b16 %v504
      %v839 = vunpack.c.l.b16 %v505
      %v840 = vunpack.c.l.b16 %v506
      %v841 = vunpack.c.l.b16 %v507
      %v842 = vunpack.c.l.b16 %v508
      %v843 = vunpack.c.l.b16 %v509
      %v844 = vunpack.c.l.b16 %v510
      %v845 = vunpack.c.l.b16 %v511
      %v846 = vunpack.c.l.b16 %v512
      %v847 = vunpack.c.l.b16 %v513
      %v848 = vunpack.c.l.b16 %v514
      %v849 = vunpack.c.l.b16 %v515
      %v850 = vpack.c.b16 %v707, %v706
      %v851 = vpack.c.b16 %v709, %v708
      %v852 = vpack.c.b16 %v711, %v710
      %v853 = vpack.c.b16 %v713, %v712
      %v854 = vpack.c.b16 %v715, %v714
      %v855 = vpack.c.b16 %v717, %v716
      %v856 = vpack.c.b16 %v719, %v718
      %v857 = vpack.c.b16 %v721, %v720
      %v858 = vpack.c.b16 %v723, %v722
      %v859 = vpack.c.b16 %v725, %v724
      %v860 = vpack.c.b16 %v727, %v726
      %v861 = vpack.c.b16 %v729, %v728
      %v862 = vpack.c.b16 %v731, %v730
      %v863 = vpack.c.b16 %v733, %v732
      %v864 = vpack.c.b16 %v735, %v734
      %v865 = vpack.c.b16 %v737, %v736
      %v866 = vpack.c.b16 %v739, %v738
      %v867 = vpack.c.b16 %v741, %v740
      %v868 = vpack.c.b16 %v743, %v742
      %v869 = vpack.c.b16 %v745, %v744
      %v870 = vpack.c.b16 %v747, %v746
      %v871 = vpack.c.b16 %v749, %v748
      %v872 = vpack.c.b16 %v751, %v750
      %v873 = vpack.c.b16 %v753, %v752
      %v874 = vpack.c.b16 %v755, %v754
      %v875 = vpack.c.b16 %v757, %v756
      %v876 = vpack.c.b16 %v759, %v758
      %v877 = vpack.c.b16 %v761, %v760
      %v878 = vpack.c.b16 %v763, %v762
      %v879 = vpack.c.b16 %v765, %v764
      %v880 = vpack.c.b16 %v767, %v766
      %v881 = vpack.c.b16 %v769, %v768
      %v882 = vpack.c.b16 %v771, %v770
      %v883 = vpack.c.b16 %v773, %v772
      %v884 = vpack.c.b16 %v775, %v774
      %v885 = vpack.c.b16 %v777, %v776
      %v886 = vpack.c.b16 %v779, %v778
      %v887 = vpack.c.b16 %v781, %v780
      %v888 = vpack.c.b16 %v783, %v782
      %v889 = vpack.c.b16 %v785, %v784
      %v890 = vpack.c.b16 %v787, %v786
      %v891 = vpack.c.b16 %v789, %v788
      %v892 = vpack.c.b16 %v791, %v790
      %v893 = vpack.c.b16 %v793, %v792
      %v894 = vpack.c.b16 %v795, %v794
      %v895 = vpack.c.b16 %v797, %v796
      %v896 = vpack.c.b16 %v799, %v798
      %v897 = vpack.c.b16 %v801, %v800
      %v898 = vpack.c.b16 %v803, %v802
      %v899 = vpack.c.b16 %v805, %v804
      %v900 = vpack.c.b16 %v807, %v806
      %v901 = vpack.c.b16 %v809, %v808
      %v902 = vpack.c.b16 %v811, %v810
      %v903 = vpack.c.b16 %v813, %v812
      %v904 = vpack.c.b16 %v815, %v814
      %v905 = vpack.c.b16 %v817, %v816
      %v906 = vpack.c.b16 %v819, %v818
      %v907 = vpack.c.b16 %v821, %v820
      %v908 = vpack.c.b16 %v823, %v822
      %v909 = vpack.c.b16 %v825, %v824
      %v910 = vpack.c.b16 %v827, %v826
      %v911 = vpack.c.b16 %v829, %v828
      %v912 = vpack.c.b16 %v831, %v830
      %v913 = vpack.c.b16 %v833, %v832
      %v914 = vpack.c.b16 %v835, %v834
      %v915 = vpack.c.b16 %v837, %v836
      %v916 = vpack.c.b16 %v839, %v838
      %v917 = vpack.c.b16 %v841, %v840
      %v918 = vpack.c.b16 %v843, %v842
      %v919 = vpack.c.b16 %v845, %v844
      %v920 = vpack.c.b16 %v847, %v846
      %v921 = vpack.c.b16 %v849, %v848
      %994 = vmatpush.bf16.msra.mxu0 %v857
      %995 = vmatpush.bf16.msra.mxu0 %v856
      %996 = vmatpush.bf16.msra.mxu0 %v855
      %997 = vmatpush.bf16.msra.mxu0 %v854
      %998 = vmatpush.bf16.msra.mxu0 %v853
      %999 = vmatpush.bf16.msra.mxu0 %v852
      %1000 = vmatpush.bf16.msra.mxu0 %v851
      %1001 = vmatpush.bf16.msra.mxu0 %v850
      %1002 = vmatmul.bf16.gmra.mxu0 %v544
      %v1003 = vpop.f32.mrf.mxu0
      %v1004 = vadd.f32 0.0, %v1003
      %v1005 = vpop.f32.mrf.mxu0
      %v1006 = vadd.f32 0.0, %v1005
      %1007 = vdwg.mxu0
      %1008 = vmatpush.bf16.msra.mxu0 %v865
      %1009 = vmatpush.bf16.msra.mxu0 %v864
      %1010 = vmatpush.bf16.msra.mxu0 %v863
      %1011 = vmatpush.bf16.msra.mxu0 %v862
      %1012 = vmatpush.bf16.msra.mxu0 %v861
      %1013 = vmatpush.bf16.msra.mxu0 %v860
      %1014 = vmatpush.bf16.msra.mxu0 %v859
      %1015 = vmatpush.bf16.msra.mxu0 %v858
      %1016 = vmatmul.bf16.gmra.mxu0 %v545
      %v1017 = vpop.f32.mrf.mxu0
      %v1018 = vadd.f32 %v1004, %v1017
      %v1019 = vpop.f32.mrf.mxu0
      %v1020 = vadd.f32 %v1006, %v1019
      %1021 = vdwg.mxu0
      %1022 = vmatpush.bf16.msra.mxu0 %v873
      %1023 = vmatpush.bf16.msra.mxu0 %v872
      %1024 = vmatpush.bf16.msra.mxu0 %v871
      %1025 = vmatpush.bf16.msra.mxu0 %v870
      %1026 = vmatpush.bf16.msra.mxu0 %v869
      %1027 = vmatpush.bf16.msra.mxu0 %v868
      %1028 = vmatpush.bf16.msra.mxu0 %v867
      %1029 = vmatpush.bf16.msra.mxu0 %v866
      %1030 = vmatmul.bf16.gmra.mxu0 %v546
      %v1031 = vpop.f32.mrf.mxu0
      %v1032 = vadd.f32 %v1018, %v1031
      %v1033 = vpop.f32.mrf.mxu0
      %v1034 = vadd.f32 %v1020, %v1033
      %1035 = vdwg.mxu0
      %1036 = vmatpush.bf16.msra.mxu0 %v881
      %1037 = vmatpush.bf16.msra.mxu0 %v880
      %1038 = vmatpush.bf16.msra.mxu0 %v879
      %1039 = vmatpush.bf16.msra.mxu0 %v878
      %1040 = vmatpush.bf16.msra.mxu0 %v877
      %1041 = vmatpush.bf16.msra.mxu0 %v876
      %1042 = vmatpush.bf16.msra.mxu0 %v875
      %1043 = vmatpush.bf16.msra.mxu0 %v874
      %1044 = vmatmul.bf16.gmra.mxu0 %v547
      %v1045 = vpop.f32.mrf.mxu0
      %v1046 = vadd.f32 %v1032, %v1045
      %v1047 = vpop.f32.mrf.mxu0
      %v1048 = vadd.f32 %v1034, %v1047
      %1049 = vdwg.mxu0
      %1050 = vmatpush.bf16.msra.mxu0 %v889
      %1051 = vmatpush.bf16.msra.mxu0 %v888
      %1052 = vmatpush.bf16.msra.mxu0 %v887
      %1053 = vmatpush.bf16.msra.mxu0 %v886
      %1054 = vmatpush.bf16.msra.mxu0 %v885
      %1055 = vmatpush.bf16.msra.mxu0 %v884
      %1056 = vmatpush.bf16.msra.mxu0 %v883
      %1057 = vmatpush.bf16.msra.mxu0 %v882
      %1058 = vmatmul.bf16.gmra.mxu0 %v548
      %v1059 = vpop.f32.mrf.mxu0
      %v1060 = vadd.f32 %v1046, %v1059
      %v1061 = vpop.f32.mrf.mxu0
      %v1062 = vadd.f32 %v1048, %v1061
      %1063 = vdwg.mxu0
      %1064 = vmatpush.bf16.msra.mxu0 %v897
      %1065 = vmatpush.bf16.msra.mxu0 %v896
      %1066 = vmatpush.bf16.msra.mxu0 %v895
      %1067 = vmatpush.bf16.msra.mxu0 %v894
      %1068 = vmatpush.bf16.msra.mxu0 %v893
      %1069 = vmatpush.bf16.msra.mxu0 %v892
      %1070 = vmatpush.bf16.msra.mxu0 %v891
      %1071 = vmatpush.bf16.msra.mxu0 %v890
      %1072 = vmatmul.bf16.gmra.mxu0 %v549
      %v1073 = vpop.f32.mrf.mxu0
      %v1074 = vadd.f32 %v1060, %v1073
      %v1075 = vpop.f32.mrf.mxu0
      %v1076 = vadd.f32 %v1062, %v1075
      %1077 = vdwg.mxu0
      %1078 = vmatpush.bf16.msra.mxu0 %v905
      %1079 = vmatpush.bf16.msra.mxu0 %v904
      %1080 = vmatpush.bf16.msra.mxu0 %v903
      %1081 = vmatpush.bf16.msra.mxu0 %v902
      %1082 = vmatpush.bf16.msra.mxu0 %v901
      %1083 = vmatpush.bf16.msra.mxu0 %v900
      %1084 = vmatpush.bf16.msra.mxu0 %v899
      %1085 = vmatpush.bf16.msra.mxu0 %v898
      %1086 = vmatmul.bf16.gmra.mxu0 %v550
      %v1087 = vpop.f32.mrf.mxu0
      %v1088 = vadd.f32 %v1074, %v1087
      %v1089 = vpop.f32.mrf.mxu0
      %v1090 = vadd.f32 %v1076, %v1089
      %1091 = vdwg.mxu0
      %1092 = vmatpush.bf16.msra.mxu0 %v913
      %1093 = vmatpush.bf16.msra.mxu0 %v912
      %1094 = vmatpush.bf16.msra.mxu0 %v911
      %1095 = vmatpush.bf16.msra.mxu0 %v910
      %1096 = vmatpush.bf16.msra.mxu0 %v909
      %1097 = vmatpush.bf16.msra.mxu0 %v908
      %1098 = vmatpush.bf16.msra.mxu0 %v907
      %1099 = vmatpush.bf16.msra.mxu0 %v906
      %1100 = vmatmul.bf16.gmra.mxu0 %v551
      %v1101 = vpop.f32.mrf.mxu0
      %v1102 = vadd.f32 %v1088, %v1101
      %v1103 = vpop.f32.mrf.mxu0
      %v1104 = vadd.f32 %v1090, %v1103
      %1105 = vdwg.mxu0
      %1106 = vmatpush.bf16.msra.mxu0 %v921
      %1107 = vmatpush.bf16.msra.mxu0 %v920
      %1108 = vmatpush.bf16.msra.mxu0 %v919
      %1109 = vmatpush.bf16.msra.mxu0 %v918
      %1110 = vmatpush.bf16.msra.mxu0 %v917
      %1111 = vmatpush.bf16.msra.mxu0 %v916
      %1112 = vmatpush.bf16.msra.mxu0 %v915
      %1113 = vmatpush.bf16.msra.mxu0 %v914
      %1114 = vmatmul.bf16.gmra.mxu0 %v552
      %v1115 = vpop.f32.mrf.mxu0
      %v1116 = vadd.f32 %v1102, %v1115
      %v1117 = vpop.f32.mrf.mxu0
      %v1118 = vadd.f32 %v1104, %v1117
      %1119 = vdwg.mxu0
      %v1120 = vadd.f32 %v360, %v1116
      %v1121 = vadd.f32 %v361, %v1118
      %1122 = vst [vmem:[#allocation2] sm:$0xff] %v1120
      %1123 = vst [vmem:[#allocation2 + $0x8] sm:$0xff] %v1121
      // Predicated region
      $region37: #{gyx_forward.15} parent=31 // pred_check
        %p1124 = pneg %p354
      $region38: #{gyx_forward.15} parent=31 // pred_check_branch
        %1126 = sbr.rel (%p1124) target = $region40
      $region39: #{gyx_forward.15} parent=31 // pred_region
        %v1127 = vld [vmem:[#allocation2] sm:$0xff]
        %v1128 = vld [vmem:[#allocation2 + $0x8] sm:$0xff]
        %v1129 = vadd.f32 %v1127, %v1128
        %v1130 = vrot.slane %v1129, 4
        %v1131 = vadd.f32 %v1129, %v1130
        %v1132 = vrot.slane %v1131, 2
        %v1133 = vadd.f32 %v1131, %v1132
        %v1134 = vrot.slane %v1133, 1
        %v1135 = vadd.f32 %v1133, %v1134
        %v1136 = vmul.f32 %v1127, %v1127
        %v1137 = vmul.f32 %v1128, %v1128
        %v1138 = vadd.f32 %v1136, %v1137
        %v1139 = vrot.slane %v1138, 4
        %v1140 = vadd.f32 %v1138, %v1139
        %v1141 = vrot.slane %v1140, 2
        %v1142 = vadd.f32 %v1140, %v1141
        %v1143 = vrot.slane %v1142, 1
        %v1144 = vadd.f32 %v1142, %v1143
        %1145 = vst [vmem:[%s347] sm:$0x1] %v1135
        %1146 = vst [vmem:[%s353] sm:$0x1] %v1144
        %v1147 = vld [vmem:[%s332] sm:$0x1]
        %v1149 = vperm.slane %v1147, 0
        %v1151 = vadd.f32 %v1127, %v1149
        %v1152 = vadd.f32 %v1128, %v1149
        %1153 = vst [vmem:[%s340] sm:$0xff] %v1151
        %1154 = vst [vmem:[%s340 + $0x8] sm:$0xff] %v1152
      $region40: #{gyx_forward.15} parent=31 // pred_fallthru
        _
      %s1155 = smul.u32 2, %s22
      %p1156 = scmp.lt.s32.totalorder %s1155, 3
      %s1157 = scalar_select %p1156, %s1155, 3
      %p1158 = scmp.lt.s32.totalorder %s23, 0
      %s1159 = scalar_select %p1158, %s23, 0
      %s1160 = sadd.s32 %s1159, %s1157
      %s1161 = smul.addr %s1160, 8
      %s1162 = scalar_lea.vmem %s3, %s1161
      %p1163 = scmp.lt.s32.totalorder %s22, 1
      %s1164 = scalar_select %p1163, %s22, 1
      %p1165 = scmp.lt.s32.totalorder %s23, 0
      %s1166 = scalar_select %p1165, %s23, 0
      %s1167 = sadd.s32 %s1166, %s1164
      %s1168 = scalar_lea.vmem %s4, %s1167
      %p1169 = scmp.lt.s32.totalorder %s22, 1
      %s1170 = scalar_select %p1169, %s22, 1
      %p1171 = scmp.lt.s32.totalorder %s23, 0
      %s1172 = scalar_select %p1171, %s23, 0
      %s1173 = sadd.s32 %s1172, %s1170
      %s1174 = scalar_lea.vmem %s5, %s1173
      // Predicated region
      $region41: #{gyx_forward.15} parent=31 // pred_check
        %p1175 = pneg %p138
      $region42: #{gyx_forward.15} parent=31 // pred_check_branch
        %1177 = sbr.rel (%p1175) target = $region44
      $region43: #{gyx_forward.15} parent=31 // pred_region
        %s1178 = smul.u32 2, %s22
      $region44: #{gyx_forward.15} parent=31 // pred_fallthru
        _
      // Predicated region
      $region45: #{gyx_forward.15} parent=31 // pred_check
        %p1179 = pneg %p166
      $region46: #{gyx_forward.15} parent=31 // pred_check_branch
        %1181 = sbr.rel (%p1179) target = $region48
      $region47: #{gyx_forward.15} parent=31 // pred_region
        _
      $region48: #{gyx_forward.15} parent=31 // pred_fallthru
        _
      // Predicated region
      $region49: #{gyx_forward.15} parent=31 // pred_check
        %p1182 = pneg %p194
      $region50: #{gyx_forward.15} parent=31 // pred_check_branch
        %1184 = sbr.rel (%p1182) target = $region52
      $region51: #{gyx_forward.15} parent=31 // pred_region
        _
      $region52: #{gyx_forward.15} parent=31 // pred_fallthru
        _
    $region32: #{gyx_forward.15} parent=5 // pred_fallthru
      _
    %p1185 = scmp.le.s32.totalorder 2, %s12
    // Predicated region
    $region53: #{gyx_forward.15} parent=5 // pred_check
      %p1186 = pneg %p1185
    $region54: #{gyx_forward.15} parent=5 // pred_check_branch
      %1188 = sbr.rel (%p1186) target = $region56
    $region55: #{gyx_forward.15} parent=5 // pred_region
      %s1189 = ssub.s32 %s12, 2
      // Predicated region
      $region57: #{gyx_forward.15} parent=55 // pred_check
        %p1190 = pneg %p144
      $region58: #{gyx_forward.15} parent=55 // pred_check_branch
        %1192 = sbr.rel (%p1190) target = $region60
      $region59: #{gyx_forward.15} parent=55 // pred_region
        %s1193 = smul.u32 2, %s25
        %p1194 = scmp.lt.s32.totalorder %s1193, 3
        %s1195 = scalar_select %p1194, %s1193, 3
        %p1196 = scmp.lt.s32.totalorder %s26, 0
        %s1197 = scalar_select %p1196, %s26, 0
        %s1198 = sadd.s32 %s1197, %s1195
        %s1199 = smul.addr %s1198, 8
        %s1200 = scalar_lea.vmem %s3, %s1199
      $region60: #{gyx_forward.15} parent=55 // pred_fallthru
        _
      // Predicated region
      $region61: #{gyx_forward.15} parent=55 // pred_check
        %p1201 = pneg %p172
      $region62: #{gyx_forward.15} parent=55 // pred_check_branch
        %1203 = sbr.rel (%p1201) target = $region64
      $region63: #{gyx_forward.15} parent=55 // pred_region
        %p1204 = scmp.lt.s32.totalorder %s25, 1
        %s1205 = scalar_select %p1204, %s25, 1
        %p1206 = scmp.lt.s32.totalorder %s26, 0
        %s1207 = scalar_select %p1206, %s26, 0
        %s1208 = sadd.s32 %s1207, %s1205
        %s1209 = scalar_lea.vmem %s4, %s1208
      $region64: #{gyx_forward.15} parent=55 // pred_fallthru
        _
      // Predicated region
      $region65: #{gyx_forward.15} parent=55 // pred_check
        %p1210 = pneg %p200
      $region66: #{gyx_forward.15} parent=55 // pred_check_branch
        %1212 = sbr.rel (%p1210) target = $region68
      $region67: #{gyx_forward.15} parent=55 // pred_region
        %p1213 = scmp.lt.s32.totalorder %s25, 1
        %s1214 = scalar_select %p1213, %s25, 1
        %p1215 = scmp.lt.s32.totalorder %s26, 0
        %s1216 = scalar_select %p1215, %s26, 0
        %s1217 = sadd.s32 %s1216, %s1214
        %s1218 = scalar_lea.vmem %s5, %s1217
      $region68: #{gyx_forward.15} parent=55 // pred_fallthru
        _
    $region56: #{gyx_forward.15} parent=5 // pred_fallthru
      _
  $region6: #{gyx_forward.15} parent=0 // loop_footer
    %s16 = sadd.s32 1, %s12
  $region7: #{gyx_forward.15} parent=0 // loop_footer_branch
    %11 = sbr.rel target = $region3
  $region8: #{gyx_forward.15} parent=0 // loop_exit
    _

// kernel: tile.42
$region0: #{tile.42}
  %s0 = inlined_call_operand.vmem [shape: f32[4,64], index: 0, kind: input, shape index: {}]
  %s1 = inlined_call_operand.vmem [shape: f32[1,256], index: 1, kind: output, shape index: {}]
  $region1: #{tile.42} parent=0
    #allocation0 [shape = 'u8[8192]{0}', space=vmem, size = 0x2000, scoped, tag = 'scoped mem for output reshape']
    #allocation1 [shape = 'u8[4096]{0}', space=vmem, size = 0x1000, scoped, tag = 'scoped mem for input reshape']
    %s3 = ssub.s32 16, 1
    %v4 = vld [vmem:[%s0] sm:%s3]
    %5 = vst [vmem:[#allocation1] sm:%s3] %v4
    %s6 = smov 3
    %v7 = vld [vmem:[#allocation1] ss:$2 sm:%s6]
    %vm8 = vcmask 523264
    %9 = vst.msk [vmem:[#allocation0] ss:$8 sm:$0x3] %vm8, %v7
    %s10 = scalar_lea.vmem [#allocation1], 1
    %s11 = smov 3
    %v12 = vld [vmem:[%s10] ss:$2 sm:%s11]
    %13 = vrot.lane.b32.xlu0 %v12, 64
    %v14 = vpop.permute.xlu0 %13
    %vm15 = vcmask 1048064
    %16 = vst.msk [vmem:[#allocation0] ss:$8 sm:$0x3] %vm15, %v14
    %s18 = ssub.s32 2, 1
    %v19 = vld [vmem:[#allocation0] sm:%s18]
    %s21 = ssub.s32 2, 1
    %22 = vst [vmem:[%s1] sm:%s21] %v19
    %s23 = scalar_lea.vmem [#allocation0], 8
    %v24 = vld [vmem:[%s23] sm:%s18]
    %s26 = ssub.s32 2, 1
    %s27 = scalar_lea.vmem %s1, 1
    %28 = vst [vmem:[%s27] sm:%s26] %v24

// kernel: tile.40
$region0: #{tile.40}
  #allocation0 [shape = 's32[1]{0}', space=sflag, size = 0x4, scoped, tag = 'scoped memory for tile.40']
  %s0 = inlined_call_operand.vmem [shape: f32[64], index: 0, kind: input, shape index: {}]
  %s1 = inlined_call_operand.vmem [shape: f32[4,64], index: 1, kind: output, shape index: {}]
  // Predicated region
  $region2: #{tile.40} parent=0 // pred_check
    _
  $region3: #{tile.40} parent=0 // pred_check_branch
    %3 = sbr.rel (0) target = $region5
  $region4: #{tile.40} parent=0 // pred_region
    _
  $region5: #{tile.40} parent=0 // pred_fallthru
    _
  %v4 = vld [vmem:[%s0] ss:$0 sm:$0xff]
  %5 = vst [vmem:[%s1] sm:$0xf] %v4

// kernel: gyx_forward.20
$region0: #{gyx_forward.20}
  #allocation0 [shape = 'u32[]', space=smem, size = 0x4, offset = 0x4, fixed_abs, tag = 'smem constant byte address 0x4 - core index']
  #allocation1 [shape = 'u32[72,128]{1,0:T(1,128)}', space=vmem, size = 0x9000, scoped, tag = 'internal scratch']
  %s0 = inlined_call_operand.vmem [shape: f32[32,256], index: 0, kind: input, shape index: {}]
  %s1 = inlined_call_operand.vmem [shape: f32[1,256], index: 1, kind: input, shape index: {}]
  %s2 = inlined_call_operand.vmem [shape: f32[1,256], index: 2, kind: input, shape index: {}]
  %s3 = inlined_call_operand.vmem [shape: bf16[32,256], index: 3, kind: output, shape index: {}]
  %s4 = sld [smem:[#allocation0]]
  $region45: #{gyx_forward.20} parent=0
    _
  %s6 = ssub.s32 1, %s4
  %s7 = scalar_select 0, %s6, %s4
  loop: start=0, step=1, limit=4
  $region2: #{gyx_forward.20} parent=0 // loop_pre_header
    _
  $region3: #{gyx_forward.20} parent=0 // loop_header
    %s9 = sphi 0, %s13
    %p10 = scmp.ge.s32.totalorder %s9, 4
    %s19 = sphi 0, %s21
    %s22 = sphi 0, %s19
    %s23 = sphi 0, %s22
    %s39 = sphi 0, %s23
    %s43 = sphi 0, %s43
    %s45 = sphi 0, %s43
    %s46 = sphi 0, %s45
    %s60 = sphi 0, %s46
    %s64 = sphi 0, %s64
    %s66 = sphi 0, %s64
    %s67 = sphi 0, %s66
    %s81 = sphi 0, %s67
    %s87 = sphi 0, %s89
    %s90 = sphi 0, %s87
    %s91 = sphi 0, %s90
    %s107 = sphi 0, %s91
  $region4: #{gyx_forward.20} parent=0 // loop_header_branch
    %12 = sbr.rel (%p10) target = $region8
  $region5: #{gyx_forward.20} parent=0 // loop_body
    %s14 = ssub.s32 %s9, 1
    %s15 = ssub.s32 %s9, 2
    %s16 = sadd.s32 %s9, 1
    %s17 = ssub.s32 %s9, %s16
    %p18 = scmp.eq.s32.totalorder %s17, 0
    %s20 = sadd.s32 %s19, 1
    %s21 = scalar_select %p18, %s19, %s20
    %p24 = pneg %p18
    %p25 = scmp.eq.s32.totalorder %s9, 1
    %p26 = por %p24, %p25
    %p27 = scmp.ne.s32.totalorder %s19, %s22
    %p28 = scmp.eq.s32.totalorder %s9, 0
    %p29 = por %p27, %p28
    %p30 = scmp.ne.s32.totalorder %s19, %s22
    %p31 = scmp.eq.s32.totalorder %s14, 1
    %p32 = por %p30, %p31
    %p33 = scmp.ne.s32.totalorder %s22, %s23
    %p34 = scmp.eq.s32.totalorder %s14, 0
    %p35 = por %p33, %p34
    %p36 = scmp.ne.s32.totalorder %s22, %s23
    %p37 = scmp.eq.s32.totalorder %s15, 1
    %p38 = por %p36, %p37
    %p40 = scmp.ne.s32.totalorder %s23, %s39
    %p41 = scmp.eq.s32.totalorder %s15, 0
    %p42 = por %p40, %p41
    %s44 = sadd.s32 %s43, 1
    %p47 = scmp.eq.s32.totalorder %s9, 1
    %p48 = scmp.ne.s32.totalorder %s43, %s45
    %p49 = scmp.eq.s32.totalorder %s9, 0
    %p50 = por %p48, %p49
    %p51 = scmp.ne.s32.totalorder %s43, %s45
    %p52 = scmp.eq.s32.totalorder %s14, 1
    %p53 = por %p51, %p52
    %p54 = scmp.ne.s32.totalorder %s45, %s46
    %p55 = scmp.eq.s32.totalorder %s14, 0
    %p56 = por %p54, %p55
    %p57 = scmp.ne.s32.totalorder %s45, %s46
    %p58 = scmp.eq.s32.totalorder %s15, 1
    %p59 = por %p57, %p58
    %p61 = scmp.ne.s32.totalorder %s46, %s60
    %p62 = scmp.eq.s32.totalorder %s15, 0
    %p63 = por %p61, %p62
    %s65 = sadd.s32 %s64, 1
    %p68 = scmp.eq.s32.totalorder %s9, 1
    %p69 = scmp.ne.s32.totalorder %s64, %s66
    %p70 = scmp.eq.s32.totalorder %s9, 0
    %p71 = por %p69, %p70
    %p72 = scmp.ne.s32.totalorder %s64, %s66
    %p73 = scmp.eq.s32.totalorder %s14, 1
    %p74 = por %p72, %p73
    %p75 = scmp.ne.s32.totalorder %s66, %s67
    %p76 = scmp.eq.s32.totalorder %s14, 0
    %p77 = por %p75, %p76
    %p78 = scmp.ne.s32.totalorder %s66, %s67
    %p79 = scmp.eq.s32.totalorder %s15, 1
    %p80 = por %p78, %p79
    %p82 = scmp.ne.s32.totalorder %s67, %s81
    %p83 = scmp.eq.s32.totalorder %s15, 0
    %p84 = por %p82, %p83
    %s85 = ssub.s32 %s9, %s16
    %p86 = scmp.eq.s32.totalorder %s85, 0
    %s88 = sadd.s32 %s87, 1
    %s89 = scalar_select %p86, %s87, %s88
    %p92 = pneg %p86
    %p93 = scmp.eq.s32.totalorder %s9, 1
    %p94 = por %p92, %p93
    %p95 = scmp.ne.s32.totalorder %s87, %s90
    %p96 = scmp.eq.s32.totalorder %s9, 0
    %p97 = por %p95, %p96
    %p98 = scmp.ne.s32.totalorder %s87, %s90
    %p99 = scmp.eq.s32.totalorder %s14, 1
    %p100 = por %p98, %p99
    %p101 = scmp.ne.s32.totalorder %s90, %s91
    %p102 = scmp.eq.s32.totalorder %s14, 0
    %p103 = por %p101, %p102
    %p104 = scmp.ne.s32.totalorder %s90, %s91
    %p105 = scmp.eq.s32.totalorder %s15, 1
    %p106 = por %p104, %p105
    %p108 = scmp.ne.s32.totalorder %s91, %s107
    %p109 = scmp.eq.s32.totalorder %s15, 0
    %p110 = por %p108, %p109
    %p111 = scmp.le.s32.totalorder 1, %s9
    %p112 = scmp.lt.s32.totalorder %s9, 3
    %p113 = pnand %p111, %p112
    %p114 = pneg %p113
    // Predicated region
    $region9: #{gyx_forward.20} parent=5 // pred_check
      _
    $region10: #{gyx_forward.20} parent=5 // pred_check_branch
      %116 = sbr.rel (%p113) target = $region12
    $region11: #{gyx_forward.20} parent=5 // pred_region
      %s117 = ssub.s32 %s9, 1
      // Predicated region
      $region13: #{gyx_forward.20} parent=11 // pred_check
        %p118 = pneg %p56
      $region14: #{gyx_forward.20} parent=11 // pred_check_branch
        %120 = sbr.rel (%p118) target = $region16
      $region15: #{gyx_forward.20} parent=11 // pred_region
        _
      $region16: #{gyx_forward.20} parent=11 // pred_fallthru
        _
      // Predicated region
      $region17: #{gyx_forward.20} parent=11 // pred_check
        %p121 = pneg %p77
      $region18: #{gyx_forward.20} parent=11 // pred_check_branch
        %123 = sbr.rel (%p121) target = $region20
      $region19: #{gyx_forward.20} parent=11 // pred_region
        _
      $region20: #{gyx_forward.20} parent=11 // pred_fallthru
        _
    $region12: #{gyx_forward.20} parent=5 // pred_fallthru
      _
    %p124 = scmp.lt.s32.totalorder %s9, 2
    // Predicated region
    $region21: #{gyx_forward.20} parent=5 // pred_check
      %p125 = pneg %p124
    $region22: #{gyx_forward.20} parent=5 // pred_check_branch
      %127 = sbr.rel (%p125) target = $region24
    $region23: #{gyx_forward.20} parent=5 // pred_region
      // Predicated region
      $region25: #{gyx_forward.20} parent=23 // pred_check
        %p128 = pneg %p29
      $region26: #{gyx_forward.20} parent=23 // pred_check_branch
        %130 = sbr.rel (%p128) target = $region28
      $region27: #{gyx_forward.20} parent=23 // pred_region
        %s131 = smul.u32 2, %s9
        %p132 = scmp.lt.s32.totalorder %s131, 3
        %s133 = scalar_select %p132, %s131, 3
        %s134 = smul.addr %s133, 2
        %s135 = smul.addr %s134, 8
        %s136 = scalar_lea.vmem %s0, %s135
        %s137 = smul.u32 2, %s9
      $region28: #{gyx_forward.20} parent=23 // pred_fallthru
        _
    $region24: #{gyx_forward.20} parent=5 // pred_fallthru
      _
    %p138 = scmp.le.s32.totalorder 1, %s9
    %p139 = scmp.lt.s32.totalorder %s9, 3
    %p140 = pnand %p138, %p139
    %p141 = pneg %p140
    // Predicated region
    $region29: #{gyx_forward.20} parent=5 // pred_check
      _
    $region30: #{gyx_forward.20} parent=5 // pred_check_branch
      %143 = sbr.rel (%p140) target = $region32
    $region31: #{gyx_forward.20} parent=5 // pred_region
      %s144 = ssub.s32 %s9, 1
      %s145 = smul.u32 2, %s14
      %p146 = scmp.lt.s32.totalorder %s145, 3
      %s147 = scalar_select %p146, %s145, 3
      %s148 = smul.addr %s147, 2
      %s149 = smul.addr %s148, 8
      %s150 = scalar_lea.vmem %s0, %s149
      %p151 = pneg %p35
      %p152 = pneg %p32
      %p153 = pneg %p56
      %p154 = pneg %p53
      %p155 = pneg %p77
      %p156 = pneg %p74
      %p157 = pneg %p103
      %p158 = pneg %p100
      %s159 = smul.u32 2, %s14
      %p160 = scmp.lt.s32.totalorder %s159, 3
      %s161 = scalar_select %p160, %s159, 3
      %s162 = smul.addr %s161, 2
      %s163 = smul.addr %s162, 4
      %s164 = scalar_lea.vmem %s3, %s163
      %s165 = smul.u32 2, %s14
      %p166 = scmp.lt.s32.totalorder %s165, 3
      %s167 = scalar_select %p166, %s165, 3
      %s168 = smul.addr %s167, 2
      %s169 = smul.addr %s168, 8
      %s170 = scalar_lea.vmem %s0, %s169
      %s171 = smul.u32 2, %s14
      %s172 = smul.u32 2, %s14
      %p173 = scmp.lt.s32.totalorder %s172, 3
      %s174 = scalar_select %p173, %s172, 3
      %s175 = smul.addr %s174, 2
      %s176 = smul.addr %s175, 4
      %s177 = scalar_lea.vmem %s3, %s176
      %s178 = smul.u32 2, %s14
      %v179 = vld [vmem:[%s170] sm:$0xff]
      %v180 = vld [vmem:[%s170 + $0x8] sm:$0xff]
      %v181 = vld [vmem:[%s170 + $0x10] sm:$0xff]
      %v182 = vld [vmem:[%s170 + $0x18] sm:$0xff]
      %v183 = vld [vmem:[%s1] sm:$0x3]
      %v185 = vperm.slane %v183, 0
      %v186 = vperm.slane %v183, 1
      %v189 = vmul.f32 %v179, %v185
      %v190 = vmul.f32 %v180, %v186
      %v191 = vmul.f32 %v181, %v185
      %v192 = vmul.f32 %v182, %v186
      %v193 = vld [vmem:[%s2] sm:$0x3]
      %v195 = vperm.slane %v193, 0
      %v196 = vperm.slane %v193, 1
      %v199 = vadd.f32 %v189, %v195
      %v200 = vadd.f32 %v190, %v196
      %v201 = vadd.f32 %v191, %v195
      %v202 = vadd.f32 %v192, %v196
      %vm203 = vcmp.ge.f32.partialorder %v199, 0.0
      %vm204 = vcmp.ge.f32.partialorder %v200, 0.0
      %vm205 = vcmp.ge.f32.partialorder %v201, 0.0
      %vm206 = vcmp.ge.f32.partialorder %v202, 0.0
      %v207 = vmul.f32 %v199, 0.05
      %v208 = vmul.f32 %v200, 0.05
      %v209 = vmul.f32 %v201, 0.05
      %v210 = vmul.f32 %v202, 0.05
      %v211 = vsel %vm203, %v199, %v207
      %v212 = vsel %vm204, %v200, %v208
      %v213 = vsel %vm205, %v201, %v209
      %v214 = vsel %vm206, %v202, %v210
      %v215 = vpack.c.bf16 %v212, %v211
      %v216 = vpack.c.bf16 %v214, %v213
      %217 = vst [vmem:[%s177] sm:$0xff] %v215
      %218 = vst [vmem:[%s177 + $0x8] sm:$0xff] %v216
      %s219 = smul.u32 2, %s14
      %p220 = scmp.lt.s32.totalorder %s219, 3
      %s221 = scalar_select %p220, %s219, 3
      %s222 = smul.addr %s221, 2
      %s223 = smul.addr %s222, 4
      %s224 = scalar_lea.vmem %s3, %s223
      // Predicated region
      $region33: #{gyx_forward.20} parent=31 // pred_check
        %p225 = pneg %p100
      $region34: #{gyx_forward.20} parent=31 // pred_check_branch
        %227 = sbr.rel (%p225) target = $region36
      $region35: #{gyx_forward.20} parent=31 // pred_region
        %s228 = smul.u32 2, %s14
      $region36: #{gyx_forward.20} parent=31 // pred_fallthru
        _
    $region32: #{gyx_forward.20} parent=5 // pred_fallthru
      _
    %p229 = scmp.le.s32.totalorder 2, %s9
    // Predicated region
    $region37: #{gyx_forward.20} parent=5 // pred_check
      %p230 = pneg %p229
    $region38: #{gyx_forward.20} parent=5 // pred_check_branch
      %232 = sbr.rel (%p230) target = $region40
    $region39: #{gyx_forward.20} parent=5 // pred_region
      %s233 = ssub.s32 %s9, 2
      // Predicated region
      $region41: #{gyx_forward.20} parent=39 // pred_check
        %p234 = pneg %p106
      $region42: #{gyx_forward.20} parent=39 // pred_check_branch
        %236 = sbr.rel (%p234) target = $region44
      $region43: #{gyx_forward.20} parent=39 // pred_region
        %s237 = smul.u32 2, %s15
        %p238 = scmp.lt.s32.totalorder %s237, 3
        %s239 = scalar_select %p238, %s237, 3
        %s240 = smul.addr %s239, 2
        %s241 = smul.addr %s240, 4
        %s242 = scalar_lea.vmem %s3, %s241
      $region44: #{gyx_forward.20} parent=39 // pred_fallthru
        _
    $region40: #{gyx_forward.20} parent=5 // pred_fallthru
      _
  $region6: #{gyx_forward.20} parent=0 // loop_footer
    %s13 = sadd.s32 1, %s9
  $region7: #{gyx_forward.20} parent=0 // loop_footer_branch
    %8 = sbr.rel target = $region3
  $region8: #{gyx_forward.20} parent=0 // loop_exit
    _

// kernel: gyx_forward.19
$region0: #{gyx_forward.19}
  #allocation0 [shape = 'u32[]', space=smem, size = 0x4, offset = 0x4, fixed_abs, tag = 'smem constant byte address 0x4 - core index']
  #allocation1 [shape = 'u32[72,128]{1,0:T(1,128)}', space=vmem, size = 0x9000, scoped, tag = 'internal scratch']
  #allocation2 [shape = 'f32[16,256]{1,0:T(8,128)}', space=vmem, size = 0x4000, scoped, tag = 'scratch operand']
  %s0 = inlined_call_operand.vmem [shape: bf16[32,1152], index: 0, kind: input, shape index: {}]
  %s1 = inlined_call_operand.vmem [shape: bf16[1152,256], index: 1, kind: input, shape index: {}]
  %s2 = inlined_call_operand.vmem [shape: f32[1,256], index: 2, kind: input, shape index: {}]
  %s3 = inlined_call_operand.vmem [shape: f32[32,256], index: 3, kind: output, shape index: {0}]
  %s4 = inlined_call_operand.vmem [shape: f32[2,1,256], index: 4, kind: output, shape index: {1}]
  %s5 = inlined_call_operand.vmem [shape: f32[2,1,256], index: 5, kind: output, shape index: {2}]
  %6 = xla_tuple %s3, %s4, %s5
  %s7 = sld [smem:[#allocation0]]
  $region69: #{gyx_forward.19} parent=0
    _
  %s9 = ssub.s32 1, %s7
  %s10 = scalar_select 0, %s9, %s7
  loop: start=0, step=1, limit=4
  $region2: #{gyx_forward.19} parent=0 // loop_pre_header
    _
  $region3: #{gyx_forward.19} parent=0 // loop_header
    %s12 = sphi 0, %s16
    %p13 = scmp.ge.s32.totalorder %s12, 4
    %s19 = sphi 0, %s38
    %s20 = sphi 0, %s34
    %s21 = sphi 0, %s30
    %s22 = sphi 0, %s19
    %s23 = sphi 0, %s20
    %s24 = sphi 0, %s21
    %s25 = sphi 0, %s22
    %s26 = sphi 0, %s23
    %s27 = sphi 0, %s24
    %s43 = sphi 0, %s45
    %s46 = sphi 0, %s43
    %s47 = sphi 0, %s46
    %s63 = sphi 0, %s47
    %s71 = sphi 0, %s73
    %s74 = sphi 0, %s71
    %s75 = sphi 0, %s74
    %s91 = sphi 0, %s75
    %s97 = sphi 0, %s99
    %s100 = sphi 0, %s97
    %s101 = sphi 0, %s100
    %s117 = sphi 0, %s101
    %s125 = sphi 0, %s127
    %s128 = sphi 0, %s125
    %s129 = sphi 0, %s128
    %s145 = sphi 0, %s129
    %s153 = sphi 0, %s155
    %s156 = sphi 0, %s153
    %s157 = sphi 0, %s156
    %s173 = sphi 0, %s157
    %s181 = sphi 0, %s183
    %s184 = sphi 0, %s181
    %s185 = sphi 0, %s184
    %s201 = sphi 0, %s185
  $region4: #{gyx_forward.19} parent=0 // loop_header_branch
    %15 = sbr.rel (%p13) target = $region8
  $region5: #{gyx_forward.19} parent=0 // loop_body
    %s17 = ssub.s32 %s12, 1
    %s18 = ssub.s32 %s12, 2
    %s28 = sadd.s32 1, %s21
    %p29 = scmp.ge.s32.totalorder %s28, 1
    %s30 = scalar_select %p29, 0, %s28
    %s31 = sadd.s32 1, %s20
    %s32 = scalar_select %p29, %s31, %s20
    %p33 = scmp.ge.s32.totalorder %s32, 1
    %s34 = scalar_select %p33, 0, %s32
    %s35 = sadd.s32 1, %s19
    %s36 = scalar_select %p33, %s35, %s19
    %p37 = scmp.ge.s32.totalorder %s36, 2
    %s38 = scalar_select %p37, 0, %s36
    %s39 = ssub.s32 %s19, %s38
    %s40 = ssub.s32 %s21, %s30
    %s41 = sor.u32 %s39, %s40
    %p42 = scmp.eq.s32.totalorder %s41, 0
    %s44 = sadd.s32 %s43, 1
    %s45 = scalar_select %p42, %s43, %s44
    %p48 = pneg %p42
    %p49 = scmp.eq.s32.totalorder %s12, 1
    %p50 = por %p48, %p49
    %p51 = scmp.ne.s32.totalorder %s43, %s46
    %p52 = scmp.eq.s32.totalorder %s12, 0
    %p53 = por %p51, %p52
    %p54 = scmp.ne.s32.totalorder %s43, %s46
    %p55 = scmp.eq.s32.totalorder %s17, 1
    %p56 = por %p54, %p55
    %p57 = scmp.ne.s32.totalorder %s46, %s47
    %p58 = scmp.eq.s32.totalorder %s17, 0
    %p59 = por %p57, %p58
    %p60 = scmp.ne.s32.totalorder %s46, %s47
    %p61 = scmp.eq.s32.totalorder %s18, 1
    %p62 = por %p60, %p61
    %p64 = scmp.ne.s32.totalorder %s47, %s63
    %p65 = scmp.eq.s32.totalorder %s18, 0
    %p66 = por %p64, %p65
    %s67 = ssub.s32 %s21, %s30
    %s68 = ssub.s32 %s20, %s34
    %s69 = sor.u32 %s67, %s68
    %p70 = scmp.eq.s32.totalorder %s69, 0
    %s72 = sadd.s32 %s71, 1
    %s73 = scalar_select %p70, %s71, %s72
    %p76 = pneg %p70
    %p77 = scmp.eq.s32.totalorder %s12, 1
    %p78 = por %p76, %p77
    %p79 = scmp.ne.s32.totalorder %s71, %s74
    %p80 = scmp.eq.s32.totalorder %s12, 0
    %p81 = por %p79, %p80
    %p82 = scmp.ne.s32.totalorder %s71, %s74
    %p83 = scmp.eq.s32.totalorder %s17, 1
    %p84 = por %p82, %p83
    %p85 = scmp.ne.s32.totalorder %s74, %s75
    %p86 = scmp.eq.s32.totalorder %s17, 0
    %p87 = por %p85, %p86
    %p88 = scmp.ne.s32.totalorder %s74, %s75
    %p89 = scmp.eq.s32.totalorder %s18, 1
    %p90 = por %p88, %p89
    %p92 = scmp.ne.s32.totalorder %s75, %s91
    %p93 = scmp.eq.s32.totalorder %s18, 0
    %p94 = por %p92, %p93
    %s95 = ssub.s32 %s20, %s34
    %p96 = scmp.eq.s32.totalorder %s95, 0
    %s98 = sadd.s32 %s97, 1
    %s99 = scalar_select %p96, %s97, %s98
    %p102 = pneg %p96
    %p103 = scmp.eq.s32.totalorder %s12, 1
    %p104 = por %p102, %p103
    %p105 = scmp.ne.s32.totalorder %s97, %s100
    %p106 = scmp.eq.s32.totalorder %s12, 0
    %p107 = por %p105, %p106
    %p108 = scmp.ne.s32.totalorder %s97, %s100
    %p109 = scmp.eq.s32.totalorder %s17, 1
    %p110 = por %p108, %p109
    %p111 = scmp.ne.s32.totalorder %s100, %s101
    %p112 = scmp.eq.s32.totalorder %s17, 0
    %p113 = por %p111, %p112
    %p114 = scmp.ne.s32.totalorder %s100, %s101
    %p115 = scmp.eq.s32.totalorder %s18, 1
    %p116 = por %p114, %p115
    %p118 = scmp.ne.s32.totalorder %s101, %s117
    %p119 = scmp.eq.s32.totalorder %s18, 0
    %p120 = por %p118, %p119
    %s121 = ssub.s32 %s19, %s38
    %s122 = ssub.s32 %s20, %s34
    %s123 = sor.u32 %s121, %s122
    %p124 = scmp.eq.s32.totalorder %s123, 0
    %s126 = sadd.s32 %s125, 1
    %s127 = scalar_select %p124, %s125, %s126
    %p130 = pneg %p124
    %p131 = scmp.eq.s32.totalorder %s12, 1
    %p132 = por %p130, %p131
    %p133 = scmp.ne.s32.totalorder %s125, %s128
    %p134 = scmp.eq.s32.totalorder %s12, 0
    %p135 = por %p133, %p134
    %p136 = scmp.ne.s32.totalorder %s125, %s128
    %p137 = scmp.eq.s32.totalorder %s17, 1
    %p138 = por %p136, %p137
    %p139 = scmp.ne.s32.totalorder %s128, %s129
    %p140 = scmp.eq.s32.totalorder %s17, 0
    %p141 = por %p139, %p140
    %p142 = scmp.ne.s32.totalorder %s128, %s129
    %p143 = scmp.eq.s32.totalorder %s18, 1
    %p144 = por %p142, %p143
    %p146 = scmp.ne.s32.totalorder %s129, %s145
    %p147 = scmp.eq.s32.totalorder %s18, 0
    %p148 = por %p146, %p147
    %s149 = ssub.s32 %s19, %s38
    %s150 = ssub.s32 %s20, %s34
    %s151 = sor.u32 %s149, %s150
    %p152 = scmp.eq.s32.totalorder %s151, 0
    %s154 = sadd.s32 %s153, 1
    %s155 = scalar_select %p152, %s153, %s154
    %p158 = pneg %p152
    %p159 = scmp.eq.s32.totalorder %s12, 1
    %p160 = por %p158, %p159
    %p161 = scmp.ne.s32.totalorder %s153, %s156
    %p162 = scmp.eq.s32.totalorder %s12, 0
    %p163 = por %p161, %p162
    %p164 = scmp.ne.s32.totalorder %s153, %s156
    %p165 = scmp.eq.s32.totalorder %s17, 1
    %p166 = por %p164, %p165
    %p167 = scmp.ne.s32.totalorder %s156, %s157
    %p168 = scmp.eq.s32.totalorder %s17, 0
    %p169 = por %p167, %p168
    %p170 = scmp.ne.s32.totalorder %s156, %s157
    %p171 = scmp.eq.s32.totalorder %s18, 1
    %p172 = por %p170, %p171
    %p174 = scmp.ne.s32.totalorder %s157, %s173
    %p175 = scmp.eq.s32.totalorder %s18, 0
    %p176 = por %p174, %p175
    %s177 = ssub.s32 %s19, %s38
    %s178 = ssub.s32 %s20, %s34
    %s179 = sor.u32 %s177, %s178
    %p180 = scmp.eq.s32.totalorder %s179, 0
    %s182 = sadd.s32 %s181, 1
    %s183 = scalar_select %p180, %s181, %s182
    %p186 = pneg %p180
    %p187 = scmp.eq.s32.totalorder %s12, 1
    %p188 = por %p186, %p187
    %p189 = scmp.ne.s32.totalorder %s181, %s184
    %p190 = scmp.eq.s32.totalorder %s12, 0
    %p191 = por %p189, %p190
    %p192 = scmp.ne.s32.totalorder %s181, %s184
    %p193 = scmp.eq.s32.totalorder %s17, 1
    %p194 = por %p192, %p193
    %p195 = scmp.ne.s32.totalorder %s184, %s185
    %p196 = scmp.eq.s32.totalorder %s17, 0
    %p197 = por %p195, %p196
    %p198 = scmp.ne.s32.totalorder %s184, %s185
    %p199 = scmp.eq.s32.totalorder %s18, 1
    %p200 = por %p198, %p199
    %p202 = scmp.ne.s32.totalorder %s185, %s201
    %p203 = scmp.eq.s32.totalorder %s18, 0
    %p204 = por %p202, %p203
    %p205 = scmp.le.s32.totalorder 1, %s12
    %p206 = scmp.lt.s32.totalorder %s12, 3
    %p207 = pnand %p205, %p206
    %p208 = pneg %p207
    // Predicated region
    $region9: #{gyx_forward.19} parent=5 // pred_check
      _
    $region10: #{gyx_forward.19} parent=5 // pred_check_branch
      %210 = sbr.rel (%p207) target = $region12
    $region11: #{gyx_forward.19} parent=5 // pred_region
      %s211 = ssub.s32 %s12, 1
      // Predicated region
      $region13: #{gyx_forward.19} parent=11 // pred_check
        %p212 = pneg %p87
      $region14: #{gyx_forward.19} parent=11 // pred_check_branch
        %214 = sbr.rel (%p212) target = $region16
      $region15: #{gyx_forward.19} parent=11 // pred_region
        %s215 = smul.u32 144, %s24
        %s216 = smul.u32 2, %s23
        %p217 = scmp.lt.s32.totalorder %s215, 143
        %s218 = scalar_select %p217, %s215, 143
        %p219 = scmp.lt.s32.totalorder %s216, 1
        %s220 = scalar_select %p219, %s216, 1
        %s221 = smul.addr %s218, 2
        %s222 = sadd.s32 %s220, %s221
        %s223 = smul.addr %s222, 4
        %s224 = scalar_lea.vmem %s1, %s223
        %s225 = smul.u32 144, %s24
        %s226 = smul.u32 2, %s23
      $region16: #{gyx_forward.19} parent=11 // pred_fallthru
        _
      // Predicated region
      $region17: #{gyx_forward.19} parent=11 // pred_check
        %p227 = pneg %p113
      $region18: #{gyx_forward.19} parent=11 // pred_check_branch
        %229 = sbr.rel (%p227) target = $region20
      $region19: #{gyx_forward.19} parent=11 // pred_region
        %s230 = smul.u32 2, %s23
        %p231 = scmp.lt.s32.totalorder %s230, 1
        %s232 = scalar_select %p231, %s230, 1
        %s233 = scalar_lea.vmem %s2, %s232
        %s234 = smul.u32 2, %s23
      $region20: #{gyx_forward.19} parent=11 // pred_fallthru
        _
    $region12: #{gyx_forward.19} parent=5 // pred_fallthru
      _
    %p235 = scmp.lt.s32.totalorder %s12, 2
    // Predicated region
    $region21: #{gyx_forward.19} parent=5 // pred_check
      %p236 = pneg %p235
    $region22: #{gyx_forward.19} parent=5 // pred_check_branch
      %238 = sbr.rel (%p236) target = $region24
    $region23: #{gyx_forward.19} parent=5 // pred_region
      // Predicated region
      $region25: #{gyx_forward.19} parent=23 // pred_check
        %p239 = pneg %p53
      $region26: #{gyx_forward.19} parent=23 // pred_check_branch
        %241 = sbr.rel (%p239) target = $region28
      $region27: #{gyx_forward.19} parent=23 // pred_region
        %s242 = smul.u32 2, %s19
        %s243 = smul.u32 9, %s21
        %p244 = scmp.lt.s32.totalorder %s242, 3
        %s245 = scalar_select %p244, %s242, 3
        %p246 = scmp.lt.s32.totalorder %s243, 8
        %s247 = scalar_select %p246, %s243, 8
        %s248 = smul.addr %s245, 9
        %s249 = sadd.s32 %s247, %s248
        %s250 = smul.addr %s249, 4
        %s251 = scalar_lea.vmem %s0, %s250
        %s252 = smul.u32 2, %s19
        %s253 = smul.u32 9, %s21
      $region28: #{gyx_forward.19} parent=23 // pred_fallthru
        _
    $region24: #{gyx_forward.19} parent=5 // pred_fallthru
      _
    %p254 = scmp.le.s32.totalorder 1, %s12
    %p255 = scmp.lt.s32.totalorder %s12, 3
    %p256 = pnand %p254, %p255
    %p257 = pneg %p256
    // Predicated region
    $region29: #{gyx_forward.19} parent=5 // pred_check
      _
    $region30: #{gyx_forward.19} parent=5 // pred_check_branch
      %259 = sbr.rel (%p256) target = $region32
    $region31: #{gyx_forward.19} parent=5 // pred_region
      %s260 = ssub.s32 %s12, 1
      %s261 = smul.u32 2, %s22
      %s262 = smul.u32 9, %s24
      %p263 = scmp.lt.s32.totalorder %s261, 3
      %s264 = scalar_select %p263, %s261, 3
      %p265 = scmp.lt.s32.totalorder %s262, 8
      %s266 = scalar_select %p265, %s262, 8
      %s267 = smul.addr %s264, 9
      %s268 = sadd.s32 %s266, %s267
      %s269 = smul.addr %s268, 4
      %s270 = scalar_lea.vmem %s0, %s269
      %p271 = pneg %p59
      %p272 = pneg %p56
      %s273 = smul.u32 144, %s24
      %s274 = smul.u32 2, %s23
      %p275 = scmp.lt.s32.totalorder %s273, 143
      %s276 = scalar_select %p275, %s273, 143
      %p277 = scmp.lt.s32.totalorder %s274, 1
      %s278 = scalar_select %p277, %s274, 1
      %s279 = smul.addr %s276, 2
      %s280 = sadd.s32 %s278, %s279
      %s281 = smul.addr %s280, 4
      %s282 = scalar_lea.vmem %s1, %s281
      %p283 = pneg %p87
      %p284 = pneg %p84
      %s285 = smul.u32 2, %s23
      %p286 = scmp.lt.s32.totalorder %s285, 1
      %s287 = scalar_select %p286, %s285, 1
      %s288 = scalar_lea.vmem %s2, %s287
      %p289 = pneg %p113
      %p290 = pneg %p110
      %p291 = pneg %p141
      %p292 = pneg %p138
      %s293 = smul.u32 2, %s22
      %s294 = smul.u32 2, %s23
      %p295 = scmp.lt.s32.totalorder %s293, 3
      %s296 = scalar_select %p295, %s293, 3
      %p297 = scmp.lt.s32.totalorder %s294, 1
      %s298 = scalar_select %p297, %s294, 1
      %s299 = smul.addr %s296, 2
      %s300 = sadd.s32 %s298, %s299
      %s301 = smul.addr %s300, 8
      %s302 = scalar_lea.vmem %s3, %s301
      %p303 = pneg %p169
      %p304 = pneg %p166
      %s305 = smul.u32 2, %s23
      %p306 = scmp.lt.s32.totalorder %s22, 1
      %s307 = scalar_select %p306, %s22, 1
      %p308 = scmp.lt.s32.totalorder %s305, 1
      %s309 = scalar_select %p308, %s305, 1
      %s310 = smul.addr %s307, 2
      %s311 = sadd.s32 %s309, %s310
      %s312 = scalar_lea.vmem %s4, %s311
      %p313 = pneg %p197
      %p314 = pneg %p194
      %s315 = smul.u32 2, %s23
      %p316 = scmp.lt.s32.totalorder %s22, 1
      %s317 = scalar_select %p316, %s22, 1
      %p318 = scmp.lt.s32.totalorder %s315, 1
      %s319 = scalar_select %p318, %s315, 1
      %s320 = smul.addr %s317, 2
      %s321 = sadd.s32 %s319, %s320
      %s322 = scalar_lea.vmem %s5, %s321
      %s323 = smul.u32 2, %s22
      %s324 = smul.u32 9, %s24
      %p325 = scmp.lt.s32.totalorder %s323, 3
      %s326 = scalar_select %p325, %s323, 3
      %p327 = scmp.lt.s32.totalorder %s324, 8
      %s328 = scalar_select %p327, %s324, 8
      %s329 = smul.addr %s326, 9
      %s330 = sadd.s32 %s328, %s329
      %s331 = smul.addr %s330, 4
      %s332 = scalar_lea.vmem %s0, %s331
      %s333 = smul.u32 2, %s22
      %s334 = smul.u32 9, %s24
      %s335 = smul.u32 144, %s24
      %s336 = smul.u32 2, %s23
      %p337 = scmp.lt.s32.totalorder %s335, 143
      %s338 = scalar_select %p337, %s335, 143
      %p339 = scmp.lt.s32.totalorder %s336, 1
      %s340 = scalar_select %p339, %s336, 1
      %s341 = smul.addr %s338, 2
      %s342 = sadd.s32 %s340, %s341
      %s343 = smul.addr %s342, 4
      %s344 = scalar_lea.vmem %s1, %s343
      %s345 = smul.u32 144, %s24
      %s346 = smul.u32 2, %s23
      %s347 = smul.u32 2, %s23
      %p348 = scmp.lt.s32.totalorder %s347, 1
      %s349 = scalar_select %p348, %s347, 1
      %s350 = scalar_lea.vmem %s2, %s349
      %s351 = smul.u32 2, %s23
      %s352 = smul.u32 2, %s22
      %s353 = smul.u32 2, %s23
      %p354 = scmp.lt.s32.totalorder %s352, 3
      %s355 = scalar_select %p354, %s352, 3
      %p356 = scmp.lt.s32.totalorder %s353, 1
      %s357 = scalar_select %p356, %s353, 1
      %s358 = smul.addr %s355, 2
      %s359 = sadd.s32 %s357, %s358
      %s360 = smul.addr %s359, 8
      %s361 = scalar_lea.vmem %s3, %s360
      %s362 = smul.u32 2, %s22
      %s363 = smul.u32 2, %s23
      %s364 = smul.u32 2, %s23
      %p365 = scmp.lt.s32.totalorder %s22, 1
      %s366 = scalar_select %p365, %s22, 1
      %p367 = scmp.lt.s32.totalorder %s364, 1
      %s368 = scalar_select %p367, %s364, 1
      %s369 = smul.addr %s366, 2
      %s370 = sadd.s32 %s368, %s369
      %s371 = scalar_lea.vmem %s4, %s370
      %s372 = smul.u32 2, %s23
      %s373 = smul.u32 2, %s23
      %p374 = scmp.lt.s32.totalorder %s22, 1
      %s375 = scalar_select %p374, %s22, 1
      %p376 = scmp.lt.s32.totalorder %s373, 1
      %s377 = scalar_select %p376, %s373, 1
      %s378 = smul.addr %s375, 2
      %s379 = sadd.s32 %s377, %s378
      %s380 = scalar_lea.vmem %s5, %s379
      %s381 = smul.u32 2, %s23
      %p382 = scmp.eq.s32.totalorder %s24, 0
      // Predicated region
      $region33: #{gyx_forward.19} parent=31 // pred_check
        %p383 = pneg %p382
      $region34: #{gyx_forward.19} parent=31 // pred_check_branch
        %385 = sbr.rel (%p383) target = $region36
      $region35: #{gyx_forward.19} parent=31 // pred_region
        %386 = vst [vmem:[#allocation2] sm:$0xff] 0.0
        %387 = vst [vmem:[#allocation2 + $0x8] sm:$0xff] 0.0
        %388 = vst [vmem:[#allocation2 + $0x10] sm:$0xff] 0.0
        %389 = vst [vmem:[#allocation2 + $0x18] sm:$0xff] 0.0
      $region36: #{gyx_forward.19} parent=31 // pred_fallthru
        _
      %v390 = vld [vmem:[#allocation2] sm:$0xff]
      %v391 = vld [vmem:[#allocation2 + $0x8] sm:$0xff]
      %v392 = vld [vmem:[#allocation2 + $0x10] sm:$0xff]
      %v393 = vld [vmem:[#allocation2 + $0x18] sm:$0xff]
      %v394 = vld [vmem:[%s332] sm:$0xff]
      %v395 = vld [vmem:[%s332 + $0x8] sm:$0xff]
      %v396 = vld [vmem:[%s332 + $0x10] sm:$0xff]
      %v397 = vld [vmem:[%s332 + $0x18] sm:$0xff]
      %v398 = vld [vmem:[%s332 + $0x20] sm:$0xf]
      %v399 = vld [vmem:[%s332 + $0x24] sm:$0xff]
      %v400 = vld [vmem:[%s332 + $0x2c] sm:$0xff]
      %v401 = vld [vmem:[%s332 + $0x34] sm:$0xff]
      %v402 = vld [vmem:[%s332 + $0x3c] sm:$0xff]
      %v403 = vld [vmem:[%s332 + $0x44] sm:$0xf]
      %v404 = vld [vmem:[%s344] sm:$0xff]
      %v405 = vld [vmem:[%s344 + $0x8] sm:$0xff]
      %v406 = vld [vmem:[%s344 + $0x10] sm:$0xff]
      %v407 = vld [vmem:[%s344 + $0x18] sm:$0xff]
      %v408 = vld [vmem:[%s344 + $0x20] sm:$0xff]
      %v409 = vld [vmem:[%s344 + $0x28] sm:$0xff]
      %v410 = vld [vmem:[%s344 + $0x30] sm:$0xff]
      %v411 = vld [vmem:[%s344 + $0x38] sm:$0xff]
      %v412 = vld [vmem:[%s344 + $0x40] sm:$0xff]
      %v413 = vld [vmem:[%s344 + $0x48] sm:$0xff]
      %v414 = vld [vmem:[%s344 + $0x50] sm:$0xff]
      %v415 = vld [vmem:[%s344 + $0x58] sm:$0xff]
      %v416 = vld [vmem:[%s344 + $0x60] sm:$0xff]
      %v417 = vld [vmem:[%s344 + $0x68] sm:$0xff]
      %v418 = vld [vmem:[%s344 + $0x70] sm:$0xff]
      %v419 = vld [vmem:[%s344 + $0x78] sm:$0xff]
      %v420 = vld [vmem:[%s344 + $0x80] sm:$0xff]
      %v421 = vld [vmem:[%s344 + $0x88] sm:$0xff]
      %v422 = vld [vmem:[%s344 + $0x90] sm:$0xff]
      %v423 = vld [vmem:[%s344 + $0x98] sm:$0xff]
      %v424 = vld [vmem:[%s344 + $0xa0] sm:$0xff]
      %v425 = vld [vmem:[%s344 + $0xa8] sm:$0xff]
      %v426 = vld [vmem:[%s344 + $0xb0] sm:$0xff]
      %v427 = vld [vmem:[%s344 + $0xb8] sm:$0xff]
      %v428 = vld [vmem:[%s344 + $0xc0] sm:$0xff]
      %v429 = vld [vmem:[%s344 + $0xc8] sm:$0xff]
      %v430 = vld [vmem:[%s344 + $0xd0] sm:$0xff]
      %v431 = vld [vmem:[%s344 + $0xd8] sm:$0xff]
      %v432 = vld [vmem:[%s344 + $0xe0] sm:$0xff]
      %v433 = vld [vmem:[%s344 + $0xe8] sm:$0xff]
      %v434 = vld [vmem:[%s344 + $0xf0] sm:$0xff]
      %v435 = vld [vmem:[%s344 + $0xf8] sm:$0xff]
      %v436 = vld [vmem:[%s344 + $0x100] sm:$0xff]
      %v437 = vld [vmem:[%s344 + $0x108] sm:$0xff]
      %v438 = vld [vmem:[%s344 + $0x110] sm:$0xff]
      %v439 = vld [vmem:[%s344 + $0x118] sm:$0xff]
      %v440 = vld [vmem:[%s344 + $0x120] sm:$0xff]
      %v441 = vld [vmem:[%s344 + $0x128] sm:$0xff]
      %v442 = vld [vmem:[%s344 + $0x130] sm:$0xff]
      %v443 = vld [vmem:[%s344 + $0x138] sm:$0xff]
      %v444 = vld [vmem:[%s344 + $0x140] sm:$0xff]
      %v445 = vld [vmem:[%s344 + $0x148] sm:$0xff]
      %v446 = vld [vmem:[%s344 + $0x150] sm:$0xff]
      %v447 = vld [vmem:[%s344 + $0x158] sm:$0xff]
      %v448 = vld [vmem:[%s344 + $0x160] sm:$0xff]
      %v449 = vld [vmem:[%s344 + $0x168] sm:$0xff]
      %v450 = vld [vmem:[%s344 + $0x170] sm:$0xff]
      %v451 = vld [vmem:[%s344 + $0x178] sm:$0xff]
      %v452 = vld [vmem:[%s344 + $0x180] sm:$0xff]
      %v453 = vld [vmem:[%s344 + $0x188] sm:$0xff]
      %v454 = vld [vmem:[%s344 + $0x190] sm:$0xff]
      %v455 = vld [vmem:[%s344 + $0x198] sm:$0xff]
      %v456 = vld [vmem:[%s344 + $0x1a0] sm:$0xff]
      %v457 = vld [vmem:[%s344 + $0x1a8] sm:$0xff]
      %v458 = vld [vmem:[%s344 + $0x1b0] sm:$0xff]
      %v459 = vld [vmem:[%s344 + $0x1b8] sm:$0xff]
      %v460 = vld [vmem:[%s344 + $0x1c0] sm:$0xff]
      %v461 = vld [vmem:[%s344 + $0x1c8] sm:$0xff]
      %v462 = vld [vmem:[%s344 + $0x1d0] sm:$0xff]
      %v463 = vld [vmem:[%s344 + $0x1d8] sm:$0xff]
      %v464 = vld [vmem:[%s344 + $0x1e0] sm:$0xff]
      %v465 = vld [vmem:[%s344 + $0x1e8] sm:$0xff]
      %v466 = vld [vmem:[%s344 + $0x1f0] sm:$0xff]
      %v467 = vld [vmem:[%s344 + $0x1f8] sm:$0xff]
      %v468 = vld [vmem:[%s344 + $0x200] sm:$0xff]
      %v469 = vld [vmem:[%s344 + $0x208] sm:$0xff]
      %v470 = vld [vmem:[%s344 + $0x210] sm:$0xff]
      %v471 = vld [vmem:[%s344 + $0x218] sm:$0xff]
      %v472 = vld [vmem:[%s344 + $0x220] sm:$0xff]
      %v473 = vld [vmem:[%s344 + $0x228] sm:$0xff]
      %v474 = vld [vmem:[%s344 + $0x230] sm:$0xff]
      %v475 = vld [vmem:[%s344 + $0x238] sm:$0xff]
      %v476 = vld [vmem:[%s344 + $0x240] sm:$0xff]
      %v477 = vld [vmem:[%s344 + $0x248] sm:$0xff]
      %v478 = vld [vmem:[%s344 + $0x250] sm:$0xff]
      %v479 = vld [vmem:[%s344 + $0x258] sm:$0xff]
      %v480 = vld [vmem:[%s344 + $0x260] sm:$0xff]
      %v481 = vld [vmem:[%s344 + $0x268] sm:$0xff]
      %v482 = vld [vmem:[%s344 + $0x270] sm:$0xff]
      %v483 = vld [vmem:[%s344 + $0x278] sm:$0xff]
      %v484 = vld [vmem:[%s344 + $0x280] sm:$0xff]
      %v485 = vld [vmem:[%s344 + $0x288] sm:$0xff]
      %v486 = vld [vmem:[%s344 + $0x290] sm:$0xff]
      %v487 = vld [vmem:[%s344 + $0x298] sm:$0xff]
      %v488 = vld [vmem:[%s344 + $0x2a0] sm:$0xff]
      %v489 = vld [vmem:[%s344 + $0x2a8] sm:$0xff]
      %v490 = vld [vmem:[%s344 + $0x2b0] sm:$0xff]
      %v491 = vld [vmem:[%s344 + $0x2b8] sm:$0xff]
      %v492 = vld [vmem:[%s344 + $0x2c0] sm:$0xff]
      %v493 = vld [vmem:[%s344 + $0x2c8] sm:$0xff]
      %v494 = vld [vmem:[%s344 + $0x2d0] sm:$0xff]
      %v495 = vld [vmem:[%s344 + $0x2d8] sm:$0xff]
      %v496 = vld [vmem:[%s344 + $0x2e0] sm:$0xff]
      %v497 = vld [vmem:[%s344 + $0x2e8] sm:$0xff]
      %v498 = vld [vmem:[%s344 + $0x2f0] sm:$0xff]
      %v499 = vld [vmem:[%s344 + $0x2f8] sm:$0xff]
      %v500 = vld [vmem:[%s344 + $0x300] sm:$0xff]
      %v501 = vld [vmem:[%s344 + $0x308] sm:$0xff]
      %v502 = vld [vmem:[%s344 + $0x310] sm:$0xff]
      %v503 = vld [vmem:[%s344 + $0x318] sm:$0xff]
      %v504 = vld [vmem:[%s344 + $0x320] sm:$0xff]
      %v505 = vld [vmem:[%s344 + $0x328] sm:$0xff]
      %v506 = vld [vmem:[%s344 + $0x330] sm:$0xff]
      %v507 = vld [vmem:[%s344 + $0x338] sm:$0xff]
      %v508 = vld [vmem:[%s344 + $0x340] sm:$0xff]
      %v509 = vld [vmem:[%s344 + $0x348] sm:$0xff]
      %v510 = vld [vmem:[%s344 + $0x350] sm:$0xff]
      %v511 = vld [vmem:[%s344 + $0x358] sm:$0xff]
      %v512 = vld [vmem:[%s344 + $0x360] sm:$0xff]
      %v513 = vld [vmem:[%s344 + $0x368] sm:$0xff]
      %v514 = vld [vmem:[%s344 + $0x370] sm:$0xff]
      %v515 = vld [vmem:[%s344 + $0x378] sm:$0xff]
      %v516 = vld [vmem:[%s344 + $0x380] sm:$0xff]
      %v517 = vld [vmem:[%s344 + $0x388] sm:$0xff]
      %v518 = vld [vmem:[%s344 + $0x390] sm:$0xff]
      %v519 = vld [vmem:[%s344 + $0x398] sm:$0xff]
      %v520 = vld [vmem:[%s344 + $0x3a0] sm:$0xff]
      %v521 = vld [vmem:[%s344 + $0x3a8] sm:$0xff]
      %v522 = vld [vmem:[%s344 + $0x3b0] sm:$0xff]
      %v523 = vld [vmem:[%s344 + $0x3b8] sm:$0xff]
      %v524 = vld [vmem:[%s344 + $0x3c0] sm:$0xff]
      %v525 = vld [vmem:[%s344 + $0x3c8] sm:$0xff]
      %v526 = vld [vmem:[%s344 + $0x3d0] sm:$0xff]
      %v527 = vld [vmem:[%s344 + $0x3d8] sm:$0xff]
      %v528 = vld [vmem:[%s344 + $0x3e0] sm:$0xff]
      %v529 = vld [vmem:[%s344 + $0x3e8] sm:$0xff]
      %v530 = vld [vmem:[%s344 + $0x3f0] sm:$0xff]
      %v531 = vld [vmem:[%s344 + $0x3f8] sm:$0xff]
      %v532 = vld [vmem:[%s344 + $0x400] sm:$0xff]
      %v533 = vld [vmem:[%s344 + $0x408] sm:$0xff]
      %v534 = vld [vmem:[%s344 + $0x410] sm:$0xff]
      %v535 = vld [vmem:[%s344 + $0x418] sm:$0xff]
      %v536 = vld [vmem:[%s344 + $0x420] sm:$0xff]
      %v537 = vld [vmem:[%s344 + $0x428] sm:$0xff]
      %v538 = vld [vmem:[%s344 + $0x430] sm:$0xff]
      %v539 = vld [vmem:[%s344 + $0x438] sm:$0xff]
      %v540 = vld [vmem:[%s344 + $0x440] sm:$0xff]
      %v541 = vld [vmem:[%s344 + $0x448] sm:$0xff]
      %v542 = vld [vmem:[%s344 + $0x450] sm:$0xff]
      %v543 = vld [vmem:[%s344 + $0x458] sm:$0xff]
      %v544 = vld [vmem:[%s344 + $0x460] sm:$0xff]
      %v545 = vld [vmem:[%s344 + $0x468] sm:$0xff]
      %v546 = vld [vmem:[%s344 + $0x470] sm:$0xff]
      %v547 = vld [vmem:[%s344 + $0x478] sm:$0xff]
      %v558 = vunpack.c.l.b16 %v394
      %v559 = vunpack.c.h.b16 %v394
      %v560 = vunpack.c.l.b16 %v395
      %v561 = vunpack.c.h.b16 %v395
      %v562 = vunpack.c.l.b16 %v396
      %v563 = vunpack.c.h.b16 %v396
      %v564 = vunpack.c.l.b16 %v397
      %v565 = vunpack.c.h.b16 %v397
      %v566 = vunpack.c.l.b16 %v398
      %v567 = vunpack.c.l.b16 %v399
      %v568 = vunpack.c.h.b16 %v399
      %v569 = vunpack.c.l.b16 %v400
      %v570 = vunpack.c.h.b16 %v400
      %v571 = vunpack.c.l.b16 %v401
      %v572 = vunpack.c.h.b16 %v401
      %v573 = vunpack.c.l.b16 %v402
      %v574 = vunpack.c.h.b16 %v402
      %v575 = vunpack.c.l.b16 %v403
      %v576 = vpack.c.b16 %v567, %v558
      %v577 = vpack.c.b16 %v568, %v559
      %v578 = vpack.c.b16 %v569, %v560
      %v579 = vpack.c.b16 %v570, %v561
      %v580 = vpack.c.b16 %v571, %v562
      %v581 = vpack.c.b16 %v572, %v563
      %v582 = vpack.c.b16 %v573, %v564
      %v583 = vpack.c.b16 %v574, %v565
      %v584 = vpack.c.b16 %v575, %v566
      %v738 = vunpack.c.l.b16 %v404
      %v739 = vunpack.c.h.b16 %v404
      %v740 = vunpack.c.l.b16 %v405
      %v741 = vunpack.c.h.b16 %v405
      %v742 = vunpack.c.l.b16 %v406
      %v743 = vunpack.c.h.b16 %v406
      %v744 = vunpack.c.l.b16 %v407
      %v745 = vunpack.c.h.b16 %v407
      %v746 = vunpack.c.l.b16 %v408
      %v747 = vunpack.c.h.b16 %v408
      %v748 = vunpack.c.l.b16 %v409
      %v749 = vunpack.c.h.b16 %v409
      %v750 = vunpack.c.l.b16 %v410
      %v751 = vunpack.c.h.b16 %v410
      %v752 = vunpack.c.l.b16 %v411
      %v753 = vunpack.c.h.b16 %v411
      %v754 = vunpack.c.l.b16 %v412
      %v755 = vunpack.c.h.b16 %v412
      %v756 = vunpack.c.l.b16 %v413
      %v757 = vunpack.c.h.b16 %v413
      %v758 = vunpack.c.l.b16 %v414
      %v759 = vunpack.c.h.b16 %v414
      %v760 = vunpack.c.l.b16 %v415
      %v761 = vunpack.c.h.b16 %v415
      %v762 = vunpack.c.l.b16 %v416
      %v763 = vunpack.c.h.b16 %v416
      %v764 = vunpack.c.l.b16 %v417
      %v765 = vunpack.c.h.b16 %v417
      %v766 = vunpack.c.l.b16 %v418
      %v767 = vunpack.c.h.b16 %v418
      %v768 = vunpack.c.l.b16 %v419
      %v769 = vunpack.c.h.b16 %v419
      %v770 = vunpack.c.l.b16 %v420
      %v771 = vunpack.c.h.b16 %v420
      %v772 = vunpack.c.l.b16 %v421
      %v773 = vunpack.c.h.b16 %v421
      %v774 = vunpack.c.l.b16 %v422
      %v775 = vunpack.c.h.b16 %v422
      %v776 = vunpack.c.l.b16 %v423
      %v777 = vunpack.c.h.b16 %v423
      %v778 = vunpack.c.l.b16 %v424
      %v779 = vunpack.c.h.b16 %v424
      %v780 = vunpack.c.l.b16 %v425
      %v781 = vunpack.c.h.b16 %v425
      %v782 = vunpack.c.l.b16 %v426
      %v783 = vunpack.c.h.b16 %v426
      %v784 = vunpack.c.l.b16 %v427
      %v785 = vunpack.c.h.b16 %v427
      %v786 = vunpack.c.l.b16 %v428
      %v787 = vunpack.c.h.b16 %v428
      %v788 = vunpack.c.l.b16 %v429
      %v789 = vunpack.c.h.b16 %v429
      %v790 = vunpack.c.l.b16 %v430
      %v791 = vunpack.c.h.b16 %v430
      %v792 = vunpack.c.l.b16 %v431
      %v793 = vunpack.c.h.b16 %v431
      %v794 = vunpack.c.l.b16 %v432
      %v795 = vunpack.c.h.b16 %v432
      %v796 = vunpack.c.l.b16 %v433
      %v797 = vunpack.c.h.b16 %v433
      %v798 = vunpack.c.l.b16 %v434
      %v799 = vunpack.c.h.b16 %v434
      %v800 = vunpack.c.l.b16 %v435
      %v801 = vunpack.c.h.b16 %v435
      %v802 = vunpack.c.l.b16 %v436
      %v803 = vunpack.c.h.b16 %v436
      %v804 = vunpack.c.l.b16 %v437
      %v805 = vunpack.c.h.b16 %v437
      %v806 = vunpack.c.l.b16 %v438
      %v807 = vunpack.c.h.b16 %v438
      %v808 = vunpack.c.l.b16 %v439
      %v809 = vunpack.c.h.b16 %v439
      %v810 = vunpack.c.l.b16 %v440
      %v811 = vunpack.c.h.b16 %v440
      %v812 = vunpack.c.l.b16 %v441
      %v813 = vunpack.c.h.b16 %v441
      %v814 = vunpack.c.l.b16 %v442
      %v815 = vunpack.c.h.b16 %v442
      %v816 = vunpack.c.l.b16 %v443
      %v817 = vunpack.c.h.b16 %v443
      %v818 = vunpack.c.l.b16 %v444
      %v819 = vunpack.c.h.b16 %v444
      %v820 = vunpack.c.l.b16 %v445
      %v821 = vunpack.c.h.b16 %v445
      %v822 = vunpack.c.l.b16 %v446
      %v823 = vunpack.c.h.b16 %v446
      %v824 = vunpack.c.l.b16 %v447
      %v825 = vunpack.c.h.b16 %v447
      %v826 = vunpack.c.l.b16 %v448
      %v827 = vunpack.c.h.b16 %v448
      %v828 = vunpack.c.l.b16 %v449
      %v829 = vunpack.c.h.b16 %v449
      %v830 = vunpack.c.l.b16 %v450
      %v831 = vunpack.c.h.b16 %v450
      %v832 = vunpack.c.l.b16 %v451
      %v833 = vunpack.c.h.b16 %v451
      %v834 = vunpack.c.l.b16 %v452
      %v835 = vunpack.c.h.b16 %v452
      %v836 = vunpack.c.l.b16 %v453
      %v837 = vunpack.c.h.b16 %v453
      %v838 = vunpack.c.l.b16 %v454
      %v839 = vunpack.c.h.b16 %v454
      %v840 = vunpack.c.l.b16 %v455
      %v841 = vunpack.c.h.b16 %v455
      %v842 = vunpack.c.l.b16 %v456
      %v843 = vunpack.c.h.b16 %v456
      %v844 = vunpack.c.l.b16 %v457
      %v845 = vunpack.c.h.b16 %v457
      %v846 = vunpack.c.l.b16 %v458
      %v847 = vunpack.c.h.b16 %v458
      %v848 = vunpack.c.l.b16 %v459
      %v849 = vunpack.c.h.b16 %v459
      %v850 = vunpack.c.l.b16 %v460
      %v851 = vunpack.c.h.b16 %v460
      %v852 = vunpack.c.l.b16 %v461
      %v853 = vunpack.c.h.b16 %v461
      %v854 = vunpack.c.l.b16 %v462
      %v855 = vunpack.c.h.b16 %v462
      %v856 = vunpack.c.l.b16 %v463
      %v857 = vunpack.c.h.b16 %v463
      %v858 = vunpack.c.l.b16 %v464
      %v859 = vunpack.c.h.b16 %v464
      %v860 = vunpack.c.l.b16 %v465
      %v861 = vunpack.c.h.b16 %v465
      %v862 = vunpack.c.l.b16 %v466
      %v863 = vunpack.c.h.b16 %v466
      %v864 = vunpack.c.l.b16 %v467
      %v865 = vunpack.c.h.b16 %v467
      %v866 = vunpack.c.l.b16 %v468
      %v867 = vunpack.c.h.b16 %v468
      %v868 = vunpack.c.l.b16 %v469
      %v869 = vunpack.c.h.b16 %v469
      %v870 = vunpack.c.l.b16 %v470
      %v871 = vunpack.c.h.b16 %v470
      %v872 = vunpack.c.l.b16 %v471
      %v873 = vunpack.c.h.b16 %v471
      %v874 = vunpack.c.l.b16 %v472
      %v875 = vunpack.c.h.b16 %v472
      %v876 = vunpack.c.l.b16 %v473
      %v877 = vunpack.c.h.b16 %v473
      %v878 = vunpack.c.l.b16 %v474
      %v879 = vunpack.c.h.b16 %v474
      %v880 = vunpack.c.l.b16 %v475
      %v881 = vunpack.c.h.b16 %v475
      %v882 = vunpack.c.l.b16 %v476
      %v883 = vunpack.c.h.b16 %v476
      %v884 = vunpack.c.l.b16 %v477
      %v885 = vunpack.c.h.b16 %v477
      %v886 = vunpack.c.l.b16 %v478
      %v887 = vunpack.c.h.b16 %v478
      %v888 = vunpack.c.l.b16 %v479
      %v889 = vunpack.c.h.b16 %v479
      %v890 = vunpack.c.l.b16 %v480
      %v891 = vunpack.c.h.b16 %v480
      %v892 = vunpack.c.l.b16 %v481
      %v893 = vunpack.c.h.b16 %v481
      %v894 = vunpack.c.l.b16 %v482
      %v895 = vunpack.c.h.b16 %v482
      %v896 = vunpack.c.l.b16 %v483
      %v897 = vunpack.c.h.b16 %v483
      %v898 = vunpack.c.l.b16 %v484
      %v899 = vunpack.c.h.b16 %v484
      %v900 = vunpack.c.l.b16 %v485
      %v901 = vunpack.c.h.b16 %v485
      %v902 = vunpack.c.l.b16 %v486
      %v903 = vunpack.c.h.b16 %v486
      %v904 = vunpack.c.l.b16 %v487
      %v905 = vunpack.c.h.b16 %v487
      %v906 = vunpack.c.l.b16 %v488
      %v907 = vunpack.c.h.b16 %v488
      %v908 = vunpack.c.l.b16 %v489
      %v909 = vunpack.c.h.b16 %v489
      %v910 = vunpack.c.l.b16 %v490
      %v911 = vunpack.c.h.b16 %v490
      %v912 = vunpack.c.l.b16 %v491
      %v913 = vunpack.c.h.b16 %v491
      %v914 = vunpack.c.l.b16 %v492
      %v915 = vunpack.c.h.b16 %v492
      %v916 = vunpack.c.l.b16 %v493
      %v917 = vunpack.c.h.b16 %v493
      %v918 = vunpack.c.l.b16 %v494
      %v919 = vunpack.c.h.b16 %v494
      %v920 = vunpack.c.l.b16 %v495
      %v921 = vunpack.c.h.b16 %v495
      %v922 = vunpack.c.l.b16 %v496
      %v923 = vunpack.c.h.b16 %v496
      %v924 = vunpack.c.l.b16 %v497
      %v925 = vunpack.c.h.b16 %v497
      %v926 = vunpack.c.l.b16 %v498
      %v927 = vunpack.c.h.b16 %v498
      %v928 = vunpack.c.l.b16 %v499
      %v929 = vunpack.c.h.b16 %v499
      %v930 = vunpack.c.l.b16 %v500
      %v931 = vunpack.c.h.b16 %v500
      %v932 = vunpack.c.l.b16 %v501
      %v933 = vunpack.c.h.b16 %v501
      %v934 = vunpack.c.l.b16 %v502
      %v935 = vunpack.c.h.b16 %v502
      %v936 = vunpack.c.l.b16 %v503
      %v937 = vunpack.c.h.b16 %v503
      %v938 = vunpack.c.l.b16 %v504
      %v939 = vunpack.c.h.b16 %v504
      %v940 = vunpack.c.l.b16 %v505
      %v941 = vunpack.c.h.b16 %v505
      %v942 = vunpack.c.l.b16 %v506
      %v943 = vunpack.c.h.b16 %v506
      %v944 = vunpack.c.l.b16 %v507
      %v945 = vunpack.c.h.b16 %v507
      %v946 = vunpack.c.l.b16 %v508
      %v947 = vunpack.c.h.b16 %v508
      %v948 = vunpack.c.l.b16 %v509
      %v949 = vunpack.c.h.b16 %v509
      %v950 = vunpack.c.l.b16 %v510
      %v951 = vunpack.c.h.b16 %v510
      %v952 = vunpack.c.l.b16 %v511
      %v953 = vunpack.c.h.b16 %v511
      %v954 = vunpack.c.l.b16 %v512
      %v955 = vunpack.c.h.b16 %v512
      %v956 = vunpack.c.l.b16 %v513
      %v957 = vunpack.c.h.b16 %v513
      %v958 = vunpack.c.l.b16 %v514
      %v959 = vunpack.c.h.b16 %v514
      %v960 = vunpack.c.l.b16 %v515
      %v961 = vunpack.c.h.b16 %v515
      %v962 = vunpack.c.l.b16 %v516
      %v963 = vunpack.c.h.b16 %v516
      %v964 = vunpack.c.l.b16 %v517
      %v965 = vunpack.c.h.b16 %v517
      %v966 = vunpack.c.l.b16 %v518
      %v967 = vunpack.c.h.b16 %v518
      %v968 = vunpack.c.l.b16 %v519
      %v969 = vunpack.c.h.b16 %v519
      %v970 = vunpack.c.l.b16 %v520
      %v971 = vunpack.c.h.b16 %v520
      %v972 = vunpack.c.l.b16 %v521
      %v973 = vunpack.c.h.b16 %v521
      %v974 = vunpack.c.l.b16 %v522
      %v975 = vunpack.c.h.b16 %v522
      %v976 = vunpack.c.l.b16 %v523
      %v977 = vunpack.c.h.b16 %v523
      %v978 = vunpack.c.l.b16 %v524
      %v979 = vunpack.c.h.b16 %v524
      %v980 = vunpack.c.l.b16 %v525
      %v981 = vunpack.c.h.b16 %v525
      %v982 = vunpack.c.l.b16 %v526
      %v983 = vunpack.c.h.b16 %v526
      %v984 = vunpack.c.l.b16 %v527
      %v985 = vunpack.c.h.b16 %v527
      %v986 = vunpack.c.l.b16 %v528
      %v987 = vunpack.c.h.b16 %v528
      %v988 = vunpack.c.l.b16 %v529
      %v989 = vunpack.c.h.b16 %v529
      %v990 = vunpack.c.l.b16 %v530
      %v991 = vunpack.c.h.b16 %v530
      %v992 = vunpack.c.l.b16 %v531
      %v993 = vunpack.c.h.b16 %v531
      %v994 = vunpack.c.l.b16 %v532
      %v995 = vunpack.c.h.b16 %v532
      %v996 = vunpack.c.l.b16 %v533
      %v997 = vunpack.c.h.b16 %v533
      %v998 = vunpack.c.l.b16 %v534
      %v999 = vunpack.c.h.b16 %v534
      %v1000 = vunpack.c.l.b16 %v535
      %v1001 = vunpack.c.h.b16 %v535
      %v1002 = vunpack.c.l.b16 %v536
      %v1003 = vunpack.c.h.b16 %v536
      %v1004 = vunpack.c.l.b16 %v537
      %v1005 = vunpack.c.h.b16 %v537
      %v1006 = vunpack.c.l.b16 %v538
      %v1007 = vunpack.c.h.b16 %v538
      %v1008 = vunpack.c.l.b16 %v539
      %v1009 = vunpack.c.h.b16 %v539
      %v1010 = vunpack.c.l.b16 %v540
      %v1011 = vunpack.c.h.b16 %v540
      %v1012 = vunpack.c.l.b16 %v541
      %v1013 = vunpack.c.h.b16 %v541
      %v1014 = vunpack.c.l.b16 %v542
      %v1015 = vunpack.c.h.b16 %v542
      %v1016 = vunpack.c.l.b16 %v543
      %v1017 = vunpack.c.h.b16 %v543
      %v1018 = vunpack.c.l.b16 %v544
      %v1019 = vunpack.c.h.b16 %v544
      %v1020 = vunpack.c.l.b16 %v545
      %v1021 = vunpack.c.h.b16 %v545
      %v1022 = vunpack.c.l.b16 %v546
      %v1023 = vunpack.c.h.b16 %v546
      %v1024 = vunpack.c.l.b16 %v547
      %v1025 = vunpack.c.h.b16 %v547
      %v1026 = vpack.c.b16 %v740, %v738
      %v1027 = vpack.c.b16 %v741, %v739
      %v1028 = vpack.c.b16 %v744, %v742
      %v1029 = vpack.c.b16 %v745, %v743
      %v1030 = vpack.c.b16 %v748, %v746
      %v1031 = vpack.c.b16 %v749, %v747
      %v1032 = vpack.c.b16 %v752, %v750
      %v1033 = vpack.c.b16 %v753, %v751
      %v1034 = vpack.c.b16 %v756, %v754
      %v1035 = vpack.c.b16 %v757, %v755
      %v1036 = vpack.c.b16 %v760, %v758
      %v1037 = vpack.c.b16 %v761, %v759
      %v1038 = vpack.c.b16 %v764, %v762
      %v1039 = vpack.c.b16 %v765, %v763
      %v1040 = vpack.c.b16 %v768, %v766
      %v1041 = vpack.c.b16 %v769, %v767
      %v1042 = vpack.c.b16 %v772, %v770
      %v1043 = vpack.c.b16 %v773, %v771
      %v1044 = vpack.c.b16 %v776, %v774
      %v1045 = vpack.c.b16 %v777, %v775
      %v1046 = vpack.c.b16 %v780, %v778
      %v1047 = vpack.c.b16 %v781, %v779
      %v1048 = vpack.c.b16 %v784, %v782
      %v1049 = vpack.c.b16 %v785, %v783
      %v1050 = vpack.c.b16 %v788, %v786
      %v1051 = vpack.c.b16 %v789, %v787
      %v1052 = vpack.c.b16 %v792, %v790
      %v1053 = vpack.c.b16 %v793, %v791
      %v1054 = vpack.c.b16 %v796, %v794
      %v1055 = vpack.c.b16 %v797, %v795
      %v1056 = vpack.c.b16 %v800, %v798
      %v1057 = vpack.c.b16 %v801, %v799
      %v1058 = vpack.c.b16 %v804, %v802
      %v1059 = vpack.c.b16 %v805, %v803
      %v1060 = vpack.c.b16 %v808, %v806
      %v1061 = vpack.c.b16 %v809, %v807
      %v1062 = vpack.c.b16 %v812, %v810
      %v1063 = vpack.c.b16 %v813, %v811
      %v1064 = vpack.c.b16 %v816, %v814
      %v1065 = vpack.c.b16 %v817, %v815
      %v1066 = vpack.c.b16 %v820, %v818
      %v1067 = vpack.c.b16 %v821, %v819
      %v1068 = vpack.c.b16 %v824, %v822
      %v1069 = vpack.c.b16 %v825, %v823
      %v1070 = vpack.c.b16 %v828, %v826
      %v1071 = vpack.c.b16 %v829, %v827
      %v1072 = vpack.c.b16 %v832, %v830
      %v1073 = vpack.c.b16 %v833, %v831
      %v1074 = vpack.c.b16 %v836, %v834
      %v1075 = vpack.c.b16 %v837, %v835
      %v1076 = vpack.c.b16 %v840, %v838
      %v1077 = vpack.c.b16 %v841, %v839
      %v1078 = vpack.c.b16 %v844, %v842
      %v1079 = vpack.c.b16 %v845, %v843
      %v1080 = vpack.c.b16 %v848, %v846
      %v1081 = vpack.c.b16 %v849, %v847
      %v1082 = vpack.c.b16 %v852, %v850
      %v1083 = vpack.c.b16 %v853, %v851
      %v1084 = vpack.c.b16 %v856, %v854
      %v1085 = vpack.c.b16 %v857, %v855
      %v1086 = vpack.c.b16 %v860, %v858
      %v1087 = vpack.c.b16 %v861, %v859
      %v1088 = vpack.c.b16 %v864, %v862
      %v1089 = vpack.c.b16 %v865, %v863
      %v1090 = vpack.c.b16 %v868, %v866
      %v1091 = vpack.c.b16 %v869, %v867
      %v1092 = vpack.c.b16 %v872, %v870
      %v1093 = vpack.c.b16 %v873, %v871
      %v1094 = vpack.c.b16 %v876, %v874
      %v1095 = vpack.c.b16 %v877, %v875
      %v1096 = vpack.c.b16 %v880, %v878
      %v1097 = vpack.c.b16 %v881, %v879
      %v1098 = vpack.c.b16 %v884, %v882
      %v1099 = vpack.c.b16 %v885, %v883
      %v1100 = vpack.c.b16 %v888, %v886
      %v1101 = vpack.c.b16 %v889, %v887
      %v1102 = vpack.c.b16 %v892, %v890
      %v1103 = vpack.c.b16 %v893, %v891
      %v1104 = vpack.c.b16 %v896, %v894
      %v1105 = vpack.c.b16 %v897, %v895
      %v1106 = vpack.c.b16 %v900, %v898
      %v1107 = vpack.c.b16 %v901, %v899
      %v1108 = vpack.c.b16 %v904, %v902
      %v1109 = vpack.c.b16 %v905, %v903
      %v1110 = vpack.c.b16 %v908, %v906
      %v1111 = vpack.c.b16 %v909, %v907
      %v1112 = vpack.c.b16 %v912, %v910
      %v1113 = vpack.c.b16 %v913, %v911
      %v1114 = vpack.c.b16 %v916, %v914
      %v1115 = vpack.c.b16 %v917, %v915
      %v1116 = vpack.c.b16 %v920, %v918
      %v1117 = vpack.c.b16 %v921, %v919
      %v1118 = vpack.c.b16 %v924, %v922
      %v1119 = vpack.c.b16 %v925, %v923
      %v1120 = vpack.c.b16 %v928, %v926
      %v1121 = vpack.c.b16 %v929, %v927
      %v1122 = vpack.c.b16 %v932, %v930
      %v1123 = vpack.c.b16 %v933, %v931
      %v1124 = vpack.c.b16 %v936, %v934
      %v1125 = vpack.c.b16 %v937, %v935
      %v1126 = vpack.c.b16 %v940, %v938
      %v1127 = vpack.c.b16 %v941, %v939
      %v1128 = vpack.c.b16 %v944, %v942
      %v1129 = vpack.c.b16 %v945, %v943
      %v1130 = vpack.c.b16 %v948, %v946
      %v1131 = vpack.c.b16 %v949, %v947
      %v1132 = vpack.c.b16 %v952, %v950
      %v1133 = vpack.c.b16 %v953, %v951
      %v1134 = vpack.c.b16 %v956, %v954
      %v1135 = vpack.c.b16 %v957, %v955
      %v1136 = vpack.c.b16 %v960, %v958
      %v1137 = vpack.c.b16 %v961, %v959
      %v1138 = vpack.c.b16 %v964, %v962
      %v1139 = vpack.c.b16 %v965, %v963
      %v1140 = vpack.c.b16 %v968, %v966
      %v1141 = vpack.c.b16 %v969, %v967
      %v1142 = vpack.c.b16 %v972, %v970
      %v1143 = vpack.c.b16 %v973, %v971
      %v1144 = vpack.c.b16 %v976, %v974
      %v1145 = vpack.c.b16 %v977, %v975
      %v1146 = vpack.c.b16 %v980, %v978
      %v1147 = vpack.c.b16 %v981, %v979
      %v1148 = vpack.c.b16 %v984, %v982
      %v1149 = vpack.c.b16 %v985, %v983
      %v1150 = vpack.c.b16 %v988, %v986
      %v1151 = vpack.c.b16 %v989, %v987
      %v1152 = vpack.c.b16 %v992, %v990
      %v1153 = vpack.c.b16 %v993, %v991
      %v1154 = vpack.c.b16 %v996, %v994
      %v1155 = vpack.c.b16 %v997, %v995
      %v1156 = vpack.c.b16 %v1000, %v998
      %v1157 = vpack.c.b16 %v1001, %v999
      %v1158 = vpack.c.b16 %v1004, %v1002
      %v1159 = vpack.c.b16 %v1005, %v1003
      %v1160 = vpack.c.b16 %v1008, %v1006
      %v1161 = vpack.c.b16 %v1009, %v1007
      %v1162 = vpack.c.b16 %v1012, %v1010
      %v1163 = vpack.c.b16 %v1013, %v1011
      %v1164 = vpack.c.b16 %v1016, %v1014
      %v1165 = vpack.c.b16 %v1017, %v1015
      %v1166 = vpack.c.b16 %v1020, %v1018
      %v1167 = vpack.c.b16 %v1021, %v1019
      %v1168 = vpack.c.b16 %v1024, %v1022
      %v1169 = vpack.c.b16 %v1025, %v1023
      %1314 = vmatpush.bf16.msra.mxu0 %v1040
      %1315 = vmatpush.bf16.msra.mxu0 %v1038
      %1316 = vmatpush.bf16.msra.mxu0 %v1036
      %1317 = vmatpush.bf16.msra.mxu0 %v1034
      %1318 = vmatpush.bf16.msra.mxu0 %v1032
      %1319 = vmatpush.bf16.msra.mxu0 %v1030
      %1320 = vmatpush.bf16.msra.mxu0 %v1028
      %1321 = vmatpush.bf16.msra.mxu0 %v1026
      %1322 = vmatmul.bf16.gmra.mxu0 %v576
      %v1323 = vpop.f32.mrf.mxu0
      %v1324 = vadd.f32 0.0, %v1323
      %v1325 = vpop.f32.mrf.mxu0
      %v1326 = vadd.f32 0.0, %v1325
      %1327 = vdwg.mxu0
      %1328 = vmatpush.bf16.msra.mxu0 %v1056
      %1329 = vmatpush.bf16.msra.mxu0 %v1054
      %1330 = vmatpush.bf16.msra.mxu0 %v1052
      %1331 = vmatpush.bf16.msra.mxu0 %v1050
      %1332 = vmatpush.bf16.msra.mxu0 %v1048
      %1333 = vmatpush.bf16.msra.mxu0 %v1046
      %1334 = vmatpush.bf16.msra.mxu0 %v1044
      %1335 = vmatpush.bf16.msra.mxu0 %v1042
      %1336 = vmatmul.bf16.gmra.mxu0 %v577
      %v1337 = vpop.f32.mrf.mxu0
      %v1338 = vadd.f32 %v1324, %v1337
      %v1339 = vpop.f32.mrf.mxu0
      %v1340 = vadd.f32 %v1326, %v1339
      %1341 = vdwg.mxu0
      %1342 = vmatpush.bf16.msra.mxu0 %v1072
      %1343 = vmatpush.bf16.msra.mxu0 %v1070
      %1344 = vmatpush.bf16.msra.mxu0 %v1068
      %1345 = vmatpush.bf16.msra.mxu0 %v1066
      %1346 = vmatpush.bf16.msra.mxu0 %v1064
      %1347 = vmatpush.bf16.msra.mxu0 %v1062
      %1348 = vmatpush.bf16.msra.mxu0 %v1060
      %1349 = vmatpush.bf16.msra.mxu0 %v1058
      %1350 = vmatmul.bf16.gmra.mxu0 %v578
      %v1351 = vpop.f32.mrf.mxu0
      %v1352 = vadd.f32 %v1338, %v1351
      %v1353 = vpop.f32.mrf.mxu0
      %v1354 = vadd.f32 %v1340, %v1353
      %1355 = vdwg.mxu0
      %1356 = vmatpush.bf16.msra.mxu0 %v1088
      %1357 = vmatpush.bf16.msra.mxu0 %v1086
      %1358 = vmatpush.bf16.msra.mxu0 %v1084
      %1359 = vmatpush.bf16.msra.mxu0 %v1082
      %1360 = vmatpush.bf16.msra.mxu0 %v1080
      %1361 = vmatpush.bf16.msra.mxu0 %v1078
      %1362 = vmatpush.bf16.msra.mxu0 %v1076
      %1363 = vmatpush.bf16.msra.mxu0 %v1074
      %1364 = vmatmul.bf16.gmra.mxu0 %v579
      %v1365 = vpop.f32.mrf.mxu0
      %v1366 = vadd.f32 %v1352, %v1365
      %v1367 = vpop.f32.mrf.mxu0
      %v1368 = vadd.f32 %v1354, %v1367
      %1369 = vdwg.mxu0
      %1370 = vmatpush.bf16.msra.mxu0 %v1104
      %1371 = vmatpush.bf16.msra.mxu0 %v1102
      %1372 = vmatpush.bf16.msra.mxu0 %v1100
      %1373 = vmatpush.bf16.msra.mxu0 %v1098
      %1374 = vmatpush.bf16.msra.mxu0 %v1096
      %1375 = vmatpush.bf16.msra.mxu0 %v1094
      %1376 = vmatpush.bf16.msra.mxu0 %v1092
      %1377 = vmatpush.bf16.msra.mxu0 %v1090
      %1378 = vmatmul.bf16.gmra.mxu0 %v580
      %v1379 = vpop.f32.mrf.mxu0
      %v1380 = vadd.f32 %v1366, %v1379
      %v1381 = vpop.f32.mrf.mxu0
      %v1382 = vadd.f32 %v1368, %v1381
      %1383 = vdwg.mxu0
      %1384 = vmatpush.bf16.msra.mxu0 %v1120
      %1385 = vmatpush.bf16.msra.mxu0 %v1118
      %1386 = vmatpush.bf16.msra.mxu0 %v1116
      %1387 = vmatpush.bf16.msra.mxu0 %v1114
      %1388 = vmatpush.bf16.msra.mxu0 %v1112
      %1389 = vmatpush.bf16.msra.mxu0 %v1110
      %1390 = vmatpush.bf16.msra.mxu0 %v1108
      %1391 = vmatpush.bf16.msra.mxu0 %v1106
      %1392 = vmatmul.bf16.gmra.mxu0 %v581
      %v1393 = vpop.f32.mrf.mxu0
      %v1394 = vadd.f32 %v1380, %v1393
      %v1395 = vpop.f32.mrf.mxu0
      %v1396 = vadd.f32 %v1382, %v1395
      %1397 = vdwg.mxu0
      %1398 = vmatpush.bf16.msra.mxu0 %v1136
      %1399 = vmatpush.bf16.msra.mxu0 %v1134
      %1400 = vmatpush.bf16.msra.mxu0 %v1132
      %1401 = vmatpush.bf16.msra.mxu0 %v1130
      %1402 = vmatpush.bf16.msra.mxu0 %v1128
      %1403 = vmatpush.bf16.msra.mxu0 %v1126
      %1404 = vmatpush.bf16.msra.mxu0 %v1124
      %1405 = vmatpush.bf16.msra.mxu0 %v1122
      %1406 = vmatmul.bf16.gmra.mxu0 %v582
      %v1407 = vpop.f32.mrf.mxu0
      %v1408 = vadd.f32 %v1394, %v1407
      %v1409 = vpop.f32.mrf.mxu0
      %v1410 = vadd.f32 %v1396, %v1409
      %1411 = vdwg.mxu0
      %1412 = vmatpush.bf16.msra.mxu0 %v1152
      %1413 = vmatpush.bf16.msra.mxu0 %v1150
      %1414 = vmatpush.bf16.msra.mxu0 %v1148
      %1415 = vmatpush.bf16.msra.mxu0 %v1146
      %1416 = vmatpush.bf16.msra.mxu0 %v1144
      %1417 = vmatpush.bf16.msra.mxu0 %v1142
      %1418 = vmatpush.bf16.msra.mxu0 %v1140
      %1419 = vmatpush.bf16.msra.mxu0 %v1138
      %1420 = vmatmul.bf16.gmra.mxu0 %v583
      %v1421 = vpop.f32.mrf.mxu0
      %v1422 = vadd.f32 %v1408, %v1421
      %v1423 = vpop.f32.mrf.mxu0
      %v1424 = vadd.f32 %v1410, %v1423
      %1425 = vdwg.mxu0
      %1426 = vmatpush.bf16.msra.mxu0 %v1168
      %1427 = vmatpush.bf16.msra.mxu0 %v1166
      %1428 = vmatpush.bf16.msra.mxu0 %v1164
      %1429 = vmatpush.bf16.msra.mxu0 %v1162
      %1430 = vmatpush.bf16.msra.mxu0 %v1160
      %1431 = vmatpush.bf16.msra.mxu0 %v1158
      %1432 = vmatpush.bf16.msra.mxu0 %v1156
      %1433 = vmatpush.bf16.msra.mxu0 %v1154
      %1434 = vmatmul.bf16.gmra.mxu0 %v584
      %v1435 = vpop.f32.mrf.mxu0
      %v1436 = vadd.f32 %v1422, %v1435
      %v1437 = vpop.f32.mrf.mxu0
      %v1438 = vadd.f32 %v1424, %v1437
      %1439 = vdwg.mxu0
      %1440 = vmatpush.bf16.msra.mxu0 %v1041
      %1441 = vmatpush.bf16.msra.mxu0 %v1039
      %1442 = vmatpush.bf16.msra.mxu0 %v1037
      %1443 = vmatpush.bf16.msra.mxu0 %v1035
      %1444 = vmatpush.bf16.msra.mxu0 %v1033
      %1445 = vmatpush.bf16.msra.mxu0 %v1031
      %1446 = vmatpush.bf16.msra.mxu0 %v1029
      %1447 = vmatpush.bf16.msra.mxu0 %v1027
      %1448 = vmatmul.bf16.gmra.mxu0 %v576
      %v1449 = vpop.f32.mrf.mxu0
      %v1450 = vadd.f32 0.0, %v1449
      %v1451 = vpop.f32.mrf.mxu0
      %v1452 = vadd.f32 0.0, %v1451
      %1453 = vdwg.mxu0
      %1454 = vmatpush.bf16.msra.mxu0 %v1057
      %1455 = vmatpush.bf16.msra.mxu0 %v1055
      %1456 = vmatpush.bf16.msra.mxu0 %v1053
      %1457 = vmatpush.bf16.msra.mxu0 %v1051
      %1458 = vmatpush.bf16.msra.mxu0 %v1049
      %1459 = vmatpush.bf16.msra.mxu0 %v1047
      %1460 = vmatpush.bf16.msra.mxu0 %v1045
      %1461 = vmatpush.bf16.msra.mxu0 %v1043
      %1462 = vmatmul.bf16.gmra.mxu0 %v577
      %v1463 = vpop.f32.mrf.mxu0
      %v1464 = vadd.f32 %v1450, %v1463
      %v1465 = vpop.f32.mrf.mxu0
      %v1466 = vadd.f32 %v1452, %v1465
      %1467 = vdwg.mxu0
      %1468 = vmatpush.bf16.msra.mxu0 %v1073
      %1469 = vmatpush.bf16.msra.mxu0 %v1071
      %1470 = vmatpush.bf16.msra.mxu0 %v1069
      %1471 = vmatpush.bf16.msra.mxu0 %v1067
      %1472 = vmatpush.bf16.msra.mxu0 %v1065
      %1473 = vmatpush.bf16.msra.mxu0 %v1063
      %1474 = vmatpush.bf16.msra.mxu0 %v1061
      %1475 = vmatpush.bf16.msra.mxu0 %v1059
      %1476 = vmatmul.bf16.gmra.mxu0 %v578
      %v1477 = vpop.f32.mrf.mxu0
      %v1478 = vadd.f32 %v1464, %v1477
      %v1479 = vpop.f32.mrf.mxu0
      %v1480 = vadd.f32 %v1466, %v1479
      %1481 = vdwg.mxu0
      %1482 = vmatpush.bf16.msra.mxu0 %v1089
      %1483 = vmatpush.bf16.msra.mxu0 %v1087
      %1484 = vmatpush.bf16.msra.mxu0 %v1085
      %1485 = vmatpush.bf16.msra.mxu0 %v1083
      %1486 = vmatpush.bf16.msra.mxu0 %v1081
      %1487 = vmatpush.bf16.msra.mxu0 %v1079
      %1488 = vmatpush.bf16.msra.mxu0 %v1077
      %1489 = vmatpush.bf16.msra.mxu0 %v1075
      %1490 = vmatmul.bf16.gmra.mxu0 %v579
      %v1491 = vpop.f32.mrf.mxu0
      %v1492 = vadd.f32 %v1478, %v1491
      %v1493 = vpop.f32.mrf.mxu0
      %v1494 = vadd.f32 %v1480, %v1493
      %1495 = vdwg.mxu0
      %1496 = vmatpush.bf16.msra.mxu0 %v1105
      %1497 = vmatpush.bf16.msra.mxu0 %v1103
      %1498 = vmatpush.bf16.msra.mxu0 %v1101
      %1499 = vmatpush.bf16.msra.mxu0 %v1099
      %1500 = vmatpush.bf16.msra.mxu0 %v1097
      %1501 = vmatpush.bf16.msra.mxu0 %v1095
      %1502 = vmatpush.bf16.msra.mxu0 %v1093
      %1503 = vmatpush.bf16.msra.mxu0 %v1091
      %1504 = vmatmul.bf16.gmra.mxu0 %v580
      %v1505 = vpop.f32.mrf.mxu0
      %v1506 = vadd.f32 %v1492, %v1505
      %v1507 = vpop.f32.mrf.mxu0
      %v1508 = vadd.f32 %v1494, %v1507
      %1509 = vdwg.mxu0
      %1510 = vmatpush.bf16.msra.mxu0 %v1121
      %1511 = vmatpush.bf16.msra.mxu0 %v1119
      %1512 = vmatpush.bf16.msra.mxu0 %v1117
      %1513 = vmatpush.bf16.msra.mxu0 %v1115
      %1514 = vmatpush.bf16.msra.mxu0 %v1113
      %1515 = vmatpush.bf16.msra.mxu0 %v1111
      %1516 = vmatpush.bf16.msra.mxu0 %v1109
      %1517 = vmatpush.bf16.msra.mxu0 %v1107
      %1518 = vmatmul.bf16.gmra.mxu0 %v581
      %v1519 = vpop.f32.mrf.mxu0
      %v1520 = vadd.f32 %v1506, %v1519
      %v1521 = vpop.f32.mrf.mxu0
      %v1522 = vadd.f32 %v1508, %v1521
      %1523 = vdwg.mxu0
      %1524 = vmatpush.bf16.msra.mxu0 %v1137
      %1525 = vmatpush.bf16.msra.mxu0 %v1135
      %1526 = vmatpush.bf16.msra.mxu0 %v1133
      %1527 = vmatpush.bf16.msra.mxu0 %v1131
      %1528 = vmatpush.bf16.msra.mxu0 %v1129
      %1529 = vmatpush.bf16.msra.mxu0 %v1127
      %1530 = vmatpush.bf16.msra.mxu0 %v1125
      %1531 = vmatpush.bf16.msra.mxu0 %v1123
      %1532 = vmatmul.bf16.gmra.mxu0 %v582
      %v1533 = vpop.f32.mrf.mxu0
      %v1534 = vadd.f32 %v1520, %v1533
      %v1535 = vpop.f32.mrf.mxu0
      %v1536 = vadd.f32 %v1522, %v1535
      %1537 = vdwg.mxu0
      %1538 = vmatpush.bf16.msra.mxu0 %v1153
      %1539 = vmatpush.bf16.msra.mxu0 %v1151
      %1540 = vmatpush.bf16.msra.mxu0 %v1149
      %1541 = vmatpush.bf16.msra.mxu0 %v1147
      %1542 = vmatpush.bf16.msra.mxu0 %v1145
      %1543 = vmatpush.bf16.msra.mxu0 %v1143
      %1544 = vmatpush.bf16.msra.mxu0 %v1141
      %1545 = vmatpush.bf16.msra.mxu0 %v1139
      %1546 = vmatmul.bf16.gmra.mxu0 %v583
      %v1547 = vpop.f32.mrf.mxu0
      %v1548 = vadd.f32 %v1534, %v1547
      %v1549 = vpop.f32.mrf.mxu0
      %v1550 = vadd.f32 %v1536, %v1549
      %1551 = vdwg.mxu0
      %1552 = vmatpush.bf16.msra.mxu0 %v1169
      %1553 = vmatpush.bf16.msra.mxu0 %v1167
      %1554 = vmatpush.bf16.msra.mxu0 %v1165
      %1555 = vmatpush.bf16.msra.mxu0 %v1163
      %1556 = vmatpush.bf16.msra.mxu0 %v1161
      %1557 = vmatpush.bf16.msra.mxu0 %v1159
      %1558 = vmatpush.bf16.msra.mxu0 %v1157
      %1559 = vmatpush.bf16.msra.mxu0 %v1155
      %1560 = vmatmul.bf16.gmra.mxu0 %v584
      %v1561 = vpop.f32.mrf.mxu0
      %v1562 = vadd.f32 %v1548, %v1561
      %v1563 = vpop.f32.mrf.mxu0
      %v1564 = vadd.f32 %v1550, %v1563
      %1565 = vdwg.mxu0
      %v1566 = vadd.f32 %v390, %v1436
      %v1567 = vadd.f32 %v391, %v1562
      %v1568 = vadd.f32 %v392, %v1438
      %v1569 = vadd.f32 %v393, %v1564
      %1570 = vst [vmem:[#allocation2] sm:$0xff] %v1566
      %1571 = vst [vmem:[#allocation2 + $0x8] sm:$0xff] %v1567
      %1572 = vst [vmem:[#allocation2 + $0x10] sm:$0xff] %v1568
      %1573 = vst [vmem:[#allocation2 + $0x18] sm:$0xff] %v1569
      // Predicated region
      $region37: #{gyx_forward.19} parent=31 // pred_check
        %p1574 = pneg %p382
      $region38: #{gyx_forward.19} parent=31 // pred_check_branch
        %1576 = sbr.rel (%p1574) target = $region40
      $region39: #{gyx_forward.19} parent=31 // pred_region
        %v1577 = vld [vmem:[#allocation2] sm:$0xff]
        %v1578 = vld [vmem:[#allocation2 + $0x8] sm:$0xff]
        %v1579 = vld [vmem:[#allocation2 + $0x10] sm:$0xff]
        %v1580 = vld [vmem:[#allocation2 + $0x18] sm:$0xff]
        %v1581 = vadd.f32 %v1577, %v1579
        %v1582 = vrot.slane %v1581, 4
        %v1583 = vadd.f32 %v1581, %v1582
        %v1584 = vrot.slane %v1583, 2
        %v1585 = vadd.f32 %v1583, %v1584
        %v1586 = vrot.slane %v1585, 1
        %v1587 = vadd.f32 %v1585, %v1586
        %v1588 = vadd.f32 %v1578, %v1580
        %v1589 = vrot.slane %v1588, 4
        %v1590 = vadd.f32 %v1588, %v1589
        %v1591 = vrot.slane %v1590, 2
        %v1592 = vadd.f32 %v1590, %v1591
        %v1593 = vrot.slane %v1592, 1
        %v1594 = vadd.f32 %v1592, %v1593
        %v1595 = vmul.f32 %v1577, %v1577
        %v1596 = vmul.f32 %v1578, %v1578
        %v1597 = vmul.f32 %v1579, %v1579
        %v1598 = vmul.f32 %v1580, %v1580
        %v1599 = vadd.f32 %v1595, %v1597
        %v1600 = vrot.slane %v1599, 4
        %v1601 = vadd.f32 %v1599, %v1600
        %v1602 = vrot.slane %v1601, 2
        %v1603 = vadd.f32 %v1601, %v1602
        %v1604 = vrot.slane %v1603, 1
        %v1605 = vadd.f32 %v1603, %v1604
        %v1606 = vadd.f32 %v1596, %v1598
        %v1607 = vrot.slane %v1606, 4
        %v1608 = vadd.f32 %v1606, %v1607
        %v1609 = vrot.slane %v1608, 2
        %v1610 = vadd.f32 %v1608, %v1609
        %v1611 = vrot.slane %v1610, 1
        %v1612 = vadd.f32 %v1610, %v1611
        %v1615 = vrot.slane %v1594, 7
        %vm1616 = vcmask 1040384
        %v1617 = vsel %vm1616, %v1587, %v1615
        %v1619 = vlaneseq
        %vm1620 = vcmp.ge.s32.totalorder %v1619, 0
        %vm1621 = vcmp.lt.s32.totalorder %v1619, 256
        %vm1622 = vmand %vm1620, %vm1621
        %1623 = vst.msk [vmem:[%s371] sm:$0x3] %vm1622, %v1617
        %v1626 = vrot.slane %v1612, 7
        %v1627 = vsel %vm1616, %v1605, %v1626
        %1629 = vst.msk [vmem:[%s380] sm:$0x3] %vm1622, %v1627
        %v1630 = vld [vmem:[%s350] sm:$0x3]
        %v1632 = vperm.slane %v1630, 0
        %v1633 = vperm.slane %v1630, 1
        %v1636 = vadd.f32 %v1577, %v1632
        %v1637 = vadd.f32 %v1578, %v1633
        %v1638 = vadd.f32 %v1579, %v1632
        %v1639 = vadd.f32 %v1580, %v1633
        %1640 = vst [vmem:[%s361] sm:$0xff] %v1636
        %1641 = vst [vmem:[%s361 + $0x8] sm:$0xff] %v1637
        %1642 = vst [vmem:[%s361 + $0x10] sm:$0xff] %v1638
        %1643 = vst [vmem:[%s361 + $0x18] sm:$0xff] %v1639
      $region40: #{gyx_forward.19} parent=31 // pred_fallthru
        _
      %s1644 = smul.u32 2, %s22
      %s1645 = smul.u32 2, %s23
      %p1646 = scmp.lt.s32.totalorder %s1644, 3
      %s1647 = scalar_select %p1646, %s1644, 3
      %p1648 = scmp.lt.s32.totalorder %s1645, 1
      %s1649 = scalar_select %p1648, %s1645, 1
      %s1650 = smul.addr %s1647, 2
      %s1651 = sadd.s32 %s1649, %s1650
      %s1652 = smul.addr %s1651, 8
      %s1653 = scalar_lea.vmem %s3, %s1652
      %s1654 = smul.u32 2, %s23
      %p1655 = scmp.lt.s32.totalorder %s22, 1
      %s1656 = scalar_select %p1655, %s22, 1
      %p1657 = scmp.lt.s32.totalorder %s1654, 1
      %s1658 = scalar_select %p1657, %s1654, 1
      %s1659 = smul.addr %s1656, 2
      %s1660 = sadd.s32 %s1658, %s1659
      %s1661 = scalar_lea.vmem %s4, %s1660
      %s1662 = smul.u32 2, %s23
      %p1663 = scmp.lt.s32.totalorder %s22, 1
      %s1664 = scalar_select %p1663, %s22, 1
      %p1665 = scmp.lt.s32.totalorder %s1662, 1
      %s1666 = scalar_select %p1665, %s1662, 1
      %s1667 = smul.addr %s1664, 2
      %s1668 = sadd.s32 %s1666, %s1667
      %s1669 = scalar_lea.vmem %s5, %s1668
      // Predicated region
      $region41: #{gyx_forward.19} parent=31 // pred_check
        %p1670 = pneg %p138
      $region42: #{gyx_forward.19} parent=31 // pred_check_branch
        %1672 = sbr.rel (%p1670) target = $region44
      $region43: #{gyx_forward.19} parent=31 // pred_region
        %s1673 = smul.u32 2, %s22
        %s1674 = smul.u32 2, %s23
      $region44: #{gyx_forward.19} parent=31 // pred_fallthru
        _
      // Predicated region
      $region45: #{gyx_forward.19} parent=31 // pred_check
        %p1675 = pneg %p166
      $region46: #{gyx_forward.19} parent=31 // pred_check_branch
        %1677 = sbr.rel (%p1675) target = $region48
      $region47: #{gyx_forward.19} parent=31 // pred_region
        %s1678 = smul.u32 2, %s23
      $region48: #{gyx_forward.19} parent=31 // pred_fallthru
        _
      // Predicated region
      $region49: #{gyx_forward.19} parent=31 // pred_check
        %p1679 = pneg %p194
      $region50: #{gyx_forward.19} parent=31 // pred_check_branch
        %1681 = sbr.rel (%p1679) target = $region52
      $region51: #{gyx_forward.19} parent=31 // pred_region
        %s1682 = smul.u32 2, %s23
      $region52: #{gyx_forward.19} parent=31 // pred_fallthru
        _
    $region32: #{gyx_forward.19} parent=5 // pred_fallthru
      _
    %p1683 = scmp.le.s32.totalorder 2, %s12
    // Predicated region
    $region53: #{gyx_forward.19} parent=5 // pred_check
      %p1684 = pneg %p1683
    $region54: #{gyx_forward.19} parent=5 // pred_check_branch
      %1686 = sbr.rel (%p1684) target = $region56
    $region55: #{gyx_forward.19} parent=5 // pred_region
      %s1687 = ssub.s32 %s12, 2
      // Predicated region
      $region57: #{gyx_forward.19} parent=55 // pred_check
        %p1688 = pneg %p144
      $region58: #{gyx_forward.19} parent=55 // pred_check_branch
        %1690 = sbr.rel (%p1688) target = $region60
      $region59: #{gyx_forward.19} parent=55 // pred_region
        %s1691 = smul.u32 2, %s25
        %s1692 = smul.u32 2, %s26
        %p1693 = scmp.lt.s32.totalorder %s1691, 3
        %s1694 = scalar_select %p1693, %s1691, 3
        %p1695 = scmp.lt.s32.totalorder %s1692, 1
        %s1696 = scalar_select %p1695, %s1692, 1
        %s1697 = smul.addr %s1694, 2
        %s1698 = sadd.s32 %s1696, %s1697
        %s1699 = smul.addr %s1698, 8
        %s1700 = scalar_lea.vmem %s3, %s1699
      $region60: #{gyx_forward.19} parent=55 // pred_fallthru
        _
      // Predicated region
      $region61: #{gyx_forward.19} parent=55 // pred_check
        %p1701 = pneg %p172
      $region62: #{gyx_forward.19} parent=55 // pred_check_branch
        %1703 = sbr.rel (%p1701) target = $region64
      $region63: #{gyx_forward.19} parent=55 // pred_region
        %s1704 = smul.u32 2, %s26
        %p1705 = scmp.lt.s32.totalorder %s25, 1
        %s1706 = scalar_select %p1705, %s25, 1
        %p1707 = scmp.lt.s32.totalorder %s1704, 1
        %s1708 = scalar_select %p1707, %s1704, 1
        %s1709 = smul.addr %s1706, 2
        %s1710 = sadd.s32 %s1708, %s1709
        %s1711 = scalar_lea.vmem %s4, %s1710
      $region64: #{gyx_forward.19} parent=55 // pred_fallthru
        _
      // Predicated region
      $region65: #{gyx_forward.19} parent=55 // pred_check
        %p1712 = pneg %p200
      $region66: #{gyx_forward.19} parent=55 // pred_check_branch
        %1714 = sbr.rel (%p1712) target = $region68
      $region67: #{gyx_forward.19} parent=55 // pred_region
        %s1715 = smul.u32 2, %s26
        %p1716 = scmp.lt.s32.totalorder %s25, 1
        %s1717 = scalar_select %p1716, %s25, 1
        %p1718 = scmp.lt.s32.totalorder %s1715, 1
        %s1719 = scalar_select %p1718, %s1715, 1
        %s1720 = smul.addr %s1717, 2
        %s1721 = sadd.s32 %s1719, %s1720
        %s1722 = scalar_lea.vmem %s5, %s1721
      $region68: #{gyx_forward.19} parent=55 // pred_fallthru
        _
    $region56: #{gyx_forward.19} parent=5 // pred_fallthru
      _
  $region6: #{gyx_forward.19} parent=0 // loop_footer
    %s16 = sadd.s32 1, %s12
  $region7: #{gyx_forward.19} parent=0 // loop_footer_branch
    %11 = sbr.rel target = $region3
  $region8: #{gyx_forward.19} parent=0 // loop_exit
    _

// kernel: gyx_forward.21
$region0: #{gyx_forward.21}
  #allocation0 [shape = 'u32[]', space=smem, size = 0x4, offset = 0x4, fixed_abs, tag = 'smem constant byte address 0x4 - core index']
  #allocation1 [shape = 'u32[72,128]{1,0:T(1,128)}', space=vmem, size = 0x9000, scoped, tag = 'internal scratch']
  #allocation2 [shape = 'f32[64,4]{1,0:T(8,128)}', space=vmem, size = 0x8000, scoped, tag = 'scratch operand']
  %s0 = inlined_call_operand.vmem [shape: bf16[128,576], index: 0, kind: input, shape index: {}]
  %s1 = inlined_call_operand.vmem [shape: bf16[576,4], index: 1, kind: input, shape index: {}]
  %s2 = inlined_call_operand.vmem [shape: f32[1,4], index: 2, kind: input, shape index: {}]
  %s3 = inlined_call_operand.vmem [shape: f32[128,4], index: 3, kind: output, shape index: {0}]
  %s4 = inlined_call_operand.hbm [shape: f32[2,1,4], index: 4, kind: output, shape index: {1}]
  %s5 = inlined_call_operand.hbm [shape: f32[2,1,4], index: 5, kind: output, shape index: {2}]
  %6 = xla_tuple %s3, %s4, %s5
  %s7 = sld [smem:[#allocation0]]
  $region69: #{gyx_forward.21} parent=0
    _
  %s9 = ssub.s32 1, %s7
  %s10 = scalar_select 0, %s9, %s7
  $region1: #{gyx_forward.21} parent=0
    #allocation3 [shape = 'u8[1024]{0}', space=vmem, size = 0x400, scoped, tag = 'output window, operand 1']
    #allocation4 [shape = 's32[2]{0}', space=sflag, size = 0x8, scoped, tag = 'scoped memory for gyx_forward.21']
    #allocation5 [shape = 'u8[1024]{0}', space=vmem, size = 0x400, scoped, tag = 'output window, operand 2']
    #allocation6 [shape = 's32[2]{0}', space=sflag, size = 0x8, scoped, tag = 'scoped memory for gyx_forward.21']
    %11 = vsyncpa [#allocation4], 0
    %s12 = scalar_lea.sflag [#allocation4], 1
    %13 = vsyncpa %s12, 0
    %14 = vsyncpa [#allocation6], 0
    %s15 = scalar_lea.sflag [#allocation6], 1
    %16 = vsyncpa %s15, 0
    loop: start=0, step=1, limit=4
    $region2: #{gyx_forward.21} parent=1 // loop_pre_header
      _
    $region3: #{gyx_forward.21} parent=1 // loop_header
      %s18 = sphi 0, %s22
      %p19 = scmp.ge.s32.totalorder %s18, 4
      %s25 = sphi 0, %s44
      %s26 = sphi 0, %s40
      %s27 = sphi 0, %s36
      %s28 = sphi 0, %s25
      %s29 = sphi 0, %s26
      %s30 = sphi 0, %s27
      %s31 = sphi 0, %s28
      %s32 = sphi 0, %s29
      %s33 = sphi 0, %s30
      %s49 = sphi 0, %s51
      %s52 = sphi 0, %s49
      %s53 = sphi 0, %s52
      %s69 = sphi 0, %s53
      %s77 = sphi 0, %s79
      %s80 = sphi 0, %s77
      %s81 = sphi 0, %s80
      %s97 = sphi 0, %s81
      %s103 = sphi 0, %s105
      %s106 = sphi 0, %s103
      %s107 = sphi 0, %s106
      %s123 = sphi 0, %s107
      %s131 = sphi 0, %s133
      %s134 = sphi 0, %s131
      %s135 = sphi 0, %s134
      %s151 = sphi 0, %s135
      %s159 = sphi 0, %s161
      %s162 = sphi 0, %s159
      %s163 = sphi 0, %s162
      %s179 = sphi 0, %s163
      %s187 = sphi 0, %s189
      %s190 = sphi 0, %s187
      %s191 = sphi 0, %s190
      %s207 = sphi 0, %s191
    $region4: #{gyx_forward.21} parent=1 // loop_header_branch
      %21 = sbr.rel (%p19) target = $region8
    $region5: #{gyx_forward.21} parent=1 // loop_body
      %s23 = ssub.s32 %s18, 1
      %s24 = ssub.s32 %s18, 2
      %s34 = sadd.s32 1, %s27
      %p35 = scmp.ge.s32.totalorder %s34, 1
      %s36 = scalar_select %p35, 0, %s34
      %s37 = sadd.s32 1, %s26
      %s38 = scalar_select %p35, %s37, %s26
      %p39 = scmp.ge.s32.totalorder %s38, 1
      %s40 = scalar_select %p39, 0, %s38
      %s41 = sadd.s32 1, %s25
      %s42 = scalar_select %p39, %s41, %s25
      %p43 = scmp.ge.s32.totalorder %s42, 2
      %s44 = scalar_select %p43, 0, %s42
      %s45 = ssub.s32 %s25, %s44
      %s46 = ssub.s32 %s27, %s36
      %s47 = sor.u32 %s45, %s46
      %p48 = scmp.eq.s32.totalorder %s47, 0
      %s50 = sadd.s32 %s49, 1
      %s51 = scalar_select %p48, %s49, %s50
      %p54 = pneg %p48
      %p55 = scmp.eq.s32.totalorder %s18, 1
      %p56 = por %p54, %p55
      %p57 = scmp.ne.s32.totalorder %s49, %s52
      %p58 = scmp.eq.s32.totalorder %s18, 0
      %p59 = por %p57, %p58
      %p60 = scmp.ne.s32.totalorder %s49, %s52
      %p61 = scmp.eq.s32.totalorder %s23, 1
      %p62 = por %p60, %p61
      %p63 = scmp.ne.s32.totalorder %s52, %s53
      %p64 = scmp.eq.s32.totalorder %s23, 0
      %p65 = por %p63, %p64
      %p66 = scmp.ne.s32.totalorder %s52, %s53
      %p67 = scmp.eq.s32.totalorder %s24, 1
      %p68 = por %p66, %p67
      %p70 = scmp.ne.s32.totalorder %s53, %s69
      %p71 = scmp.eq.s32.totalorder %s24, 0
      %p72 = por %p70, %p71
      %s73 = ssub.s32 %s27, %s36
      %s74 = ssub.s32 %s26, %s40
      %s75 = sor.u32 %s73, %s74
      %p76 = scmp.eq.s32.totalorder %s75, 0
      %s78 = sadd.s32 %s77, 1
      %s79 = scalar_select %p76, %s77, %s78
      %p82 = pneg %p76
      %p83 = scmp.eq.s32.totalorder %s18, 1
      %p84 = por %p82, %p83
      %p85 = scmp.ne.s32.totalorder %s77, %s80
      %p86 = scmp.eq.s32.totalorder %s18, 0
      %p87 = por %p85, %p86
      %p88 = scmp.ne.s32.totalorder %s77, %s80
      %p89 = scmp.eq.s32.totalorder %s23, 1
      %p90 = por %p88, %p89
      %p91 = scmp.ne.s32.totalorder %s80, %s81
      %p92 = scmp.eq.s32.totalorder %s23, 0
      %p93 = por %p91, %p92
      %p94 = scmp.ne.s32.totalorder %s80, %s81
      %p95 = scmp.eq.s32.totalorder %s24, 1
      %p96 = por %p94, %p95
      %p98 = scmp.ne.s32.totalorder %s81, %s97
      %p99 = scmp.eq.s32.totalorder %s24, 0
      %p100 = por %p98, %p99
      %s101 = ssub.s32 %s26, %s40
      %p102 = scmp.eq.s32.totalorder %s101, 0
      %s104 = sadd.s32 %s103, 1
      %s105 = scalar_select %p102, %s103, %s104
      %p108 = pneg %p102
      %p109 = scmp.eq.s32.totalorder %s18, 1
      %p110 = por %p108, %p109
      %p111 = scmp.ne.s32.totalorder %s103, %s106
      %p112 = scmp.eq.s32.totalorder %s18, 0
      %p113 = por %p111, %p112
      %p114 = scmp.ne.s32.totalorder %s103, %s106
      %p115 = scmp.eq.s32.totalorder %s23, 1
      %p116 = por %p114, %p115
      %p117 = scmp.ne.s32.totalorder %s106, %s107
      %p118 = scmp.eq.s32.totalorder %s23, 0
      %p119 = por %p117, %p118
      %p120 = scmp.ne.s32.totalorder %s106, %s107
      %p121 = scmp.eq.s32.totalorder %s24, 1
      %p122 = por %p120, %p121
      %p124 = scmp.ne.s32.totalorder %s107, %s123
      %p125 = scmp.eq.s32.totalorder %s24, 0
      %p126 = por %p124, %p125
      %s127 = ssub.s32 %s25, %s44
      %s128 = ssub.s32 %s26, %s40
      %s129 = sor.u32 %s127, %s128
      %p130 = scmp.eq.s32.totalorder %s129, 0
      %s132 = sadd.s32 %s131, 1
      %s133 = scalar_select %p130, %s131, %s132
      %p136 = pneg %p130
      %p137 = scmp.eq.s32.totalorder %s18, 1
      %p138 = por %p136, %p137
      %p139 = scmp.ne.s32.totalorder %s131, %s134
      %p140 = scmp.eq.s32.totalorder %s18, 0
      %p141 = por %p139, %p140
      %p142 = scmp.ne.s32.totalorder %s131, %s134
      %p143 = scmp.eq.s32.totalorder %s23, 1
      %p144 = por %p142, %p143
      %p145 = scmp.ne.s32.totalorder %s134, %s135
      %p146 = scmp.eq.s32.totalorder %s23, 0
      %p147 = por %p145, %p146
      %p148 = scmp.ne.s32.totalorder %s134, %s135
      %p149 = scmp.eq.s32.totalorder %s24, 1
      %p150 = por %p148, %p149
      %p152 = scmp.ne.s32.totalorder %s135, %s151
      %p153 = scmp.eq.s32.totalorder %s24, 0
      %p154 = por %p152, %p153
      %s155 = ssub.s32 %s25, %s44
      %s156 = ssub.s32 %s26, %s40
      %s157 = sor.u32 %s155, %s156
      %p158 = scmp.eq.s32.totalorder %s157, 0
      %s160 = sadd.s32 %s159, 1
      %s161 = scalar_select %p158, %s159, %s160
      %p164 = pneg %p158
      %p165 = scmp.eq.s32.totalorder %s18, 1
      %p166 = por %p164, %p165
      %p167 = scmp.ne.s32.totalorder %s159, %s162
      %p168 = scmp.eq.s32.totalorder %s18, 0
      %p169 = por %p167, %p168
      %p170 = scmp.ne.s32.totalorder %s159, %s162
      %p171 = scmp.eq.s32.totalorder %s23, 1
      %p172 = por %p170, %p171
      %p173 = scmp.ne.s32.totalorder %s162, %s163
      %p174 = scmp.eq.s32.totalorder %s23, 0
      %p175 = por %p173, %p174
      %p176 = scmp.ne.s32.totalorder %s162, %s163
      %p177 = scmp.eq.s32.totalorder %s24, 1
      %p178 = por %p176, %p177
      %p180 = scmp.ne.s32.totalorder %s163, %s179
      %p181 = scmp.eq.s32.totalorder %s24, 0
      %p182 = por %p180, %p181
      %s183 = ssub.s32 %s25, %s44
      %s184 = ssub.s32 %s26, %s40
      %s185 = sor.u32 %s183, %s184
      %p186 = scmp.eq.s32.totalorder %s185, 0
      %s188 = sadd.s32 %s187, 1
      %s189 = scalar_select %p186, %s187, %s188
      %p192 = pneg %p186
      %p193 = scmp.eq.s32.totalorder %s18, 1
      %p194 = por %p192, %p193
      %p195 = scmp.ne.s32.totalorder %s187, %s190
      %p196 = scmp.eq.s32.totalorder %s18, 0
      %p197 = por %p195, %p196
      %p198 = scmp.ne.s32.totalorder %s187, %s190
      %p199 = scmp.eq.s32.totalorder %s23, 1
      %p200 = por %p198, %p199
      %p201 = scmp.ne.s32.totalorder %s190, %s191
      %p202 = scmp.eq.s32.totalorder %s23, 0
      %p203 = por %p201, %p202
      %p204 = scmp.ne.s32.totalorder %s190, %s191
      %p205 = scmp.eq.s32.totalorder %s24, 1
      %p206 = por %p204, %p205
      %p208 = scmp.ne.s32.totalorder %s191, %s207
      %p209 = scmp.eq.s32.totalorder %s24, 0
      %p210 = por %p208, %p209
      %p211 = scmp.le.s32.totalorder 1, %s18
      %p212 = scmp.lt.s32.totalorder %s18, 3
      %p213 = pnand %p211, %p212
      %p214 = pneg %p213
      // Predicated region
      $region9: #{gyx_forward.21} parent=5 // pred_check
        _
      $region10: #{gyx_forward.21} parent=5 // pred_check_branch
        %216 = sbr.rel (%p213) target = $region12
      $region11: #{gyx_forward.21} parent=5 // pred_region
        %s217 = ssub.s32 %s18, 1
        // Predicated region
        $region13: #{gyx_forward.21} parent=11 // pred_check
          %p218 = pneg %p93
        $region14: #{gyx_forward.21} parent=11 // pred_check_branch
          %220 = sbr.rel (%p218) target = $region16
        $region15: #{gyx_forward.21} parent=11 // pred_region
          %s221 = smul.u32 72, %s30
          %p222 = scmp.lt.s32.totalorder %s221, 71
          %s223 = scalar_select %p222, %s221, 71
          %p224 = scmp.lt.s32.totalorder %s29, 0
          %s225 = scalar_select %p224, %s29, 0
          %s226 = sadd.s32 %s225, %s223
          %s227 = smul.addr %s226, 4
          %s228 = scalar_lea.vmem %s1, %s227
          %s229 = smul.u32 72, %s30
        $region16: #{gyx_forward.21} parent=11 // pred_fallthru
          _
        // Predicated region
        $region17: #{gyx_forward.21} parent=11 // pred_check
          %p230 = pneg %p119
        $region18: #{gyx_forward.21} parent=11 // pred_check_branch
          %232 = sbr.rel (%p230) target = $region20
        $region19: #{gyx_forward.21} parent=11 // pred_region
          %p233 = scmp.lt.s32.totalorder %s29, 0
          %s234 = scalar_select %p233, %s29, 0
          %s235 = scalar_lea.vmem %s2, %s234
        $region20: #{gyx_forward.21} parent=11 // pred_fallthru
          _
      $region12: #{gyx_forward.21} parent=5 // pred_fallthru
        _
      %p236 = scmp.lt.s32.totalorder %s18, 2
      // Predicated region
      $region21: #{gyx_forward.21} parent=5 // pred_check
        %p237 = pneg %p236
      $region22: #{gyx_forward.21} parent=5 // pred_check_branch
        %239 = sbr.rel (%p237) target = $region24
      $region23: #{gyx_forward.21} parent=5 // pred_region
        // Predicated region
        $region25: #{gyx_forward.21} parent=23 // pred_check
          %p240 = pneg %p59
        $region26: #{gyx_forward.21} parent=23 // pred_check_branch
          %242 = sbr.rel (%p240) target = $region28
        $region27: #{gyx_forward.21} parent=23 // pred_region
          %s243 = smul.u32 8, %s25
          %s244 = smul.u32 5, %s27
          %p245 = scmp.lt.s32.totalorder %s243, 15
          %s246 = scalar_select %p245, %s243, 15
          %p247 = scmp.lt.s32.totalorder %s244, 4
          %s248 = scalar_select %p247, %s244, 4
          %s249 = smul.addr %s246, 5
          %s250 = sadd.s32 %s248, %s249
          %s251 = smul.addr %s250, 4
          %s252 = scalar_lea.vmem %s0, %s251
          %s253 = smul.u32 8, %s25
          %s254 = smul.u32 5, %s27
        $region28: #{gyx_forward.21} parent=23 // pred_fallthru
          _
      $region24: #{gyx_forward.21} parent=5 // pred_fallthru
        _
      %p255 = scmp.le.s32.totalorder 1, %s18
      %p256 = scmp.lt.s32.totalorder %s18, 3
      %p257 = pnand %p255, %p256
      %p258 = pneg %p257
      // Predicated region
      $region29: #{gyx_forward.21} parent=5 // pred_check
        _
      $region30: #{gyx_forward.21} parent=5 // pred_check_branch
        %260 = sbr.rel (%p257) target = $region32
      $region31: #{gyx_forward.21} parent=5 // pred_region
        %s261 = ssub.s32 %s18, 1
        %s262 = smul.u32 8, %s28
        %s263 = smul.u32 5, %s30
        %p264 = scmp.lt.s32.totalorder %s262, 15
        %s265 = scalar_select %p264, %s262, 15
        %p266 = scmp.lt.s32.totalorder %s263, 4
        %s267 = scalar_select %p266, %s263, 4
        %s268 = smul.addr %s265, 5
        %s269 = sadd.s32 %s267, %s268
        %s270 = smul.addr %s269, 4
        %s271 = scalar_lea.vmem %s0, %s270
        %p272 = pneg %p65
        %p273 = pneg %p62
        %s274 = smul.u32 72, %s30
        %p275 = scmp.lt.s32.totalorder %s274, 71
        %s276 = scalar_select %p275, %s274, 71
        %p277 = scmp.lt.s32.totalorder %s29, 0
        %s278 = scalar_select %p277, %s29, 0
        %s279 = sadd.s32 %s278, %s276
        %s280 = smul.addr %s279, 4
        %s281 = scalar_lea.vmem %s1, %s280
        %p282 = pneg %p93
        %p283 = pneg %p90
        %p284 = scmp.lt.s32.totalorder %s29, 0
        %s285 = scalar_select %p284, %s29, 0
        %s286 = scalar_lea.vmem %s2, %s285
        %p287 = pneg %p119
        %p288 = pneg %p116
        %p289 = pneg %p147
        %p290 = pneg %p144
        %s291 = smul.u32 8, %s28
        %p292 = scmp.lt.s32.totalorder %s291, 15
        %s293 = scalar_select %p292, %s291, 15
        %p294 = scmp.lt.s32.totalorder %s29, 0
        %s295 = scalar_select %p294, %s29, 0
        %s296 = sadd.s32 %s295, %s293
        %s297 = smul.addr %s296, 8
        %s298 = scalar_lea.vmem %s3, %s297
        %p299 = pneg %p175
        %p300 = pneg %p172
        %s301 = sand.u32 %s162, 1
        %s302 = scalar_lea.sflag [#allocation4], %s301
        %s303 = sand.u32 %s162, 1
        %s304 = scalar_lea.vmem [#allocation3], %s303
        %p305 = pneg %p203
        %p306 = pneg %p200
        %s307 = sand.u32 %s190, 1
        %s308 = scalar_lea.sflag [#allocation6], %s307
        %s309 = sand.u32 %s190, 1
        %s310 = scalar_lea.vmem [#allocation5], %s309
        %s311 = smul.u32 8, %s28
        %s312 = smul.u32 5, %s30
        %p313 = scmp.lt.s32.totalorder %s311, 15
        %s314 = scalar_select %p313, %s311, 15
        %p315 = scmp.lt.s32.totalorder %s312, 4
        %s316 = scalar_select %p315, %s312, 4
        %s317 = smul.addr %s314, 5
        %s318 = sadd.s32 %s316, %s317
        %s319 = smul.addr %s318, 4
        %s320 = scalar_lea.vmem %s0, %s319
        %s321 = smul.u32 8, %s28
        %s322 = smul.u32 5, %s30
        %s323 = smul.u32 72, %s30
        %p324 = scmp.lt.s32.totalorder %s323, 71
        %s325 = scalar_select %p324, %s323, 71
        %p326 = scmp.lt.s32.totalorder %s29, 0
        %s327 = scalar_select %p326, %s29, 0
        %s328 = sadd.s32 %s327, %s325
        %s329 = smul.addr %s328, 4
        %s330 = scalar_lea.vmem %s1, %s329
        %s331 = smul.u32 72, %s30
        %p332 = scmp.lt.s32.totalorder %s29, 0
        %s333 = scalar_select %p332, %s29, 0
        %s334 = scalar_lea.vmem %s2, %s333
        %s335 = smul.u32 8, %s28
        %p336 = scmp.lt.s32.totalorder %s335, 15
        %s337 = scalar_select %p336, %s335, 15
        %p338 = scmp.lt.s32.totalorder %s29, 0
        %s339 = scalar_select %p338, %s29, 0
        %s340 = sadd.s32 %s339, %s337
        %s341 = smul.addr %s340, 8
        %s342 = scalar_lea.vmem %s3, %s341
        %s343 = smul.u32 8, %s28
        %p345 = scmp.eq.s32.totalorder %s30, 0
        // Predicated region
        $region33: #{gyx_forward.21} parent=31 // pred_check
          %p346 = pneg %p345
        $region34: #{gyx_forward.21} parent=31 // pred_check_branch
          %348 = sbr.rel (%p346) target = $region36
        $region35: #{gyx_forward.21} parent=31 // pred_region
          %vm349 = vcmask 31744
          %350 = vst.msk [vmem:[#allocation2] sm:$0xff] %vm349, 0.0
          %351 = vst.msk [vmem:[#allocation2 + $0x8] sm:$0xff] %vm349, 0.0
          %352 = vst.msk [vmem:[#allocation2 + $0x10] sm:$0xff] %vm349, 0.0
          %353 = vst.msk [vmem:[#allocation2 + $0x18] sm:$0xff] %vm349, 0.0
          %354 = vst.msk [vmem:[#allocation2 + $0x20] sm:$0xff] %vm349, 0.0
          %355 = vst.msk [vmem:[#allocation2 + $0x28] sm:$0xff] %vm349, 0.0
          %356 = vst.msk [vmem:[#allocation2 + $0x30] sm:$0xff] %vm349, 0.0
          %357 = vst.msk [vmem:[#allocation2 + $0x38] sm:$0xff] %vm349, 0.0
        $region36: #{gyx_forward.21} parent=31 // pred_fallthru
          _
        %v358 = vld [vmem:[#allocation2] sm:$0xff]
        %v359 = vld [vmem:[#allocation2 + $0x8] sm:$0xff]
        %v360 = vld [vmem:[#allocation2 + $0x10] sm:$0xff]
        %v361 = vld [vmem:[#allocation2 + $0x18] sm:$0xff]
        %v362 = vld [vmem:[#allocation2 + $0x20] sm:$0xff]
        %v363 = vld [vmem:[#allocation2 + $0x28] sm:$0xff]
        %v364 = vld [vmem:[#allocation2 + $0x30] sm:$0xff]
        %v365 = vld [vmem:[#allocation2 + $0x38] sm:$0xff]
        %v366 = vld [vmem:[%s320] sm:$0xff]
        %v367 = vld [vmem:[%s320 + $0x8] sm:$0xff]
        %v368 = vld [vmem:[%s320 + $0x10] sm:$0xf]
        %v369 = vld [vmem:[%s320 + $0x14] sm:$0xff]
        %v370 = vld [vmem:[%s320 + $0x1c] sm:$0xff]
        %v371 = vld [vmem:[%s320 + $0x24] sm:$0xf]
        %v372 = vld [vmem:[%s320 + $0x28] sm:$0xff]
        %v373 = vld [vmem:[%s320 + $0x30] sm:$0xff]
        %v374 = vld [vmem:[%s320 + $0x38] sm:$0xf]
        %v375 = vld [vmem:[%s320 + $0x3c] sm:$0xff]
        %v376 = vld [vmem:[%s320 + $0x44] sm:$0xff]
        %v377 = vld [vmem:[%s320 + $0x4c] sm:$0xf]
        %v378 = vld [vmem:[%s320 + $0x50] sm:$0xff]
        %v379 = vld [vmem:[%s320 + $0x58] sm:$0xff]
        %v380 = vld [vmem:[%s320 + $0x60] sm:$0xf]
        %v381 = vld [vmem:[%s320 + $0x64] sm:$0xff]
        %v382 = vld [vmem:[%s320 + $0x6c] sm:$0xff]
        %v383 = vld [vmem:[%s320 + $0x74] sm:$0xf]
        %v384 = vld [vmem:[%s320 + $0x78] sm:$0xff]
        %v385 = vld [vmem:[%s320 + $0x80] sm:$0xff]
        %v386 = vld [vmem:[%s320 + $0x88] sm:$0xf]
        %v387 = vld [vmem:[%s320 + $0x8c] sm:$0xff]
        %v388 = vld [vmem:[%s320 + $0x94] sm:$0xff]
        %v389 = vld [vmem:[%s320 + $0x9c] sm:$0xf]
        %v390 = vld [vmem:[%s330] sm:$0xf]
        %v391 = vld [vmem:[%s330 + $0x4] sm:$0xf]
        %v392 = vld [vmem:[%s330 + $0x8] sm:$0xf]
        %v393 = vld [vmem:[%s330 + $0xc] sm:$0xf]
        %v394 = vld [vmem:[%s330 + $0x10] sm:$0xf]
        %v395 = vld [vmem:[%s330 + $0x14] sm:$0xf]
        %v396 = vld [vmem:[%s330 + $0x18] sm:$0xf]
        %v397 = vld [vmem:[%s330 + $0x1c] sm:$0xf]
        %v398 = vld [vmem:[%s330 + $0x20] sm:$0xf]
        %v399 = vld [vmem:[%s330 + $0x24] sm:$0xf]
        %v400 = vld [vmem:[%s330 + $0x28] sm:$0xf]
        %v401 = vld [vmem:[%s330 + $0x2c] sm:$0xf]
        %v402 = vld [vmem:[%s330 + $0x30] sm:$0xf]
        %v403 = vld [vmem:[%s330 + $0x34] sm:$0xf]
        %v404 = vld [vmem:[%s330 + $0x38] sm:$0xf]
        %v405 = vld [vmem:[%s330 + $0x3c] sm:$0xf]
        %v406 = vld [vmem:[%s330 + $0x40] sm:$0xf]
        %v407 = vld [vmem:[%s330 + $0x44] sm:$0xf]
        %v408 = vld [vmem:[%s330 + $0x48] sm:$0xf]
        %v409 = vld [vmem:[%s330 + $0x4c] sm:$0xf]
        %v410 = vld [vmem:[%s330 + $0x50] sm:$0xf]
        %v411 = vld [vmem:[%s330 + $0x54] sm:$0xf]
        %v412 = vld [vmem:[%s330 + $0x58] sm:$0xf]
        %v413 = vld [vmem:[%s330 + $0x5c] sm:$0xf]
        %v414 = vld [vmem:[%s330 + $0x60] sm:$0xf]
        %v415 = vld [vmem:[%s330 + $0x64] sm:$0xf]
        %v416 = vld [vmem:[%s330 + $0x68] sm:$0xf]
        %v417 = vld [vmem:[%s330 + $0x6c] sm:$0xf]
        %v418 = vld [vmem:[%s330 + $0x70] sm:$0xf]
        %v419 = vld [vmem:[%s330 + $0x74] sm:$0xf]
        %v420 = vld [vmem:[%s330 + $0x78] sm:$0xf]
        %v421 = vld [vmem:[%s330 + $0x7c] sm:$0xf]
        %v422 = vld [vmem:[%s330 + $0x80] sm:$0xf]
        %v423 = vld [vmem:[%s330 + $0x84] sm:$0xf]
        %v424 = vld [vmem:[%s330 + $0x88] sm:$0xf]
        %v425 = vld [vmem:[%s330 + $0x8c] sm:$0xf]
        %v426 = vld [vmem:[%s330 + $0x90] sm:$0xf]
        %v427 = vld [vmem:[%s330 + $0x94] sm:$0xf]
        %v428 = vld [vmem:[%s330 + $0x98] sm:$0xf]
        %v429 = vld [vmem:[%s330 + $0x9c] sm:$0xf]
        %v430 = vld [vmem:[%s330 + $0xa0] sm:$0xf]
        %v431 = vld [vmem:[%s330 + $0xa4] sm:$0xf]
        %v432 = vld [vmem:[%s330 + $0xa8] sm:$0xf]
        %v433 = vld [vmem:[%s330 + $0xac] sm:$0xf]
        %v434 = vld [vmem:[%s330 + $0xb0] sm:$0xf]
        %v435 = vld [vmem:[%s330 + $0xb4] sm:$0xf]
        %v436 = vld [vmem:[%s330 + $0xb8] sm:$0xf]
        %v437 = vld [vmem:[%s330 + $0xbc] sm:$0xf]
        %v438 = vld [vmem:[%s330 + $0xc0] sm:$0xf]
        %v439 = vld [vmem:[%s330 + $0xc4] sm:$0xf]
        %v440 = vld [vmem:[%s330 + $0xc8] sm:$0xf]
        %v441 = vld [vmem:[%s330 + $0xcc] sm:$0xf]
        %v442 = vld [vmem:[%s330 + $0xd0] sm:$0xf]
        %v443 = vld [vmem:[%s330 + $0xd4] sm:$0xf]
        %v444 = vld [vmem:[%s330 + $0xd8] sm:$0xf]
        %v445 = vld [vmem:[%s330 + $0xdc] sm:$0xf]
        %v446 = vld [vmem:[%s330 + $0xe0] sm:$0xf]
        %v447 = vld [vmem:[%s330 + $0xe4] sm:$0xf]
        %v448 = vld [vmem:[%s330 + $0xe8] sm:$0xf]
        %v449 = vld [vmem:[%s330 + $0xec] sm:$0xf]
        %v450 = vld [vmem:[%s330 + $0xf0] sm:$0xf]
        %v451 = vld [vmem:[%s330 + $0xf4] sm:$0xf]
        %v452 = vld [vmem:[%s330 + $0xf8] sm:$0xf]
        %v453 = vld [vmem:[%s330 + $0xfc] sm:$0xf]
        %v454 = vld [vmem:[%s330 + $0x100] sm:$0xf]
        %v455 = vld [vmem:[%s330 + $0x104] sm:$0xf]
        %v456 = vld [vmem:[%s330 + $0x108] sm:$0xf]
        %v457 = vld [vmem:[%s330 + $0x10c] sm:$0xf]
        %v458 = vld [vmem:[%s330 + $0x110] sm:$0xf]
        %v459 = vld [vmem:[%s330 + $0x114] sm:$0xf]
        %v460 = vld [vmem:[%s330 + $0x118] sm:$0xf]
        %v461 = vld [vmem:[%s330 + $0x11c] sm:$0xf]
        %v486 = vunpack.c.l.b16 %v366
        %v487 = vunpack.c.h.b16 %v366
        %v488 = vunpack.c.l.b16 %v367
        %v489 = vunpack.c.h.b16 %v367
        %v490 = vunpack.c.l.b16 %v368
        %v491 = vunpack.c.l.b16 %v369
        %v492 = vunpack.c.h.b16 %v369
        %v493 = vunpack.c.l.b16 %v370
        %v494 = vunpack.c.h.b16 %v370
        %v495 = vunpack.c.l.b16 %v371
        %v496 = vunpack.c.l.b16 %v372
        %v497 = vunpack.c.h.b16 %v372
        %v498 = vunpack.c.l.b16 %v373
        %v499 = vunpack.c.h.b16 %v373
        %v500 = vunpack.c.l.b16 %v374
        %v501 = vunpack.c.l.b16 %v375
        %v502 = vunpack.c.h.b16 %v375
        %v503 = vunpack.c.l.b16 %v376
        %v504 = vunpack.c.h.b16 %v376
        %v505 = vunpack.c.l.b16 %v377
        %v506 = vunpack.c.l.b16 %v378
        %v507 = vunpack.c.h.b16 %v378
        %v508 = vunpack.c.l.b16 %v379
        %v509 = vunpack.c.h.b16 %v379
        %v510 = vunpack.c.l.b16 %v380
        %v511 = vunpack.c.l.b16 %v381
        %v512 = vunpack.c.h.b16 %v381
        %v513 = vunpack.c.l.b16 %v382
        %v514 = vunpack.c.h.b16 %v382
        %v515 = vunpack.c.l.b16 %v383
        %v516 = vunpack.c.l.b16 %v384
        %v517 = vunpack.c.h.b16 %v384
        %v518 = vunpack.c.l.b16 %v385
        %v519 = vunpack.c.h.b16 %v385
        %v520 = vunpack.c.l.b16 %v386
        %v521 = vunpack.c.l.b16 %v387
        %v522 = vunpack.c.h.b16 %v387
        %v523 = vunpack.c.l.b16 %v388
        %v524 = vunpack.c.h.b16 %v388
        %v525 = vunpack.c.l.b16 %v389
        %v526 = vpack.c.b16 %v491, %v486
        %v527 = vpack.c.b16 %v492, %v487
        %v528 = vpack.c.b16 %v493, %v488
        %v529 = vpack.c.b16 %v494, %v489
        %v530 = vpack.c.b16 %v495, %v490
        %v531 = vpack.c.b16 %v501, %v496
        %v532 = vpack.c.b16 %v502, %v497
        %v533 = vpack.c.b16 %v503, %v498
        %v534 = vpack.c.b16 %v504, %v499
        %v535 = vpack.c.b16 %v505, %v500
        %v536 = vpack.c.b16 %v511, %v506
        %v537 = vpack.c.b16 %v512, %v507
        %v538 = vpack.c.b16 %v513, %v508
        %v539 = vpack.c.b16 %v514, %v509
        %v540 = vpack.c.b16 %v515, %v510
        %v541 = vpack.c.b16 %v521, %v516
        %v542 = vpack.c.b16 %v522, %v517
        %v543 = vpack.c.b16 %v523, %v518
        %v544 = vpack.c.b16 %v524, %v519
        %v545 = vpack.c.b16 %v525, %v520
        %v634 = vunpack.c.l.b16 %v390
        %v635 = vunpack.c.l.b16 %v391
        %v636 = vunpack.c.l.b16 %v392
        %v637 = vunpack.c.l.b16 %v393
        %v638 = vunpack.c.l.b16 %v394
        %v639 = vunpack.c.l.b16 %v395
        %v640 = vunpack.c.l.b16 %v396
        %v641 = vunpack.c.l.b16 %v397
        %v642 = vunpack.c.l.b16 %v398
        %v643 = vunpack.c.l.b16 %v399
        %v644 = vunpack.c.l.b16 %v400
        %v645 = vunpack.c.l.b16 %v401
        %v646 = vunpack.c.l.b16 %v402
        %v647 = vunpack.c.l.b16 %v403
        %v648 = vunpack.c.l.b16 %v404
        %v649 = vunpack.c.l.b16 %v405
        %v650 = vunpack.c.l.b16 %v406
        %v651 = vunpack.c.l.b16 %v407
        %v652 = vunpack.c.l.b16 %v408
        %v653 = vunpack.c.l.b16 %v409
        %v654 = vunpack.c.l.b16 %v410
        %v655 = vunpack.c.l.b16 %v411
        %v656 = vunpack.c.l.b16 %v412
        %v657 = vunpack.c.l.b16 %v413
        %v658 = vunpack.c.l.b16 %v414
        %v659 = vunpack.c.l.b16 %v415
        %v660 = vunpack.c.l.b16 %v416
        %v661 = vunpack.c.l.b16 %v417
        %v662 = vunpack.c.l.b16 %v418
        %v663 = vunpack.c.l.b16 %v419
        %v664 = vunpack.c.l.b16 %v420
        %v665 = vunpack.c.l.b16 %v421
        %v666 = vunpack.c.l.b16 %v422
        %v667 = vunpack.c.l.b16 %v423
        %v668 = vunpack.c.l.b16 %v424
        %v669 = vunpack.c.l.b16 %v425
        %v670 = vunpack.c.l.b16 %v426
        %v671 = vunpack.c.l.b16 %v427
        %v672 = vunpack.c.l.b16 %v428
        %v673 = vunpack.c.l.b16 %v429
        %v674 = vunpack.c.l.b16 %v430
        %v675 = vunpack.c.l.b16 %v431
        %v676 = vunpack.c.l.b16 %v432
        %v677 = vunpack.c.l.b16 %v433
        %v678 = vunpack.c.l.b16 %v434
        %v679 = vunpack.c.l.b16 %v435
        %v680 = vunpack.c.l.b16 %v436
        %v681 = vunpack.c.l.b16 %v437
        %v682 = vunpack.c.l.b16 %v438
        %v683 = vunpack.c.l.b16 %v439
        %v684 = vunpack.c.l.b16 %v440
        %v685 = vunpack.c.l.b16 %v441
        %v686 = vunpack.c.l.b16 %v442
        %v687 = vunpack.c.l.b16 %v443
        %v688 = vunpack.c.l.b16 %v444
        %v689 = vunpack.c.l.b16 %v445
        %v690 = vunpack.c.l.b16 %v446
        %v691 = vunpack.c.l.b16 %v447
        %v692 = vunpack.c.l.b16 %v448
        %v693 = vunpack.c.l.b16 %v449
        %v694 = vunpack.c.l.b16 %v450
        %v695 = vunpack.c.l.b16 %v451
        %v696 = vunpack.c.l.b16 %v452
        %v697 = vunpack.c.l.b16 %v453
        %v698 = vunpack.c.l.b16 %v454
        %v699 = vunpack.c.l.b16 %v455
        %v700 = vunpack.c.l.b16 %v456
        %v701 = vunpack.c.l.b16 %v457
        %v702 = vunpack.c.l.b16 %v458
        %v703 = vunpack.c.l.b16 %v459
        %v704 = vunpack.c.l.b16 %v460
        %v705 = vunpack.c.l.b16 %v461
        %v706 = vpack.c.b16 %v635, %v634
        %v707 = vpack.c.b16 %v637, %v636
        %v708 = vpack.c.b16 %v639, %v638
        %v709 = vpack.c.b16 %v641, %v640
        %v710 = vpack.c.b16 %v643, %v642
        %v711 = vpack.c.b16 %v645, %v644
        %v712 = vpack.c.b16 %v647, %v646
        %v713 = vpack.c.b16 %v649, %v648
        %v714 = vpack.c.b16 %v651, %v650
        %v715 = vpack.c.b16 %v653, %v652
        %v716 = vpack.c.b16 %v655, %v654
        %v717 = vpack.c.b16 %v657, %v656
        %v718 = vpack.c.b16 %v659, %v658
        %v719 = vpack.c.b16 %v661, %v660
        %v720 = vpack.c.b16 %v663, %v662
        %v721 = vpack.c.b16 %v665, %v664
        %v722 = vpack.c.b16 %v667, %v666
        %v723 = vpack.c.b16 %v669, %v668
        %v724 = vpack.c.b16 %v671, %v670
        %v725 = vpack.c.b16 %v673, %v672
        %v726 = vpack.c.b16 %v675, %v674
        %v727 = vpack.c.b16 %v677, %v676
        %v728 = vpack.c.b16 %v679, %v678
        %v729 = vpack.c.b16 %v681, %v680
        %v730 = vpack.c.b16 %v683, %v682
        %v731 = vpack.c.b16 %v685, %v684
        %v732 = vpack.c.b16 %v687, %v686
        %v733 = vpack.c.b16 %v689, %v688
        %v734 = vpack.c.b16 %v691, %v690
        %v735 = vpack.c.b16 %v693, %v692
        %v736 = vpack.c.b16 %v695, %v694
        %v737 = vpack.c.b16 %v697, %v696
        %v738 = vpack.c.b16 %v699, %v698
        %v739 = vpack.c.b16 %v701, %v700
        %v740 = vpack.c.b16 %v703, %v702
        %v741 = vpack.c.b16 %v705, %v704
        %vm778 = vcmask 523264
        %v780 = vsel %vm778, %v530, 0
        %v783 = vsel %vm778, %v535, 0
        %v786 = vsel %vm778, %v540, 0
        %v789 = vsel %vm778, %v545, 0
        %791 = vmatpush.bf16.msra.mxu0 %v713
        %792 = vmatpush.bf16.msra.mxu0 %v712
        %793 = vmatpush.bf16.msra.mxu0 %v711
        %794 = vmatpush.bf16.msra.mxu0 %v710
        %795 = vmatpush.bf16.msra.mxu0 %v709
        %796 = vmatpush.bf16.msra.mxu0 %v708
        %797 = vmatpush.bf16.msra.mxu0 %v707
        %798 = vmatpush.bf16.msra.mxu0 %v706
        %799 = vmatmul.bf16.gmra.mxu0 %v526
        %v800 = vpop.f32.mrf.mxu0
        %v801 = vadd.f32 0.0, %v800
        %v802 = vpop.f32.mrf.mxu0
        %v803 = vadd.f32 0.0, %v802
        %804 = vmatmul.bf16.gmra.mxu0 %v531
        %v805 = vpop.f32.mrf.mxu0
        %v806 = vadd.f32 0.0, %v805
        %v807 = vpop.f32.mrf.mxu0
        %v808 = vadd.f32 0.0, %v807
        %809 = vmatmul.bf16.gmra.mxu0 %v536
        %v810 = vpop.f32.mrf.mxu0
        %v811 = vadd.f32 0.0, %v810
        %v812 = vpop.f32.mrf.mxu0
        %v813 = vadd.f32 0.0, %v812
        %814 = vmatmul.bf16.gmra.mxu0 %v541
        %v815 = vpop.f32.mrf.mxu0
        %v816 = vadd.f32 0.0, %v815
        %v817 = vpop.f32.mrf.mxu0
        %v818 = vadd.f32 0.0, %v817
        %819 = vdwg.mxu0
        %820 = vmatpush.bf16.msra.mxu0 %v721
        %821 = vmatpush.bf16.msra.mxu0 %v720
        %822 = vmatpush.bf16.msra.mxu0 %v719
        %823 = vmatpush.bf16.msra.mxu0 %v718
        %824 = vmatpush.bf16.msra.mxu0 %v717
        %825 = vmatpush.bf16.msra.mxu0 %v716
        %826 = vmatpush.bf16.msra.mxu0 %v715
        %827 = vmatpush.bf16.msra.mxu0 %v714
        %828 = vmatmul.bf16.gmra.mxu0 %v527
        %v829 = vpop.f32.mrf.mxu0
        %v830 = vadd.f32 %v801, %v829
        %v831 = vpop.f32.mrf.mxu0
        %v832 = vadd.f32 %v803, %v831
        %833 = vmatmul.bf16.gmra.mxu0 %v532
        %v834 = vpop.f32.mrf.mxu0
        %v835 = vadd.f32 %v806, %v834
        %v836 = vpop.f32.mrf.mxu0
        %v837 = vadd.f32 %v808, %v836
        %838 = vmatmul.bf16.gmra.mxu0 %v537
        %v839 = vpop.f32.mrf.mxu0
        %v840 = vadd.f32 %v811, %v839
        %v841 = vpop.f32.mrf.mxu0
        %v842 = vadd.f32 %v813, %v841
        %843 = vmatmul.bf16.gmra.mxu0 %v542
        %v844 = vpop.f32.mrf.mxu0
        %v845 = vadd.f32 %v816, %v844
        %v846 = vpop.f32.mrf.mxu0
        %v847 = vadd.f32 %v818, %v846
        %848 = vdwg.mxu0
        %849 = vmatpush.bf16.msra.mxu0 %v729
        %850 = vmatpush.bf16.msra.mxu0 %v728
        %851 = vmatpush.bf16.msra.mxu0 %v727
        %852 = vmatpush.bf16.msra.mxu0 %v726
        %853 = vmatpush.bf16.msra.mxu0 %v725
        %854 = vmatpush.bf16.msra.mxu0 %v724
        %855 = vmatpush.bf16.msra.mxu0 %v723
        %856 = vmatpush.bf16.msra.mxu0 %v722
        %857 = vmatmul.bf16.gmra.mxu0 %v528
        %v858 = vpop.f32.mrf.mxu0
        %v859 = vadd.f32 %v830, %v858
        %v860 = vpop.f32.mrf.mxu0
        %v861 = vadd.f32 %v832, %v860
        %862 = vmatmul.bf16.gmra.mxu0 %v533
        %v863 = vpop.f32.mrf.mxu0
        %v864 = vadd.f32 %v835, %v863
        %v865 = vpop.f32.mrf.mxu0
        %v866 = vadd.f32 %v837, %v865
        %867 = vmatmul.bf16.gmra.mxu0 %v538
        %v868 = vpop.f32.mrf.mxu0
        %v869 = vadd.f32 %v840, %v868
        %v870 = vpop.f32.mrf.mxu0
        %v871 = vadd.f32 %v842, %v870
        %872 = vmatmul.bf16.gmra.mxu0 %v543
        %v873 = vpop.f32.mrf.mxu0
        %v874 = vadd.f32 %v845, %v873
        %v875 = vpop.f32.mrf.mxu0
        %v876 = vadd.f32 %v847, %v875
        %877 = vdwg.mxu0
        %878 = vmatpush.bf16.msra.mxu0 %v737
        %879 = vmatpush.bf16.msra.mxu0 %v736
        %880 = vmatpush.bf16.msra.mxu0 %v735
        %881 = vmatpush.bf16.msra.mxu0 %v734
        %882 = vmatpush.bf16.msra.mxu0 %v733
        %883 = vmatpush.bf16.msra.mxu0 %v732
        %884 = vmatpush.bf16.msra.mxu0 %v731
        %885 = vmatpush.bf16.msra.mxu0 %v730
        %886 = vmatmul.bf16.gmra.mxu0 %v529
        %v887 = vpop.f32.mrf.mxu0
        %v888 = vadd.f32 %v859, %v887
        %v889 = vpop.f32.mrf.mxu0
        %v890 = vadd.f32 %v861, %v889
        %891 = vmatmul.bf16.gmra.mxu0 %v534
        %v892 = vpop.f32.mrf.mxu0
        %v893 = vadd.f32 %v864, %v892
        %v894 = vpop.f32.mrf.mxu0
        %v895 = vadd.f32 %v866, %v894
        %896 = vmatmul.bf16.gmra.mxu0 %v539
        %v897 = vpop.f32.mrf.mxu0
        %v898 = vadd.f32 %v869, %v897
        %v899 = vpop.f32.mrf.mxu0
        %v900 = vadd.f32 %v871, %v899
        %901 = vmatmul.bf16.gmra.mxu0 %v544
        %v902 = vpop.f32.mrf.mxu0
        %v903 = vadd.f32 %v874, %v902
        %v904 = vpop.f32.mrf.mxu0
        %v905 = vadd.f32 %v876, %v904
        %906 = vdwg.mxu0
        %907 = vmatpush.bf16.msra.mxu0 0
        %908 = vmatpush.bf16.msra.mxu0 0
        %909 = vmatpush.bf16.msra.mxu0 0
        %910 = vmatpush.bf16.msra.mxu0 0
        %911 = vmatpush.bf16.msra.mxu0 %v741
        %912 = vmatpush.bf16.msra.mxu0 %v740
        %913 = vmatpush.bf16.msra.mxu0 %v739
        %914 = vmatpush.bf16.msra.mxu0 %v738
        %915 = vmatmul.bf16.gmra.mxu0 %v780
        %v916 = vpop.f32.mrf.mxu0
        %v917 = vadd.f32 %v888, %v916
        %v918 = vpop.f32.mrf.mxu0
        %v919 = vadd.f32 %v890, %v918
        %920 = vmatmul.bf16.gmra.mxu0 %v783
        %v921 = vpop.f32.mrf.mxu0
        %v922 = vadd.f32 %v893, %v921
        %v923 = vpop.f32.mrf.mxu0
        %v924 = vadd.f32 %v895, %v923
        %925 = vmatmul.bf16.gmra.mxu0 %v786
        %v926 = vpop.f32.mrf.mxu0
        %v927 = vadd.f32 %v898, %v926
        %v928 = vpop.f32.mrf.mxu0
        %v929 = vadd.f32 %v900, %v928
        %930 = vmatmul.bf16.gmra.mxu0 %v789
        %v931 = vpop.f32.mrf.mxu0
        %v932 = vadd.f32 %v903, %v931
        %v933 = vpop.f32.mrf.mxu0
        %v934 = vadd.f32 %v905, %v933
        %935 = vdwg.mxu0
        %v936 = vadd.f32 %v358, %v917
        %v937 = vadd.f32 %v359, %v919
        %v938 = vadd.f32 %v360, %v922
        %v939 = vadd.f32 %v361, %v924
        %v940 = vadd.f32 %v362, %v927
        %v941 = vadd.f32 %v363, %v929
        %v942 = vadd.f32 %v364, %v932
        %v943 = vadd.f32 %v365, %v934
        %vm944 = vcmask 31744
        %945 = vst.msk [vmem:[#allocation2] sm:$0xff] %vm944, %v936
        %946 = vst.msk [vmem:[#allocation2 + $0x8] sm:$0xff] %vm944, %v937
        %947 = vst.msk [vmem:[#allocation2 + $0x10] sm:$0xff] %vm944, %v938
        %948 = vst.msk [vmem:[#allocation2 + $0x18] sm:$0xff] %vm944, %v939
        %949 = vst.msk [vmem:[#allocation2 + $0x20] sm:$0xff] %vm944, %v940
        %950 = vst.msk [vmem:[#allocation2 + $0x28] sm:$0xff] %vm944, %v941
        %951 = vst.msk [vmem:[#allocation2 + $0x30] sm:$0xff] %vm944, %v942
        %952 = vst.msk [vmem:[#allocation2 + $0x38] sm:$0xff] %vm944, %v943
        // Predicated region
        $region37: #{gyx_forward.21} parent=31 // pred_check
          %p953 = pneg %p345
        $region38: #{gyx_forward.21} parent=31 // pred_check_branch
          %955 = sbr.rel (%p953) target = $region40
        $region39: #{gyx_forward.21} parent=31 // pred_region
          %v956 = vld [vmem:[#allocation2] sm:$0xff]
          %v957 = vld [vmem:[#allocation2 + $0x8] sm:$0xff]
          %v958 = vld [vmem:[#allocation2 + $0x10] sm:$0xff]
          %v959 = vld [vmem:[#allocation2 + $0x18] sm:$0xff]
          %v960 = vld [vmem:[#allocation2 + $0x20] sm:$0xff]
          %v961 = vld [vmem:[#allocation2 + $0x28] sm:$0xff]
          %v962 = vld [vmem:[#allocation2 + $0x30] sm:$0xff]
          %v963 = vld [vmem:[#allocation2 + $0x38] sm:$0xff]
          %v964 = vsel %vm944, %v956, 0.0
          %v965 = vsel %vm944, %v957, 0.0
          %v966 = vadd.f32 %v964, %v965
          %v967 = vsel %vm944, %v958, 0.0
          %v968 = vadd.f32 %v966, %v967
          %v969 = vsel %vm944, %v959, 0.0
          %v970 = vadd.f32 %v968, %v969
          %v971 = vsel %vm944, %v960, 0.0
          %v972 = vadd.f32 %v970, %v971
          %v973 = vsel %vm944, %v961, 0.0
          %v974 = vadd.f32 %v972, %v973
          %v975 = vsel %vm944, %v962, 0.0
          %v976 = vadd.f32 %v974, %v975
          %v977 = vsel %vm944, %v963, 0.0
          %v978 = vadd.f32 %v976, %v977
          %v979 = vrot.slane %v978, 4
          %v980 = vadd.f32 %v978, %v979
          %v981 = vrot.slane %v980, 2
          %v982 = vadd.f32 %v980, %v981
          %v983 = vrot.slane %v982, 1
          %v984 = vadd.f32 %v982, %v983
          %v985 = vmul.f32 %v956, %v956
          %v986 = vmul.f32 %v957, %v957
          %v987 = vmul.f32 %v958, %v958
          %v988 = vmul.f32 %v959, %v959
          %v989 = vmul.f32 %v960, %v960
          %v990 = vmul.f32 %v961, %v961
          %v991 = vmul.f32 %v962, %v962
          %v992 = vmul.f32 %v963, %v963
          %v993 = vsel %vm944, %v985, 0.0
          %v994 = vsel %vm944, %v986, 0.0
          %v995 = vadd.f32 %v993, %v994
          %v996 = vsel %vm944, %v987, 0.0
          %v997 = vadd.f32 %v995, %v996
          %v998 = vsel %vm944, %v988, 0.0
          %v999 = vadd.f32 %v997, %v998
          %v1000 = vsel %vm944, %v989, 0.0
          %v1001 = vadd.f32 %v999, %v1000
          %v1002 = vsel %vm944, %v990, 0.0
          %v1003 = vadd.f32 %v1001, %v1002
          %v1004 = vsel %vm944, %v991, 0.0
          %v1005 = vadd.f32 %v1003, %v1004
          %v1006 = vsel %vm944, %v992, 0.0
          %v1007 = vadd.f32 %v1005, %v1006
          %v1008 = vrot.slane %v1007, 4
          %v1009 = vadd.f32 %v1007, %v1008
          %v1010 = vrot.slane %v1009, 2
          %v1011 = vadd.f32 %v1009, %v1010
          %v1012 = vrot.slane %v1011, 1
          %v1013 = vadd.f32 %v1011, %v1012
          %vm1014 = vcmask 24576
          %1015 = vst.msk [vmem:[%s304] sm:$0x1] %vm1014, %v984
          %1016 = vst.msk [vmem:[%s310] sm:$0x1] %vm1014, %v1013
          %v1017 = vld [vmem:[%s334] sm:$0x1]
          %v1019 = vperm.slane %v1017, 0
          %v1021 = vadd.f32 %v956, %v1019
          %v1022 = vadd.f32 %v957, %v1019
          %v1023 = vadd.f32 %v958, %v1019
          %v1024 = vadd.f32 %v959, %v1019
          %v1025 = vadd.f32 %v960, %v1019
          %v1026 = vadd.f32 %v961, %v1019
          %v1027 = vadd.f32 %v962, %v1019
          %v1028 = vadd.f32 %v963, %v1019
          %v1029 = vtanh.pop %v1021
          %v1030 = vtanh.pop %v1022
          %v1031 = vtanh.pop %v1023
          %v1032 = vtanh.pop %v1024
          %v1033 = vtanh.pop %v1025
          %v1034 = vtanh.pop %v1026
          %v1035 = vtanh.pop %v1027
          %v1036 = vtanh.pop %v1028
          %1037 = vst.msk [vmem:[%s342] sm:$0xff] %vm944, %v1029
          %1038 = vst.msk [vmem:[%s342 + $0x8] sm:$0xff] %vm944, %v1030
          %1039 = vst.msk [vmem:[%s342 + $0x10] sm:$0xff] %vm944, %v1031
          %1040 = vst.msk [vmem:[%s342 + $0x18] sm:$0xff] %vm944, %v1032
          %1041 = vst.msk [vmem:[%s342 + $0x20] sm:$0xff] %vm944, %v1033
          %1042 = vst.msk [vmem:[%s342 + $0x28] sm:$0xff] %vm944, %v1034
          %1043 = vst.msk [vmem:[%s342 + $0x30] sm:$0xff] %vm944, %v1035
          %1044 = vst.msk [vmem:[%s342 + $0x38] sm:$0xff] %vm944, %v1036
        $region40: #{gyx_forward.21} parent=31 // pred_fallthru
          _
        %s1045 = smul.u32 8, %s28
        %p1046 = scmp.lt.s32.totalorder %s1045, 15
        %s1047 = scalar_select %p1046, %s1045, 15
        %p1048 = scmp.lt.s32.totalorder %s29, 0
        %s1049 = scalar_select %p1048, %s29, 0
        %s1050 = sadd.s32 %s1049, %s1047
        %s1051 = smul.addr %s1050, 8
        %s1052 = scalar_lea.vmem %s3, %s1051
        %s1053 = sand.u32 %s162, 1
        %s1054 = scalar_lea.sflag [#allocation4], %s1053
        %s1055 = sand.u32 %s162, 1
        %s1056 = scalar_lea.vmem [#allocation3], %s1055
        %s1057 = sand.u32 %s190, 1
        %s1058 = scalar_lea.sflag [#allocation6], %s1057
        %s1059 = sand.u32 %s190, 1
        %s1060 = scalar_lea.vmem [#allocation5], %s1059
        // Predicated region
        $region41: #{gyx_forward.21} parent=31 // pred_check
          %p1061 = pneg %p144
        $region42: #{gyx_forward.21} parent=31 // pred_check_branch
          %1063 = sbr.rel (%p1061) target = $region44
        $region43: #{gyx_forward.21} parent=31 // pred_region
          %s1064 = smul.u32 8, %s28
        $region44: #{gyx_forward.21} parent=31 // pred_fallthru
          _
        // Predicated region
        $region45: #{gyx_forward.21} parent=31 // pred_check
          %p1065 = pneg %p172
        $region46: #{gyx_forward.21} parent=31 // pred_check_branch
          %1067 = sbr.rel (%p1065) target = $region48
        $region47: #{gyx_forward.21} parent=31 // pred_region
          %1069 = vsyncadd %s1054, 0
          %s1070 = sadd.s32 %s29, %s28
          %s1071 = scalar_lea.hbm %s4, %s1070
          %s1073 = sshll.u32 %s1056, 4
          %s1074 = int_to_ptr.vmem [resolvable:$true] %s1073
          %s1075 = sshll.u32 %s1071, 4
          %s1076 = int_to_ptr.hbm [resolvable:$true] %s1075
          %1078 = dma.vmem_to_hbm [thread:$0]  %s1074, 16, %s1076, %s1054
        $region48: #{gyx_forward.21} parent=31 // pred_fallthru
          _
        // Predicated region
        $region49: #{gyx_forward.21} parent=31 // pred_check
          %p1079 = pneg %p200
        $region50: #{gyx_forward.21} parent=31 // pred_check_branch
          %1081 = sbr.rel (%p1079) target = $region52
        $region51: #{gyx_forward.21} parent=31 // pred_region
          %1083 = vsyncadd %s1058, 0
          %s1084 = sadd.s32 %s29, %s28
          %s1085 = scalar_lea.hbm %s5, %s1084
          %s1087 = sshll.u32 %s1060, 4
          %s1088 = int_to_ptr.vmem [resolvable:$true] %s1087
          %s1089 = sshll.u32 %s1085, 4
          %s1090 = int_to_ptr.hbm [resolvable:$true] %s1089
          %1092 = dma.vmem_to_hbm [thread:$0]  %s1088, 16, %s1090, %s1058
        $region52: #{gyx_forward.21} parent=31 // pred_fallthru
          _
      $region32: #{gyx_forward.21} parent=5 // pred_fallthru
        _
      %p1093 = scmp.le.s32.totalorder 2, %s18
      // Predicated region
      $region53: #{gyx_forward.21} parent=5 // pred_check
        %p1094 = pneg %p1093
      $region54: #{gyx_forward.21} parent=5 // pred_check_branch
        %1096 = sbr.rel (%p1094) target = $region56
      $region55: #{gyx_forward.21} parent=5 // pred_region
        %s1097 = ssub.s32 %s18, 2
        // Predicated region
        $region57: #{gyx_forward.21} parent=55 // pred_check
          %p1098 = pneg %p150
        $region58: #{gyx_forward.21} parent=55 // pred_check_branch
          %1100 = sbr.rel (%p1098) target = $region60
        $region59: #{gyx_forward.21} parent=55 // pred_region
          %s1101 = smul.u32 8, %s31
          %p1102 = scmp.lt.s32.totalorder %s1101, 15
          %s1103 = scalar_select %p1102, %s1101, 15
          %p1104 = scmp.lt.s32.totalorder %s32, 0
          %s1105 = scalar_select %p1104, %s32, 0
          %s1106 = sadd.s32 %s1105, %s1103
          %s1107 = smul.addr %s1106, 8
          %s1108 = scalar_lea.vmem %s3, %s1107
        $region60: #{gyx_forward.21} parent=55 // pred_fallthru
          _
        // Predicated region
        $region61: #{gyx_forward.21} parent=55 // pred_check
          %p1109 = pneg %p178
        $region62: #{gyx_forward.21} parent=55 // pred_check_branch
          %1111 = sbr.rel (%p1109) target = $region64
        $region63: #{gyx_forward.21} parent=55 // pred_region
          %s1112 = sand.u32 %s163, 1
          %s1113 = scalar_lea.sflag [#allocation4], %s1112
          %s1114 = sand.u32 %s163, 1
          %s1115 = scalar_lea.vmem [#allocation3], %s1114
          %1117 = dma.done %s1113, 16
        $region64: #{gyx_forward.21} parent=55 // pred_fallthru
          _
        // Predicated region
        $region65: #{gyx_forward.21} parent=55 // pred_check
          %p1118 = pneg %p206
        $region66: #{gyx_forward.21} parent=55 // pred_check_branch
          %1120 = sbr.rel (%p1118) target = $region68
        $region67: #{gyx_forward.21} parent=55 // pred_region
          %s1121 = sand.u32 %s191, 1
          %s1122 = scalar_lea.sflag [#allocation6], %s1121
          %s1123 = sand.u32 %s191, 1
          %s1124 = scalar_lea.vmem [#allocation5], %s1123
          %1126 = dma.done %s1122, 16
        $region68: #{gyx_forward.21} parent=55 // pred_fallthru
          _
      $region56: #{gyx_forward.21} parent=5 // pred_fallthru
        _
    $region6: #{gyx_forward.21} parent=1 // loop_footer
      %s22 = sadd.s32 1, %s18
    $region7: #{gyx_forward.21} parent=1 // loop_footer_branch
      %17 = sbr.rel target = $region3
    $region8: #{gyx_forward.21} parent=1 // loop_exit
      _
    %1127 = vsyncpa [#allocation4], 1
    %s1128 = scalar_lea.sflag [#allocation4], 1
    %1129 = vsyncpa %s1128, 1
    %1130 = vsyncpa [#allocation6], 1
    %s1131 = scalar_lea.sflag [#allocation6], 1
    %1132 = vsyncpa %s1131, 1

</llo_original>
